<compile_context>
chip_gen: v7x
topology: tpu7x:2x2x1
jax: 0.10.0
libtpu: 0.0.40
codegen_flags: <defaults>
</compile_context>

<pallas_src>
import functools

import jax
import jax.numpy as jnp
from jax.experimental import pallas as pl
from jax.experimental.pallas import tpu as pltpu


# ------------------------------ fused kernel ------------------------------- #

def _cnn_fused_kernel(x_ref, w1_ref, b1_ref, w2_ref, b2_ref, wfc_ref, bfc_ref,
                      out_ref,
                      h1_scr, wm1_scr, p1_scr, h2_scr, wm2_scr, p2_scr, *, bt):
    # conv2's wide-form tap slices over-read p1 rows 196..197 (they only feed
    # garbage columns that are never consumed); keep those rows deterministic.
    p1_scr[196:200, :] = jnp.zeros((4, 16), jnp.float32)

    for img in range(bt):
        # ---- conv1: single im2col matmul (784,27)@(27,16), fused bias+relu ----
        h1 = jnp.dot(x_ref[img], w1_ref[...], preferred_element_type=jnp.float32)
        h1_scr[...] = jnp.maximum(h1 + b1_ref[...], 0.0)          # rows r = h*28 + w

        # ---- pool1 ----
        # horizontal max: even/odd columns via two sublane-strided ref loads
        #   wm1[h*14 + j] = max(h1[h, 2j], h1[h, 2j+1])
        wm1_scr[...] = jnp.maximum(h1_scr[pl.ds(0, 392, 2), :],
                                   h1_scr[pl.ds(1, 392, 2), :])   # (392,16)
        # vertical max: contiguous 14-row block pairs -> p1[i*14 + j] = pooled1(i,j)
        for i in range(14):
            p1_scr[14 * i:14 * i + 14, :] = jnp.maximum(
                wm1_scr[28 * i:28 * i + 14, :],
                wm1_scr[28 * i + 14:28 * i + 28, :])

        # ---- conv2 (wide form on the 14x14 pooled grid), rows q = 14*i2 + j2 ----
        # columns j2 in {12,13} are garbage and never read downstream
        acc2 = jnp.dot(p1_scr[0:168, :], w2_ref[0:16, :],
                       preferred_element_type=jnp.float32)        # tap (0,0) inits acc
        for t in range(1, 9):
            off = 14 * (t // 3) + (t % 3)
            acc2 = acc2 + jnp.dot(p1_scr[off:off + 168, :],
                                  w2_ref[16 * t:16 * t + 16, :],
                                  preferred_element_type=jnp.float32)
        h2_scr[...] = jnp.maximum(acc2 + b2_ref[...], 0.0)        # (168,32)

        # ---- pool2: same strided even/odd + contiguous block maxima ----
        wm2_scr[...] = jnp.maximum(h2_scr[pl.ds(0, 84, 2), :],
                                   h2_scr[pl.ds(1, 84, 2), :])    # (84,32)
        for ii in range(6):
            p2_scr[6 * ii:6 * ii + 6, :] = jnp.maximum(
                wm2_scr[14 * ii:14 * ii + 6, :],
                wm2_scr[14 * ii + 7:14 * ii + 13, :])              # p2[ii*6+jj]

        # ---- fc: single contraction (broadcast multiply + reductions, no MXU chain) ----
        p2 = p2_scr[...]                                           # (36,32)
        prod = p2[None, :, :] * wfc_ref[...]                       # (5,36,32)
        partial = jnp.sum(prod, axis=1)                            # (5,32)
        logits = jnp.sum(partial, axis=1, keepdims=True) + bfc_ref[...]   # (5,1)
        out_ref[img] = logits


# ------------------------------- host glue --------------------------------- #

def cnn_forward(x_nchw, params):
    B = x_nchw.shape[0]

    # host-side im2col for conv1: (B, 784, 27), col index = (dh*3+dw)*3 + ci
    x_nhwc = jnp.transpose(x_nchw, (0, 2, 3, 1))                   # (B,30,30,3)
    cols = [x_nhwc[:, dh:dh + 28, dw:dw + 28, :]
            for dh in range(3) for dw in range(3)]
    xcol = jnp.concatenate(cols, axis=-1).reshape(B, 784, 27)

    # batch Bt images per grid step; pad B up to a multiple of Bt if needed
    Bt = B if B <= 8 else 8
    Bp = ((B + Bt - 1) // Bt) * Bt
    if Bp != B:
        xcol = jnp.pad(xcol, ((0, Bp - B), (0, 0), (0, 0)))

    # weights, reordered once on the host (tiny tensors)
    w1 = jnp.transpose(params["w1"], (2, 3, 1, 0)).reshape(27, 16)    # [dh,dw,ci] x co
    b1 = params["b1"].reshape(1, 16)
    w2 = jnp.transpose(params["w2"], (2, 3, 1, 0)).reshape(144, 32)   # [dh,dw,ci] x co
    b2 = params["b2"].reshape(1, 32)
    # torch flatten order is (c, ii, jj): Wfc[o, c*36+s] -> cube[o, s, c]
    wfc = jnp.transpose(params["wfc"].reshape(5, 32, 36), (0, 2, 1))  # (5,36,32)
    bfc = params["bfc"].reshape(5, 1)

    macs = 784 * 27 * 16 + 9 * 168 * 16 * 32 + 36 * 32 * 5
    cost = pl.CostEstimate(
        flops=2 * Bp * macs,
        transcendentals=0,
        bytes_accessed=Bp * 784 * 27 * 4 + (27 * 16 + 144 * 32 + 5 * 36 * 32 + 53) * 4
                       + Bp * 5 * 4)

    const2d = lambda shape: pl.BlockSpec(shape, lambda b: (0, 0))

    out = pl.pallas_call(
        functools.partial(_cnn_fused_kernel, bt=Bt),
        out_shape=jax.ShapeDtypeStruct((Bp, 5, 1), jnp.float32),
        grid=(Bp // Bt,),
        in_specs=[
            pl.BlockSpec((Bt, 784, 27), lambda b: (b, 0, 0)),
            const2d((27, 16)),
            const2d((1, 16)),
            const2d((144, 32)),
            const2d((1, 32)),
            pl.BlockSpec((5, 36, 32), lambda b: (0, 0, 0)),
            const2d((5, 1)),
        ],
        out_specs=pl.BlockSpec((Bt, 5, 1), lambda b: (b, 0, 0)),
        scratch_shapes=[
            pltpu.VMEM((784, 16), jnp.float32),   # h1
            pltpu.VMEM((392, 16), jnp.float32),   # pool1 horizontal max
            pltpu.VMEM((200, 16), jnp.float32),   # p1 (+4 pad rows for conv2 taps)
            pltpu.VMEM((168, 32), jnp.float32),   # h2 (wide form)
            pltpu.VMEM((84, 32), jnp.float32),    # pool2 horizontal max
            pltpu.VMEM((36, 32), jnp.float32),    # p2
        ],
        compiler_params=pltpu.CompilerParams(
            dimension_semantics=("parallel",)),
        cost_estimate=cost,
    )(xcol, w1, b1, w2, b2, wfc, bfc)
    return out[:B, :, 0]


def init_params(key):
    k1, k2, k3, k4, k5, k6 = jax.random.split(key, 6)
    return {
        "w1": 0.1 * jax.random.normal(k1, (16, 3, 3, 3), jnp.float32),     # Conv2d(3,16,3)
        "b1": 0.1 * jax.random.normal(k2, (16,), jnp.float32),
        "w2": 0.1 * jax.random.normal(k3, (32, 16, 3, 3), jnp.float32),    # Conv2d(16,32,3)
        "b2": 0.1 * jax.random.normal(k4, (32,), jnp.float32),
        "wfc": 0.1 * jax.random.normal(k5, (5, 32 * 6 * 6), jnp.float32),  # Linear(1152,5)
        "bfc": 0.1 * jax.random.normal(k6, (5,), jnp.float32),
    }


# pure-JAX reference for the correctness check
def cnn_reference(x_nchw, params):
    def conv(x, w, b):
        y = jax.lax.conv_general_dilated(
            x, w, window_strides=(1, 1), padding="VALID",
            dimension_numbers=("NCHW", "OIHW", "NCHW"))
        return y + b.reshape(1, -1, 1, 1)

    def pool(x):
        return jax.lax.reduce_window(
            x, -jnp.inf, jax.lax.max, (1, 1, 2, 2), (1, 1, 2, 2), "VALID")

    h = pool(jax.nn.relu(conv(x_nchw, params["w1"], params["b1"])))
    h = pool(jax.nn.relu(conv(h, params["w2"], params["b2"])))
    h = h.reshape(x_nchw.shape[0], -1)
    return h @ params["wfc"].T + params["bfc"]


if __name__ == "__main__":
    key = jax.random.PRNGKey(0)
    kx, kp = jax.random.split(key)
    # input consistent with fc1 = Linear(32*6*6, 5): (B, 3, 30, 30)
    x = jax.random.normal(kx, (2, 3, 30, 30), jnp.float32)
    params = init_params(kp)

    out = jax.block_until_ready(jax.jit(cnn_forward)(x, params))
    ref = jax.block_until_ready(cnn_reference(x, params))

    assert out.shape == (2, 5), out.shape
    assert jnp.allclose(out, ref, atol=5e-4, rtol=5e-4), (out, ref)
    print("KERNEL_OK")
</pallas_src>

<mosaic_0001>
module attributes {stable_mosaic.version = 11 : i64} {
  func.func @_cnn_fused_kernel(%arg0: i32, %arg1: memref<2x784x27xf32, #tpu.memory_space<vmem>>, %arg2: memref<27x16xf32, #tpu.memory_space<vmem>>, %arg3: memref<1x16xf32, #tpu.memory_space<vmem>>, %arg4: memref<144x32xf32, #tpu.memory_space<vmem>>, %arg5: memref<1x32xf32, #tpu.memory_space<vmem>>, %arg6: memref<5x36x32xf32, #tpu.memory_space<vmem>>, %arg7: memref<5x1xf32, #tpu.memory_space<vmem>>, %arg8: memref<2x5x1xf32, #tpu.memory_space<vmem>>, %arg9: memref<784x16xf32, #tpu.memory_space<vmem>>, %arg10: memref<392x16xf32, #tpu.memory_space<vmem>>, %arg11: memref<200x16xf32, #tpu.memory_space<vmem>>, %arg12: memref<168x32xf32, #tpu.memory_space<vmem>>, %arg13: memref<84x32xf32, #tpu.memory_space<vmem>>, %arg14: memref<36x32xf32, #tpu.memory_space<vmem>>) attributes {dimension_semantics = [#tpu.dimension_semantics<parallel>], iteration_bounds = array<i64: 1>, scalar_prefetch = 0 : i64, scratch_operands = 6 : i64, tpu.core_type = #tpu.core_type<tc>, window_params = [{transform_indices = @transform_0, window_bounds = array<i64: 2, 784, 27>}, {pipeline_mode = #tpu.pipeline_mode<synchronous>, transform_indices = @transform_1, window_bounds = array<i64: 27, 16>}, {pipeline_mode = #tpu.pipeline_mode<synchronous>, transform_indices = @transform_2, window_bounds = array<i64: 1, 16>}, {pipeline_mode = #tpu.pipeline_mode<synchronous>, transform_indices = @transform_3, window_bounds = array<i64: 144, 32>}, {pipeline_mode = #tpu.pipeline_mode<synchronous>, transform_indices = @transform_4, window_bounds = array<i64: 1, 32>}, {pipeline_mode = #tpu.pipeline_mode<synchronous>, transform_indices = @transform_5, window_bounds = array<i64: 5, 36, 32>}, {pipeline_mode = #tpu.pipeline_mode<synchronous>, transform_indices = @transform_6, window_bounds = array<i64: 5, 1>}, {transform_indices = @transform_7, window_bounds = array<i64: 2, 5, 1>}]} {
    %cst = arith.constant 0.000000e+00 : f32
    %0 = vector.broadcast %cst : f32 to vector<4x16xf32>
    %c196 = arith.constant 196 : index
    %c0 = arith.constant 0 : index
    %1 = vector.load %arg11[%c196, %c0] : memref<200x16xf32, #tpu.memory_space<vmem>>, vector<4x16xf32>
    tpu.vector_store %arg11[%c196, %c0], %0 {strides = array<i32>} : memref<200x16xf32, #tpu.memory_space<vmem>>, vector<4x16xf32>,
    %c0_0 = arith.constant 0 : index
    %c0_1 = arith.constant 0 : index
    %c0_2 = arith.constant 0 : index
    %2 = vector.load %arg1[%c0_0, %c0_1, %c0_2] : memref<2x784x27xf32, #tpu.memory_space<vmem>>, vector<1x784x27xf32>
    %3 = vector.shape_cast %2 : vector<1x784x27xf32> to vector<784x27xf32>
    %c0_3 = arith.constant 0 : index
    %c0_4 = arith.constant 0 : index
    %4 = vector.load %arg2[%c0_3, %c0_4] : memref<27x16xf32, #tpu.memory_space<vmem>>, vector<27x16xf32>
    %cst_5 = arith.constant dense<0.000000e+00> : vector<784x16xf32>
    %5 = tpu.matmul %3, %4, %cst_5 {dimension_numbers = #tpu.dot_dimension_numbers<[1], [0], [0], [1], [0, 0, 1, 1], [], []>} : vector<784x27xf32>, vector<27x16xf32>, vector<784x16xf32> -> vector<784x16xf32>
    %c0_6 = arith.constant 0 : index
    %c0_7 = arith.constant 0 : index
    %6 = vector.load %arg3[%c0_6, %c0_7] : memref<1x16xf32, #tpu.memory_space<vmem>>, vector<1x16xf32>
    %7 = vector.broadcast %6 : vector<1x16xf32> to vector<784x16xf32>
    %8 = arith.addf %5, %7 : vector<784x16xf32>
    %cst_8 = arith.constant 0.000000e+00 : f32
    %9 = vector.broadcast %cst_8 : f32 to vector<784x16xf32>
    %10 = arith.maximumf %8, %9 : vector<784x16xf32>
    %c0_9 = arith.constant 0 : index
    %c0_10 = arith.constant 0 : index
    %11 = vector.load %arg9[%c0_9, %c0_10] : memref<784x16xf32, #tpu.memory_space<vmem>>, vector<784x16xf32>
    tpu.vector_store %arg9[%c0_9, %c0_10], %10 {strides = array<i32>} : memref<784x16xf32, #tpu.memory_space<vmem>>, vector<784x16xf32>,
    %c0_11 = arith.constant 0 : index
    %c0_12 = arith.constant 0 : index
    %12 = tpu.strided_load %arg9[%c0_11, %c0_12] {strides = array<i32: 2, 1>} : memref<784x16xf32, #tpu.memory_space<vmem>>, vector<392x16xf32>
    %c1 = arith.constant 1 : index
    %c0_13 = arith.constant 0 : index
    %13 = tpu.strided_load %arg9[%c1, %c0_13] {strides = array<i32: 2, 1>} : memref<784x16xf32, #tpu.memory_space<vmem>>, vector<392x16xf32>
    %14 = arith.maximumf %12, %13 : vector<392x16xf32>
    %c0_14 = arith.constant 0 : index
    %c0_15 = arith.constant 0 : index
    %15 = vector.load %arg10[%c0_14, %c0_15] : memref<392x16xf32, #tpu.memory_space<vmem>>, vector<392x16xf32>
    tpu.vector_store %arg10[%c0_14, %c0_15], %14 {strides = array<i32>} : memref<392x16xf32, #tpu.memory_space<vmem>>, vector<392x16xf32>,
    %c0_16 = arith.constant 0 : index
    %c0_17 = arith.constant 0 : index
    %16 = vector.load %arg10[%c0_16, %c0_17] : memref<392x16xf32, #tpu.memory_space<vmem>>, vector<14x16xf32>
    %c14 = arith.constant 14 : index
    %c0_18 = arith.constant 0 : index
    %17 = vector.load %arg10[%c14, %c0_18] : memref<392x16xf32, #tpu.memory_space<vmem>>, vector<14x16xf32>
    %18 = arith.maximumf %16, %17 : vector<14x16xf32>
    %c0_19 = arith.constant 0 : index
    %c0_20 = arith.constant 0 : index
    %19 = vector.load %arg11[%c0_19, %c0_20] : memref<200x16xf32, #tpu.memory_space<vmem>>, vector<14x16xf32>
    tpu.vector_store %arg11[%c0_19, %c0_20], %18 {strides = array<i32>} : memref<200x16xf32, #tpu.memory_space<vmem>>, vector<14x16xf32>,
    %c28 = arith.constant 28 : index
    %c0_21 = arith.constant 0 : index
    %20 = vector.load %arg10[%c28, %c0_21] : memref<392x16xf32, #tpu.memory_space<vmem>>, vector<14x16xf32>
    %c42 = arith.constant 42 : index
    %c0_22 = arith.constant 0 : index
    %21 = vector.load %arg10[%c42, %c0_22] : memref<392x16xf32, #tpu.memory_space<vmem>>, vector<14x16xf32>
    %22 = arith.maximumf %20, %21 : vector<14x16xf32>
    %c14_23 = arith.constant 14 : index
    %c0_24 = arith.constant 0 : index
    %23 = vector.load %arg11[%c14_23, %c0_24] : memref<200x16xf32, #tpu.memory_space<vmem>>, vector<14x16xf32>
    tpu.vector_store %arg11[%c14_23, %c0_24], %22 {strides = array<i32>} : memref<200x16xf32, #tpu.memory_space<vmem>>, vector<14x16xf32>,
    %c56 = arith.constant 56 : index
    %c0_25 = arith.constant 0 : index
    %24 = vector.load %arg10[%c56, %c0_25] : memref<392x16xf32, #tpu.memory_space<vmem>>, vector<14x16xf32>
    %c70 = arith.constant 70 : index
    %c0_26 = arith.constant 0 : index
    %25 = vector.load %arg10[%c70, %c0_26] : memref<392x16xf32, #tpu.memory_space<vmem>>, vector<14x16xf32>
    %26 = arith.maximumf %24, %25 : vector<14x16xf32>
    %c28_27 = arith.constant 28 : index
    %c0_28 = arith.constant 0 : index
    %27 = vector.load %arg11[%c28_27, %c0_28] : memref<200x16xf32, #tpu.memory_space<vmem>>, vector<14x16xf32>
    tpu.vector_store %arg11[%c28_27, %c0_28], %26 {strides = array<i32>} : memref<200x16xf32, #tpu.memory_space<vmem>>, vector<14x16xf32>,
    %c84 = arith.constant 84 : index
    %c0_29 = arith.constant 0 : index
    %28 = vector.load %arg10[%c84, %c0_29] : memref<392x16xf32, #tpu.memory_space<vmem>>, vector<14x16xf32>
    %c98 = arith.constant 98 : index
    %c0_30 = arith.constant 0 : index
    %29 = vector.load %arg10[%c98, %c0_30] : memref<392x16xf32, #tpu.memory_space<vmem>>, vector<14x16xf32>
    %30 = arith.maximumf %28, %29 : vector<14x16xf32>
    %c42_31 = arith.constant 42 : index
    %c0_32 = arith.constant 0 : index
    %31 = vector.load %arg11[%c42_31, %c0_32] : memref<200x16xf32, #tpu.memory_space<vmem>>, vector<14x16xf32>
    tpu.vector_store %arg11[%c42_31, %c0_32], %30 {strides = array<i32>} : memref<200x16xf32, #tpu.memory_space<vmem>>, vector<14x16xf32>,
    %c112 = arith.constant 112 : index
    %c0_33 = arith.constant 0 : index
    %32 = vector.load %arg10[%c112, %c0_33] : memref<392x16xf32, #tpu.memory_space<vmem>>, vector<14x16xf32>
    %c126 = arith.constant 126 : index
    %c0_34 = arith.constant 0 : index
    %33 = vector.load %arg10[%c126, %c0_34] : memref<392x16xf32, #tpu.memory_space<vmem>>, vector<14x16xf32>
    %34 = arith.maximumf %32, %33 : vector<14x16xf32>
    %c56_35 = arith.constant 56 : index
    %c0_36 = arith.constant 0 : index
    %35 = vector.load %arg11[%c56_35, %c0_36] : memref<200x16xf32, #tpu.memory_space<vmem>>, vector<14x16xf32>
    tpu.vector_store %arg11[%c56_35, %c0_36], %34 {strides = array<i32>} : memref<200x16xf32, #tpu.memory_space<vmem>>, vector<14x16xf32>,
    %c140 = arith.constant 140 : index
    %c0_37 = arith.constant 0 : index
    %36 = vector.load %arg10[%c140, %c0_37] : memref<392x16xf32, #tpu.memory_space<vmem>>, vector<14x16xf32>
    %c154 = arith.constant 154 : index
    %c0_38 = arith.constant 0 : index
    %37 = vector.load %arg10[%c154, %c0_38] : memref<392x16xf32, #tpu.memory_space<vmem>>, vector<14x16xf32>
    %38 = arith.maximumf %36, %37 : vector<14x16xf32>
    %c70_39 = arith.constant 70 : index
    %c0_40 = arith.constant 0 : index
    %39 = vector.load %arg11[%c70_39, %c0_40] : memref<200x16xf32, #tpu.memory_space<vmem>>, vector<14x16xf32>
    tpu.vector_store %arg11[%c70_39, %c0_40], %38 {strides = array<i32>} : memref<200x16xf32, #tpu.memory_space<vmem>>, vector<14x16xf32>,
    %c168 = arith.constant 168 : index
    %c0_41 = arith.constant 0 : index
    %40 = vector.load %arg10[%c168, %c0_41] : memref<392x16xf32, #tpu.memory_space<vmem>>, vector<14x16xf32>
    %c182 = arith.constant 182 : index
    %c0_42 = arith.constant 0 : index
    %41 = vector.load %arg10[%c182, %c0_42] : memref<392x16xf32, #tpu.memory_space<vmem>>, vector<14x16xf32>
    %42 = arith.maximumf %40, %41 : vector<14x16xf32>
    %c84_43 = arith.constant 84 : index
    %c0_44 = arith.constant 0 : index
    %43 = vector.load %arg11[%c84_43, %c0_44] : memref<200x16xf32, #tpu.memory_space<vmem>>, vector<14x16xf32>
    tpu.vector_store %arg11[%c84_43, %c0_44], %42 {strides = array<i32>} : memref<200x16xf32, #tpu.memory_space<vmem>>, vector<14x16xf32>,
    %c196_45 = arith.constant 196 : index
    %c0_46 = arith.constant 0 : index
    %44 = vector.load %arg10[%c196_45, %c0_46] : memref<392x16xf32, #tpu.memory_space<vmem>>, vector<14x16xf32>
    %c210 = arith.constant 210 : index
    %c0_47 = arith.constant 0 : index
    %45 = vector.load %arg10[%c210, %c0_47] : memref<392x16xf32, #tpu.memory_space<vmem>>, vector<14x16xf32>
    %46 = arith.maximumf %44, %45 : vector<14x16xf32>
    %c98_48 = arith.constant 98 : index
    %c0_49 = arith.constant 0 : index
    %47 = vector.load %arg11[%c98_48, %c0_49] : memref<200x16xf32, #tpu.memory_space<vmem>>, vector<14x16xf32>
    tpu.vector_store %arg11[%c98_48, %c0_49], %46 {strides = array<i32>} : memref<200x16xf32, #tpu.memory_space<vmem>>, vector<14x16xf32>,
    %c224 = arith.constant 224 : index
    %c0_50 = arith.constant 0 : index
    %48 = vector.load %arg10[%c224, %c0_50] : memref<392x16xf32, #tpu.memory_space<vmem>>, vector<14x16xf32>
    %c238 = arith.constant 238 : index
    %c0_51 = arith.constant 0 : index
    %49 = vector.load %arg10[%c238, %c0_51] : memref<392x16xf32, #tpu.memory_space<vmem>>, vector<14x16xf32>
    %50 = arith.maximumf %48, %49 : vector<14x16xf32>
    %c112_52 = arith.constant 112 : index
    %c0_53 = arith.constant 0 : index
    %51 = vector.load %arg11[%c112_52, %c0_53] : memref<200x16xf32, #tpu.memory_space<vmem>>, vector<14x16xf32>
    tpu.vector_store %arg11[%c112_52, %c0_53], %50 {strides = array<i32>} : memref<200x16xf32, #tpu.memory_space<vmem>>, vector<14x16xf32>,
    %c252 = arith.constant 252 : index
    %c0_54 = arith.constant 0 : index
    %52 = vector.load %arg10[%c252, %c0_54] : memref<392x16xf32, #tpu.memory_space<vmem>>, vector<14x16xf32>
    %c266 = arith.constant 266 : index
    %c0_55 = arith.constant 0 : index
    %53 = vector.load %arg10[%c266, %c0_55] : memref<392x16xf32, #tpu.memory_space<vmem>>, vector<14x16xf32>
    %54 = arith.maximumf %52, %53 : vector<14x16xf32>
    %c126_56 = arith.constant 126 : index
    %c0_57 = arith.constant 0 : index
    %55 = vector.load %arg11[%c126_56, %c0_57] : memref<200x16xf32, #tpu.memory_space<vmem>>, vector<14x16xf32>
    tpu.vector_store %arg11[%c126_56, %c0_57], %54 {strides = array<i32>} : memref<200x16xf32, #tpu.memory_space<vmem>>, vector<14x16xf32>,
    %c280 = arith.constant 280 : index
    %c0_58 = arith.constant 0 : index
    %56 = vector.load %arg10[%c280, %c0_58] : memref<392x16xf32, #tpu.memory_space<vmem>>, vector<14x16xf32>
    %c294 = arith.constant 294 : index
    %c0_59 = arith.constant 0 : index
    %57 = vector.load %arg10[%c294, %c0_59] : memref<392x16xf32, #tpu.memory_space<vmem>>, vector<14x16xf32>
    %58 = arith.maximumf %56, %57 : vector<14x16xf32>
    %c140_60 = arith.constant 140 : index
    %c0_61 = arith.constant 0 : index
    %59 = vector.load %arg11[%c140_60, %c0_61] : memref<200x16xf32, #tpu.memory_space<vmem>>, vector<14x16xf32>
    tpu.vector_store %arg11[%c140_60, %c0_61], %58 {strides = array<i32>} : memref<200x16xf32, #tpu.memory_space<vmem>>, vector<14x16xf32>,
    %c308 = arith.constant 308 : index
    %c0_62 = arith.constant 0 : index
    %60 = vector.load %arg10[%c308, %c0_62] : memref<392x16xf32, #tpu.memory_space<vmem>>, vector<14x16xf32>
    %c322 = arith.constant 322 : index
    %c0_63 = arith.constant 0 : index
    %61 = vector.load %arg10[%c322, %c0_63] : memref<392x16xf32, #tpu.memory_space<vmem>>, vector<14x16xf32>
    %62 = arith.maximumf %60, %61 : vector<14x16xf32>
    %c154_64 = arith.constant 154 : index
    %c0_65 = arith.constant 0 : index
    %63 = vector.load %arg11[%c154_64, %c0_65] : memref<200x16xf32, #tpu.memory_space<vmem>>, vector<14x16xf32>
    tpu.vector_store %arg11[%c154_64, %c0_65], %62 {strides = array<i32>} : memref<200x16xf32, #tpu.memory_space<vmem>>, vector<14x16xf32>,
    %c336 = arith.constant 336 : index
    %c0_66 = arith.constant 0 : index
    %64 = vector.load %arg10[%c336, %c0_66] : memref<392x16xf32, #tpu.memory_space<vmem>>, vector<14x16xf32>
    %c350 = arith.constant 350 : index
    %c0_67 = arith.constant 0 : index
    %65 = vector.load %arg10[%c350, %c0_67] : memref<392x16xf32, #tpu.memory_space<vmem>>, vector<14x16xf32>
    %66 = arith.maximumf %64, %65 : vector<14x16xf32>
    %c168_68 = arith.constant 168 : index
    %c0_69 = arith.constant 0 : index
    %67 = vector.load %arg11[%c168_68, %c0_69] : memref<200x16xf32, #tpu.memory_space<vmem>>, vector<14x16xf32>
    tpu.vector_store %arg11[%c168_68, %c0_69], %66 {strides = array<i32>} : memref<200x16xf32, #tpu.memory_space<vmem>>, vector<14x16xf32>,
    %c364 = arith.constant 364 : index
    %c0_70 = arith.constant 0 : index
    %68 = vector.load %arg10[%c364, %c0_70] : memref<392x16xf32, #tpu.memory_space<vmem>>, vector<14x16xf32>
    %c378 = arith.constant 378 : index
    %c0_71 = arith.constant 0 : index
    %69 = vector.load %arg10[%c378, %c0_71] : memref<392x16xf32, #tpu.memory_space<vmem>>, vector<14x16xf32>
    %70 = arith.maximumf %68, %69 : vector<14x16xf32>
    %c182_72 = arith.constant 182 : index
    %c0_73 = arith.constant 0 : index
    %71 = vector.load %arg11[%c182_72, %c0_73] : memref<200x16xf32, #tpu.memory_space<vmem>>, vector<14x16xf32>
    tpu.vector_store %arg11[%c182_72, %c0_73], %70 {strides = array<i32>} : memref<200x16xf32, #tpu.memory_space<vmem>>, vector<14x16xf32>,
    %c0_74 = arith.constant 0 : index
    %c0_75 = arith.constant 0 : index
    %72 = vector.load %arg11[%c0_74, %c0_75] : memref<200x16xf32, #tpu.memory_space<vmem>>, vector<168x16xf32>
    %c0_76 = arith.constant 0 : index
    %c0_77 = arith.constant 0 : index
    %73 = vector.load %arg4[%c0_76, %c0_77] : memref<144x32xf32, #tpu.memory_space<vmem>>, vector<16x32xf32>
    %cst_78 = arith.constant dense<0.000000e+00> : vector<168x32xf32>
    %74 = tpu.matmul %72, %73, %cst_78 {dimension_numbers = #tpu.dot_dimension_numbers<[1], [0], [0], [1], [0, 0, 1, 1], [], []>} : vector<168x16xf32>, vector<16x32xf32>, vector<168x32xf32> -> vector<168x32xf32>
    %c1_79 = arith.constant 1 : index
    %c0_80 = arith.constant 0 : index
    %75 = vector.load %arg11[%c1_79, %c0_80] : memref<200x16xf32, #tpu.memory_space<vmem>>, vector<168x16xf32>
    %c16 = arith.constant 16 : index
    %c0_81 = arith.constant 0 : index
    %76 = vector.load %arg4[%c16, %c0_81] : memref<144x32xf32, #tpu.memory_space<vmem>>, vector<16x32xf32>
    %cst_82 = arith.constant dense<0.000000e+00> : vector<168x32xf32>
    %77 = tpu.matmul %75, %76, %cst_82 {dimension_numbers = #tpu.dot_dimension_numbers<[1], [0], [0], [1], [0, 0, 1, 1], [], []>} : vector<168x16xf32>, vector<16x32xf32>, vector<168x32xf32> -> vector<168x32xf32>
    %78 = arith.addf %74, %77 : vector<168x32xf32>
    %c2 = arith.constant 2 : index
    %c0_83 = arith.constant 0 : index
    %79 = vector.load %arg11[%c2, %c0_83] : memref<200x16xf32, #tpu.memory_space<vmem>>, vector<168x16xf32>
    %c32 = arith.constant 32 : index
    %c0_84 = arith.constant 0 : index
    %80 = vector.load %arg4[%c32, %c0_84] : memref<144x32xf32, #tpu.memory_space<vmem>>, vector<16x32xf32>
    %cst_85 = arith.constant dense<0.000000e+00> : vector<168x32xf32>
    %81 = tpu.matmul %79, %80, %cst_85 {dimension_numbers = #tpu.dot_dimension_numbers<[1], [0], [0], [1], [0, 0, 1, 1], [], []>} : vector<168x16xf32>, vector<16x32xf32>, vector<168x32xf32> -> vector<168x32xf32>
    %82 = arith.addf %78, %81 : vector<168x32xf32>
    %c14_86 = arith.constant 14 : index
    %c0_87 = arith.constant 0 : index
    %83 = vector.load %arg11[%c14_86, %c0_87] : memref<200x16xf32, #tpu.memory_space<vmem>>, vector<168x16xf32>
    %c48 = arith.constant 48 : index
    %c0_88 = arith.constant 0 : index
    %84 = vector.load %arg4[%c48, %c0_88] : memref<144x32xf32, #tpu.memory_space<vmem>>, vector<16x32xf32>
    %cst_89 = arith.constant dense<0.000000e+00> : vector<168x32xf32>
    %85 = tpu.matmul %83, %84, %cst_89 {dimension_numbers = #tpu.dot_dimension_numbers<[1], [0], [0], [1], [0, 0, 1, 1], [], []>} : vector<168x16xf32>, vector<16x32xf32>, vector<168x32xf32> -> vector<168x32xf32>
    %86 = arith.addf %82, %85 : vector<168x32xf32>
    %c15 = arith.constant 15 : index
    %c0_90 = arith.constant 0 : index
    %87 = vector.load %arg11[%c15, %c0_90] : memref<200x16xf32, #tpu.memory_space<vmem>>, vector<168x16xf32>
    %c64 = arith.constant 64 : index
    %c0_91 = arith.constant 0 : index
    %88 = vector.load %arg4[%c64, %c0_91] : memref<144x32xf32, #tpu.memory_space<vmem>>, vector<16x32xf32>
    %cst_92 = arith.constant dense<0.000000e+00> : vector<168x32xf32>
    %89 = tpu.matmul %87, %88, %cst_92 {dimension_numbers = #tpu.dot_dimension_numbers<[1], [0], [0], [1], [0, 0, 1, 1], [], []>} : vector<168x16xf32>, vector<16x32xf32>, vector<168x32xf32> -> vector<168x32xf32>
    %90 = arith.addf %86, %89 : vector<168x32xf32>
    %c16_93 = arith.constant 16 : index
    %c0_94 = arith.constant 0 : index
    %91 = vector.load %arg11[%c16_93, %c0_94] : memref<200x16xf32, #tpu.memory_space<vmem>>, vector<168x16xf32>
    %c80 = arith.constant 80 : index
    %c0_95 = arith.constant 0 : index
    %92 = vector.load %arg4[%c80, %c0_95] : memref<144x32xf32, #tpu.memory_space<vmem>>, vector<16x32xf32>
    %cst_96 = arith.constant dense<0.000000e+00> : vector<168x32xf32>
    %93 = tpu.matmul %91, %92, %cst_96 {dimension_numbers = #tpu.dot_dimension_numbers<[1], [0], [0], [1], [0, 0, 1, 1], [], []>} : vector<168x16xf32>, vector<16x32xf32>, vector<168x32xf32> -> vector<168x32xf32>
    %94 = arith.addf %90, %93 : vector<168x32xf32>
    %c28_97 = arith.constant 28 : index
    %c0_98 = arith.constant 0 : index
    %95 = vector.load %arg11[%c28_97, %c0_98] : memref<200x16xf32, #tpu.memory_space<vmem>>, vector<168x16xf32>
    %c96 = arith.constant 96 : index
    %c0_99 = arith.constant 0 : index
    %96 = vector.load %arg4[%c96, %c0_99] : memref<144x32xf32, #tpu.memory_space<vmem>>, vector<16x32xf32>
    %cst_100 = arith.constant dense<0.000000e+00> : vector<168x32xf32>
    %97 = tpu.matmul %95, %96, %cst_100 {dimension_numbers = #tpu.dot_dimension_numbers<[1], [0], [0], [1], [0, 0, 1, 1], [], []>} : vector<168x16xf32>, vector<16x32xf32>, vector<168x32xf32> -> vector<168x32xf32>
    %98 = arith.addf %94, %97 : vector<168x32xf32>
    %c29 = arith.constant 29 : index
    %c0_101 = arith.constant 0 : index
    %99 = vector.load %arg11[%c29, %c0_101] : memref<200x16xf32, #tpu.memory_space<vmem>>, vector<168x16xf32>
    %c112_102 = arith.constant 112 : index
    %c0_103 = arith.constant 0 : index
    %100 = vector.load %arg4[%c112_102, %c0_103] : memref<144x32xf32, #tpu.memory_space<vmem>>, vector<16x32xf32>
    %cst_104 = arith.constant dense<0.000000e+00> : vector<168x32xf32>
    %101 = tpu.matmul %99, %100, %cst_104 {dimension_numbers = #tpu.dot_dimension_numbers<[1], [0], [0], [1], [0, 0, 1, 1], [], []>} : vector<168x16xf32>, vector<16x32xf32>, vector<168x32xf32> -> vector<168x32xf32>
    %102 = arith.addf %98, %101 : vector<168x32xf32>
    %c30 = arith.constant 30 : index
    %c0_105 = arith.constant 0 : index
    %103 = vector.load %arg11[%c30, %c0_105] : memref<200x16xf32, #tpu.memory_space<vmem>>, vector<168x16xf32>
    %c128 = arith.constant 128 : index
    %c0_106 = arith.constant 0 : index
    %104 = vector.load %arg4[%c128, %c0_106] : memref<144x32xf32, #tpu.memory_space<vmem>>, vector<16x32xf32>
    %cst_107 = arith.constant dense<0.000000e+00> : vector<168x32xf32>
    %105 = tpu.matmul %103, %104, %cst_107 {dimension_numbers = #tpu.dot_dimension_numbers<[1], [0], [0], [1], [0, 0, 1, 1], [], []>} : vector<168x16xf32>, vector<16x32xf32>, vector<168x32xf32> -> vector<168x32xf32>
    %106 = arith.addf %102, %105 : vector<168x32xf32>
    %c0_108 = arith.constant 0 : index
    %c0_109 = arith.constant 0 : index
    %107 = vector.load %arg5[%c0_108, %c0_109] : memref<1x32xf32, #tpu.memory_space<vmem>>, vector<1x32xf32>
    %108 = vector.broadcast %107 : vector<1x32xf32> to vector<168x32xf32>
    %109 = arith.addf %106, %108 : vector<168x32xf32>
    %cst_110 = arith.constant 0.000000e+00 : f32
    %110 = vector.broadcast %cst_110 : f32 to vector<168x32xf32>
    %111 = arith.maximumf %109, %110 : vector<168x32xf32>
    %c0_111 = arith.constant 0 : index
    %c0_112 = arith.constant 0 : index
    %112 = vector.load %arg12[%c0_111, %c0_112] : memref<168x32xf32, #tpu.memory_space<vmem>>, vector<168x32xf32>
    tpu.vector_store %arg12[%c0_111, %c0_112], %111 {strides = array<i32>} : memref<168x32xf32, #tpu.memory_space<vmem>>, vector<168x32xf32>,
    %c0_113 = arith.constant 0 : index
    %c0_114 = arith.constant 0 : index
    %113 = tpu.strided_load %arg12[%c0_113, %c0_114] {strides = array<i32: 2, 1>} : memref<168x32xf32, #tpu.memory_space<vmem>>, vector<84x32xf32>
    %c1_115 = arith.constant 1 : index
    %c0_116 = arith.constant 0 : index
    %114 = tpu.strided_load %arg12[%c1_115, %c0_116] {strides = array<i32: 2, 1>} : memref<168x32xf32, #tpu.memory_space<vmem>>, vector<84x32xf32>
    %115 = arith.maximumf %113, %114 : vector<84x32xf32>
    %c0_117 = arith.constant 0 : index
    %c0_118 = arith.constant 0 : index
    %116 = vector.load %arg13[%c0_117, %c0_118] : memref<84x32xf32, #tpu.memory_space<vmem>>, vector<84x32xf32>
    tpu.vector_store %arg13[%c0_117, %c0_118], %115 {strides = array<i32>} : memref<84x32xf32, #tpu.memory_space<vmem>>, vector<84x32xf32>,
    %c0_119 = arith.constant 0 : index
    %c0_120 = arith.constant 0 : index
    %117 = vector.load %arg13[%c0_119, %c0_120] : memref<84x32xf32, #tpu.memory_space<vmem>>, vector<6x32xf32>
    %c7 = arith.constant 7 : index
    %c0_121 = arith.constant 0 : index
    %118 = vector.load %arg13[%c7, %c0_121] : memref<84x32xf32, #tpu.memory_space<vmem>>, vector<6x32xf32>
    %119 = arith.maximumf %117, %118 : vector<6x32xf32>
    %c0_122 = arith.constant 0 : index
    %c0_123 = arith.constant 0 : index
    %120 = vector.load %arg14[%c0_122, %c0_123] : memref<36x32xf32, #tpu.memory_space<vmem>>, vector<6x32xf32>
    tpu.vector_store %arg14[%c0_122, %c0_123], %119 {strides = array<i32>} : memref<36x32xf32, #tpu.memory_space<vmem>>, vector<6x32xf32>,
    %c14_124 = arith.constant 14 : index
    %c0_125 = arith.constant 0 : index
    %121 = vector.load %arg13[%c14_124, %c0_125] : memref<84x32xf32, #tpu.memory_space<vmem>>, vector<6x32xf32>
    %c21 = arith.constant 21 : index
    %c0_126 = arith.constant 0 : index
    %122 = vector.load %arg13[%c21, %c0_126] : memref<84x32xf32, #tpu.memory_space<vmem>>, vector<6x32xf32>
    %123 = arith.maximumf %121, %122 : vector<6x32xf32>
    %c6 = arith.constant 6 : index
    %c0_127 = arith.constant 0 : index
    %124 = vector.load %arg14[%c6, %c0_127] : memref<36x32xf32, #tpu.memory_space<vmem>>, vector<6x32xf32>
    tpu.vector_store %arg14[%c6, %c0_127], %123 {strides = array<i32>} : memref<36x32xf32, #tpu.memory_space<vmem>>, vector<6x32xf32>,
    %c28_128 = arith.constant 28 : index
    %c0_129 = arith.constant 0 : index
    %125 = vector.load %arg13[%c28_128, %c0_129] : memref<84x32xf32, #tpu.memory_space<vmem>>, vector<6x32xf32>
    %c35 = arith.constant 35 : index
    %c0_130 = arith.constant 0 : index
    %126 = vector.load %arg13[%c35, %c0_130] : memref<84x32xf32, #tpu.memory_space<vmem>>, vector<6x32xf32>
    %127 = arith.maximumf %125, %126 : vector<6x32xf32>
    %c12 = arith.constant 12 : index
    %c0_131 = arith.constant 0 : index
    %128 = vector.load %arg14[%c12, %c0_131] : memref<36x32xf32, #tpu.memory_space<vmem>>, vector<6x32xf32>
    tpu.vector_store %arg14[%c12, %c0_131], %127 {strides = array<i32>} : memref<36x32xf32, #tpu.memory_space<vmem>>, vector<6x32xf32>,
    %c42_132 = arith.constant 42 : index
    %c0_133 = arith.constant 0 : index
    %129 = vector.load %arg13[%c42_132, %c0_133] : memref<84x32xf32, #tpu.memory_space<vmem>>, vector<6x32xf32>
    %c49 = arith.constant 49 : index
    %c0_134 = arith.constant 0 : index
    %130 = vector.load %arg13[%c49, %c0_134] : memref<84x32xf32, #tpu.memory_space<vmem>>, vector<6x32xf32>
    %131 = arith.maximumf %129, %130 : vector<6x32xf32>
    %c18 = arith.constant 18 : index
    %c0_135 = arith.constant 0 : index
    %132 = vector.load %arg14[%c18, %c0_135] : memref<36x32xf32, #tpu.memory_space<vmem>>, vector<6x32xf32>
    tpu.vector_store %arg14[%c18, %c0_135], %131 {strides = array<i32>} : memref<36x32xf32, #tpu.memory_space<vmem>>, vector<6x32xf32>,
    %c56_136 = arith.constant 56 : index
    %c0_137 = arith.constant 0 : index
    %133 = vector.load %arg13[%c56_136, %c0_137] : memref<84x32xf32, #tpu.memory_space<vmem>>, vector<6x32xf32>
    %c63 = arith.constant 63 : index
    %c0_138 = arith.constant 0 : index
    %134 = vector.load %arg13[%c63, %c0_138] : memref<84x32xf32, #tpu.memory_space<vmem>>, vector<6x32xf32>
    %135 = arith.maximumf %133, %134 : vector<6x32xf32>
    %c24 = arith.constant 24 : index
    %c0_139 = arith.constant 0 : index
    %136 = vector.load %arg14[%c24, %c0_139] : memref<36x32xf32, #tpu.memory_space<vmem>>, vector<6x32xf32>
    tpu.vector_store %arg14[%c24, %c0_139], %135 {strides = array<i32>} : memref<36x32xf32, #tpu.memory_space<vmem>>, vector<6x32xf32>,
    %c70_140 = arith.constant 70 : index
    %c0_141 = arith.constant 0 : index
    %137 = vector.load %arg13[%c70_140, %c0_141] : memref<84x32xf32, #tpu.memory_space<vmem>>, vector<6x32xf32>
    %c77 = arith.constant 77 : index
    %c0_142 = arith.constant 0 : index
    %138 = vector.load %arg13[%c77, %c0_142] : memref<84x32xf32, #tpu.memory_space<vmem>>, vector<6x32xf32>
    %139 = arith.maximumf %137, %138 : vector<6x32xf32>
    %c30_143 = arith.constant 30 : index
    %c0_144 = arith.constant 0 : index
    %140 = vector.load %arg14[%c30_143, %c0_144] : memref<36x32xf32, #tpu.memory_space<vmem>>, vector<6x32xf32>
    tpu.vector_store %arg14[%c30_143, %c0_144], %139 {strides = array<i32>} : memref<36x32xf32, #tpu.memory_space<vmem>>, vector<6x32xf32>,
    %c0_145 = arith.constant 0 : index
    %c0_146 = arith.constant 0 : index
    %141 = vector.load %arg14[%c0_145, %c0_146] : memref<36x32xf32, #tpu.memory_space<vmem>>, vector<36x32xf32>
    %142 = vector.shape_cast %141 : vector<36x32xf32> to vector<1x36x32xf32>
    %c0_147 = arith.constant 0 : index
    %c0_148 = arith.constant 0 : index
    %c0_149 = arith.constant 0 : index
    %143 = vector.load %arg6[%c0_147, %c0_148, %c0_149] : memref<5x36x32xf32, #tpu.memory_space<vmem>>, vector<5x36x32xf32>
    %144 = vector.broadcast %142 : vector<1x36x32xf32> to vector<5x36x32xf32>
    %145 = arith.mulf %144, %143 : vector<5x36x32xf32>
    %cst_150 = arith.constant dense<0.000000e+00> : vector<5x32xf32>
    %146 = vector.multi_reduction <add>, %145, %cst_150 [1] : vector<5x36x32xf32> to vector<5x32xf32>
    %cst_151 = arith.constant dense<0.000000e+00> : vector<5xf32>
    %147 = vector.multi_reduction <add>, %146, %cst_151 [1] : vector<5x32xf32> to vector<5xf32>
    %148 = vector.shape_cast %147 : vector<5xf32> to vector<5x1xf32>
    %c0_152 = arith.constant 0 : index
    %c0_153 = arith.constant 0 : index
    %149 = vector.load %arg7[%c0_152, %c0_153] : memref<5x1xf32, #tpu.memory_space<vmem>>, vector<5x1xf32>
    %150 = arith.addf %148, %149 : vector<5x1xf32>
    %c0_154 = arith.constant 0 : index
    %c0_155 = arith.constant 0 : index
    %c0_156 = arith.constant 0 : index
    %151 = vector.load %arg8[%c0_154, %c0_155, %c0_156] : memref<2x5x1xf32, #tpu.memory_space<vmem>>, vector<1x5x1xf32>
    %152 = vector.shape_cast %151 : vector<1x5x1xf32> to vector<5x1xf32>
    %153 = vector.shape_cast %150 : vector<5x1xf32> to vector<1x5x1xf32>
    tpu.vector_store %arg8[%c0_154, %c0_155, %c0_156], %153 {strides = array<i32>} : memref<2x5x1xf32, #tpu.memory_space<vmem>>, vector<1x5x1xf32>,
    %c1_157 = arith.constant 1 : index
    %c0_158 = arith.constant 0 : index
    %c0_159 = arith.constant 0 : index
    %154 = vector.load %arg1[%c1_157, %c0_158, %c0_159] : memref<2x784x27xf32, #tpu.memory_space<vmem>>, vector<1x784x27xf32>
    %155 = vector.shape_cast %154 : vector<1x784x27xf32> to vector<784x27xf32>
    %c0_160 = arith.constant 0 : index
    %c0_161 = arith.constant 0 : index
    %156 = vector.load %arg2[%c0_160, %c0_161] : memref<27x16xf32, #tpu.memory_space<vmem>>, vector<27x16xf32>
    %cst_162 = arith.constant dense<0.000000e+00> : vector<784x16xf32>
    %157 = tpu.matmul %155, %156, %cst_162 {dimension_numbers = #tpu.dot_dimension_numbers<[1], [0], [0], [1], [0, 0, 1, 1], [], []>} : vector<784x27xf32>, vector<27x16xf32>, vector<784x16xf32> -> vector<784x16xf32>
    %c0_163 = arith.constant 0 : index
    %c0_164 = arith.constant 0 : index
    %158 = vector.load %arg3[%c0_163, %c0_164] : memref<1x16xf32, #tpu.memory_space<vmem>>, vector<1x16xf32>
    %159 = vector.broadcast %158 : vector<1x16xf32> to vector<784x16xf32>
    %160 = arith.addf %157, %159 : vector<784x16xf32>
    %cst_165 = arith.constant 0.000000e+00 : f32
    %161 = vector.broadcast %cst_165 : f32 to vector<784x16xf32>
    %162 = arith.maximumf %160, %161 : vector<784x16xf32>
    %c0_166 = arith.constant 0 : index
    %c0_167 = arith.constant 0 : index
    %163 = vector.load %arg9[%c0_166, %c0_167] : memref<784x16xf32, #tpu.memory_space<vmem>>, vector<784x16xf32>
    tpu.vector_store %arg9[%c0_166, %c0_167], %162 {strides = array<i32>} : memref<784x16xf32, #tpu.memory_space<vmem>>, vector<784x16xf32>,
    %c0_168 = arith.constant 0 : index
    %c0_169 = arith.constant 0 : index
    %164 = tpu.strided_load %arg9[%c0_168, %c0_169] {strides = array<i32: 2, 1>} : memref<784x16xf32, #tpu.memory_space<vmem>>, vector<392x16xf32>
    %c1_170 = arith.constant 1 : index
    %c0_171 = arith.constant 0 : index
    %165 = tpu.strided_load %arg9[%c1_170, %c0_171] {strides = array<i32: 2, 1>} : memref<784x16xf32, #tpu.memory_space<vmem>>, vector<392x16xf32>
    %166 = arith.maximumf %164, %165 : vector<392x16xf32>
    %c0_172 = arith.constant 0 : index
    %c0_173 = arith.constant 0 : index
    %167 = vector.load %arg10[%c0_172, %c0_173] : memref<392x16xf32, #tpu.memory_space<vmem>>, vector<392x16xf32>
    tpu.vector_store %arg10[%c0_172, %c0_173], %166 {strides = array<i32>} : memref<392x16xf32, #tpu.memory_space<vmem>>, vector<392x16xf32>,
    %c0_174 = arith.constant 0 : index
    %c0_175 = arith.constant 0 : index
    %168 = vector.load %arg10[%c0_174, %c0_175] : memref<392x16xf32, #tpu.memory_space<vmem>>, vector<14x16xf32>
    %c14_176 = arith.constant 14 : index
    %c0_177 = arith.constant 0 : index
    %169 = vector.load %arg10[%c14_176, %c0_177] : memref<392x16xf32, #tpu.memory_space<vmem>>, vector<14x16xf32>
    %170 = arith.maximumf %168, %169 : vector<14x16xf32>
    %c0_178 = arith.constant 0 : index
    %c0_179 = arith.constant 0 : index
    %171 = vector.load %arg11[%c0_178, %c0_179] : memref<200x16xf32, #tpu.memory_space<vmem>>, vector<14x16xf32>
    tpu.vector_store %arg11[%c0_178, %c0_179], %170 {strides = array<i32>} : memref<200x16xf32, #tpu.memory_space<vmem>>, vector<14x16xf32>,
    %c28_180 = arith.constant 28 : index
    %c0_181 = arith.constant 0 : index
    %172 = vector.load %arg10[%c28_180, %c0_181] : memref<392x16xf32, #tpu.memory_space<vmem>>, vector<14x16xf32>
    %c42_182 = arith.constant 42 : index
    %c0_183 = arith.constant 0 : index
    %173 = vector.load %arg10[%c42_182, %c0_183] : memref<392x16xf32, #tpu.memory_space<vmem>>, vector<14x16xf32>
    %174 = arith.maximumf %172, %173 : vector<14x16xf32>
    %c14_184 = arith.constant 14 : index
    %c0_185 = arith.constant 0 : index
    %175 = vector.load %arg11[%c14_184, %c0_185] : memref<200x16xf32, #tpu.memory_space<vmem>>, vector<14x16xf32>
    tpu.vector_store %arg11[%c14_184, %c0_185], %174 {strides = array<i32>} : memref<200x16xf32, #tpu.memory_space<vmem>>, vector<14x16xf32>,
    %c56_186 = arith.constant 56 : index
    %c0_187 = arith.constant 0 : index
    %176 = vector.load %arg10[%c56_186, %c0_187] : memref<392x16xf32, #tpu.memory_space<vmem>>, vector<14x16xf32>
    %c70_188 = arith.constant 70 : index
    %c0_189 = arith.constant 0 : index
    %177 = vector.load %arg10[%c70_188, %c0_189] : memref<392x16xf32, #tpu.memory_space<vmem>>, vector<14x16xf32>
    %178 = arith.maximumf %176, %177 : vector<14x16xf32>
    %c28_190 = arith.constant 28 : index
    %c0_191 = arith.constant 0 : index
    %179 = vector.load %arg11[%c28_190, %c0_191] : memref<200x16xf32, #tpu.memory_space<vmem>>, vector<14x16xf32>
    tpu.vector_store %arg11[%c28_190, %c0_191], %178 {strides = array<i32>} : memref<200x16xf32, #tpu.memory_space<vmem>>, vector<14x16xf32>,
    %c84_192 = arith.constant 84 : index
    %c0_193 = arith.constant 0 : index
    %180 = vector.load %arg10[%c84_192, %c0_193] : memref<392x16xf32, #tpu.memory_space<vmem>>, vector<14x16xf32>
    %c98_194 = arith.constant 98 : index
    %c0_195 = arith.constant 0 : index
    %181 = vector.load %arg10[%c98_194, %c0_195] : memref<392x16xf32, #tpu.memory_space<vmem>>, vector<14x16xf32>
    %182 = arith.maximumf %180, %181 : vector<14x16xf32>
    %c42_196 = arith.constant 42 : index
    %c0_197 = arith.constant 0 : index
    %183 = vector.load %arg11[%c42_196, %c0_197] : memref<200x16xf32, #tpu.memory_space<vmem>>, vector<14x16xf32>
    tpu.vector_store %arg11[%c42_196, %c0_197], %182 {strides = array<i32>} : memref<200x16xf32, #tpu.memory_space<vmem>>, vector<14x16xf32>,
    %c112_198 = arith.constant 112 : index
    %c0_199 = arith.constant 0 : index
    %184 = vector.load %arg10[%c112_198, %c0_199] : memref<392x16xf32, #tpu.memory_space<vmem>>, vector<14x16xf32>
    %c126_200 = arith.constant 126 : index
    %c0_201 = arith.constant 0 : index
    %185 = vector.load %arg10[%c126_200, %c0_201] : memref<392x16xf32, #tpu.memory_space<vmem>>, vector<14x16xf32>
    %186 = arith.maximumf %184, %185 : vector<14x16xf32>
    %c56_202 = arith.constant 56 : index
    %c0_203 = arith.constant 0 : index
    %187 = vector.load %arg11[%c56_202, %c0_203] : memref<200x16xf32, #tpu.memory_space<vmem>>, vector<14x16xf32>
    tpu.vector_store %arg11[%c56_202, %c0_203], %186 {strides = array<i32>} : memref<200x16xf32, #tpu.memory_space<vmem>>, vector<14x16xf32>,
    %c140_204 = arith.constant 140 : index
    %c0_205 = arith.constant 0 : index
    %188 = vector.load %arg10[%c140_204, %c0_205] : memref<392x16xf32, #tpu.memory_space<vmem>>, vector<14x16xf32>
    %c154_206 = arith.constant 154 : index
    %c0_207 = arith.constant 0 : index
    %189 = vector.load %arg10[%c154_206, %c0_207] : memref<392x16xf32, #tpu.memory_space<vmem>>, vector<14x16xf32>
    %190 = arith.maximumf %188, %189 : vector<14x16xf32>
    %c70_208 = arith.constant 70 : index
    %c0_209 = arith.constant 0 : index
    %191 = vector.load %arg11[%c70_208, %c0_209] : memref<200x16xf32, #tpu.memory_space<vmem>>, vector<14x16xf32>
    tpu.vector_store %arg11[%c70_208, %c0_209], %190 {strides = array<i32>} : memref<200x16xf32, #tpu.memory_space<vmem>>, vector<14x16xf32>,
    %c168_210 = arith.constant 168 : index
    %c0_211 = arith.constant 0 : index
    %192 = vector.load %arg10[%c168_210, %c0_211] : memref<392x16xf32, #tpu.memory_space<vmem>>, vector<14x16xf32>
    %c182_212 = arith.constant 182 : index
    %c0_213 = arith.constant 0 : index
    %193 = vector.load %arg10[%c182_212, %c0_213] : memref<392x16xf32, #tpu.memory_space<vmem>>, vector<14x16xf32>
    %194 = arith.maximumf %192, %193 : vector<14x16xf32>
    %c84_214 = arith.constant 84 : index
    %c0_215 = arith.constant 0 : index
    %195 = vector.load %arg11[%c84_214, %c0_215] : memref<200x16xf32, #tpu.memory_space<vmem>>, vector<14x16xf32>
    tpu.vector_store %arg11[%c84_214, %c0_215], %194 {strides = array<i32>} : memref<200x16xf32, #tpu.memory_space<vmem>>, vector<14x16xf32>,
    %c196_216 = arith.constant 196 : index
    %c0_217 = arith.constant 0 : index
    %196 = vector.load %arg10[%c196_216, %c0_217] : memref<392x16xf32, #tpu.memory_space<vmem>>, vector<14x16xf32>
    %c210_218 = arith.constant 210 : index
    %c0_219 = arith.constant 0 : index
    %197 = vector.load %arg10[%c210_218, %c0_219] : memref<392x16xf32, #tpu.memory_space<vmem>>, vector<14x16xf32>
    %198 = arith.maximumf %196, %197 : vector<14x16xf32>
    %c98_220 = arith.constant 98 : index
    %c0_221 = arith.constant 0 : index
    %199 = vector.load %arg11[%c98_220, %c0_221] : memref<200x16xf32, #tpu.memory_space<vmem>>, vector<14x16xf32>
    tpu.vector_store %arg11[%c98_220, %c0_221], %198 {strides = array<i32>} : memref<200x16xf32, #tpu.memory_space<vmem>>, vector<14x16xf32>,
    %c224_222 = arith.constant 224 : index
    %c0_223 = arith.constant 0 : index
    %200 = vector.load %arg10[%c224_222, %c0_223] : memref<392x16xf32, #tpu.memory_space<vmem>>, vector<14x16xf32>
    %c238_224 = arith.constant 238 : index
    %c0_225 = arith.constant 0 : index
    %201 = vector.load %arg10[%c238_224, %c0_225] : memref<392x16xf32, #tpu.memory_space<vmem>>, vector<14x16xf32>
    %202 = arith.maximumf %200, %201 : vector<14x16xf32>
    %c112_226 = arith.constant 112 : index
    %c0_227 = arith.constant 0 : index
    %203 = vector.load %arg11[%c112_226, %c0_227] : memref<200x16xf32, #tpu.memory_space<vmem>>, vector<14x16xf32>
    tpu.vector_store %arg11[%c112_226, %c0_227], %202 {strides = array<i32>} : memref<200x16xf32, #tpu.memory_space<vmem>>, vector<14x16xf32>,
    %c252_228 = arith.constant 252 : index
    %c0_229 = arith.constant 0 : index
    %204 = vector.load %arg10[%c252_228, %c0_229] : memref<392x16xf32, #tpu.memory_space<vmem>>, vector<14x16xf32>
    %c266_230 = arith.constant 266 : index
    %c0_231 = arith.constant 0 : index
    %205 = vector.load %arg10[%c266_230, %c0_231] : memref<392x16xf32, #tpu.memory_space<vmem>>, vector<14x16xf32>
    %206 = arith.maximumf %204, %205 : vector<14x16xf32>
    %c126_232 = arith.constant 126 : index
    %c0_233 = arith.constant 0 : index
    %207 = vector.load %arg11[%c126_232, %c0_233] : memref<200x16xf32, #tpu.memory_space<vmem>>, vector<14x16xf32>
    tpu.vector_store %arg11[%c126_232, %c0_233], %206 {strides = array<i32>} : memref<200x16xf32, #tpu.memory_space<vmem>>, vector<14x16xf32>,
    %c280_234 = arith.constant 280 : index
    %c0_235 = arith.constant 0 : index
    %208 = vector.load %arg10[%c280_234, %c0_235] : memref<392x16xf32, #tpu.memory_space<vmem>>, vector<14x16xf32>
    %c294_236 = arith.constant 294 : index
    %c0_237 = arith.constant 0 : index
    %209 = vector.load %arg10[%c294_236, %c0_237] : memref<392x16xf32, #tpu.memory_space<vmem>>, vector<14x16xf32>
    %210 = arith.maximumf %208, %209 : vector<14x16xf32>
    %c140_238 = arith.constant 140 : index
    %c0_239 = arith.constant 0 : index
    %211 = vector.load %arg11[%c140_238, %c0_239] : memref<200x16xf32, #tpu.memory_space<vmem>>, vector<14x16xf32>
    tpu.vector_store %arg11[%c140_238, %c0_239], %210 {strides = array<i32>} : memref<200x16xf32, #tpu.memory_space<vmem>>, vector<14x16xf32>,
    %c308_240 = arith.constant 308 : index
    %c0_241 = arith.constant 0 : index
    %212 = vector.load %arg10[%c308_240, %c0_241] : memref<392x16xf32, #tpu.memory_space<vmem>>, vector<14x16xf32>
    %c322_242 = arith.constant 322 : index
    %c0_243 = arith.constant 0 : index
    %213 = vector.load %arg10[%c322_242, %c0_243] : memref<392x16xf32, #tpu.memory_space<vmem>>, vector<14x16xf32>
    %214 = arith.maximumf %212, %213 : vector<14x16xf32>
    %c154_244 = arith.constant 154 : index
    %c0_245 = arith.constant 0 : index
    %215 = vector.load %arg11[%c154_244, %c0_245] : memref<200x16xf32, #tpu.memory_space<vmem>>, vector<14x16xf32>
    tpu.vector_store %arg11[%c154_244, %c0_245], %214 {strides = array<i32>} : memref<200x16xf32, #tpu.memory_space<vmem>>, vector<14x16xf32>,
    %c336_246 = arith.constant 336 : index
    %c0_247 = arith.constant 0 : index
    %216 = vector.load %arg10[%c336_246, %c0_247] : memref<392x16xf32, #tpu.memory_space<vmem>>, vector<14x16xf32>
    %c350_248 = arith.constant 350 : index
    %c0_249 = arith.constant 0 : index
    %217 = vector.load %arg10[%c350_248, %c0_249] : memref<392x16xf32, #tpu.memory_space<vmem>>, vector<14x16xf32>
    %218 = arith.maximumf %216, %217 : vector<14x16xf32>
    %c168_250 = arith.constant 168 : index
    %c0_251 = arith.constant 0 : index
    %219 = vector.load %arg11[%c168_250, %c0_251] : memref<200x16xf32, #tpu.memory_space<vmem>>, vector<14x16xf32>
    tpu.vector_store %arg11[%c168_250, %c0_251], %218 {strides = array<i32>} : memref<200x16xf32, #tpu.memory_space<vmem>>, vector<14x16xf32>,
    %c364_252 = arith.constant 364 : index
    %c0_253 = arith.constant 0 : index
    %220 = vector.load %arg10[%c364_252, %c0_253] : memref<392x16xf32, #tpu.memory_space<vmem>>, vector<14x16xf32>
    %c378_254 = arith.constant 378 : index
    %c0_255 = arith.constant 0 : index
    %221 = vector.load %arg10[%c378_254, %c0_255] : memref<392x16xf32, #tpu.memory_space<vmem>>, vector<14x16xf32>
    %222 = arith.maximumf %220, %221 : vector<14x16xf32>
    %c182_256 = arith.constant 182 : index
    %c0_257 = arith.constant 0 : index
    %223 = vector.load %arg11[%c182_256, %c0_257] : memref<200x16xf32, #tpu.memory_space<vmem>>, vector<14x16xf32>
    tpu.vector_store %arg11[%c182_256, %c0_257], %222 {strides = array<i32>} : memref<200x16xf32, #tpu.memory_space<vmem>>, vector<14x16xf32>,
    %c0_258 = arith.constant 0 : index
    %c0_259 = arith.constant 0 : index
    %224 = vector.load %arg11[%c0_258, %c0_259] : memref<200x16xf32, #tpu.memory_space<vmem>>, vector<168x16xf32>
    %c0_260 = arith.constant 0 : index
    %c0_261 = arith.constant 0 : index
    %225 = vector.load %arg4[%c0_260, %c0_261] : memref<144x32xf32, #tpu.memory_space<vmem>>, vector<16x32xf32>
    %cst_262 = arith.constant dense<0.000000e+00> : vector<168x32xf32>
    %226 = tpu.matmul %224, %225, %cst_262 {dimension_numbers = #tpu.dot_dimension_numbers<[1], [0], [0], [1], [0, 0, 1, 1], [], []>} : vector<168x16xf32>, vector<16x32xf32>, vector<168x32xf32> -> vector<168x32xf32>
    %c1_263 = arith.constant 1 : index
    %c0_264 = arith.constant 0 : index
    %227 = vector.load %arg11[%c1_263, %c0_264] : memref<200x16xf32, #tpu.memory_space<vmem>>, vector<168x16xf32>
    %c16_265 = arith.constant 16 : index
    %c0_266 = arith.constant 0 : index
    %228 = vector.load %arg4[%c16_265, %c0_266] : memref<144x32xf32, #tpu.memory_space<vmem>>, vector<16x32xf32>
    %cst_267 = arith.constant dense<0.000000e+00> : vector<168x32xf32>
    %229 = tpu.matmul %227, %228, %cst_267 {dimension_numbers = #tpu.dot_dimension_numbers<[1], [0], [0], [1], [0, 0, 1, 1], [], []>} : vector<168x16xf32>, vector<16x32xf32>, vector<168x32xf32> -> vector<168x32xf32>
    %230 = arith.addf %226, %229 : vector<168x32xf32>
    %c2_268 = arith.constant 2 : index
    %c0_269 = arith.constant 0 : index
    %231 = vector.load %arg11[%c2_268, %c0_269] : memref<200x16xf32, #tpu.memory_space<vmem>>, vector<168x16xf32>
    %c32_270 = arith.constant 32 : index
    %c0_271 = arith.constant 0 : index
    %232 = vector.load %arg4[%c32_270, %c0_271] : memref<144x32xf32, #tpu.memory_space<vmem>>, vector<16x32xf32>
    %cst_272 = arith.constant dense<0.000000e+00> : vector<168x32xf32>
    %233 = tpu.matmul %231, %232, %cst_272 {dimension_numbers = #tpu.dot_dimension_numbers<[1], [0], [0], [1], [0, 0, 1, 1], [], []>} : vector<168x16xf32>, vector<16x32xf32>, vector<168x32xf32> -> vector<168x32xf32>
    %234 = arith.addf %230, %233 : vector<168x32xf32>
    %c14_273 = arith.constant 14 : index
    %c0_274 = arith.constant 0 : index
    %235 = vector.load %arg11[%c14_273, %c0_274] : memref<200x16xf32, #tpu.memory_space<vmem>>, vector<168x16xf32>
    %c48_275 = arith.constant 48 : index
    %c0_276 = arith.constant 0 : index
    %236 = vector.load %arg4[%c48_275, %c0_276] : memref<144x32xf32, #tpu.memory_space<vmem>>, vector<16x32xf32>
    %cst_277 = arith.constant dense<0.000000e+00> : vector<168x32xf32>
    %237 = tpu.matmul %235, %236, %cst_277 {dimension_numbers = #tpu.dot_dimension_numbers<[1], [0], [0], [1], [0, 0, 1, 1], [], []>} : vector<168x16xf32>, vector<16x32xf32>, vector<168x32xf32> -> vector<168x32xf32>
    %238 = arith.addf %234, %237 : vector<168x32xf32>
    %c15_278 = arith.constant 15 : index
    %c0_279 = arith.constant 0 : index
    %239 = vector.load %arg11[%c15_278, %c0_279] : memref<200x16xf32, #tpu.memory_space<vmem>>, vector<168x16xf32>
    %c64_280 = arith.constant 64 : index
    %c0_281 = arith.constant 0 : index
    %240 = vector.load %arg4[%c64_280, %c0_281] : memref<144x32xf32, #tpu.memory_space<vmem>>, vector<16x32xf32>
    %cst_282 = arith.constant dense<0.000000e+00> : vector<168x32xf32>
    %241 = tpu.matmul %239, %240, %cst_282 {dimension_numbers = #tpu.dot_dimension_numbers<[1], [0], [0], [1], [0, 0, 1, 1], [], []>} : vector<168x16xf32>, vector<16x32xf32>, vector<168x32xf32> -> vector<168x32xf32>
    %242 = arith.addf %238, %241 : vector<168x32xf32>
    %c16_283 = arith.constant 16 : index
    %c0_284 = arith.constant 0 : index
    %243 = vector.load %arg11[%c16_283, %c0_284] : memref<200x16xf32, #tpu.memory_space<vmem>>, vector<168x16xf32>
    %c80_285 = arith.constant 80 : index
    %c0_286 = arith.constant 0 : index
    %244 = vector.load %arg4[%c80_285, %c0_286] : memref<144x32xf32, #tpu.memory_space<vmem>>, vector<16x32xf32>
    %cst_287 = arith.constant dense<0.000000e+00> : vector<168x32xf32>
    %245 = tpu.matmul %243, %244, %cst_287 {dimension_numbers = #tpu.dot_dimension_numbers<[1], [0], [0], [1], [0, 0, 1, 1], [], []>} : vector<168x16xf32>, vector<16x32xf32>, vector<168x32xf32> -> vector<168x32xf32>
    %246 = arith.addf %242, %245 : vector<168x32xf32>
    %c28_288 = arith.constant 28 : index
    %c0_289 = arith.constant 0 : index
    %247 = vector.load %arg11[%c28_288, %c0_289] : memref<200x16xf32, #tpu.memory_space<vmem>>, vector<168x16xf32>
    %c96_290 = arith.constant 96 : index
    %c0_291 = arith.constant 0 : index
    %248 = vector.load %arg4[%c96_290, %c0_291] : memref<144x32xf32, #tpu.memory_space<vmem>>, vector<16x32xf32>
    %cst_292 = arith.constant dense<0.000000e+00> : vector<168x32xf32>
    %249 = tpu.matmul %247, %248, %cst_292 {dimension_numbers = #tpu.dot_dimension_numbers<[1], [0], [0], [1], [0, 0, 1, 1], [], []>} : vector<168x16xf32>, vector<16x32xf32>, vector<168x32xf32> -> vector<168x32xf32>
    %250 = arith.addf %246, %249 : vector<168x32xf32>
    %c29_293 = arith.constant 29 : index
    %c0_294 = arith.constant 0 : index
    %251 = vector.load %arg11[%c29_293, %c0_294] : memref<200x16xf32, #tpu.memory_space<vmem>>, vector<168x16xf32>
    %c112_295 = arith.constant 112 : index
    %c0_296 = arith.constant 0 : index
    %252 = vector.load %arg4[%c112_295, %c0_296] : memref<144x32xf32, #tpu.memory_space<vmem>>, vector<16x32xf32>
    %cst_297 = arith.constant dense<0.000000e+00> : vector<168x32xf32>
    %253 = tpu.matmul %251, %252, %cst_297 {dimension_numbers = #tpu.dot_dimension_numbers<[1], [0], [0], [1], [0, 0, 1, 1], [], []>} : vector<168x16xf32>, vector<16x32xf32>, vector<168x32xf32> -> vector<168x32xf32>
    %254 = arith.addf %250, %253 : vector<168x32xf32>
    %c30_298 = arith.constant 30 : index
    %c0_299 = arith.constant 0 : index
    %255 = vector.load %arg11[%c30_298, %c0_299] : memref<200x16xf32, #tpu.memory_space<vmem>>, vector<168x16xf32>
    %c128_300 = arith.constant 128 : index
    %c0_301 = arith.constant 0 : index
    %256 = vector.load %arg4[%c128_300, %c0_301] : memref<144x32xf32, #tpu.memory_space<vmem>>, vector<16x32xf32>
    %cst_302 = arith.constant dense<0.000000e+00> : vector<168x32xf32>
    %257 = tpu.matmul %255, %256, %cst_302 {dimension_numbers = #tpu.dot_dimension_numbers<[1], [0], [0], [1], [0, 0, 1, 1], [], []>} : vector<168x16xf32>, vector<16x32xf32>, vector<168x32xf32> -> vector<168x32xf32>
    %258 = arith.addf %254, %257 : vector<168x32xf32>
    %c0_303 = arith.constant 0 : index
    %c0_304 = arith.constant 0 : index
    %259 = vector.load %arg5[%c0_303, %c0_304] : memref<1x32xf32, #tpu.memory_space<vmem>>, vector<1x32xf32>
    %260 = vector.broadcast %259 : vector<1x32xf32> to vector<168x32xf32>
    %261 = arith.addf %258, %260 : vector<168x32xf32>
    %cst_305 = arith.constant 0.000000e+00 : f32
    %262 = vector.broadcast %cst_305 : f32 to vector<168x32xf32>
    %263 = arith.maximumf %261, %262 : vector<168x32xf32>
    %c0_306 = arith.constant 0 : index
    %c0_307 = arith.constant 0 : index
    %264 = vector.load %arg12[%c0_306, %c0_307] : memref<168x32xf32, #tpu.memory_space<vmem>>, vector<168x32xf32>
    tpu.vector_store %arg12[%c0_306, %c0_307], %263 {strides = array<i32>} : memref<168x32xf32, #tpu.memory_space<vmem>>, vector<168x32xf32>,
    %c0_308 = arith.constant 0 : index
    %c0_309 = arith.constant 0 : index
    %265 = tpu.strided_load %arg12[%c0_308, %c0_309] {strides = array<i32: 2, 1>} : memref<168x32xf32, #tpu.memory_space<vmem>>, vector<84x32xf32>
    %c1_310 = arith.constant 1 : index
    %c0_311 = arith.constant 0 : index
    %266 = tpu.strided_load %arg12[%c1_310, %c0_311] {strides = array<i32: 2, 1>} : memref<168x32xf32, #tpu.memory_space<vmem>>, vector<84x32xf32>
    %267 = arith.maximumf %265, %266 : vector<84x32xf32>
    %c0_312 = arith.constant 0 : index
    %c0_313 = arith.constant 0 : index
    %268 = vector.load %arg13[%c0_312, %c0_313] : memref<84x32xf32, #tpu.memory_space<vmem>>, vector<84x32xf32>
    tpu.vector_store %arg13[%c0_312, %c0_313], %267 {strides = array<i32>} : memref<84x32xf32, #tpu.memory_space<vmem>>, vector<84x32xf32>,
    %c0_314 = arith.constant 0 : index
    %c0_315 = arith.constant 0 : index
    %269 = vector.load %arg13[%c0_314, %c0_315] : memref<84x32xf32, #tpu.memory_space<vmem>>, vector<6x32xf32>
    %c7_316 = arith.constant 7 : index
    %c0_317 = arith.constant 0 : index
    %270 = vector.load %arg13[%c7_316, %c0_317] : memref<84x32xf32, #tpu.memory_space<vmem>>, vector<6x32xf32>
    %271 = arith.maximumf %269, %270 : vector<6x32xf32>
    %c0_318 = arith.constant 0 : index
    %c0_319 = arith.constant 0 : index
    %272 = vector.load %arg14[%c0_318, %c0_319] : memref<36x32xf32, #tpu.memory_space<vmem>>, vector<6x32xf32>
    tpu.vector_store %arg14[%c0_318, %c0_319], %271 {strides = array<i32>} : memref<36x32xf32, #tpu.memory_space<vmem>>, vector<6x32xf32>,
    %c14_320 = arith.constant 14 : index
    %c0_321 = arith.constant 0 : index
    %273 = vector.load %arg13[%c14_320, %c0_321] : memref<84x32xf32, #tpu.memory_space<vmem>>, vector<6x32xf32>
    %c21_322 = arith.constant 21 : index
    %c0_323 = arith.constant 0 : index
    %274 = vector.load %arg13[%c21_322, %c0_323] : memref<84x32xf32, #tpu.memory_space<vmem>>, vector<6x32xf32>
    %275 = arith.maximumf %273, %274 : vector<6x32xf32>
    %c6_324 = arith.constant 6 : index
    %c0_325 = arith.constant 0 : index
    %276 = vector.load %arg14[%c6_324, %c0_325] : memref<36x32xf32, #tpu.memory_space<vmem>>, vector<6x32xf32>
    tpu.vector_store %arg14[%c6_324, %c0_325], %275 {strides = array<i32>} : memref<36x32xf32, #tpu.memory_space<vmem>>, vector<6x32xf32>,
    %c28_326 = arith.constant 28 : index
    %c0_327 = arith.constant 0 : index
    %277 = vector.load %arg13[%c28_326, %c0_327] : memref<84x32xf32, #tpu.memory_space<vmem>>, vector<6x32xf32>
    %c35_328 = arith.constant 35 : index
    %c0_329 = arith.constant 0 : index
    %278 = vector.load %arg13[%c35_328, %c0_329] : memref<84x32xf32, #tpu.memory_space<vmem>>, vector<6x32xf32>
    %279 = arith.maximumf %277, %278 : vector<6x32xf32>
    %c12_330 = arith.constant 12 : index
    %c0_331 = arith.constant 0 : index
    %280 = vector.load %arg14[%c12_330, %c0_331] : memref<36x32xf32, #tpu.memory_space<vmem>>, vector<6x32xf32>
    tpu.vector_store %arg14[%c12_330, %c0_331], %279 {strides = array<i32>} : memref<36x32xf32, #tpu.memory_space<vmem>>, vector<6x32xf32>,
    %c42_332 = arith.constant 42 : index
    %c0_333 = arith.constant 0 : index
    %281 = vector.load %arg13[%c42_332, %c0_333] : memref<84x32xf32, #tpu.memory_space<vmem>>, vector<6x32xf32>
    %c49_334 = arith.constant 49 : index
    %c0_335 = arith.constant 0 : index
    %282 = vector.load %arg13[%c49_334, %c0_335] : memref<84x32xf32, #tpu.memory_space<vmem>>, vector<6x32xf32>
    %283 = arith.maximumf %281, %282 : vector<6x32xf32>
    %c18_336 = arith.constant 18 : index
    %c0_337 = arith.constant 0 : index
    %284 = vector.load %arg14[%c18_336, %c0_337] : memref<36x32xf32, #tpu.memory_space<vmem>>, vector<6x32xf32>
    tpu.vector_store %arg14[%c18_336, %c0_337], %283 {strides = array<i32>} : memref<36x32xf32, #tpu.memory_space<vmem>>, vector<6x32xf32>,
    %c56_338 = arith.constant 56 : index
    %c0_339 = arith.constant 0 : index
    %285 = vector.load %arg13[%c56_338, %c0_339] : memref<84x32xf32, #tpu.memory_space<vmem>>, vector<6x32xf32>
    %c63_340 = arith.constant 63 : index
    %c0_341 = arith.constant 0 : index
    %286 = vector.load %arg13[%c63_340, %c0_341] : memref<84x32xf32, #tpu.memory_space<vmem>>, vector<6x32xf32>
    %287 = arith.maximumf %285, %286 : vector<6x32xf32>
    %c24_342 = arith.constant 24 : index
    %c0_343 = arith.constant 0 : index
    %288 = vector.load %arg14[%c24_342, %c0_343] : memref<36x32xf32, #tpu.memory_space<vmem>>, vector<6x32xf32>
    tpu.vector_store %arg14[%c24_342, %c0_343], %287 {strides = array<i32>} : memref<36x32xf32, #tpu.memory_space<vmem>>, vector<6x32xf32>,
    %c70_344 = arith.constant 70 : index
    %c0_345 = arith.constant 0 : index
    %289 = vector.load %arg13[%c70_344, %c0_345] : memref<84x32xf32, #tpu.memory_space<vmem>>, vector<6x32xf32>
    %c77_346 = arith.constant 77 : index
    %c0_347 = arith.constant 0 : index
    %290 = vector.load %arg13[%c77_346, %c0_347] : memref<84x32xf32, #tpu.memory_space<vmem>>, vector<6x32xf32>
    %291 = arith.maximumf %289, %290 : vector<6x32xf32>
    %c30_348 = arith.constant 30 : index
    %c0_349 = arith.constant 0 : index
    %292 = vector.load %arg14[%c30_348, %c0_349] : memref<36x32xf32, #tpu.memory_space<vmem>>, vector<6x32xf32>
    tpu.vector_store %arg14[%c30_348, %c0_349], %291 {strides = array<i32>} : memref<36x32xf32, #tpu.memory_space<vmem>>, vector<6x32xf32>,
    %c0_350 = arith.constant 0 : index
    %c0_351 = arith.constant 0 : index
    %293 = vector.load %arg14[%c0_350, %c0_351] : memref<36x32xf32, #tpu.memory_space<vmem>>, vector<36x32xf32>
    %294 = vector.shape_cast %293 : vector<36x32xf32> to vector<1x36x32xf32>
    %c0_352 = arith.constant 0 : index
    %c0_353 = arith.constant 0 : index
    %c0_354 = arith.constant 0 : index
    %295 = vector.load %arg6[%c0_352, %c0_353, %c0_354] : memref<5x36x32xf32, #tpu.memory_space<vmem>>, vector<5x36x32xf32>
    %296 = vector.broadcast %294 : vector<1x36x32xf32> to vector<5x36x32xf32>
    %297 = arith.mulf %296, %295 : vector<5x36x32xf32>
    %cst_355 = arith.constant dense<0.000000e+00> : vector<5x32xf32>
    %298 = vector.multi_reduction <add>, %297, %cst_355 [1] : vector<5x36x32xf32> to vector<5x32xf32>
    %cst_356 = arith.constant dense<0.000000e+00> : vector<5xf32>
    %299 = vector.multi_reduction <add>, %298, %cst_356 [1] : vector<5x32xf32> to vector<5xf32>
    %300 = vector.shape_cast %299 : vector<5xf32> to vector<5x1xf32>
    %c0_357 = arith.constant 0 : index
    %c0_358 = arith.constant 0 : index
    %301 = vector.load %arg7[%c0_357, %c0_358] : memref<5x1xf32, #tpu.memory_space<vmem>>, vector<5x1xf32>
    %302 = arith.addf %300, %301 : vector<5x1xf32>
    %c1_359 = arith.constant 1 : index
    %c0_360 = arith.constant 0 : index
    %c0_361 = arith.constant 0 : index
    %303 = vector.load %arg8[%c1_359, %c0_360, %c0_361] : memref<2x5x1xf32, #tpu.memory_space<vmem>>, vector<1x5x1xf32>
    %304 = vector.shape_cast %303 : vector<1x5x1xf32> to vector<5x1xf32>
    %305 = vector.shape_cast %302 : vector<5x1xf32> to vector<1x5x1xf32>
    tpu.vector_store %arg8[%c1_359, %c0_360, %c0_361], %305 {strides = array<i32>} : memref<2x5x1xf32, #tpu.memory_space<vmem>>, vector<1x5x1xf32>,
    return
  }
  func.func @transform_0(%arg0: i32) -> (i32, i32, i32) {
    %c0_i32 = arith.constant 0 : i32
    %c0_i32_0 = arith.constant 0 : i32
    %c0_i32_1 = arith.constant 0 : i32
    return %arg0, %c0_i32, %c0_i32_0 : i32, i32, i32
  }
  func.func @transform_1(%arg0: i32) -> (i32, i32) {
    %c0_i32 = arith.constant 0 : i32
    %c0_i32_0 = arith.constant 0 : i32
    %c0_i32_1 = arith.constant 0 : i32
    return %c0_i32, %c0_i32_0 : i32, i32
  }
  func.func @transform_2(%arg0: i32) -> (i32, i32) {
    %c0_i32 = arith.constant 0 : i32
    %c0_i32_0 = arith.constant 0 : i32
    %c0_i32_1 = arith.constant 0 : i32
    return %c0_i32, %c0_i32_0 : i32, i32
  }
  func.func @transform_3(%arg0: i32) -> (i32, i32) {
    %c0_i32 = arith.constant 0 : i32
    %c0_i32_0 = arith.constant 0 : i32
    %c0_i32_1 = arith.constant 0 : i32
    return %c0_i32, %c0_i32_0 : i32, i32
  }
  func.func @transform_4(%arg0: i32) -> (i32, i32) {
    %c0_i32 = arith.constant 0 : i32
    %c0_i32_0 = arith.constant 0 : i32
    %c0_i32_1 = arith.constant 0 : i32
    return %c0_i32, %c0_i32_0 : i32, i32
  }
  func.func @transform_5(%arg0: i32) -> (i32, i32, i32) {
    %c0_i32 = arith.constant 0 : i32
    %c0_i32_0 = arith.constant 0 : i32
    %c0_i32_1 = arith.constant 0 : i32
    %c0_i32_2 = arith.constant 0 : i32
    return %c0_i32, %c0_i32_0, %c0_i32_1 : i32, i32, i32
  }
  func.func @transform_6(%arg0: i32) -> (i32, i32) {
    %c0_i32 = arith.constant 0 : i32
    %c0_i32_0 = arith.constant 0 : i32
    %c0_i32_1 = arith.constant 0 : i32
    return %c0_i32, %c0_i32_0 : i32, i32
  }
  func.func @transform_7(%arg0: i32) -> (i32, i32, i32) {
    %c0_i32 = arith.constant 0 : i32
    %c0_i32_0 = arith.constant 0 : i32
    %c0_i32_1 = arith.constant 0 : i32
    return %arg0, %c0_i32, %c0_i32_0 : i32, i32, i32
  }
}

</mosaic_0001>

<llo_original>
// kernel: cnn_forward.1
$region0: #{cnn_forward.1}
  #allocation0 [shape = 'u32[]', space=smem, size = 0x4, offset = 0x4, fixed_abs, tag = 'smem constant byte address 0x4 - core index']
  #allocation1 [shape = 'u32[144,128]{1,0:T(1,128)}', space=vmem, size = 0x12000, scoped, tag = 'internal scratch']
  #allocation2 [shape = 'f32[784,16]{1,0:T(8,128)}', space=vmem, size = 0x62000, scoped, tag = 'scratch operand']
  #allocation3 [shape = 'f32[392,16]{1,0:T(8,128)}', space=vmem, size = 0x31000, scoped, tag = 'scratch operand']
  #allocation4 [shape = 'f32[200,16]{1,0:T(8,128)}', space=vmem, size = 0x19000, scoped, tag = 'scratch operand']
  #allocation5 [shape = 'f32[168,32]{1,0:T(8,128)}', space=vmem, size = 0x15000, scoped, tag = 'scratch operand']
  #allocation6 [shape = 'f32[84,32]{1,0:T(8,128)}', space=vmem, size = 0xb000, scoped, tag = 'scratch operand']
  #allocation7 [shape = 'f32[36,32]{1,0:T(8,128)}', space=vmem, size = 0x5000, scoped, tag = 'scratch operand']
  %s0 = inlined_call_operand.vmem [shape: f32[2,784,27], index: 0, kind: input, shape index: {}]
  %s1 = inlined_call_operand.vmem [shape: f32[27,16], index: 1, kind: input, shape index: {}]
  %s2 = inlined_call_operand.vmem [shape: f32[1,16], index: 2, kind: input, shape index: {}]
  %s3 = inlined_call_operand.vmem [shape: f32[144,32], index: 3, kind: input, shape index: {}]
  %s4 = inlined_call_operand.vmem [shape: f32[1,32], index: 4, kind: input, shape index: {}]
  %s5 = inlined_call_operand.vmem [shape: f32[5,36,32], index: 5, kind: input, shape index: {}]
  %s6 = inlined_call_operand.vmem [shape: f32[5,1], index: 6, kind: input, shape index: {}]
  %s7 = inlined_call_operand.vmem [shape: f32[2,5,1], index: 7, kind: output, shape index: {}]
  %s8 = sld [smem:[#allocation0]]
  $region38: #{cnn_forward.1} parent=0
    _
  %s10 = ssub.s32 1, %s8
  %s11 = scalar_select 0, %s10, %s8
  // Predicated region
  $region2: #{cnn_forward.1} parent=0 // pred_check
    _
  $region3: #{cnn_forward.1} parent=0 // pred_check_branch
    %13 = sbr.rel (0) target = $region5
  $region4: #{cnn_forward.1} parent=0 // pred_region
    _
  $region5: #{cnn_forward.1} parent=0 // pred_fallthru
    _
  // Predicated region
  $region6: #{cnn_forward.1} parent=0 // pred_check
    _
  $region7: #{cnn_forward.1} parent=0 // pred_check_branch
    %15 = sbr.rel (0) target = $region9
  $region8: #{cnn_forward.1} parent=0 // pred_region
    _
  $region9: #{cnn_forward.1} parent=0 // pred_fallthru
    _
  // Predicated region
  $region10: #{cnn_forward.1} parent=0 // pred_check
    _
  $region11: #{cnn_forward.1} parent=0 // pred_check_branch
    %17 = sbr.rel (0) target = $region13
  $region12: #{cnn_forward.1} parent=0 // pred_region
    _
  $region13: #{cnn_forward.1} parent=0 // pred_fallthru
    _
  // Predicated region
  $region14: #{cnn_forward.1} parent=0 // pred_check
    _
  $region15: #{cnn_forward.1} parent=0 // pred_check_branch
    %19 = sbr.rel (0) target = $region17
  $region16: #{cnn_forward.1} parent=0 // pred_region
    _
  $region17: #{cnn_forward.1} parent=0 // pred_fallthru
    _
  // Predicated region
  $region18: #{cnn_forward.1} parent=0 // pred_check
    _
  $region19: #{cnn_forward.1} parent=0 // pred_check_branch
    %21 = sbr.rel (0) target = $region21
  $region20: #{cnn_forward.1} parent=0 // pred_region
    _
  $region21: #{cnn_forward.1} parent=0 // pred_fallthru
    _
  // Predicated region
  $region22: #{cnn_forward.1} parent=0 // pred_check
    _
  $region23: #{cnn_forward.1} parent=0 // pred_check_branch
    %23 = sbr.rel (0) target = $region25
  $region24: #{cnn_forward.1} parent=0 // pred_region
    _
  $region25: #{cnn_forward.1} parent=0 // pred_fallthru
    _
  // Predicated region
  $region26: #{cnn_forward.1} parent=0 // pred_check
    _
  $region27: #{cnn_forward.1} parent=0 // pred_check_branch
    %25 = sbr.rel (0) target = $region29
  $region28: #{cnn_forward.1} parent=0 // pred_region
    _
  $region29: #{cnn_forward.1} parent=0 // pred_fallthru
    _
  %vm26 = vcmask 125952
  %27 = vst.msk [vmem:[#allocation4 + $0xc4] sm:$0xf] %vm26, 0.0
  %v28 = vld [vmem:[%s0] sm:$0xff]
  %v29 = vld [vmem:[%s0 + $0x8] sm:$0xff]
  %v30 = vld [vmem:[%s0 + $0x10] sm:$0xff]
  %v31 = vld [vmem:[%s0 + $0x18] sm:$0xff]
  %v32 = vld [vmem:[%s0 + $0x20] sm:$0xff]
  %v33 = vld [vmem:[%s0 + $0x28] sm:$0xff]
  %v34 = vld [vmem:[%s0 + $0x30] sm:$0xff]
  %v35 = vld [vmem:[%s0 + $0x38] sm:$0xff]
  %v36 = vld [vmem:[%s0 + $0x40] sm:$0xff]
  %v37 = vld [vmem:[%s0 + $0x48] sm:$0xff]
  %v38 = vld [vmem:[%s0 + $0x50] sm:$0xff]
  %v39 = vld [vmem:[%s0 + $0x58] sm:$0xff]
  %v40 = vld [vmem:[%s0 + $0x60] sm:$0xff]
  %v41 = vld [vmem:[%s0 + $0x68] sm:$0xff]
  %v42 = vld [vmem:[%s0 + $0x70] sm:$0xff]
  %v43 = vld [vmem:[%s0 + $0x78] sm:$0xff]
  %v44 = vld [vmem:[%s0 + $0x80] sm:$0xff]
  %v45 = vld [vmem:[%s0 + $0x88] sm:$0xff]
  %v46 = vld [vmem:[%s0 + $0x90] sm:$0xff]
  %v47 = vld [vmem:[%s0 + $0x98] sm:$0xff]
  %v48 = vld [vmem:[%s0 + $0xa0] sm:$0xff]
  %v49 = vld [vmem:[%s0 + $0xa8] sm:$0xff]
  %v50 = vld [vmem:[%s0 + $0xb0] sm:$0xff]
  %v51 = vld [vmem:[%s0 + $0xb8] sm:$0xff]
  %v52 = vld [vmem:[%s0 + $0xc0] sm:$0xff]
  %v53 = vld [vmem:[%s0 + $0xc8] sm:$0xff]
  %v54 = vld [vmem:[%s0 + $0xd0] sm:$0xff]
  %v55 = vld [vmem:[%s0 + $0xd8] sm:$0xff]
  %v56 = vld [vmem:[%s0 + $0xe0] sm:$0xff]
  %v57 = vld [vmem:[%s0 + $0xe8] sm:$0xff]
  %v58 = vld [vmem:[%s0 + $0xf0] sm:$0xff]
  %v59 = vld [vmem:[%s0 + $0xf8] sm:$0xff]
  %v60 = vld [vmem:[%s0 + $0x100] sm:$0xff]
  %v61 = vld [vmem:[%s0 + $0x108] sm:$0xff]
  %v62 = vld [vmem:[%s0 + $0x110] sm:$0xff]
  %v63 = vld [vmem:[%s0 + $0x118] sm:$0xff]
  %v64 = vld [vmem:[%s0 + $0x120] sm:$0xff]
  %v65 = vld [vmem:[%s0 + $0x128] sm:$0xff]
  %v66 = vld [vmem:[%s0 + $0x130] sm:$0xff]
  %v67 = vld [vmem:[%s0 + $0x138] sm:$0xff]
  %v68 = vld [vmem:[%s0 + $0x140] sm:$0xff]
  %v69 = vld [vmem:[%s0 + $0x148] sm:$0xff]
  %v70 = vld [vmem:[%s0 + $0x150] sm:$0xff]
  %v71 = vld [vmem:[%s0 + $0x158] sm:$0xff]
  %v72 = vld [vmem:[%s0 + $0x160] sm:$0xff]
  %v73 = vld [vmem:[%s0 + $0x168] sm:$0xff]
  %v74 = vld [vmem:[%s0 + $0x170] sm:$0xff]
  %v75 = vld [vmem:[%s0 + $0x178] sm:$0xff]
  %v76 = vld [vmem:[%s0 + $0x180] sm:$0xff]
  %v77 = vld [vmem:[%s0 + $0x188] sm:$0xff]
  %v78 = vld [vmem:[%s0 + $0x190] sm:$0xff]
  %v79 = vld [vmem:[%s0 + $0x198] sm:$0xff]
  %v80 = vld [vmem:[%s0 + $0x1a0] sm:$0xff]
  %v81 = vld [vmem:[%s0 + $0x1a8] sm:$0xff]
  %v82 = vld [vmem:[%s0 + $0x1b0] sm:$0xff]
  %v83 = vld [vmem:[%s0 + $0x1b8] sm:$0xff]
  %v84 = vld [vmem:[%s0 + $0x1c0] sm:$0xff]
  %v85 = vld [vmem:[%s0 + $0x1c8] sm:$0xff]
  %v86 = vld [vmem:[%s0 + $0x1d0] sm:$0xff]
  %v87 = vld [vmem:[%s0 + $0x1d8] sm:$0xff]
  %v88 = vld [vmem:[%s0 + $0x1e0] sm:$0xff]
  %v89 = vld [vmem:[%s0 + $0x1e8] sm:$0xff]
  %v90 = vld [vmem:[%s0 + $0x1f0] sm:$0xff]
  %v91 = vld [vmem:[%s0 + $0x1f8] sm:$0xff]
  %v92 = vld [vmem:[%s0 + $0x200] sm:$0xff]
  %v93 = vld [vmem:[%s0 + $0x208] sm:$0xff]
  %v94 = vld [vmem:[%s0 + $0x210] sm:$0xff]
  %v95 = vld [vmem:[%s0 + $0x218] sm:$0xff]
  %v96 = vld [vmem:[%s0 + $0x220] sm:$0xff]
  %v97 = vld [vmem:[%s0 + $0x228] sm:$0xff]
  %v98 = vld [vmem:[%s0 + $0x230] sm:$0xff]
  %v99 = vld [vmem:[%s0 + $0x238] sm:$0xff]
  %v100 = vld [vmem:[%s0 + $0x240] sm:$0xff]
  %v101 = vld [vmem:[%s0 + $0x248] sm:$0xff]
  %v102 = vld [vmem:[%s0 + $0x250] sm:$0xff]
  %v103 = vld [vmem:[%s0 + $0x258] sm:$0xff]
  %v104 = vld [vmem:[%s0 + $0x260] sm:$0xff]
  %v105 = vld [vmem:[%s0 + $0x268] sm:$0xff]
  %v106 = vld [vmem:[%s0 + $0x270] sm:$0xff]
  %v107 = vld [vmem:[%s0 + $0x278] sm:$0xff]
  %v108 = vld [vmem:[%s0 + $0x280] sm:$0xff]
  %v109 = vld [vmem:[%s0 + $0x288] sm:$0xff]
  %v110 = vld [vmem:[%s0 + $0x290] sm:$0xff]
  %v111 = vld [vmem:[%s0 + $0x298] sm:$0xff]
  %v112 = vld [vmem:[%s0 + $0x2a0] sm:$0xff]
  %v113 = vld [vmem:[%s0 + $0x2a8] sm:$0xff]
  %v114 = vld [vmem:[%s0 + $0x2b0] sm:$0xff]
  %v115 = vld [vmem:[%s0 + $0x2b8] sm:$0xff]
  %v116 = vld [vmem:[%s0 + $0x2c0] sm:$0xff]
  %v117 = vld [vmem:[%s0 + $0x2c8] sm:$0xff]
  %v118 = vld [vmem:[%s0 + $0x2d0] sm:$0xff]
  %v119 = vld [vmem:[%s0 + $0x2d8] sm:$0xff]
  %v120 = vld [vmem:[%s0 + $0x2e0] sm:$0xff]
  %v121 = vld [vmem:[%s0 + $0x2e8] sm:$0xff]
  %v122 = vld [vmem:[%s0 + $0x2f0] sm:$0xff]
  %v123 = vld [vmem:[%s0 + $0x2f8] sm:$0xff]
  %v124 = vld [vmem:[%s0 + $0x300] sm:$0xff]
  %v125 = vld [vmem:[%s0 + $0x308] sm:$0xff]
  %v126 = vld [vmem:[%s1] sm:$0xff]
  %v127 = vld [vmem:[%s1 + $0x8] sm:$0xff]
  %v128 = vld [vmem:[%s1 + $0x10] sm:$0xff]
  %v129 = vld [vmem:[%s1 + $0x18] sm:$0x7]
  %v130 = vld [vmem:[%s2] sm:$0x1]
  %v132 = vlaneseq
  %v133 = vshrl.u32 %v132, 7
  %v134 = vsub.s32 0, %v133
  %v135 = vrot.slane %v130, %v134
  %vm137 = vcmask 220160
  %v139 = vsel %vm137, %v28, 0
  %v142 = vsel %vm137, %v29, 0
  %v145 = vsel %vm137, %v30, 0
  %v148 = vsel %vm137, %v31, 0
  %v151 = vsel %vm137, %v32, 0
  %v154 = vsel %vm137, %v33, 0
  %v157 = vsel %vm137, %v34, 0
  %v160 = vsel %vm137, %v35, 0
  %v163 = vsel %vm137, %v36, 0
  %v166 = vsel %vm137, %v37, 0
  %v169 = vsel %vm137, %v38, 0
  %v172 = vsel %vm137, %v39, 0
  %v175 = vsel %vm137, %v40, 0
  %v178 = vsel %vm137, %v41, 0
  %v181 = vsel %vm137, %v42, 0
  %v184 = vsel %vm137, %v43, 0
  %v187 = vsel %vm137, %v44, 0
  %v190 = vsel %vm137, %v45, 0
  %v193 = vsel %vm137, %v46, 0
  %v196 = vsel %vm137, %v47, 0
  %v199 = vsel %vm137, %v48, 0
  %v202 = vsel %vm137, %v49, 0
  %v205 = vsel %vm137, %v50, 0
  %v208 = vsel %vm137, %v51, 0
  %v211 = vsel %vm137, %v52, 0
  %v214 = vsel %vm137, %v53, 0
  %v217 = vsel %vm137, %v54, 0
  %v220 = vsel %vm137, %v55, 0
  %v223 = vsel %vm137, %v56, 0
  %v226 = vsel %vm137, %v57, 0
  %v229 = vsel %vm137, %v58, 0
  %v232 = vsel %vm137, %v59, 0
  %v235 = vsel %vm137, %v60, 0
  %v238 = vsel %vm137, %v61, 0
  %v241 = vsel %vm137, %v62, 0
  %v244 = vsel %vm137, %v63, 0
  %v247 = vsel %vm137, %v64, 0
  %v250 = vsel %vm137, %v65, 0
  %v253 = vsel %vm137, %v66, 0
  %v256 = vsel %vm137, %v67, 0
  %v259 = vsel %vm137, %v68, 0
  %v262 = vsel %vm137, %v69, 0
  %v265 = vsel %vm137, %v70, 0
  %v268 = vsel %vm137, %v71, 0
  %v271 = vsel %vm137, %v72, 0
  %v274 = vsel %vm137, %v73, 0
  %v277 = vsel %vm137, %v74, 0
  %v280 = vsel %vm137, %v75, 0
  %v283 = vsel %vm137, %v76, 0
  %v286 = vsel %vm137, %v77, 0
  %v289 = vsel %vm137, %v78, 0
  %v292 = vsel %vm137, %v79, 0
  %v295 = vsel %vm137, %v80, 0
  %v298 = vsel %vm137, %v81, 0
  %v301 = vsel %vm137, %v82, 0
  %v304 = vsel %vm137, %v83, 0
  %v307 = vsel %vm137, %v84, 0
  %v310 = vsel %vm137, %v85, 0
  %v313 = vsel %vm137, %v86, 0
  %v316 = vsel %vm137, %v87, 0
  %v319 = vsel %vm137, %v88, 0
  %v322 = vsel %vm137, %v89, 0
  %v325 = vsel %vm137, %v90, 0
  %v328 = vsel %vm137, %v91, 0
  %v331 = vsel %vm137, %v92, 0
  %v334 = vsel %vm137, %v93, 0
  %v337 = vsel %vm137, %v94, 0
  %v340 = vsel %vm137, %v95, 0
  %v343 = vsel %vm137, %v96, 0
  %v346 = vsel %vm137, %v97, 0
  %v349 = vsel %vm137, %v98, 0
  %v352 = vsel %vm137, %v99, 0
  %v355 = vsel %vm137, %v100, 0
  %v358 = vsel %vm137, %v101, 0
  %v361 = vsel %vm137, %v102, 0
  %v364 = vsel %vm137, %v103, 0
  %v367 = vsel %vm137, %v104, 0
  %v370 = vsel %vm137, %v105, 0
  %v373 = vsel %vm137, %v106, 0
  %v376 = vsel %vm137, %v107, 0
  %v379 = vsel %vm137, %v108, 0
  %v382 = vsel %vm137, %v109, 0
  %v385 = vsel %vm137, %v110, 0
  %v388 = vsel %vm137, %v111, 0
  %v391 = vsel %vm137, %v112, 0
  %v394 = vsel %vm137, %v113, 0
  %v397 = vsel %vm137, %v114, 0
  %v400 = vsel %vm137, %v115, 0
  %v403 = vsel %vm137, %v116, 0
  %v406 = vsel %vm137, %v117, 0
  %v409 = vsel %vm137, %v118, 0
  %v412 = vsel %vm137, %v119, 0
  %v415 = vsel %vm137, %v120, 0
  %v418 = vsel %vm137, %v121, 0
  %v421 = vsel %vm137, %v122, 0
  %v424 = vsel %vm137, %v123, 0
  %v427 = vsel %vm137, %v124, 0
  %v430 = vsel %vm137, %v125, 0
  %vm432 = vcmask 1042432
  %v434 = vsel %vm432, %v129, 0
  %436 = vmatprep.subr.mxu0 0.0
  %437 = vmatpush1.msra.mxu0 %v126
  %438 = vmatprep.subr.mxu0 0.0
  %439 = vmatpush1.msra.mxu0 %v127
  %440 = vmatprep.subr.mxu0 0.0
  %441 = vmatpush1.msra.mxu0 %v128
  %442 = vmatprep.subr.mxu0 0.0
  %443 = vmatpush1.msra.mxu0 %v434
  %444 = vmatprep.subr.mxu0 0.0
  %445 = vmatpush1.msra.mxu0 0.0
  %446 = vmatprep.subr.mxu0 0.0
  %447 = vmatpush1.msra.mxu0 0.0
  %448 = vmatprep.subr.mxu0 0.0
  %449 = vmatpush1.msra.mxu0 0.0
  %450 = vmatprep.subr.mxu0 0.0
  %451 = vmatpush1.msra.mxu0 0.0
  %452 = vmatprep.subr.mxu0 0.0
  %453 = vmatpush1.msra.mxu0 0.0
  %454 = vmatprep.subr.mxu0 0.0
  %455 = vmatpush1.msra.mxu0 0.0
  %456 = vmatprep.subr.mxu0 0.0
  %457 = vmatpush1.msra.mxu0 0.0
  %458 = vmatprep.subr.mxu0 0.0
  %459 = vmatpush1.msra.mxu0 0.0
  %460 = vmatprep.subr.mxu0 0.0
  %461 = vmatpush1.msra.mxu0 0.0
  %462 = vmatprep.subr.mxu0 0.0
  %463 = vmatpush1.msra.mxu0 0.0
  %464 = vmatprep.subr.mxu0 0.0
  %465 = vmatpush1.msra.mxu0 0.0
  %466 = vmatprep.subr.mxu0 0.0
  %467 = vmatpush1.msra.mxu0 0.0
  %468 = vmatprep.subr.mxu0 0.0
  %469 = vmatpush1.msra.mxu0 0.0
  %470 = vmatprep.subr.mxu0 0.0
  %471 = vmatpush1.msra.mxu0 0.0
  %472 = vmatprep.subr.mxu0 0.0
  %473 = vmatpush1.msra.mxu0 0.0
  %474 = vmatprep.subr.mxu0 0.0
  %475 = vmatpush1.msra.mxu0 0.0
  %476 = vmatprep.subr.mxu0 0.0
  %477 = vmatpush1.msra.mxu0 0.0
  %478 = vmatprep.subr.mxu0 0.0
  %479 = vmatpush1.msra.mxu0 0.0
  %480 = vmatprep.subr.mxu0 0.0
  %481 = vmatpush1.msra.mxu0 0.0
  %482 = vmatprep.subr.mxu0 0.0
  %483 = vmatpush1.msra.mxu0 0.0
  %484 = vmatprep.subr.mxu0 0.0
  %485 = vmatpush1.msra.mxu0 0.0
  %486 = vmatprep.subr.mxu0 0.0
  %487 = vmatpush1.msra.mxu0 0.0
  %488 = vmatprep.subr.mxu0 0.0
  %489 = vmatpush1.msra.mxu0 0.0
  %490 = vmatprep.subr.mxu0 0.0
  %491 = vmatpush1.msra.mxu0 0.0
  %492 = vmatprep.subr.mxu0 0.0
  %493 = vmatpush1.msra.mxu0 0.0
  %494 = vmatprep.subr.mxu0 0.0
  %495 = vmatpush1.msra.mxu0 0.0
  %496 = vmatprep.subr.mxu0 0.0
  %497 = vmatpush1.msra.mxu0 0.0
  %498 = vmatprep.subr.mxu0 0.0
  %499 = vmatpush1.msra.mxu0 0.0
  %500 = vmatprep.mubr.f32.mxu0 0.0
  %501 = vmatmul.mubr.f32.gmra.mrb[0].mxu0 %v139
  %v502 = vpop.f32.mrb[0].mxu0
  %v503 = vadd.f32 %v135, %v502
  %v504 = vpop.f32.mrb[0].mxu0
  %505 = vmatprep.mubr.f32.mxu0 0.0
  %506 = vmatmul.mubr.f32.gmra.mrb[0].mxu0 %v142
  %v507 = vpop.f32.mrb[0].mxu0
  %v508 = vadd.f32 %v135, %v507
  %v509 = vpop.f32.mrb[0].mxu0
  %510 = vmatprep.mubr.f32.mxu0 0.0
  %511 = vmatmul.mubr.f32.gmra.mrb[0].mxu0 %v145
  %v512 = vpop.f32.mrb[0].mxu0
  %v513 = vadd.f32 %v135, %v512
  %v514 = vpop.f32.mrb[0].mxu0
  %515 = vmatprep.mubr.f32.mxu0 0.0
  %516 = vmatmul.mubr.f32.gmra.mrb[0].mxu0 %v148
  %v517 = vpop.f32.mrb[0].mxu0
  %v518 = vadd.f32 %v135, %v517
  %v519 = vpop.f32.mrb[0].mxu0
  %520 = vmatprep.mubr.f32.mxu0 0.0
  %521 = vmatmul.mubr.f32.gmra.mrb[0].mxu0 %v151
  %v522 = vpop.f32.mrb[0].mxu0
  %v523 = vadd.f32 %v135, %v522
  %v524 = vpop.f32.mrb[0].mxu0
  %525 = vmatprep.mubr.f32.mxu0 0.0
  %526 = vmatmul.mubr.f32.gmra.mrb[0].mxu0 %v154
  %v527 = vpop.f32.mrb[0].mxu0
  %v528 = vadd.f32 %v135, %v527
  %v529 = vpop.f32.mrb[0].mxu0
  %530 = vmatprep.mubr.f32.mxu0 0.0
  %531 = vmatmul.mubr.f32.gmra.mrb[0].mxu0 %v157
  %v532 = vpop.f32.mrb[0].mxu0
  %v533 = vadd.f32 %v135, %v532
  %v534 = vpop.f32.mrb[0].mxu0
  %535 = vmatprep.mubr.f32.mxu0 0.0
  %536 = vmatmul.mubr.f32.gmra.mrb[0].mxu0 %v160
  %v537 = vpop.f32.mrb[0].mxu0
  %v538 = vadd.f32 %v135, %v537
  %v539 = vpop.f32.mrb[0].mxu0
  %540 = vmatprep.mubr.f32.mxu0 0.0
  %541 = vmatmul.mubr.f32.gmra.mrb[0].mxu0 %v163
  %v542 = vpop.f32.mrb[0].mxu0
  %v543 = vadd.f32 %v135, %v542
  %v544 = vpop.f32.mrb[0].mxu0
  %545 = vmatprep.mubr.f32.mxu0 0.0
  %546 = vmatmul.mubr.f32.gmra.mrb[0].mxu0 %v166
  %v547 = vpop.f32.mrb[0].mxu0
  %v548 = vadd.f32 %v135, %v547
  %v549 = vpop.f32.mrb[0].mxu0
  %550 = vmatprep.mubr.f32.mxu0 0.0
  %551 = vmatmul.mubr.f32.gmra.mrb[0].mxu0 %v169
  %v552 = vpop.f32.mrb[0].mxu0
  %v553 = vadd.f32 %v135, %v552
  %v554 = vpop.f32.mrb[0].mxu0
  %555 = vmatprep.mubr.f32.mxu0 0.0
  %556 = vmatmul.mubr.f32.gmra.mrb[0].mxu0 %v172
  %v557 = vpop.f32.mrb[0].mxu0
  %v558 = vadd.f32 %v135, %v557
  %v559 = vpop.f32.mrb[0].mxu0
  %560 = vmatprep.mubr.f32.mxu0 0.0
  %561 = vmatmul.mubr.f32.gmra.mrb[0].mxu0 %v175
  %v562 = vpop.f32.mrb[0].mxu0
  %v563 = vadd.f32 %v135, %v562
  %v564 = vpop.f32.mrb[0].mxu0
  %565 = vmatprep.mubr.f32.mxu0 0.0
  %566 = vmatmul.mubr.f32.gmra.mrb[0].mxu0 %v178
  %v567 = vpop.f32.mrb[0].mxu0
  %v568 = vadd.f32 %v135, %v567
  %v569 = vpop.f32.mrb[0].mxu0
  %570 = vmatprep.mubr.f32.mxu0 0.0
  %571 = vmatmul.mubr.f32.gmra.mrb[0].mxu0 %v181
  %v572 = vpop.f32.mrb[0].mxu0
  %v573 = vadd.f32 %v135, %v572
  %v574 = vpop.f32.mrb[0].mxu0
  %575 = vmatprep.mubr.f32.mxu0 0.0
  %576 = vmatmul.mubr.f32.gmra.mrb[0].mxu0 %v184
  %v577 = vpop.f32.mrb[0].mxu0
  %v578 = vadd.f32 %v135, %v577
  %v579 = vpop.f32.mrb[0].mxu0
  %580 = vmatprep.mubr.f32.mxu0 0.0
  %581 = vmatmul.mubr.f32.gmra.mrb[0].mxu0 %v187
  %v582 = vpop.f32.mrb[0].mxu0
  %v583 = vadd.f32 %v135, %v582
  %v584 = vpop.f32.mrb[0].mxu0
  %585 = vmatprep.mubr.f32.mxu0 0.0
  %586 = vmatmul.mubr.f32.gmra.mrb[0].mxu0 %v190
  %v587 = vpop.f32.mrb[0].mxu0
  %v588 = vadd.f32 %v135, %v587
  %v589 = vpop.f32.mrb[0].mxu0
  %590 = vmatprep.mubr.f32.mxu0 0.0
  %591 = vmatmul.mubr.f32.gmra.mrb[0].mxu0 %v193
  %v592 = vpop.f32.mrb[0].mxu0
  %v593 = vadd.f32 %v135, %v592
  %v594 = vpop.f32.mrb[0].mxu0
  %595 = vmatprep.mubr.f32.mxu0 0.0
  %596 = vmatmul.mubr.f32.gmra.mrb[0].mxu0 %v196
  %v597 = vpop.f32.mrb[0].mxu0
  %v598 = vadd.f32 %v135, %v597
  %v599 = vpop.f32.mrb[0].mxu0
  %600 = vmatprep.mubr.f32.mxu0 0.0
  %601 = vmatmul.mubr.f32.gmra.mrb[0].mxu0 %v199
  %v602 = vpop.f32.mrb[0].mxu0
  %v603 = vadd.f32 %v135, %v602
  %v604 = vpop.f32.mrb[0].mxu0
  %605 = vmatprep.mubr.f32.mxu0 0.0
  %606 = vmatmul.mubr.f32.gmra.mrb[0].mxu0 %v202
  %v607 = vpop.f32.mrb[0].mxu0
  %v608 = vadd.f32 %v135, %v607
  %v609 = vpop.f32.mrb[0].mxu0
  %610 = vmatprep.mubr.f32.mxu0 0.0
  %611 = vmatmul.mubr.f32.gmra.mrb[0].mxu0 %v205
  %v612 = vpop.f32.mrb[0].mxu0
  %v613 = vadd.f32 %v135, %v612
  %v614 = vpop.f32.mrb[0].mxu0
  %615 = vmatprep.mubr.f32.mxu0 0.0
  %616 = vmatmul.mubr.f32.gmra.mrb[0].mxu0 %v208
  %v617 = vpop.f32.mrb[0].mxu0
  %v618 = vadd.f32 %v135, %v617
  %v619 = vpop.f32.mrb[0].mxu0
  %620 = vmatprep.mubr.f32.mxu0 0.0
  %621 = vmatmul.mubr.f32.gmra.mrb[0].mxu0 %v211
  %v622 = vpop.f32.mrb[0].mxu0
  %v623 = vadd.f32 %v135, %v622
  %v624 = vpop.f32.mrb[0].mxu0
  %625 = vmatprep.mubr.f32.mxu0 0.0
  %626 = vmatmul.mubr.f32.gmra.mrb[0].mxu0 %v214
  %v627 = vpop.f32.mrb[0].mxu0
  %v628 = vadd.f32 %v135, %v627
  %v629 = vpop.f32.mrb[0].mxu0
  %630 = vmatprep.mubr.f32.mxu0 0.0
  %631 = vmatmul.mubr.f32.gmra.mrb[0].mxu0 %v217
  %v632 = vpop.f32.mrb[0].mxu0
  %v633 = vadd.f32 %v135, %v632
  %v634 = vpop.f32.mrb[0].mxu0
  %635 = vmatprep.mubr.f32.mxu0 0.0
  %636 = vmatmul.mubr.f32.gmra.mrb[0].mxu0 %v220
  %v637 = vpop.f32.mrb[0].mxu0
  %v638 = vadd.f32 %v135, %v637
  %v639 = vpop.f32.mrb[0].mxu0
  %640 = vmatprep.mubr.f32.mxu0 0.0
  %641 = vmatmul.mubr.f32.gmra.mrb[0].mxu0 %v223
  %v642 = vpop.f32.mrb[0].mxu0
  %v643 = vadd.f32 %v135, %v642
  %v644 = vpop.f32.mrb[0].mxu0
  %645 = vmatprep.mubr.f32.mxu0 0.0
  %646 = vmatmul.mubr.f32.gmra.mrb[0].mxu0 %v226
  %v647 = vpop.f32.mrb[0].mxu0
  %v648 = vadd.f32 %v135, %v647
  %v649 = vpop.f32.mrb[0].mxu0
  %650 = vmatprep.mubr.f32.mxu0 0.0
  %651 = vmatmul.mubr.f32.gmra.mrb[0].mxu0 %v229
  %v652 = vpop.f32.mrb[0].mxu0
  %v653 = vadd.f32 %v135, %v652
  %v654 = vpop.f32.mrb[0].mxu0
  %655 = vmatprep.mubr.f32.mxu0 0.0
  %656 = vmatmul.mubr.f32.gmra.mrb[0].mxu0 %v232
  %v657 = vpop.f32.mrb[0].mxu0
  %v658 = vadd.f32 %v135, %v657
  %v659 = vpop.f32.mrb[0].mxu0
  %660 = vmatprep.mubr.f32.mxu0 0.0
  %661 = vmatmul.mubr.f32.gmra.mrb[0].mxu0 %v235
  %v662 = vpop.f32.mrb[0].mxu0
  %v663 = vadd.f32 %v135, %v662
  %v664 = vpop.f32.mrb[0].mxu0
  %665 = vmatprep.mubr.f32.mxu0 0.0
  %666 = vmatmul.mubr.f32.gmra.mrb[0].mxu0 %v238
  %v667 = vpop.f32.mrb[0].mxu0
  %v668 = vadd.f32 %v135, %v667
  %v669 = vpop.f32.mrb[0].mxu0
  %670 = vmatprep.mubr.f32.mxu0 0.0
  %671 = vmatmul.mubr.f32.gmra.mrb[0].mxu0 %v241
  %v672 = vpop.f32.mrb[0].mxu0
  %v673 = vadd.f32 %v135, %v672
  %v674 = vpop.f32.mrb[0].mxu0
  %675 = vmatprep.mubr.f32.mxu0 0.0
  %676 = vmatmul.mubr.f32.gmra.mrb[0].mxu0 %v244
  %v677 = vpop.f32.mrb[0].mxu0
  %v678 = vadd.f32 %v135, %v677
  %v679 = vpop.f32.mrb[0].mxu0
  %680 = vmatprep.mubr.f32.mxu0 0.0
  %681 = vmatmul.mubr.f32.gmra.mrb[0].mxu0 %v247
  %v682 = vpop.f32.mrb[0].mxu0
  %v683 = vadd.f32 %v135, %v682
  %v684 = vpop.f32.mrb[0].mxu0
  %685 = vmatprep.mubr.f32.mxu0 0.0
  %686 = vmatmul.mubr.f32.gmra.mrb[0].mxu0 %v250
  %v687 = vpop.f32.mrb[0].mxu0
  %v688 = vadd.f32 %v135, %v687
  %v689 = vpop.f32.mrb[0].mxu0
  %690 = vmatprep.mubr.f32.mxu0 0.0
  %691 = vmatmul.mubr.f32.gmra.mrb[0].mxu0 %v253
  %v692 = vpop.f32.mrb[0].mxu0
  %v693 = vadd.f32 %v135, %v692
  %v694 = vpop.f32.mrb[0].mxu0
  %695 = vmatprep.mubr.f32.mxu0 0.0
  %696 = vmatmul.mubr.f32.gmra.mrb[0].mxu0 %v256
  %v697 = vpop.f32.mrb[0].mxu0
  %v698 = vadd.f32 %v135, %v697
  %v699 = vpop.f32.mrb[0].mxu0
  %700 = vmatprep.mubr.f32.mxu0 0.0
  %701 = vmatmul.mubr.f32.gmra.mrb[0].mxu0 %v259
  %v702 = vpop.f32.mrb[0].mxu0
  %v703 = vadd.f32 %v135, %v702
  %v704 = vpop.f32.mrb[0].mxu0
  %705 = vmatprep.mubr.f32.mxu0 0.0
  %706 = vmatmul.mubr.f32.gmra.mrb[0].mxu0 %v262
  %v707 = vpop.f32.mrb[0].mxu0
  %v708 = vadd.f32 %v135, %v707
  %v709 = vpop.f32.mrb[0].mxu0
  %710 = vmatprep.mubr.f32.mxu0 0.0
  %711 = vmatmul.mubr.f32.gmra.mrb[0].mxu0 %v265
  %v712 = vpop.f32.mrb[0].mxu0
  %v713 = vadd.f32 %v135, %v712
  %v714 = vpop.f32.mrb[0].mxu0
  %715 = vmatprep.mubr.f32.mxu0 0.0
  %716 = vmatmul.mubr.f32.gmra.mrb[0].mxu0 %v268
  %v717 = vpop.f32.mrb[0].mxu0
  %v718 = vadd.f32 %v135, %v717
  %v719 = vpop.f32.mrb[0].mxu0
  %720 = vmatprep.mubr.f32.mxu0 0.0
  %721 = vmatmul.mubr.f32.gmra.mrb[0].mxu0 %v271
  %v722 = vpop.f32.mrb[0].mxu0
  %v723 = vadd.f32 %v135, %v722
  %v724 = vpop.f32.mrb[0].mxu0
  %725 = vmatprep.mubr.f32.mxu0 0.0
  %726 = vmatmul.mubr.f32.gmra.mrb[0].mxu0 %v274
  %v727 = vpop.f32.mrb[0].mxu0
  %v728 = vadd.f32 %v135, %v727
  %v729 = vpop.f32.mrb[0].mxu0
  %730 = vmatprep.mubr.f32.mxu0 0.0
  %731 = vmatmul.mubr.f32.gmra.mrb[0].mxu0 %v277
  %v732 = vpop.f32.mrb[0].mxu0
  %v733 = vadd.f32 %v135, %v732
  %v734 = vpop.f32.mrb[0].mxu0
  %735 = vmatprep.mubr.f32.mxu0 0.0
  %736 = vmatmul.mubr.f32.gmra.mrb[0].mxu0 %v280
  %v737 = vpop.f32.mrb[0].mxu0
  %v738 = vadd.f32 %v135, %v737
  %v739 = vpop.f32.mrb[0].mxu0
  %740 = vmatprep.mubr.f32.mxu0 0.0
  %741 = vmatmul.mubr.f32.gmra.mrb[0].mxu0 %v283
  %v742 = vpop.f32.mrb[0].mxu0
  %v743 = vadd.f32 %v135, %v742
  %v744 = vpop.f32.mrb[0].mxu0
  %745 = vmatprep.mubr.f32.mxu0 0.0
  %746 = vmatmul.mubr.f32.gmra.mrb[0].mxu0 %v286
  %v747 = vpop.f32.mrb[0].mxu0
  %v748 = vadd.f32 %v135, %v747
  %v749 = vpop.f32.mrb[0].mxu0
  %750 = vmatprep.mubr.f32.mxu0 0.0
  %751 = vmatmul.mubr.f32.gmra.mrb[0].mxu0 %v289
  %v752 = vpop.f32.mrb[0].mxu0
  %v753 = vadd.f32 %v135, %v752
  %v754 = vpop.f32.mrb[0].mxu0
  %755 = vmatprep.mubr.f32.mxu0 0.0
  %756 = vmatmul.mubr.f32.gmra.mrb[0].mxu0 %v292
  %v757 = vpop.f32.mrb[0].mxu0
  %v758 = vadd.f32 %v135, %v757
  %v759 = vpop.f32.mrb[0].mxu0
  %760 = vmatprep.mubr.f32.mxu0 0.0
  %761 = vmatmul.mubr.f32.gmra.mrb[0].mxu0 %v295
  %v762 = vpop.f32.mrb[0].mxu0
  %v763 = vadd.f32 %v135, %v762
  %v764 = vpop.f32.mrb[0].mxu0
  %765 = vmatprep.mubr.f32.mxu0 0.0
  %766 = vmatmul.mubr.f32.gmra.mrb[0].mxu0 %v298
  %v767 = vpop.f32.mrb[0].mxu0
  %v768 = vadd.f32 %v135, %v767
  %v769 = vpop.f32.mrb[0].mxu0
  %770 = vmatprep.mubr.f32.mxu0 0.0
  %771 = vmatmul.mubr.f32.gmra.mrb[0].mxu0 %v301
  %v772 = vpop.f32.mrb[0].mxu0
  %v773 = vadd.f32 %v135, %v772
  %v774 = vpop.f32.mrb[0].mxu0
  %775 = vmatprep.mubr.f32.mxu0 0.0
  %776 = vmatmul.mubr.f32.gmra.mrb[0].mxu0 %v304
  %v777 = vpop.f32.mrb[0].mxu0
  %v778 = vadd.f32 %v135, %v777
  %v779 = vpop.f32.mrb[0].mxu0
  %780 = vmatprep.mubr.f32.mxu0 0.0
  %781 = vmatmul.mubr.f32.gmra.mrb[0].mxu0 %v307
  %v782 = vpop.f32.mrb[0].mxu0
  %v783 = vadd.f32 %v135, %v782
  %v784 = vpop.f32.mrb[0].mxu0
  %785 = vmatprep.mubr.f32.mxu0 0.0
  %786 = vmatmul.mubr.f32.gmra.mrb[0].mxu0 %v310
  %v787 = vpop.f32.mrb[0].mxu0
  %v788 = vadd.f32 %v135, %v787
  %v789 = vpop.f32.mrb[0].mxu0
  %790 = vmatprep.mubr.f32.mxu0 0.0
  %791 = vmatmul.mubr.f32.gmra.mrb[0].mxu0 %v313
  %v792 = vpop.f32.mrb[0].mxu0
  %v793 = vadd.f32 %v135, %v792
  %v794 = vpop.f32.mrb[0].mxu0
  %795 = vmatprep.mubr.f32.mxu0 0.0
  %796 = vmatmul.mubr.f32.gmra.mrb[0].mxu0 %v316
  %v797 = vpop.f32.mrb[0].mxu0
  %v798 = vadd.f32 %v135, %v797
  %v799 = vpop.f32.mrb[0].mxu0
  %800 = vmatprep.mubr.f32.mxu0 0.0
  %801 = vmatmul.mubr.f32.gmra.mrb[0].mxu0 %v319
  %v802 = vpop.f32.mrb[0].mxu0
  %v803 = vadd.f32 %v135, %v802
  %v804 = vpop.f32.mrb[0].mxu0
  %805 = vmatprep.mubr.f32.mxu0 0.0
  %806 = vmatmul.mubr.f32.gmra.mrb[0].mxu0 %v322
  %v807 = vpop.f32.mrb[0].mxu0
  %v808 = vadd.f32 %v135, %v807
  %v809 = vpop.f32.mrb[0].mxu0
  %810 = vmatprep.mubr.f32.mxu0 0.0
  %811 = vmatmul.mubr.f32.gmra.mrb[0].mxu0 %v325
  %v812 = vpop.f32.mrb[0].mxu0
  %v813 = vadd.f32 %v135, %v812
  %v814 = vpop.f32.mrb[0].mxu0
  %815 = vmatprep.mubr.f32.mxu0 0.0
  %816 = vmatmul.mubr.f32.gmra.mrb[0].mxu0 %v328
  %v817 = vpop.f32.mrb[0].mxu0
  %v818 = vadd.f32 %v135, %v817
  %v819 = vpop.f32.mrb[0].mxu0
  %820 = vmatprep.mubr.f32.mxu0 0.0
  %821 = vmatmul.mubr.f32.gmra.mrb[0].mxu0 %v331
  %v822 = vpop.f32.mrb[0].mxu0
  %v823 = vadd.f32 %v135, %v822
  %v824 = vpop.f32.mrb[0].mxu0
  %825 = vmatprep.mubr.f32.mxu0 0.0
  %826 = vmatmul.mubr.f32.gmra.mrb[0].mxu0 %v334
  %v827 = vpop.f32.mrb[0].mxu0
  %v828 = vadd.f32 %v135, %v827
  %v829 = vpop.f32.mrb[0].mxu0
  %830 = vmatprep.mubr.f32.mxu0 0.0
  %831 = vmatmul.mubr.f32.gmra.mrb[0].mxu0 %v337
  %v832 = vpop.f32.mrb[0].mxu0
  %v833 = vadd.f32 %v135, %v832
  %v834 = vpop.f32.mrb[0].mxu0
  %835 = vmatprep.mubr.f32.mxu0 0.0
  %836 = vmatmul.mubr.f32.gmra.mrb[0].mxu0 %v340
  %v837 = vpop.f32.mrb[0].mxu0
  %v838 = vadd.f32 %v135, %v837
  %v839 = vpop.f32.mrb[0].mxu0
  %840 = vmatprep.mubr.f32.mxu0 0.0
  %841 = vmatmul.mubr.f32.gmra.mrb[0].mxu0 %v343
  %v842 = vpop.f32.mrb[0].mxu0
  %v843 = vadd.f32 %v135, %v842
  %v844 = vpop.f32.mrb[0].mxu0
  %845 = vmatprep.mubr.f32.mxu0 0.0
  %846 = vmatmul.mubr.f32.gmra.mrb[0].mxu0 %v346
  %v847 = vpop.f32.mrb[0].mxu0
  %v848 = vadd.f32 %v135, %v847
  %v849 = vpop.f32.mrb[0].mxu0
  %850 = vmatprep.mubr.f32.mxu0 0.0
  %851 = vmatmul.mubr.f32.gmra.mrb[0].mxu0 %v349
  %v852 = vpop.f32.mrb[0].mxu0
  %v853 = vadd.f32 %v135, %v852
  %v854 = vpop.f32.mrb[0].mxu0
  %855 = vmatprep.mubr.f32.mxu0 0.0
  %856 = vmatmul.mubr.f32.gmra.mrb[0].mxu0 %v352
  %v857 = vpop.f32.mrb[0].mxu0
  %v858 = vadd.f32 %v135, %v857
  %v859 = vpop.f32.mrb[0].mxu0
  %860 = vmatprep.mubr.f32.mxu0 0.0
  %861 = vmatmul.mubr.f32.gmra.mrb[0].mxu0 %v355
  %v862 = vpop.f32.mrb[0].mxu0
  %v863 = vadd.f32 %v135, %v862
  %v864 = vpop.f32.mrb[0].mxu0
  %865 = vmatprep.mubr.f32.mxu0 0.0
  %866 = vmatmul.mubr.f32.gmra.mrb[0].mxu0 %v358
  %v867 = vpop.f32.mrb[0].mxu0
  %v868 = vadd.f32 %v135, %v867
  %v869 = vpop.f32.mrb[0].mxu0
  %870 = vmatprep.mubr.f32.mxu0 0.0
  %871 = vmatmul.mubr.f32.gmra.mrb[0].mxu0 %v361
  %v872 = vpop.f32.mrb[0].mxu0
  %v873 = vadd.f32 %v135, %v872
  %v874 = vpop.f32.mrb[0].mxu0
  %875 = vmatprep.mubr.f32.mxu0 0.0
  %876 = vmatmul.mubr.f32.gmra.mrb[0].mxu0 %v364
  %v877 = vpop.f32.mrb[0].mxu0
  %v878 = vadd.f32 %v135, %v877
  %v879 = vpop.f32.mrb[0].mxu0
  %880 = vmatprep.mubr.f32.mxu0 0.0
  %881 = vmatmul.mubr.f32.gmra.mrb[0].mxu0 %v367
  %v882 = vpop.f32.mrb[0].mxu0
  %v883 = vadd.f32 %v135, %v882
  %v884 = vpop.f32.mrb[0].mxu0
  %885 = vmatprep.mubr.f32.mxu0 0.0
  %886 = vmatmul.mubr.f32.gmra.mrb[0].mxu0 %v370
  %v887 = vpop.f32.mrb[0].mxu0
  %v888 = vadd.f32 %v135, %v887
  %v889 = vpop.f32.mrb[0].mxu0
  %890 = vmatprep.mubr.f32.mxu0 0.0
  %891 = vmatmul.mubr.f32.gmra.mrb[0].mxu0 %v373
  %v892 = vpop.f32.mrb[0].mxu0
  %v893 = vadd.f32 %v135, %v892
  %v894 = vpop.f32.mrb[0].mxu0
  %895 = vmatprep.mubr.f32.mxu0 0.0
  %896 = vmatmul.mubr.f32.gmra.mrb[0].mxu0 %v376
  %v897 = vpop.f32.mrb[0].mxu0
  %v898 = vadd.f32 %v135, %v897
  %v899 = vpop.f32.mrb[0].mxu0
  %900 = vmatprep.mubr.f32.mxu0 0.0
  %901 = vmatmul.mubr.f32.gmra.mrb[0].mxu0 %v379
  %v902 = vpop.f32.mrb[0].mxu0
  %v903 = vadd.f32 %v135, %v902
  %v904 = vpop.f32.mrb[0].mxu0
  %905 = vmatprep.mubr.f32.mxu0 0.0
  %906 = vmatmul.mubr.f32.gmra.mrb[0].mxu0 %v382
  %v907 = vpop.f32.mrb[0].mxu0
  %v908 = vadd.f32 %v135, %v907
  %v909 = vpop.f32.mrb[0].mxu0
  %910 = vmatprep.mubr.f32.mxu0 0.0
  %911 = vmatmul.mubr.f32.gmra.mrb[0].mxu0 %v385
  %v912 = vpop.f32.mrb[0].mxu0
  %v913 = vadd.f32 %v135, %v912
  %v914 = vpop.f32.mrb[0].mxu0
  %915 = vmatprep.mubr.f32.mxu0 0.0
  %916 = vmatmul.mubr.f32.gmra.mrb[0].mxu0 %v388
  %v917 = vpop.f32.mrb[0].mxu0
  %v918 = vadd.f32 %v135, %v917
  %v919 = vpop.f32.mrb[0].mxu0
  %920 = vmatprep.mubr.f32.mxu0 0.0
  %921 = vmatmul.mubr.f32.gmra.mrb[0].mxu0 %v391
  %v922 = vpop.f32.mrb[0].mxu0
  %v923 = vadd.f32 %v135, %v922
  %v924 = vpop.f32.mrb[0].mxu0
  %925 = vmatprep.mubr.f32.mxu0 0.0
  %926 = vmatmul.mubr.f32.gmra.mrb[0].mxu0 %v394
  %v927 = vpop.f32.mrb[0].mxu0
  %v928 = vadd.f32 %v135, %v927
  %v929 = vpop.f32.mrb[0].mxu0
  %930 = vmatprep.mubr.f32.mxu0 0.0
  %931 = vmatmul.mubr.f32.gmra.mrb[0].mxu0 %v397
  %v932 = vpop.f32.mrb[0].mxu0
  %v933 = vadd.f32 %v135, %v932
  %v934 = vpop.f32.mrb[0].mxu0
  %935 = vmatprep.mubr.f32.mxu0 0.0
  %936 = vmatmul.mubr.f32.gmra.mrb[0].mxu0 %v400
  %v937 = vpop.f32.mrb[0].mxu0
  %v938 = vadd.f32 %v135, %v937
  %v939 = vpop.f32.mrb[0].mxu0
  %940 = vmatprep.mubr.f32.mxu0 0.0
  %941 = vmatmul.mubr.f32.gmra.mrb[0].mxu0 %v403
  %v942 = vpop.f32.mrb[0].mxu0
  %v943 = vadd.f32 %v135, %v942
  %v944 = vpop.f32.mrb[0].mxu0
  %945 = vmatprep.mubr.f32.mxu0 0.0
  %946 = vmatmul.mubr.f32.gmra.mrb[0].mxu0 %v406
  %v947 = vpop.f32.mrb[0].mxu0
  %v948 = vadd.f32 %v135, %v947
  %v949 = vpop.f32.mrb[0].mxu0
  %950 = vmatprep.mubr.f32.mxu0 0.0
  %951 = vmatmul.mubr.f32.gmra.mrb[0].mxu0 %v409
  %v952 = vpop.f32.mrb[0].mxu0
  %v953 = vadd.f32 %v135, %v952
  %v954 = vpop.f32.mrb[0].mxu0
  %955 = vmatprep.mubr.f32.mxu0 0.0
  %956 = vmatmul.mubr.f32.gmra.mrb[0].mxu0 %v412
  %v957 = vpop.f32.mrb[0].mxu0
  %v958 = vadd.f32 %v135, %v957
  %v959 = vpop.f32.mrb[0].mxu0
  %960 = vmatprep.mubr.f32.mxu0 0.0
  %961 = vmatmul.mubr.f32.gmra.mrb[0].mxu0 %v415
  %v962 = vpop.f32.mrb[0].mxu0
  %v963 = vadd.f32 %v135, %v962
  %v964 = vpop.f32.mrb[0].mxu0
  %965 = vmatprep.mubr.f32.mxu0 0.0
  %966 = vmatmul.mubr.f32.gmra.mrb[0].mxu0 %v418
  %v967 = vpop.f32.mrb[0].mxu0
  %v968 = vadd.f32 %v135, %v967
  %v969 = vpop.f32.mrb[0].mxu0
  %970 = vmatprep.mubr.f32.mxu0 0.0
  %971 = vmatmul.mubr.f32.gmra.mrb[0].mxu0 %v421
  %v972 = vpop.f32.mrb[0].mxu0
  %v973 = vadd.f32 %v135, %v972
  %v974 = vpop.f32.mrb[0].mxu0
  %975 = vmatprep.mubr.f32.mxu0 0.0
  %976 = vmatmul.mubr.f32.gmra.mrb[0].mxu0 %v424
  %v977 = vpop.f32.mrb[0].mxu0
  %v978 = vadd.f32 %v135, %v977
  %v979 = vpop.f32.mrb[0].mxu0
  %980 = vmatprep.mubr.f32.mxu0 0.0
  %981 = vmatmul.mubr.f32.gmra.mrb[0].mxu0 %v427
  %v982 = vpop.f32.mrb[0].mxu0
  %v983 = vadd.f32 %v135, %v982
  %v984 = vpop.f32.mrb[0].mxu0
  %985 = vmatprep.mubr.f32.mxu0 0.0
  %986 = vmatmul.mubr.f32.gmra.mrb[0].mxu0 %v430
  %v987 = vpop.f32.mrb[0].mxu0
  %v988 = vadd.f32 %v135, %v987
  %v989 = vpop.f32.mrb[0].mxu0
  %990 = vdwg.mxu0
  %v991 = vmax.f32 %v503, 0.0
  %v992 = vmax.f32 %v508, 0.0
  %v993 = vmax.f32 %v513, 0.0
  %v994 = vmax.f32 %v518, 0.0
  %v995 = vmax.f32 %v523, 0.0
  %v996 = vmax.f32 %v528, 0.0
  %v997 = vmax.f32 %v533, 0.0
  %v998 = vmax.f32 %v538, 0.0
  %v999 = vmax.f32 %v543, 0.0
  %v1000 = vmax.f32 %v548, 0.0
  %v1001 = vmax.f32 %v553, 0.0
  %v1002 = vmax.f32 %v558, 0.0
  %v1003 = vmax.f32 %v563, 0.0
  %v1004 = vmax.f32 %v568, 0.0
  %v1005 = vmax.f32 %v573, 0.0
  %v1006 = vmax.f32 %v578, 0.0
  %v1007 = vmax.f32 %v583, 0.0
  %v1008 = vmax.f32 %v588, 0.0
  %v1009 = vmax.f32 %v593, 0.0
  %v1010 = vmax.f32 %v598, 0.0
  %v1011 = vmax.f32 %v603, 0.0
  %v1012 = vmax.f32 %v608, 0.0
  %v1013 = vmax.f32 %v613, 0.0
  %v1014 = vmax.f32 %v618, 0.0
  %v1015 = vmax.f32 %v623, 0.0
  %v1016 = vmax.f32 %v628, 0.0
  %v1017 = vmax.f32 %v633, 0.0
  %v1018 = vmax.f32 %v638, 0.0
  %v1019 = vmax.f32 %v643, 0.0
  %v1020 = vmax.f32 %v648, 0.0
  %v1021 = vmax.f32 %v653, 0.0
  %v1022 = vmax.f32 %v658, 0.0
  %v1023 = vmax.f32 %v663, 0.0
  %v1024 = vmax.f32 %v668, 0.0
  %v1025 = vmax.f32 %v673, 0.0
  %v1026 = vmax.f32 %v678, 0.0
  %v1027 = vmax.f32 %v683, 0.0
  %v1028 = vmax.f32 %v688, 0.0
  %v1029 = vmax.f32 %v693, 0.0
  %v1030 = vmax.f32 %v698, 0.0
  %v1031 = vmax.f32 %v703, 0.0
  %v1032 = vmax.f32 %v708, 0.0
  %v1033 = vmax.f32 %v713, 0.0
  %v1034 = vmax.f32 %v718, 0.0
  %v1035 = vmax.f32 %v723, 0.0
  %v1036 = vmax.f32 %v728, 0.0
  %v1037 = vmax.f32 %v733, 0.0
  %v1038 = vmax.f32 %v738, 0.0
  %v1039 = vmax.f32 %v743, 0.0
  %v1040 = vmax.f32 %v748, 0.0
  %v1041 = vmax.f32 %v753, 0.0
  %v1042 = vmax.f32 %v758, 0.0
  %v1043 = vmax.f32 %v763, 0.0
  %v1044 = vmax.f32 %v768, 0.0
  %v1045 = vmax.f32 %v773, 0.0
  %v1046 = vmax.f32 %v778, 0.0
  %v1047 = vmax.f32 %v783, 0.0
  %v1048 = vmax.f32 %v788, 0.0
  %v1049 = vmax.f32 %v793, 0.0
  %v1050 = vmax.f32 %v798, 0.0
  %v1051 = vmax.f32 %v803, 0.0
  %v1052 = vmax.f32 %v808, 0.0
  %v1053 = vmax.f32 %v813, 0.0
  %v1054 = vmax.f32 %v818, 0.0
  %v1055 = vmax.f32 %v823, 0.0
  %v1056 = vmax.f32 %v828, 0.0
  %v1057 = vmax.f32 %v833, 0.0
  %v1058 = vmax.f32 %v838, 0.0
  %v1059 = vmax.f32 %v843, 0.0
  %v1060 = vmax.f32 %v848, 0.0
  %v1061 = vmax.f32 %v853, 0.0
  %v1062 = vmax.f32 %v858, 0.0
  %v1063 = vmax.f32 %v863, 0.0
  %v1064 = vmax.f32 %v868, 0.0
  %v1065 = vmax.f32 %v873, 0.0
  %v1066 = vmax.f32 %v878, 0.0
  %v1067 = vmax.f32 %v883, 0.0
  %v1068 = vmax.f32 %v888, 0.0
  %v1069 = vmax.f32 %v893, 0.0
  %v1070 = vmax.f32 %v898, 0.0
  %v1071 = vmax.f32 %v903, 0.0
  %v1072 = vmax.f32 %v908, 0.0
  %v1073 = vmax.f32 %v913, 0.0
  %v1074 = vmax.f32 %v918, 0.0
  %v1075 = vmax.f32 %v923, 0.0
  %v1076 = vmax.f32 %v928, 0.0
  %v1077 = vmax.f32 %v933, 0.0
  %v1078 = vmax.f32 %v938, 0.0
  %v1079 = vmax.f32 %v943, 0.0
  %v1080 = vmax.f32 %v948, 0.0
  %v1081 = vmax.f32 %v953, 0.0
  %v1082 = vmax.f32 %v958, 0.0
  %v1083 = vmax.f32 %v963, 0.0
  %v1084 = vmax.f32 %v968, 0.0
  %v1085 = vmax.f32 %v973, 0.0
  %v1086 = vmax.f32 %v978, 0.0
  %v1087 = vmax.f32 %v983, 0.0
  %v1088 = vmax.f32 %v988, 0.0
  %vm1089 = vcmask 130048
  %1090 = vst.msk [vmem:[#allocation2] sm:$0xff] %vm1089, %v991
  %1091 = vst.msk [vmem:[#allocation2 + $0x8] sm:$0xff] %vm1089, %v992
  %1092 = vst.msk [vmem:[#allocation2 + $0x10] sm:$0xff] %vm1089, %v993
  %1093 = vst.msk [vmem:[#allocation2 + $0x18] sm:$0xff] %vm1089, %v994
  %1094 = vst.msk [vmem:[#allocation2 + $0x20] sm:$0xff] %vm1089, %v995
  %1095 = vst.msk [vmem:[#allocation2 + $0x28] sm:$0xff] %vm1089, %v996
  %1096 = vst.msk [vmem:[#allocation2 + $0x30] sm:$0xff] %vm1089, %v997
  %1097 = vst.msk [vmem:[#allocation2 + $0x38] sm:$0xff] %vm1089, %v998
  %1098 = vst.msk [vmem:[#allocation2 + $0x40] sm:$0xff] %vm1089, %v999
  %1099 = vst.msk [vmem:[#allocation2 + $0x48] sm:$0xff] %vm1089, %v1000
  %1100 = vst.msk [vmem:[#allocation2 + $0x50] sm:$0xff] %vm1089, %v1001
  %1101 = vst.msk [vmem:[#allocation2 + $0x58] sm:$0xff] %vm1089, %v1002
  %1102 = vst.msk [vmem:[#allocation2 + $0x60] sm:$0xff] %vm1089, %v1003
  %1103 = vst.msk [vmem:[#allocation2 + $0x68] sm:$0xff] %vm1089, %v1004
  %1104 = vst.msk [vmem:[#allocation2 + $0x70] sm:$0xff] %vm1089, %v1005
  %1105 = vst.msk [vmem:[#allocation2 + $0x78] sm:$0xff] %vm1089, %v1006
  %1106 = vst.msk [vmem:[#allocation2 + $0x80] sm:$0xff] %vm1089, %v1007
  %1107 = vst.msk [vmem:[#allocation2 + $0x88] sm:$0xff] %vm1089, %v1008
  %1108 = vst.msk [vmem:[#allocation2 + $0x90] sm:$0xff] %vm1089, %v1009
  %1109 = vst.msk [vmem:[#allocation2 + $0x98] sm:$0xff] %vm1089, %v1010
  %1110 = vst.msk [vmem:[#allocation2 + $0xa0] sm:$0xff] %vm1089, %v1011
  %1111 = vst.msk [vmem:[#allocation2 + $0xa8] sm:$0xff] %vm1089, %v1012
  %1112 = vst.msk [vmem:[#allocation2 + $0xb0] sm:$0xff] %vm1089, %v1013
  %1113 = vst.msk [vmem:[#allocation2 + $0xb8] sm:$0xff] %vm1089, %v1014
  %1114 = vst.msk [vmem:[#allocation2 + $0xc0] sm:$0xff] %vm1089, %v1015
  %1115 = vst.msk [vmem:[#allocation2 + $0xc8] sm:$0xff] %vm1089, %v1016
  %1116 = vst.msk [vmem:[#allocation2 + $0xd0] sm:$0xff] %vm1089, %v1017
  %1117 = vst.msk [vmem:[#allocation2 + $0xd8] sm:$0xff] %vm1089, %v1018
  %1118 = vst.msk [vmem:[#allocation2 + $0xe0] sm:$0xff] %vm1089, %v1019
  %1119 = vst.msk [vmem:[#allocation2 + $0xe8] sm:$0xff] %vm1089, %v1020
  %1120 = vst.msk [vmem:[#allocation2 + $0xf0] sm:$0xff] %vm1089, %v1021
  %1121 = vst.msk [vmem:[#allocation2 + $0xf8] sm:$0xff] %vm1089, %v1022
  %1122 = vst.msk [vmem:[#allocation2 + $0x100] sm:$0xff] %vm1089, %v1023
  %1123 = vst.msk [vmem:[#allocation2 + $0x108] sm:$0xff] %vm1089, %v1024
  %1124 = vst.msk [vmem:[#allocation2 + $0x110] sm:$0xff] %vm1089, %v1025
  %1125 = vst.msk [vmem:[#allocation2 + $0x118] sm:$0xff] %vm1089, %v1026
  %1126 = vst.msk [vmem:[#allocation2 + $0x120] sm:$0xff] %vm1089, %v1027
  %1127 = vst.msk [vmem:[#allocation2 + $0x128] sm:$0xff] %vm1089, %v1028
  %1128 = vst.msk [vmem:[#allocation2 + $0x130] sm:$0xff] %vm1089, %v1029
  %1129 = vst.msk [vmem:[#allocation2 + $0x138] sm:$0xff] %vm1089, %v1030
  %1130 = vst.msk [vmem:[#allocation2 + $0x140] sm:$0xff] %vm1089, %v1031
  %1131 = vst.msk [vmem:[#allocation2 + $0x148] sm:$0xff] %vm1089, %v1032
  %1132 = vst.msk [vmem:[#allocation2 + $0x150] sm:$0xff] %vm1089, %v1033
  %1133 = vst.msk [vmem:[#allocation2 + $0x158] sm:$0xff] %vm1089, %v1034
  %1134 = vst.msk [vmem:[#allocation2 + $0x160] sm:$0xff] %vm1089, %v1035
  %1135 = vst.msk [vmem:[#allocation2 + $0x168] sm:$0xff] %vm1089, %v1036
  %1136 = vst.msk [vmem:[#allocation2 + $0x170] sm:$0xff] %vm1089, %v1037
  %1137 = vst.msk [vmem:[#allocation2 + $0x178] sm:$0xff] %vm1089, %v1038
  %1138 = vst.msk [vmem:[#allocation2 + $0x180] sm:$0xff] %vm1089, %v1039
  %1139 = vst.msk [vmem:[#allocation2 + $0x188] sm:$0xff] %vm1089, %v1040
  %1140 = vst.msk [vmem:[#allocation2 + $0x190] sm:$0xff] %vm1089, %v1041
  %1141 = vst.msk [vmem:[#allocation2 + $0x198] sm:$0xff] %vm1089, %v1042
  %1142 = vst.msk [vmem:[#allocation2 + $0x1a0] sm:$0xff] %vm1089, %v1043
  %1143 = vst.msk [vmem:[#allocation2 + $0x1a8] sm:$0xff] %vm1089, %v1044
  %1144 = vst.msk [vmem:[#allocation2 + $0x1b0] sm:$0xff] %vm1089, %v1045
  %1145 = vst.msk [vmem:[#allocation2 + $0x1b8] sm:$0xff] %vm1089, %v1046
  %1146 = vst.msk [vmem:[#allocation2 + $0x1c0] sm:$0xff] %vm1089, %v1047
  %1147 = vst.msk [vmem:[#allocation2 + $0x1c8] sm:$0xff] %vm1089, %v1048
  %1148 = vst.msk [vmem:[#allocation2 + $0x1d0] sm:$0xff] %vm1089, %v1049
  %1149 = vst.msk [vmem:[#allocation2 + $0x1d8] sm:$0xff] %vm1089, %v1050
  %1150 = vst.msk [vmem:[#allocation2 + $0x1e0] sm:$0xff] %vm1089, %v1051
  %1151 = vst.msk [vmem:[#allocation2 + $0x1e8] sm:$0xff] %vm1089, %v1052
  %1152 = vst.msk [vmem:[#allocation2 + $0x1f0] sm:$0xff] %vm1089, %v1053
  %1153 = vst.msk [vmem:[#allocation2 + $0x1f8] sm:$0xff] %vm1089, %v1054
  %1154 = vst.msk [vmem:[#allocation2 + $0x200] sm:$0xff] %vm1089, %v1055
  %1155 = vst.msk [vmem:[#allocation2 + $0x208] sm:$0xff] %vm1089, %v1056
  %1156 = vst.msk [vmem:[#allocation2 + $0x210] sm:$0xff] %vm1089, %v1057
  %1157 = vst.msk [vmem:[#allocation2 + $0x218] sm:$0xff] %vm1089, %v1058
  %1158 = vst.msk [vmem:[#allocation2 + $0x220] sm:$0xff] %vm1089, %v1059
  %1159 = vst.msk [vmem:[#allocation2 + $0x228] sm:$0xff] %vm1089, %v1060
  %1160 = vst.msk [vmem:[#allocation2 + $0x230] sm:$0xff] %vm1089, %v1061
  %1161 = vst.msk [vmem:[#allocation2 + $0x238] sm:$0xff] %vm1089, %v1062
  %1162 = vst.msk [vmem:[#allocation2 + $0x240] sm:$0xff] %vm1089, %v1063
  %1163 = vst.msk [vmem:[#allocation2 + $0x248] sm:$0xff] %vm1089, %v1064
  %1164 = vst.msk [vmem:[#allocation2 + $0x250] sm:$0xff] %vm1089, %v1065
  %1165 = vst.msk [vmem:[#allocation2 + $0x258] sm:$0xff] %vm1089, %v1066
  %1166 = vst.msk [vmem:[#allocation2 + $0x260] sm:$0xff] %vm1089, %v1067
  %1167 = vst.msk [vmem:[#allocation2 + $0x268] sm:$0xff] %vm1089, %v1068
  %1168 = vst.msk [vmem:[#allocation2 + $0x270] sm:$0xff] %vm1089, %v1069
  %1169 = vst.msk [vmem:[#allocation2 + $0x278] sm:$0xff] %vm1089, %v1070
  %1170 = vst.msk [vmem:[#allocation2 + $0x280] sm:$0xff] %vm1089, %v1071
  %1171 = vst.msk [vmem:[#allocation2 + $0x288] sm:$0xff] %vm1089, %v1072
  %1172 = vst.msk [vmem:[#allocation2 + $0x290] sm:$0xff] %vm1089, %v1073
  %1173 = vst.msk [vmem:[#allocation2 + $0x298] sm:$0xff] %vm1089, %v1074
  %1174 = vst.msk [vmem:[#allocation2 + $0x2a0] sm:$0xff] %vm1089, %v1075
  %1175 = vst.msk [vmem:[#allocation2 + $0x2a8] sm:$0xff] %vm1089, %v1076
  %1176 = vst.msk [vmem:[#allocation2 + $0x2b0] sm:$0xff] %vm1089, %v1077
  %1177 = vst.msk [vmem:[#allocation2 + $0x2b8] sm:$0xff] %vm1089, %v1078
  %1178 = vst.msk [vmem:[#allocation2 + $0x2c0] sm:$0xff] %vm1089, %v1079
  %1179 = vst.msk [vmem:[#allocation2 + $0x2c8] sm:$0xff] %vm1089, %v1080
  %1180 = vst.msk [vmem:[#allocation2 + $0x2d0] sm:$0xff] %vm1089, %v1081
  %1181 = vst.msk [vmem:[#allocation2 + $0x2d8] sm:$0xff] %vm1089, %v1082
  %1182 = vst.msk [vmem:[#allocation2 + $0x2e0] sm:$0xff] %vm1089, %v1083
  %1183 = vst.msk [vmem:[#allocation2 + $0x2e8] sm:$0xff] %vm1089, %v1084
  %1184 = vst.msk [vmem:[#allocation2 + $0x2f0] sm:$0xff] %vm1089, %v1085
  %1185 = vst.msk [vmem:[#allocation2 + $0x2f8] sm:$0xff] %vm1089, %v1086
  %1186 = vst.msk [vmem:[#allocation2 + $0x300] sm:$0xff] %vm1089, %v1087
  %1187 = vst.msk [vmem:[#allocation2 + $0x308] sm:$0xff] %vm1089, %v1088
  %v1188 = vld [vmem:[#allocation2] ss:$2 sm:$0xff]
  %s1189 = scalar_lea.vmem [#allocation2], 16
  %v1190 = vld [vmem:[%s1189] ss:$2 sm:$0xff]
  %s1191 = scalar_lea.vmem [#allocation2], 32
  %v1192 = vld [vmem:[%s1191] ss:$2 sm:$0xff]
  %s1193 = scalar_lea.vmem [#allocation2], 48
  %v1194 = vld [vmem:[%s1193] ss:$2 sm:$0xff]
  %s1195 = scalar_lea.vmem [#allocation2], 64
  %v1196 = vld [vmem:[%s1195] ss:$2 sm:$0xff]
  %s1197 = scalar_lea.vmem [#allocation2], 80
  %v1198 = vld [vmem:[%s1197] ss:$2 sm:$0xff]
  %s1199 = scalar_lea.vmem [#allocation2], 96
  %v1200 = vld [vmem:[%s1199] ss:$2 sm:$0xff]
  %s1201 = scalar_lea.vmem [#allocation2], 112
  %v1202 = vld [vmem:[%s1201] ss:$2 sm:$0xff]
  %s1203 = scalar_lea.vmem [#allocation2], 128
  %v1204 = vld [vmem:[%s1203] ss:$2 sm:$0xff]
  %s1205 = scalar_lea.vmem [#allocation2], 144
  %v1206 = vld [vmem:[%s1205] ss:$2 sm:$0xff]
  %s1207 = scalar_lea.vmem [#allocation2], 160
  %v1208 = vld [vmem:[%s1207] ss:$2 sm:$0xff]
  %s1209 = scalar_lea.vmem [#allocation2], 176
  %v1210 = vld [vmem:[%s1209] ss:$2 sm:$0xff]
  %s1211 = scalar_lea.vmem [#allocation2], 192
  %v1212 = vld [vmem:[%s1211] ss:$2 sm:$0xff]
  %s1213 = scalar_lea.vmem [#allocation2], 208
  %v1214 = vld [vmem:[%s1213] ss:$2 sm:$0xff]
  %s1215 = scalar_lea.vmem [#allocation2], 224
  %v1216 = vld [vmem:[%s1215] ss:$2 sm:$0xff]
  %s1217 = scalar_lea.vmem [#allocation2], 240
  %v1218 = vld [vmem:[%s1217] ss:$2 sm:$0xff]
  %s1219 = scalar_lea.vmem [#allocation2], 256
  %v1220 = vld [vmem:[%s1219] ss:$2 sm:$0xff]
  %s1221 = scalar_lea.vmem [#allocation2], 272
  %v1222 = vld [vmem:[%s1221] ss:$2 sm:$0xff]
  %s1223 = scalar_lea.vmem [#allocation2], 288
  %v1224 = vld [vmem:[%s1223] ss:$2 sm:$0xff]
  %s1225 = scalar_lea.vmem [#allocation2], 304
  %v1226 = vld [vmem:[%s1225] ss:$2 sm:$0xff]
  %s1227 = scalar_lea.vmem [#allocation2], 320
  %v1228 = vld [vmem:[%s1227] ss:$2 sm:$0xff]
  %s1229 = scalar_lea.vmem [#allocation2], 336
  %v1230 = vld [vmem:[%s1229] ss:$2 sm:$0xff]
  %s1231 = scalar_lea.vmem [#allocation2], 352
  %v1232 = vld [vmem:[%s1231] ss:$2 sm:$0xff]
  %s1233 = scalar_lea.vmem [#allocation2], 368
  %v1234 = vld [vmem:[%s1233] ss:$2 sm:$0xff]
  %s1235 = scalar_lea.vmem [#allocation2], 384
  %v1236 = vld [vmem:[%s1235] ss:$2 sm:$0xff]
  %s1237 = scalar_lea.vmem [#allocation2], 400
  %v1238 = vld [vmem:[%s1237] ss:$2 sm:$0xff]
  %s1239 = scalar_lea.vmem [#allocation2], 416
  %v1240 = vld [vmem:[%s1239] ss:$2 sm:$0xff]
  %s1241 = scalar_lea.vmem [#allocation2], 432
  %v1242 = vld [vmem:[%s1241] ss:$2 sm:$0xff]
  %s1243 = scalar_lea.vmem [#allocation2], 448
  %v1244 = vld [vmem:[%s1243] ss:$2 sm:$0xff]
  %s1245 = scalar_lea.vmem [#allocation2], 464
  %v1246 = vld [vmem:[%s1245] ss:$2 sm:$0xff]
  %s1247 = scalar_lea.vmem [#allocation2], 480
  %v1248 = vld [vmem:[%s1247] ss:$2 sm:$0xff]
  %s1249 = scalar_lea.vmem [#allocation2], 496
  %v1250 = vld [vmem:[%s1249] ss:$2 sm:$0xff]
  %s1251 = scalar_lea.vmem [#allocation2], 512
  %v1252 = vld [vmem:[%s1251] ss:$2 sm:$0xff]
  %s1253 = scalar_lea.vmem [#allocation2], 528
  %v1254 = vld [vmem:[%s1253] ss:$2 sm:$0xff]
  %s1255 = scalar_lea.vmem [#allocation2], 544
  %v1256 = vld [vmem:[%s1255] ss:$2 sm:$0xff]
  %s1257 = scalar_lea.vmem [#allocation2], 560
  %v1258 = vld [vmem:[%s1257] ss:$2 sm:$0xff]
  %s1259 = scalar_lea.vmem [#allocation2], 576
  %v1260 = vld [vmem:[%s1259] ss:$2 sm:$0xff]
  %s1261 = scalar_lea.vmem [#allocation2], 592
  %v1262 = vld [vmem:[%s1261] ss:$2 sm:$0xff]
  %s1263 = scalar_lea.vmem [#allocation2], 608
  %v1264 = vld [vmem:[%s1263] ss:$2 sm:$0xff]
  %s1265 = scalar_lea.vmem [#allocation2], 624
  %v1266 = vld [vmem:[%s1265] ss:$2 sm:$0xff]
  %s1267 = scalar_lea.vmem [#allocation2], 640
  %v1268 = vld [vmem:[%s1267] ss:$2 sm:$0xff]
  %s1269 = scalar_lea.vmem [#allocation2], 656
  %v1270 = vld [vmem:[%s1269] ss:$2 sm:$0xff]
  %s1271 = scalar_lea.vmem [#allocation2], 672
  %v1272 = vld [vmem:[%s1271] ss:$2 sm:$0xff]
  %s1273 = scalar_lea.vmem [#allocation2], 688
  %v1274 = vld [vmem:[%s1273] ss:$2 sm:$0xff]
  %s1275 = scalar_lea.vmem [#allocation2], 704
  %v1276 = vld [vmem:[%s1275] ss:$2 sm:$0xff]
  %s1277 = scalar_lea.vmem [#allocation2], 720
  %v1278 = vld [vmem:[%s1277] ss:$2 sm:$0xff]
  %s1279 = scalar_lea.vmem [#allocation2], 736
  %v1280 = vld [vmem:[%s1279] ss:$2 sm:$0xff]
  %s1281 = scalar_lea.vmem [#allocation2], 752
  %v1282 = vld [vmem:[%s1281] ss:$2 sm:$0xff]
  %s1283 = scalar_lea.vmem [#allocation2], 768
  %v1284 = vld [vmem:[%s1283] ss:$2 sm:$0xff]
  %s1285 = scalar_lea.vmem [#allocation2], 1
  %v1286 = vld [vmem:[%s1285] ss:$2 sm:$0xff]
  %s1287 = scalar_lea.vmem [#allocation2], 17
  %v1288 = vld [vmem:[%s1287] ss:$2 sm:$0xff]
  %s1289 = scalar_lea.vmem [#allocation2], 33
  %v1290 = vld [vmem:[%s1289] ss:$2 sm:$0xff]
  %s1291 = scalar_lea.vmem [#allocation2], 49
  %v1292 = vld [vmem:[%s1291] ss:$2 sm:$0xff]
  %s1293 = scalar_lea.vmem [#allocation2], 65
  %v1294 = vld [vmem:[%s1293] ss:$2 sm:$0xff]
  %s1295 = scalar_lea.vmem [#allocation2], 81
  %v1296 = vld [vmem:[%s1295] ss:$2 sm:$0xff]
  %s1297 = scalar_lea.vmem [#allocation2], 97
  %v1298 = vld [vmem:[%s1297] ss:$2 sm:$0xff]
  %s1299 = scalar_lea.vmem [#allocation2], 113
  %v1300 = vld [vmem:[%s1299] ss:$2 sm:$0xff]
  %s1301 = scalar_lea.vmem [#allocation2], 129
  %v1302 = vld [vmem:[%s1301] ss:$2 sm:$0xff]
  %s1303 = scalar_lea.vmem [#allocation2], 145
  %v1304 = vld [vmem:[%s1303] ss:$2 sm:$0xff]
  %s1305 = scalar_lea.vmem [#allocation2], 161
  %v1306 = vld [vmem:[%s1305] ss:$2 sm:$0xff]
  %s1307 = scalar_lea.vmem [#allocation2], 177
  %v1308 = vld [vmem:[%s1307] ss:$2 sm:$0xff]
  %s1309 = scalar_lea.vmem [#allocation2], 193
  %v1310 = vld [vmem:[%s1309] ss:$2 sm:$0xff]
  %s1311 = scalar_lea.vmem [#allocation2], 209
  %v1312 = vld [vmem:[%s1311] ss:$2 sm:$0xff]
  %s1313 = scalar_lea.vmem [#allocation2], 225
  %v1314 = vld [vmem:[%s1313] ss:$2 sm:$0xff]
  %s1315 = scalar_lea.vmem [#allocation2], 241
  %v1316 = vld [vmem:[%s1315] ss:$2 sm:$0xff]
  %s1317 = scalar_lea.vmem [#allocation2], 257
  %v1318 = vld [vmem:[%s1317] ss:$2 sm:$0xff]
  %s1319 = scalar_lea.vmem [#allocation2], 273
  %v1320 = vld [vmem:[%s1319] ss:$2 sm:$0xff]
  %s1321 = scalar_lea.vmem [#allocation2], 289
  %v1322 = vld [vmem:[%s1321] ss:$2 sm:$0xff]
  %s1323 = scalar_lea.vmem [#allocation2], 305
  %v1324 = vld [vmem:[%s1323] ss:$2 sm:$0xff]
  %s1325 = scalar_lea.vmem [#allocation2], 321
  %v1326 = vld [vmem:[%s1325] ss:$2 sm:$0xff]
  %s1327 = scalar_lea.vmem [#allocation2], 337
  %v1328 = vld [vmem:[%s1327] ss:$2 sm:$0xff]
  %s1329 = scalar_lea.vmem [#allocation2], 353
  %v1330 = vld [vmem:[%s1329] ss:$2 sm:$0xff]
  %s1331 = scalar_lea.vmem [#allocation2], 369
  %v1332 = vld [vmem:[%s1331] ss:$2 sm:$0xff]
  %s1333 = scalar_lea.vmem [#allocation2], 385
  %v1334 = vld [vmem:[%s1333] ss:$2 sm:$0xff]
  %s1335 = scalar_lea.vmem [#allocation2], 401
  %v1336 = vld [vmem:[%s1335] ss:$2 sm:$0xff]
  %s1337 = scalar_lea.vmem [#allocation2], 417
  %v1338 = vld [vmem:[%s1337] ss:$2 sm:$0xff]
  %s1339 = scalar_lea.vmem [#allocation2], 433
  %v1340 = vld [vmem:[%s1339] ss:$2 sm:$0xff]
  %s1341 = scalar_lea.vmem [#allocation2], 449
  %v1342 = vld [vmem:[%s1341] ss:$2 sm:$0xff]
  %s1343 = scalar_lea.vmem [#allocation2], 465
  %v1344 = vld [vmem:[%s1343] ss:$2 sm:$0xff]
  %s1345 = scalar_lea.vmem [#allocation2], 481
  %v1346 = vld [vmem:[%s1345] ss:$2 sm:$0xff]
  %s1347 = scalar_lea.vmem [#allocation2], 497
  %v1348 = vld [vmem:[%s1347] ss:$2 sm:$0xff]
  %s1349 = scalar_lea.vmem [#allocation2], 513
  %v1350 = vld [vmem:[%s1349] ss:$2 sm:$0xff]
  %s1351 = scalar_lea.vmem [#allocation2], 529
  %v1352 = vld [vmem:[%s1351] ss:$2 sm:$0xff]
  %s1353 = scalar_lea.vmem [#allocation2], 545
  %v1354 = vld [vmem:[%s1353] ss:$2 sm:$0xff]
  %s1355 = scalar_lea.vmem [#allocation2], 561
  %v1356 = vld [vmem:[%s1355] ss:$2 sm:$0xff]
  %s1357 = scalar_lea.vmem [#allocation2], 577
  %v1358 = vld [vmem:[%s1357] ss:$2 sm:$0xff]
  %s1359 = scalar_lea.vmem [#allocation2], 593
  %v1360 = vld [vmem:[%s1359] ss:$2 sm:$0xff]
  %s1361 = scalar_lea.vmem [#allocation2], 609
  %v1362 = vld [vmem:[%s1361] ss:$2 sm:$0xff]
  %s1363 = scalar_lea.vmem [#allocation2], 625
  %v1364 = vld [vmem:[%s1363] ss:$2 sm:$0xff]
  %s1365 = scalar_lea.vmem [#allocation2], 641
  %v1366 = vld [vmem:[%s1365] ss:$2 sm:$0xff]
  %s1367 = scalar_lea.vmem [#allocation2], 657
  %v1368 = vld [vmem:[%s1367] ss:$2 sm:$0xff]
  %s1369 = scalar_lea.vmem [#allocation2], 673
  %v1370 = vld [vmem:[%s1369] ss:$2 sm:$0xff]
  %s1371 = scalar_lea.vmem [#allocation2], 689
  %v1372 = vld [vmem:[%s1371] ss:$2 sm:$0xff]
  %s1373 = scalar_lea.vmem [#allocation2], 705
  %v1374 = vld [vmem:[%s1373] ss:$2 sm:$0xff]
  %s1375 = scalar_lea.vmem [#allocation2], 721
  %v1376 = vld [vmem:[%s1375] ss:$2 sm:$0xff]
  %s1377 = scalar_lea.vmem [#allocation2], 737
  %v1378 = vld [vmem:[%s1377] ss:$2 sm:$0xff]
  %s1379 = scalar_lea.vmem [#allocation2], 753
  %v1380 = vld [vmem:[%s1379] ss:$2 sm:$0xff]
  %s1381 = scalar_lea.vmem [#allocation2], 769
  %v1382 = vld [vmem:[%s1381] ss:$2 sm:$0xff]
  %v1383 = vmax.f32 %v1188, %v1286
  %v1384 = vmax.f32 %v1190, %v1288
  %v1385 = vmax.f32 %v1192, %v1290
  %v1386 = vmax.f32 %v1194, %v1292
  %v1387 = vmax.f32 %v1196, %v1294
  %v1388 = vmax.f32 %v1198, %v1296
  %v1389 = vmax.f32 %v1200, %v1298
  %v1390 = vmax.f32 %v1202, %v1300
  %v1391 = vmax.f32 %v1204, %v1302
  %v1392 = vmax.f32 %v1206, %v1304
  %v1393 = vmax.f32 %v1208, %v1306
  %v1394 = vmax.f32 %v1210, %v1308
  %v1395 = vmax.f32 %v1212, %v1310
  %v1396 = vmax.f32 %v1214, %v1312
  %v1397 = vmax.f32 %v1216, %v1314
  %v1398 = vmax.f32 %v1218, %v1316
  %v1399 = vmax.f32 %v1220, %v1318
  %v1400 = vmax.f32 %v1222, %v1320
  %v1401 = vmax.f32 %v1224, %v1322
  %v1402 = vmax.f32 %v1226, %v1324
  %v1403 = vmax.f32 %v1228, %v1326
  %v1404 = vmax.f32 %v1230, %v1328
  %v1405 = vmax.f32 %v1232, %v1330
  %v1406 = vmax.f32 %v1234, %v1332
  %v1407 = vmax.f32 %v1236, %v1334
  %v1408 = vmax.f32 %v1238, %v1336
  %v1409 = vmax.f32 %v1240, %v1338
  %v1410 = vmax.f32 %v1242, %v1340
  %v1411 = vmax.f32 %v1244, %v1342
  %v1412 = vmax.f32 %v1246, %v1344
  %v1413 = vmax.f32 %v1248, %v1346
  %v1414 = vmax.f32 %v1250, %v1348
  %v1415 = vmax.f32 %v1252, %v1350
  %v1416 = vmax.f32 %v1254, %v1352
  %v1417 = vmax.f32 %v1256, %v1354
  %v1418 = vmax.f32 %v1258, %v1356
  %v1419 = vmax.f32 %v1260, %v1358
  %v1420 = vmax.f32 %v1262, %v1360
  %v1421 = vmax.f32 %v1264, %v1362
  %v1422 = vmax.f32 %v1266, %v1364
  %v1423 = vmax.f32 %v1268, %v1366
  %v1424 = vmax.f32 %v1270, %v1368
  %v1425 = vmax.f32 %v1272, %v1370
  %v1426 = vmax.f32 %v1274, %v1372
  %v1427 = vmax.f32 %v1276, %v1374
  %v1428 = vmax.f32 %v1278, %v1376
  %v1429 = vmax.f32 %v1280, %v1378
  %v1430 = vmax.f32 %v1282, %v1380
  %v1431 = vmax.f32 %v1284, %v1382
  %1432 = vst.msk [vmem:[#allocation3] sm:$0xff] %vm1089, %v1383
  %1433 = vst.msk [vmem:[#allocation3 + $0x8] sm:$0xff] %vm1089, %v1384
  %1434 = vst.msk [vmem:[#allocation3 + $0x10] sm:$0xff] %vm1089, %v1385
  %1435 = vst.msk [vmem:[#allocation3 + $0x18] sm:$0xff] %vm1089, %v1386
  %1436 = vst.msk [vmem:[#allocation3 + $0x20] sm:$0xff] %vm1089, %v1387
  %1437 = vst.msk [vmem:[#allocation3 + $0x28] sm:$0xff] %vm1089, %v1388
  %1438 = vst.msk [vmem:[#allocation3 + $0x30] sm:$0xff] %vm1089, %v1389
  %1439 = vst.msk [vmem:[#allocation3 + $0x38] sm:$0xff] %vm1089, %v1390
  %1440 = vst.msk [vmem:[#allocation3 + $0x40] sm:$0xff] %vm1089, %v1391
  %1441 = vst.msk [vmem:[#allocation3 + $0x48] sm:$0xff] %vm1089, %v1392
  %1442 = vst.msk [vmem:[#allocation3 + $0x50] sm:$0xff] %vm1089, %v1393
  %1443 = vst.msk [vmem:[#allocation3 + $0x58] sm:$0xff] %vm1089, %v1394
  %1444 = vst.msk [vmem:[#allocation3 + $0x60] sm:$0xff] %vm1089, %v1395
  %1445 = vst.msk [vmem:[#allocation3 + $0x68] sm:$0xff] %vm1089, %v1396
  %1446 = vst.msk [vmem:[#allocation3 + $0x70] sm:$0xff] %vm1089, %v1397
  %1447 = vst.msk [vmem:[#allocation3 + $0x78] sm:$0xff] %vm1089, %v1398
  %1448 = vst.msk [vmem:[#allocation3 + $0x80] sm:$0xff] %vm1089, %v1399
  %1449 = vst.msk [vmem:[#allocation3 + $0x88] sm:$0xff] %vm1089, %v1400
  %1450 = vst.msk [vmem:[#allocation3 + $0x90] sm:$0xff] %vm1089, %v1401
  %1451 = vst.msk [vmem:[#allocation3 + $0x98] sm:$0xff] %vm1089, %v1402
  %1452 = vst.msk [vmem:[#allocation3 + $0xa0] sm:$0xff] %vm1089, %v1403
  %1453 = vst.msk [vmem:[#allocation3 + $0xa8] sm:$0xff] %vm1089, %v1404
  %1454 = vst.msk [vmem:[#allocation3 + $0xb0] sm:$0xff] %vm1089, %v1405
  %1455 = vst.msk [vmem:[#allocation3 + $0xb8] sm:$0xff] %vm1089, %v1406
  %1456 = vst.msk [vmem:[#allocation3 + $0xc0] sm:$0xff] %vm1089, %v1407
  %1457 = vst.msk [vmem:[#allocation3 + $0xc8] sm:$0xff] %vm1089, %v1408
  %1458 = vst.msk [vmem:[#allocation3 + $0xd0] sm:$0xff] %vm1089, %v1409
  %1459 = vst.msk [vmem:[#allocation3 + $0xd8] sm:$0xff] %vm1089, %v1410
  %1460 = vst.msk [vmem:[#allocation3 + $0xe0] sm:$0xff] %vm1089, %v1411
  %1461 = vst.msk [vmem:[#allocation3 + $0xe8] sm:$0xff] %vm1089, %v1412
  %1462 = vst.msk [vmem:[#allocation3 + $0xf0] sm:$0xff] %vm1089, %v1413
  %1463 = vst.msk [vmem:[#allocation3 + $0xf8] sm:$0xff] %vm1089, %v1414
  %1464 = vst.msk [vmem:[#allocation3 + $0x100] sm:$0xff] %vm1089, %v1415
  %1465 = vst.msk [vmem:[#allocation3 + $0x108] sm:$0xff] %vm1089, %v1416
  %1466 = vst.msk [vmem:[#allocation3 + $0x110] sm:$0xff] %vm1089, %v1417
  %1467 = vst.msk [vmem:[#allocation3 + $0x118] sm:$0xff] %vm1089, %v1418
  %1468 = vst.msk [vmem:[#allocation3 + $0x120] sm:$0xff] %vm1089, %v1419
  %1469 = vst.msk [vmem:[#allocation3 + $0x128] sm:$0xff] %vm1089, %v1420
  %1470 = vst.msk [vmem:[#allocation3 + $0x130] sm:$0xff] %vm1089, %v1421
  %1471 = vst.msk [vmem:[#allocation3 + $0x138] sm:$0xff] %vm1089, %v1422
  %1472 = vst.msk [vmem:[#allocation3 + $0x140] sm:$0xff] %vm1089, %v1423
  %1473 = vst.msk [vmem:[#allocation3 + $0x148] sm:$0xff] %vm1089, %v1424
  %1474 = vst.msk [vmem:[#allocation3 + $0x150] sm:$0xff] %vm1089, %v1425
  %1475 = vst.msk [vmem:[#allocation3 + $0x158] sm:$0xff] %vm1089, %v1426
  %1476 = vst.msk [vmem:[#allocation3 + $0x160] sm:$0xff] %vm1089, %v1427
  %1477 = vst.msk [vmem:[#allocation3 + $0x168] sm:$0xff] %vm1089, %v1428
  %1478 = vst.msk [vmem:[#allocation3 + $0x170] sm:$0xff] %vm1089, %v1429
  %1479 = vst.msk [vmem:[#allocation3 + $0x178] sm:$0xff] %vm1089, %v1430
  %1480 = vst.msk [vmem:[#allocation3 + $0x180] sm:$0xff] %vm1089, %v1431
  %v1481 = vld [vmem:[#allocation3] sm:$0xff]
  %v1482 = vld [vmem:[#allocation3 + $0x8] sm:$0x3f]
  %v1483 = vld [vmem:[#allocation3 + $0xe] sm:$0xff]
  %v1484 = vld [vmem:[#allocation3 + $0x16] sm:$0x3f]
  %v1485 = vmax.f32 %v1481, %v1483
  %v1486 = vmax.f32 %v1482, %v1484
  %1487 = vst.msk [vmem:[#allocation4] sm:$0xff] %vm1089, %v1485
  %vm1488 = vcmask 128000
  %1489 = vst.msk [vmem:[#allocation4 + $0x8] sm:$0x3f] %vm1488, %v1486
  %v1490 = vld [vmem:[#allocation3 + $0x1c] sm:$0xff]
  %v1491 = vld [vmem:[#allocation3 + $0x24] sm:$0x3f]
  %v1492 = vld [vmem:[#allocation3 + $0x2a] sm:$0xff]
  %v1493 = vld [vmem:[#allocation3 + $0x32] sm:$0x3f]
  %v1494 = vmax.f32 %v1490, %v1492
  %v1495 = vmax.f32 %v1491, %v1493
  %1496 = vst.msk [vmem:[#allocation4 + $0xe] sm:$0xff] %vm1089, %v1494
  %1497 = vst.msk [vmem:[#allocation4 + $0x16] sm:$0x3f] %vm1488, %v1495
  %v1498 = vld [vmem:[#allocation3 + $0x38] sm:$0xff]
  %v1499 = vld [vmem:[#allocation3 + $0x40] sm:$0x3f]
  %v1500 = vld [vmem:[#allocation3 + $0x46] sm:$0xff]
  %v1501 = vld [vmem:[#allocation3 + $0x4e] sm:$0x3f]
  %v1502 = vmax.f32 %v1498, %v1500
  %v1503 = vmax.f32 %v1499, %v1501
  %1504 = vst.msk [vmem:[#allocation4 + $0x1c] sm:$0xff] %vm1089, %v1502
  %1505 = vst.msk [vmem:[#allocation4 + $0x24] sm:$0x3f] %vm1488, %v1503
  %v1506 = vld [vmem:[#allocation3 + $0x54] sm:$0xff]
  %v1507 = vld [vmem:[#allocation3 + $0x5c] sm:$0x3f]
  %v1508 = vld [vmem:[#allocation3 + $0x62] sm:$0xff]
  %v1509 = vld [vmem:[#allocation3 + $0x6a] sm:$0x3f]
  %v1510 = vmax.f32 %v1506, %v1508
  %v1511 = vmax.f32 %v1507, %v1509
  %1512 = vst.msk [vmem:[#allocation4 + $0x2a] sm:$0xff] %vm1089, %v1510
  %1513 = vst.msk [vmem:[#allocation4 + $0x32] sm:$0x3f] %vm1488, %v1511
  %v1514 = vld [vmem:[#allocation3 + $0x70] sm:$0xff]
  %v1515 = vld [vmem:[#allocation3 + $0x78] sm:$0x3f]
  %v1516 = vld [vmem:[#allocation3 + $0x7e] sm:$0xff]
  %v1517 = vld [vmem:[#allocation3 + $0x86] sm:$0x3f]
  %v1518 = vmax.f32 %v1514, %v1516
  %v1519 = vmax.f32 %v1515, %v1517
  %1520 = vst.msk [vmem:[#allocation4 + $0x38] sm:$0xff] %vm1089, %v1518
  %1521 = vst.msk [vmem:[#allocation4 + $0x40] sm:$0x3f] %vm1488, %v1519
  %v1522 = vld [vmem:[#allocation3 + $0x8c] sm:$0xff]
  %v1523 = vld [vmem:[#allocation3 + $0x94] sm:$0x3f]
  %v1524 = vld [vmem:[#allocation3 + $0x9a] sm:$0xff]
  %v1525 = vld [vmem:[#allocation3 + $0xa2] sm:$0x3f]
  %v1526 = vmax.f32 %v1522, %v1524
  %v1527 = vmax.f32 %v1523, %v1525
  %1528 = vst.msk [vmem:[#allocation4 + $0x46] sm:$0xff] %vm1089, %v1526
  %1529 = vst.msk [vmem:[#allocation4 + $0x4e] sm:$0x3f] %vm1488, %v1527
  %v1530 = vld [vmem:[#allocation3 + $0xa8] sm:$0xff]
  %v1531 = vld [vmem:[#allocation3 + $0xb0] sm:$0x3f]
  %v1532 = vld [vmem:[#allocation3 + $0xb6] sm:$0xff]
  %v1533 = vld [vmem:[#allocation3 + $0xbe] sm:$0x3f]
  %v1534 = vmax.f32 %v1530, %v1532
  %v1535 = vmax.f32 %v1531, %v1533
  %1536 = vst.msk [vmem:[#allocation4 + $0x54] sm:$0xff] %vm1089, %v1534
  %1537 = vst.msk [vmem:[#allocation4 + $0x5c] sm:$0x3f] %vm1488, %v1535
  %v1538 = vld [vmem:[#allocation3 + $0xc4] sm:$0xff]
  %v1539 = vld [vmem:[#allocation3 + $0xcc] sm:$0x3f]
  %v1540 = vld [vmem:[#allocation3 + $0xd2] sm:$0xff]
  %v1541 = vld [vmem:[#allocation3 + $0xda] sm:$0x3f]
  %v1542 = vmax.f32 %v1538, %v1540
  %v1543 = vmax.f32 %v1539, %v1541
  %1544 = vst.msk [vmem:[#allocation4 + $0x62] sm:$0xff] %vm1089, %v1542
  %1545 = vst.msk [vmem:[#allocation4 + $0x6a] sm:$0x3f] %vm1488, %v1543
  %v1546 = vld [vmem:[#allocation3 + $0xe0] sm:$0xff]
  %v1547 = vld [vmem:[#allocation3 + $0xe8] sm:$0x3f]
  %v1548 = vld [vmem:[#allocation3 + $0xee] sm:$0xff]
  %v1549 = vld [vmem:[#allocation3 + $0xf6] sm:$0x3f]
  %v1550 = vmax.f32 %v1546, %v1548
  %v1551 = vmax.f32 %v1547, %v1549
  %1552 = vst.msk [vmem:[#allocation4 + $0x70] sm:$0xff] %vm1089, %v1550
  %1553 = vst.msk [vmem:[#allocation4 + $0x78] sm:$0x3f] %vm1488, %v1551
  %v1554 = vld [vmem:[#allocation3 + $0xfc] sm:$0xff]
  %v1555 = vld [vmem:[#allocation3 + $0x104] sm:$0x3f]
  %v1556 = vld [vmem:[#allocation3 + $0x10a] sm:$0xff]
  %v1557 = vld [vmem:[#allocation3 + $0x112] sm:$0x3f]
  %v1558 = vmax.f32 %v1554, %v1556
  %v1559 = vmax.f32 %v1555, %v1557
  %1560 = vst.msk [vmem:[#allocation4 + $0x7e] sm:$0xff] %vm1089, %v1558
  %1561 = vst.msk [vmem:[#allocation4 + $0x86] sm:$0x3f] %vm1488, %v1559
  %v1562 = vld [vmem:[#allocation3 + $0x118] sm:$0xff]
  %v1563 = vld [vmem:[#allocation3 + $0x120] sm:$0x3f]
  %v1564 = vld [vmem:[#allocation3 + $0x126] sm:$0xff]
  %v1565 = vld [vmem:[#allocation3 + $0x12e] sm:$0x3f]
  %v1566 = vmax.f32 %v1562, %v1564
  %v1567 = vmax.f32 %v1563, %v1565
  %1568 = vst.msk [vmem:[#allocation4 + $0x8c] sm:$0xff] %vm1089, %v1566
  %1569 = vst.msk [vmem:[#allocation4 + $0x94] sm:$0x3f] %vm1488, %v1567
  %v1570 = vld [vmem:[#allocation3 + $0x134] sm:$0xff]
  %v1571 = vld [vmem:[#allocation3 + $0x13c] sm:$0x3f]
  %v1572 = vld [vmem:[#allocation3 + $0x142] sm:$0xff]
  %v1573 = vld [vmem:[#allocation3 + $0x14a] sm:$0x3f]
  %v1574 = vmax.f32 %v1570, %v1572
  %v1575 = vmax.f32 %v1571, %v1573
  %1576 = vst.msk [vmem:[#allocation4 + $0x9a] sm:$0xff] %vm1089, %v1574
  %1577 = vst.msk [vmem:[#allocation4 + $0xa2] sm:$0x3f] %vm1488, %v1575
  %v1578 = vld [vmem:[#allocation3 + $0x150] sm:$0xff]
  %v1579 = vld [vmem:[#allocation3 + $0x158] sm:$0x3f]
  %v1580 = vld [vmem:[#allocation3 + $0x15e] sm:$0xff]
  %v1581 = vld [vmem:[#allocation3 + $0x166] sm:$0x3f]
  %v1582 = vmax.f32 %v1578, %v1580
  %v1583 = vmax.f32 %v1579, %v1581
  %1584 = vst.msk [vmem:[#allocation4 + $0xa8] sm:$0xff] %vm1089, %v1582
  %1585 = vst.msk [vmem:[#allocation4 + $0xb0] sm:$0x3f] %vm1488, %v1583
  %v1586 = vld [vmem:[#allocation3 + $0x16c] sm:$0xff]
  %v1587 = vld [vmem:[#allocation3 + $0x174] sm:$0x3f]
  %v1588 = vld [vmem:[#allocation3 + $0x17a] sm:$0xff]
  %v1589 = vld [vmem:[#allocation3 + $0x182] sm:$0x3f]
  %v1590 = vmax.f32 %v1586, %v1588
  %v1591 = vmax.f32 %v1587, %v1589
  %1592 = vst.msk [vmem:[#allocation4 + $0xb6] sm:$0xff] %vm1089, %v1590
  %1593 = vst.msk [vmem:[#allocation4 + $0xbe] sm:$0x3f] %vm1488, %v1591
  %v1594 = vld [vmem:[#allocation4] sm:$0xff]
  %v1595 = vld [vmem:[#allocation4 + $0x8] sm:$0xff]
  %v1596 = vld [vmem:[#allocation4 + $0x10] sm:$0xff]
  %v1597 = vld [vmem:[#allocation4 + $0x18] sm:$0xff]
  %v1598 = vld [vmem:[#allocation4 + $0x20] sm:$0xff]
  %v1599 = vld [vmem:[#allocation4 + $0x28] sm:$0xff]
  %v1600 = vld [vmem:[#allocation4 + $0x30] sm:$0xff]
  %v1601 = vld [vmem:[#allocation4 + $0x38] sm:$0xff]
  %v1602 = vld [vmem:[#allocation4 + $0x40] sm:$0xff]
  %v1603 = vld [vmem:[#allocation4 + $0x48] sm:$0xff]
  %v1604 = vld [vmem:[#allocation4 + $0x50] sm:$0xff]
  %v1605 = vld [vmem:[#allocation4 + $0x58] sm:$0xff]
  %v1606 = vld [vmem:[#allocation4 + $0x60] sm:$0xff]
  %v1607 = vld [vmem:[#allocation4 + $0x68] sm:$0xff]
  %v1608 = vld [vmem:[#allocation4 + $0x70] sm:$0xff]
  %v1609 = vld [vmem:[#allocation4 + $0x78] sm:$0xff]
  %v1610 = vld [vmem:[#allocation4 + $0x80] sm:$0xff]
  %v1611 = vld [vmem:[#allocation4 + $0x88] sm:$0xff]
  %v1612 = vld [vmem:[#allocation4 + $0x90] sm:$0xff]
  %v1613 = vld [vmem:[#allocation4 + $0x98] sm:$0xff]
  %v1614 = vld [vmem:[#allocation4 + $0xa0] sm:$0xff]
  %v1615 = vld [vmem:[%s3] sm:$0xff]
  %v1616 = vld [vmem:[%s3 + $0x8] sm:$0xff]
  %v1617 = vld [vmem:[#allocation4 + $0x1] sm:$0xff]
  %v1618 = vld [vmem:[#allocation4 + $0x9] sm:$0xff]
  %v1619 = vld [vmem:[#allocation4 + $0x11] sm:$0xff]
  %v1620 = vld [vmem:[#allocation4 + $0x19] sm:$0xff]
  %v1621 = vld [vmem:[#allocation4 + $0x21] sm:$0xff]
  %v1622 = vld [vmem:[#allocation4 + $0x29] sm:$0xff]
  %v1623 = vld [vmem:[#allocation4 + $0x31] sm:$0xff]
  %v1624 = vld [vmem:[#allocation4 + $0x39] sm:$0xff]
  %v1625 = vld [vmem:[#allocation4 + $0x41] sm:$0xff]
  %v1626 = vld [vmem:[#allocation4 + $0x49] sm:$0xff]
  %v1627 = vld [vmem:[#allocation4 + $0x51] sm:$0xff]
  %v1628 = vld [vmem:[#allocation4 + $0x59] sm:$0xff]
  %v1629 = vld [vmem:[#allocation4 + $0x61] sm:$0xff]
  %v1630 = vld [vmem:[#allocation4 + $0x69] sm:$0xff]
  %v1631 = vld [vmem:[#allocation4 + $0x71] sm:$0xff]
  %v1632 = vld [vmem:[#allocation4 + $0x79] sm:$0xff]
  %v1633 = vld [vmem:[#allocation4 + $0x81] sm:$0xff]
  %v1634 = vld [vmem:[#allocation4 + $0x89] sm:$0xff]
  %v1635 = vld [vmem:[#allocation4 + $0x91] sm:$0xff]
  %v1636 = vld [vmem:[#allocation4 + $0x99] sm:$0xff]
  %v1637 = vld [vmem:[#allocation4 + $0xa1] sm:$0xff]
  %v1638 = vld [vmem:[%s3 + $0x10] sm:$0xff]
  %v1639 = vld [vmem:[%s3 + $0x18] sm:$0xff]
  %v1641 = vsel %vm1089, %v1617, 0
  %v1644 = vsel %vm1089, %v1618, 0
  %v1647 = vsel %vm1089, %v1619, 0
  %v1650 = vsel %vm1089, %v1620, 0
  %v1653 = vsel %vm1089, %v1621, 0
  %v1656 = vsel %vm1089, %v1622, 0
  %v1659 = vsel %vm1089, %v1623, 0
  %v1662 = vsel %vm1089, %v1624, 0
  %v1665 = vsel %vm1089, %v1625, 0
  %v1668 = vsel %vm1089, %v1626, 0
  %v1671 = vsel %vm1089, %v1627, 0
  %v1674 = vsel %vm1089, %v1628, 0
  %v1677 = vsel %vm1089, %v1629, 0
  %v1680 = vsel %vm1089, %v1630, 0
  %v1683 = vsel %vm1089, %v1631, 0
  %v1686 = vsel %vm1089, %v1632, 0
  %v1689 = vsel %vm1089, %v1633, 0
  %v1692 = vsel %vm1089, %v1634, 0
  %v1695 = vsel %vm1089, %v1635, 0
  %v1698 = vsel %vm1089, %v1636, 0
  %v1701 = vsel %vm1089, %v1637, 0
  %1703 = vmatprep.subr.mxu0 0.0
  %1704 = vmatpush1.msra.mxu0 %v1638
  %1705 = vmatprep.subr.mxu0 0.0
  %1706 = vmatpush1.msra.mxu0 %v1639
  %1707 = vmatprep.subr.mxu0 0.0
  %1708 = vmatpush1.msra.mxu0 0.0
  %1709 = vmatprep.subr.mxu0 0.0
  %1710 = vmatpush1.msra.mxu0 0.0
  %1711 = vmatprep.subr.mxu0 0.0
  %1712 = vmatpush1.msra.mxu0 0.0
  %1713 = vmatprep.subr.mxu0 0.0
  %1714 = vmatpush1.msra.mxu0 0.0
  %1715 = vmatprep.subr.mxu0 0.0
  %1716 = vmatpush1.msra.mxu0 0.0
  %1717 = vmatprep.subr.mxu0 0.0
  %1718 = vmatpush1.msra.mxu0 0.0
  %1719 = vmatprep.subr.mxu0 0.0
  %1720 = vmatpush1.msra.mxu0 0.0
  %1721 = vmatprep.subr.mxu0 0.0
  %1722 = vmatpush1.msra.mxu0 0.0
  %1723 = vmatprep.subr.mxu0 0.0
  %1724 = vmatpush1.msra.mxu0 0.0
  %1725 = vmatprep.subr.mxu0 0.0
  %1726 = vmatpush1.msra.mxu0 0.0
  %1727 = vmatprep.subr.mxu0 0.0
  %1728 = vmatpush1.msra.mxu0 0.0
  %1729 = vmatprep.subr.mxu0 0.0
  %1730 = vmatpush1.msra.mxu0 0.0
  %1731 = vmatprep.subr.mxu0 0.0
  %1732 = vmatpush1.msra.mxu0 0.0
  %1733 = vmatprep.subr.mxu0 0.0
  %1734 = vmatpush1.msra.mxu0 0.0
  %1735 = vmatprep.subr.mxu0 0.0
  %1736 = vmatpush1.msra.mxu0 0.0
  %1737 = vmatprep.subr.mxu0 0.0
  %1738 = vmatpush1.msra.mxu0 0.0
  %1739 = vmatprep.subr.mxu0 0.0
  %1740 = vmatpush1.msra.mxu0 0.0
  %1741 = vmatprep.subr.mxu0 0.0
  %1742 = vmatpush1.msra.mxu0 0.0
  %1743 = vmatprep.subr.mxu0 0.0
  %1744 = vmatpush1.msra.mxu0 0.0
  %1745 = vmatprep.subr.mxu0 0.0
  %1746 = vmatpush1.msra.mxu0 0.0
  %1747 = vmatprep.subr.mxu0 0.0
  %1748 = vmatpush1.msra.mxu0 0.0
  %1749 = vmatprep.subr.mxu0 0.0
  %1750 = vmatpush1.msra.mxu0 0.0
  %1751 = vmatprep.subr.mxu0 0.0
  %1752 = vmatpush1.msra.mxu0 0.0
  %1753 = vmatprep.subr.mxu0 0.0
  %1754 = vmatpush1.msra.mxu0 0.0
  %1755 = vmatprep.subr.mxu0 0.0
  %1756 = vmatpush1.msra.mxu0 0.0
  %1757 = vmatprep.subr.mxu0 0.0
  %1758 = vmatpush1.msra.mxu0 0.0
  %1759 = vmatprep.subr.mxu0 0.0
  %1760 = vmatpush1.msra.mxu0 0.0
  %1761 = vmatprep.subr.mxu0 0.0
  %1762 = vmatpush1.msra.mxu0 0.0
  %1763 = vmatprep.subr.mxu0 0.0
  %1764 = vmatpush1.msra.mxu0 0.0
  %1765 = vmatprep.subr.mxu0 0.0
  %1766 = vmatpush1.msra.mxu0 0.0
  %1767 = vmatprep.mubr.f32.mxu0 0.0
  %1768 = vmatmul.mubr.f32.gmra.mrb[0].mxu0 %v1641
  %v1769 = vpop.f32.mrb[0].mxu0
  %v1770 = vadd.f32 0.0, %v1769
  %v1771 = vpop.f32.mrb[0].mxu0
  %1772 = vmatprep.mubr.f32.mxu0 0.0
  %1773 = vmatmul.mubr.f32.gmra.mrb[0].mxu0 %v1644
  %v1774 = vpop.f32.mrb[0].mxu0
  %v1775 = vadd.f32 0.0, %v1774
  %v1776 = vpop.f32.mrb[0].mxu0
  %1777 = vmatprep.mubr.f32.mxu0 0.0
  %1778 = vmatmul.mubr.f32.gmra.mrb[0].mxu0 %v1647
  %v1779 = vpop.f32.mrb[0].mxu0
  %v1780 = vadd.f32 0.0, %v1779
  %v1781 = vpop.f32.mrb[0].mxu0
  %1782 = vmatprep.mubr.f32.mxu0 0.0
  %1783 = vmatmul.mubr.f32.gmra.mrb[0].mxu0 %v1650
  %v1784 = vpop.f32.mrb[0].mxu0
  %v1785 = vadd.f32 0.0, %v1784
  %v1786 = vpop.f32.mrb[0].mxu0
  %1787 = vmatprep.mubr.f32.mxu0 0.0
  %1788 = vmatmul.mubr.f32.gmra.mrb[0].mxu0 %v1653
  %v1789 = vpop.f32.mrb[0].mxu0
  %v1790 = vadd.f32 0.0, %v1789
  %v1791 = vpop.f32.mrb[0].mxu0
  %1792 = vmatprep.mubr.f32.mxu0 0.0
  %1793 = vmatmul.mubr.f32.gmra.mrb[0].mxu0 %v1656
  %v1794 = vpop.f32.mrb[0].mxu0
  %v1795 = vadd.f32 0.0, %v1794
  %v1796 = vpop.f32.mrb[0].mxu0
  %1797 = vmatprep.mubr.f32.mxu0 0.0
  %1798 = vmatmul.mubr.f32.gmra.mrb[0].mxu0 %v1659
  %v1799 = vpop.f32.mrb[0].mxu0
  %v1800 = vadd.f32 0.0, %v1799
  %v1801 = vpop.f32.mrb[0].mxu0
  %1802 = vmatprep.mubr.f32.mxu0 0.0
  %1803 = vmatmul.mubr.f32.gmra.mrb[0].mxu0 %v1662
  %v1804 = vpop.f32.mrb[0].mxu0
  %v1805 = vadd.f32 0.0, %v1804
  %v1806 = vpop.f32.mrb[0].mxu0
  %1807 = vmatprep.mubr.f32.mxu0 0.0
  %1808 = vmatmul.mubr.f32.gmra.mrb[0].mxu0 %v1665
  %v1809 = vpop.f32.mrb[0].mxu0
  %v1810 = vadd.f32 0.0, %v1809
  %v1811 = vpop.f32.mrb[0].mxu0
  %1812 = vmatprep.mubr.f32.mxu0 0.0
  %1813 = vmatmul.mubr.f32.gmra.mrb[0].mxu0 %v1668
  %v1814 = vpop.f32.mrb[0].mxu0
  %v1815 = vadd.f32 0.0, %v1814
  %v1816 = vpop.f32.mrb[0].mxu0
  %1817 = vmatprep.mubr.f32.mxu0 0.0
  %1818 = vmatmul.mubr.f32.gmra.mrb[0].mxu0 %v1671
  %v1819 = vpop.f32.mrb[0].mxu0
  %v1820 = vadd.f32 0.0, %v1819
  %v1821 = vpop.f32.mrb[0].mxu0
  %1822 = vmatprep.mubr.f32.mxu0 0.0
  %1823 = vmatmul.mubr.f32.gmra.mrb[0].mxu0 %v1674
  %v1824 = vpop.f32.mrb[0].mxu0
  %v1825 = vadd.f32 0.0, %v1824
  %v1826 = vpop.f32.mrb[0].mxu0
  %1827 = vmatprep.mubr.f32.mxu0 0.0
  %1828 = vmatmul.mubr.f32.gmra.mrb[0].mxu0 %v1677
  %v1829 = vpop.f32.mrb[0].mxu0
  %v1830 = vadd.f32 0.0, %v1829
  %v1831 = vpop.f32.mrb[0].mxu0
  %1832 = vmatprep.mubr.f32.mxu0 0.0
  %1833 = vmatmul.mubr.f32.gmra.mrb[0].mxu0 %v1680
  %v1834 = vpop.f32.mrb[0].mxu0
  %v1835 = vadd.f32 0.0, %v1834
  %v1836 = vpop.f32.mrb[0].mxu0
  %1837 = vmatprep.mubr.f32.mxu0 0.0
  %1838 = vmatmul.mubr.f32.gmra.mrb[0].mxu0 %v1683
  %v1839 = vpop.f32.mrb[0].mxu0
  %v1840 = vadd.f32 0.0, %v1839
  %v1841 = vpop.f32.mrb[0].mxu0
  %1842 = vmatprep.mubr.f32.mxu0 0.0
  %1843 = vmatmul.mubr.f32.gmra.mrb[0].mxu0 %v1686
  %v1844 = vpop.f32.mrb[0].mxu0
  %v1845 = vadd.f32 0.0, %v1844
  %v1846 = vpop.f32.mrb[0].mxu0
  %1847 = vmatprep.mubr.f32.mxu0 0.0
  %1848 = vmatmul.mubr.f32.gmra.mrb[0].mxu0 %v1689
  %v1849 = vpop.f32.mrb[0].mxu0
  %v1850 = vadd.f32 0.0, %v1849
  %v1851 = vpop.f32.mrb[0].mxu0
  %1852 = vmatprep.mubr.f32.mxu0 0.0
  %1853 = vmatmul.mubr.f32.gmra.mrb[0].mxu0 %v1692
  %v1854 = vpop.f32.mrb[0].mxu0
  %v1855 = vadd.f32 0.0, %v1854
  %v1856 = vpop.f32.mrb[0].mxu0
  %1857 = vmatprep.mubr.f32.mxu0 0.0
  %1858 = vmatmul.mubr.f32.gmra.mrb[0].mxu0 %v1695
  %v1859 = vpop.f32.mrb[0].mxu0
  %v1860 = vadd.f32 0.0, %v1859
  %v1861 = vpop.f32.mrb[0].mxu0
  %1862 = vmatprep.mubr.f32.mxu0 0.0
  %1863 = vmatmul.mubr.f32.gmra.mrb[0].mxu0 %v1698
  %v1864 = vpop.f32.mrb[0].mxu0
  %v1865 = vadd.f32 0.0, %v1864
  %v1866 = vpop.f32.mrb[0].mxu0
  %1867 = vmatprep.mubr.f32.mxu0 0.0
  %1868 = vmatmul.mubr.f32.gmra.mrb[0].mxu0 %v1701
  %v1869 = vpop.f32.mrb[0].mxu0
  %v1870 = vadd.f32 0.0, %v1869
  %v1871 = vpop.f32.mrb[0].mxu0
  %1872 = vdwg.mxu0
  %v1874 = vsel %vm1089, %v1594, 0
  %v1877 = vsel %vm1089, %v1595, 0
  %v1880 = vsel %vm1089, %v1596, 0
  %v1883 = vsel %vm1089, %v1597, 0
  %v1886 = vsel %vm1089, %v1598, 0
  %v1889 = vsel %vm1089, %v1599, 0
  %v1892 = vsel %vm1089, %v1600, 0
  %v1895 = vsel %vm1089, %v1601, 0
  %v1898 = vsel %vm1089, %v1602, 0
  %v1901 = vsel %vm1089, %v1603, 0
  %v1904 = vsel %vm1089, %v1604, 0
  %v1907 = vsel %vm1089, %v1605, 0
  %v1910 = vsel %vm1089, %v1606, 0
  %v1913 = vsel %vm1089, %v1607, 0
  %v1916 = vsel %vm1089, %v1608, 0
  %v1919 = vsel %vm1089, %v1609, 0
  %v1922 = vsel %vm1089, %v1610, 0
  %v1925 = vsel %vm1089, %v1611, 0
  %v1928 = vsel %vm1089, %v1612, 0
  %v1931 = vsel %vm1089, %v1613, 0
  %v1934 = vsel %vm1089, %v1614, 0
  %1936 = vmatprep.subr.mxu0 0.0
  %1937 = vmatpush1.msra.mxu0 %v1615
  %1938 = vmatprep.subr.mxu0 0.0
  %1939 = vmatpush1.msra.mxu0 %v1616
  %1940 = vmatprep.subr.mxu0 0.0
  %1941 = vmatpush1.msra.mxu0 0.0
  %1942 = vmatprep.subr.mxu0 0.0
  %1943 = vmatpush1.msra.mxu0 0.0
  %1944 = vmatprep.subr.mxu0 0.0
  %1945 = vmatpush1.msra.mxu0 0.0
  %1946 = vmatprep.subr.mxu0 0.0
  %1947 = vmatpush1.msra.mxu0 0.0
  %1948 = vmatprep.subr.mxu0 0.0
  %1949 = vmatpush1.msra.mxu0 0.0
  %1950 = vmatprep.subr.mxu0 0.0
  %1951 = vmatpush1.msra.mxu0 0.0
  %1952 = vmatprep.subr.mxu0 0.0
  %1953 = vmatpush1.msra.mxu0 0.0
  %1954 = vmatprep.subr.mxu0 0.0
  %1955 = vmatpush1.msra.mxu0 0.0
  %1956 = vmatprep.subr.mxu0 0.0
  %1957 = vmatpush1.msra.mxu0 0.0
  %1958 = vmatprep.subr.mxu0 0.0
  %1959 = vmatpush1.msra.mxu0 0.0
  %1960 = vmatprep.subr.mxu0 0.0
  %1961 = vmatpush1.msra.mxu0 0.0
  %1962 = vmatprep.subr.mxu0 0.0
  %1963 = vmatpush1.msra.mxu0 0.0
  %1964 = vmatprep.subr.mxu0 0.0
  %1965 = vmatpush1.msra.mxu0 0.0
  %1966 = vmatprep.subr.mxu0 0.0
  %1967 = vmatpush1.msra.mxu0 0.0
  %1968 = vmatprep.subr.mxu0 0.0
  %1969 = vmatpush1.msra.mxu0 0.0
  %1970 = vmatprep.subr.mxu0 0.0
  %1971 = vmatpush1.msra.mxu0 0.0
  %1972 = vmatprep.subr.mxu0 0.0
  %1973 = vmatpush1.msra.mxu0 0.0
  %1974 = vmatprep.subr.mxu0 0.0
  %1975 = vmatpush1.msra.mxu0 0.0
  %1976 = vmatprep.subr.mxu0 0.0
  %1977 = vmatpush1.msra.mxu0 0.0
  %1978 = vmatprep.subr.mxu0 0.0
  %1979 = vmatpush1.msra.mxu0 0.0
  %1980 = vmatprep.subr.mxu0 0.0
  %1981 = vmatpush1.msra.mxu0 0.0
  %1982 = vmatprep.subr.mxu0 0.0
  %1983 = vmatpush1.msra.mxu0 0.0
  %1984 = vmatprep.subr.mxu0 0.0
  %1985 = vmatpush1.msra.mxu0 0.0
  %1986 = vmatprep.subr.mxu0 0.0
  %1987 = vmatpush1.msra.mxu0 0.0
  %1988 = vmatprep.subr.mxu0 0.0
  %1989 = vmatpush1.msra.mxu0 0.0
  %1990 = vmatprep.subr.mxu0 0.0
  %1991 = vmatpush1.msra.mxu0 0.0
  %1992 = vmatprep.subr.mxu0 0.0
  %1993 = vmatpush1.msra.mxu0 0.0
  %1994 = vmatprep.subr.mxu0 0.0
  %1995 = vmatpush1.msra.mxu0 0.0
  %1996 = vmatprep.subr.mxu0 0.0
  %1997 = vmatpush1.msra.mxu0 0.0
  %1998 = vmatprep.subr.mxu0 0.0
  %1999 = vmatpush1.msra.mxu0 0.0
  %2000 = vmatprep.mubr.f32.mxu0 0.0
  %2001 = vmatmul.mubr.f32.gmra.mrb[0].mxu0 %v1874
  %v2002 = vpop.f32.mrb[0].mxu0
  %v2003 = vadd.f32 %v1770, %v2002
  %v2004 = vpop.f32.mrb[0].mxu0
  %2005 = vmatprep.mubr.f32.mxu0 0.0
  %2006 = vmatmul.mubr.f32.gmra.mrb[0].mxu0 %v1877
  %v2007 = vpop.f32.mrb[0].mxu0
  %v2008 = vadd.f32 %v1775, %v2007
  %v2009 = vpop.f32.mrb[0].mxu0
  %2010 = vmatprep.mubr.f32.mxu0 0.0
  %2011 = vmatmul.mubr.f32.gmra.mrb[0].mxu0 %v1880
  %v2012 = vpop.f32.mrb[0].mxu0
  %v2013 = vadd.f32 %v1780, %v2012
  %v2014 = vpop.f32.mrb[0].mxu0
  %2015 = vmatprep.mubr.f32.mxu0 0.0
  %2016 = vmatmul.mubr.f32.gmra.mrb[0].mxu0 %v1883
  %v2017 = vpop.f32.mrb[0].mxu0
  %v2018 = vadd.f32 %v1785, %v2017
  %v2019 = vpop.f32.mrb[0].mxu0
  %2020 = vmatprep.mubr.f32.mxu0 0.0
  %2021 = vmatmul.mubr.f32.gmra.mrb[0].mxu0 %v1886
  %v2022 = vpop.f32.mrb[0].mxu0
  %v2023 = vadd.f32 %v1790, %v2022
  %v2024 = vpop.f32.mrb[0].mxu0
  %2025 = vmatprep.mubr.f32.mxu0 0.0
  %2026 = vmatmul.mubr.f32.gmra.mrb[0].mxu0 %v1889
  %v2027 = vpop.f32.mrb[0].mxu0
  %v2028 = vadd.f32 %v1795, %v2027
  %v2029 = vpop.f32.mrb[0].mxu0
  %2030 = vmatprep.mubr.f32.mxu0 0.0
  %2031 = vmatmul.mubr.f32.gmra.mrb[0].mxu0 %v1892
  %v2032 = vpop.f32.mrb[0].mxu0
  %v2033 = vadd.f32 %v1800, %v2032
  %v2034 = vpop.f32.mrb[0].mxu0
  %2035 = vmatprep.mubr.f32.mxu0 0.0
  %2036 = vmatmul.mubr.f32.gmra.mrb[0].mxu0 %v1895
  %v2037 = vpop.f32.mrb[0].mxu0
  %v2038 = vadd.f32 %v1805, %v2037
  %v2039 = vpop.f32.mrb[0].mxu0
  %2040 = vmatprep.mubr.f32.mxu0 0.0
  %2041 = vmatmul.mubr.f32.gmra.mrb[0].mxu0 %v1898
  %v2042 = vpop.f32.mrb[0].mxu0
  %v2043 = vadd.f32 %v1810, %v2042
  %v2044 = vpop.f32.mrb[0].mxu0
  %2045 = vmatprep.mubr.f32.mxu0 0.0
  %2046 = vmatmul.mubr.f32.gmra.mrb[0].mxu0 %v1901
  %v2047 = vpop.f32.mrb[0].mxu0
  %v2048 = vadd.f32 %v1815, %v2047
  %v2049 = vpop.f32.mrb[0].mxu0
  %2050 = vmatprep.mubr.f32.mxu0 0.0
  %2051 = vmatmul.mubr.f32.gmra.mrb[0].mxu0 %v1904
  %v2052 = vpop.f32.mrb[0].mxu0
  %v2053 = vadd.f32 %v1820, %v2052
  %v2054 = vpop.f32.mrb[0].mxu0
  %2055 = vmatprep.mubr.f32.mxu0 0.0
  %2056 = vmatmul.mubr.f32.gmra.mrb[0].mxu0 %v1907
  %v2057 = vpop.f32.mrb[0].mxu0
  %v2058 = vadd.f32 %v1825, %v2057
  %v2059 = vpop.f32.mrb[0].mxu0
  %2060 = vmatprep.mubr.f32.mxu0 0.0
  %2061 = vmatmul.mubr.f32.gmra.mrb[0].mxu0 %v1910
  %v2062 = vpop.f32.mrb[0].mxu0
  %v2063 = vadd.f32 %v1830, %v2062
  %v2064 = vpop.f32.mrb[0].mxu0
  %2065 = vmatprep.mubr.f32.mxu0 0.0
  %2066 = vmatmul.mubr.f32.gmra.mrb[0].mxu0 %v1913
  %v2067 = vpop.f32.mrb[0].mxu0
  %v2068 = vadd.f32 %v1835, %v2067
  %v2069 = vpop.f32.mrb[0].mxu0
  %2070 = vmatprep.mubr.f32.mxu0 0.0
  %2071 = vmatmul.mubr.f32.gmra.mrb[0].mxu0 %v1916
  %v2072 = vpop.f32.mrb[0].mxu0
  %v2073 = vadd.f32 %v1840, %v2072
  %v2074 = vpop.f32.mrb[0].mxu0
  %2075 = vmatprep.mubr.f32.mxu0 0.0
  %2076 = vmatmul.mubr.f32.gmra.mrb[0].mxu0 %v1919
  %v2077 = vpop.f32.mrb[0].mxu0
  %v2078 = vadd.f32 %v1845, %v2077
  %v2079 = vpop.f32.mrb[0].mxu0
  %2080 = vmatprep.mubr.f32.mxu0 0.0
  %2081 = vmatmul.mubr.f32.gmra.mrb[0].mxu0 %v1922
  %v2082 = vpop.f32.mrb[0].mxu0
  %v2083 = vadd.f32 %v1850, %v2082
  %v2084 = vpop.f32.mrb[0].mxu0
  %2085 = vmatprep.mubr.f32.mxu0 0.0
  %2086 = vmatmul.mubr.f32.gmra.mrb[0].mxu0 %v1925
  %v2087 = vpop.f32.mrb[0].mxu0
  %v2088 = vadd.f32 %v1855, %v2087
  %v2089 = vpop.f32.mrb[0].mxu0
  %2090 = vmatprep.mubr.f32.mxu0 0.0
  %2091 = vmatmul.mubr.f32.gmra.mrb[0].mxu0 %v1928
  %v2092 = vpop.f32.mrb[0].mxu0
  %v2093 = vadd.f32 %v1860, %v2092
  %v2094 = vpop.f32.mrb[0].mxu0
  %2095 = vmatprep.mubr.f32.mxu0 0.0
  %2096 = vmatmul.mubr.f32.gmra.mrb[0].mxu0 %v1931
  %v2097 = vpop.f32.mrb[0].mxu0
  %v2098 = vadd.f32 %v1865, %v2097
  %v2099 = vpop.f32.mrb[0].mxu0
  %2100 = vmatprep.mubr.f32.mxu0 0.0
  %2101 = vmatmul.mubr.f32.gmra.mrb[0].mxu0 %v1934
  %v2102 = vpop.f32.mrb[0].mxu0
  %v2103 = vadd.f32 %v1870, %v2102
  %v2104 = vpop.f32.mrb[0].mxu0
  %2105 = vdwg.mxu0
  %v2106 = vld [vmem:[#allocation4 + $0x2] sm:$0xff]
  %v2107 = vld [vmem:[#allocation4 + $0xa] sm:$0xff]
  %v2108 = vld [vmem:[#allocation4 + $0x12] sm:$0xff]
  %v2109 = vld [vmem:[#allocation4 + $0x1a] sm:$0xff]
  %v2110 = vld [vmem:[#allocation4 + $0x22] sm:$0xff]
  %v2111 = vld [vmem:[#allocation4 + $0x2a] sm:$0xff]
  %v2112 = vld [vmem:[#allocation4 + $0x32] sm:$0xff]
  %v2113 = vld [vmem:[#allocation4 + $0x3a] sm:$0xff]
  %v2114 = vld [vmem:[#allocation4 + $0x42] sm:$0xff]
  %v2115 = vld [vmem:[#allocation4 + $0x4a] sm:$0xff]
  %v2116 = vld [vmem:[#allocation4 + $0x52] sm:$0xff]
  %v2117 = vld [vmem:[#allocation4 + $0x5a] sm:$0xff]
  %v2118 = vld [vmem:[#allocation4 + $0x62] sm:$0xff]
  %v2119 = vld [vmem:[#allocation4 + $0x6a] sm:$0xff]
  %v2120 = vld [vmem:[#allocation4 + $0x72] sm:$0xff]
  %v2121 = vld [vmem:[#allocation4 + $0x7a] sm:$0xff]
  %v2122 = vld [vmem:[#allocation4 + $0x82] sm:$0xff]
  %v2123 = vld [vmem:[#allocation4 + $0x8a] sm:$0xff]
  %v2124 = vld [vmem:[#allocation4 + $0x92] sm:$0xff]
  %v2125 = vld [vmem:[#allocation4 + $0x9a] sm:$0xff]
  %v2126 = vld [vmem:[#allocation4 + $0xa2] sm:$0xff]
  %v2127 = vld [vmem:[%s3 + $0x20] sm:$0xff]
  %v2128 = vld [vmem:[%s3 + $0x28] sm:$0xff]
  %v2130 = vsel %vm1089, %v2106, 0
  %v2133 = vsel %vm1089, %v2107, 0
  %v2136 = vsel %vm1089, %v2108, 0
  %v2139 = vsel %vm1089, %v2109, 0
  %v2142 = vsel %vm1089, %v2110, 0
  %v2145 = vsel %vm1089, %v2111, 0
  %v2148 = vsel %vm1089, %v2112, 0
  %v2151 = vsel %vm1089, %v2113, 0
  %v2154 = vsel %vm1089, %v2114, 0
  %v2157 = vsel %vm1089, %v2115, 0
  %v2160 = vsel %vm1089, %v2116, 0
  %v2163 = vsel %vm1089, %v2117, 0
  %v2166 = vsel %vm1089, %v2118, 0
  %v2169 = vsel %vm1089, %v2119, 0
  %v2172 = vsel %vm1089, %v2120, 0
  %v2175 = vsel %vm1089, %v2121, 0
  %v2178 = vsel %vm1089, %v2122, 0
  %v2181 = vsel %vm1089, %v2123, 0
  %v2184 = vsel %vm1089, %v2124, 0
  %v2187 = vsel %vm1089, %v2125, 0
  %v2190 = vsel %vm1089, %v2126, 0
  %2192 = vmatprep.subr.mxu0 0.0
  %2193 = vmatpush1.msra.mxu0 %v2127
  %2194 = vmatprep.subr.mxu0 0.0
  %2195 = vmatpush1.msra.mxu0 %v2128
  %2196 = vmatprep.subr.mxu0 0.0
  %2197 = vmatpush1.msra.mxu0 0.0
  %2198 = vmatprep.subr.mxu0 0.0
  %2199 = vmatpush1.msra.mxu0 0.0
  %2200 = vmatprep.subr.mxu0 0.0
  %2201 = vmatpush1.msra.mxu0 0.0
  %2202 = vmatprep.subr.mxu0 0.0
  %2203 = vmatpush1.msra.mxu0 0.0
  %2204 = vmatprep.subr.mxu0 0.0
  %2205 = vmatpush1.msra.mxu0 0.0
  %2206 = vmatprep.subr.mxu0 0.0
  %2207 = vmatpush1.msra.mxu0 0.0
  %2208 = vmatprep.subr.mxu0 0.0
  %2209 = vmatpush1.msra.mxu0 0.0
  %2210 = vmatprep.subr.mxu0 0.0
  %2211 = vmatpush1.msra.mxu0 0.0
  %2212 = vmatprep.subr.mxu0 0.0
  %2213 = vmatpush1.msra.mxu0 0.0
  %2214 = vmatprep.subr.mxu0 0.0
  %2215 = vmatpush1.msra.mxu0 0.0
  %2216 = vmatprep.subr.mxu0 0.0
  %2217 = vmatpush1.msra.mxu0 0.0
  %2218 = vmatprep.subr.mxu0 0.0
  %2219 = vmatpush1.msra.mxu0 0.0
  %2220 = vmatprep.subr.mxu0 0.0
  %2221 = vmatpush1.msra.mxu0 0.0
  %2222 = vmatprep.subr.mxu0 0.0
  %2223 = vmatpush1.msra.mxu0 0.0
  %2224 = vmatprep.subr.mxu0 0.0
  %2225 = vmatpush1.msra.mxu0 0.0
  %2226 = vmatprep.subr.mxu0 0.0
  %2227 = vmatpush1.msra.mxu0 0.0
  %2228 = vmatprep.subr.mxu0 0.0
  %2229 = vmatpush1.msra.mxu0 0.0
  %2230 = vmatprep.subr.mxu0 0.0
  %2231 = vmatpush1.msra.mxu0 0.0
  %2232 = vmatprep.subr.mxu0 0.0
  %2233 = vmatpush1.msra.mxu0 0.0
  %2234 = vmatprep.subr.mxu0 0.0
  %2235 = vmatpush1.msra.mxu0 0.0
  %2236 = vmatprep.subr.mxu0 0.0
  %2237 = vmatpush1.msra.mxu0 0.0
  %2238 = vmatprep.subr.mxu0 0.0
  %2239 = vmatpush1.msra.mxu0 0.0
  %2240 = vmatprep.subr.mxu0 0.0
  %2241 = vmatpush1.msra.mxu0 0.0
  %2242 = vmatprep.subr.mxu0 0.0
  %2243 = vmatpush1.msra.mxu0 0.0
  %2244 = vmatprep.subr.mxu0 0.0
  %2245 = vmatpush1.msra.mxu0 0.0
  %2246 = vmatprep.subr.mxu0 0.0
  %2247 = vmatpush1.msra.mxu0 0.0
  %2248 = vmatprep.subr.mxu0 0.0
  %2249 = vmatpush1.msra.mxu0 0.0
  %2250 = vmatprep.subr.mxu0 0.0
  %2251 = vmatpush1.msra.mxu0 0.0
  %2252 = vmatprep.subr.mxu0 0.0
  %2253 = vmatpush1.msra.mxu0 0.0
  %2254 = vmatprep.subr.mxu0 0.0
  %2255 = vmatpush1.msra.mxu0 0.0
  %2256 = vmatprep.mubr.f32.mxu0 0.0
  %2257 = vmatmul.mubr.f32.gmra.mrb[0].mxu0 %v2130
  %v2258 = vpop.f32.mrb[0].mxu0
  %v2259 = vadd.f32 0.0, %v2258
  %v2260 = vpop.f32.mrb[0].mxu0
  %2261 = vmatprep.mubr.f32.mxu0 0.0
  %2262 = vmatmul.mubr.f32.gmra.mrb[0].mxu0 %v2133
  %v2263 = vpop.f32.mrb[0].mxu0
  %v2264 = vadd.f32 0.0, %v2263
  %v2265 = vpop.f32.mrb[0].mxu0
  %2266 = vmatprep.mubr.f32.mxu0 0.0
  %2267 = vmatmul.mubr.f32.gmra.mrb[0].mxu0 %v2136
  %v2268 = vpop.f32.mrb[0].mxu0
  %v2269 = vadd.f32 0.0, %v2268
  %v2270 = vpop.f32.mrb[0].mxu0
  %2271 = vmatprep.mubr.f32.mxu0 0.0
  %2272 = vmatmul.mubr.f32.gmra.mrb[0].mxu0 %v2139
  %v2273 = vpop.f32.mrb[0].mxu0
  %v2274 = vadd.f32 0.0, %v2273
  %v2275 = vpop.f32.mrb[0].mxu0
  %2276 = vmatprep.mubr.f32.mxu0 0.0
  %2277 = vmatmul.mubr.f32.gmra.mrb[0].mxu0 %v2142
  %v2278 = vpop.f32.mrb[0].mxu0
  %v2279 = vadd.f32 0.0, %v2278
  %v2280 = vpop.f32.mrb[0].mxu0
  %2281 = vmatprep.mubr.f32.mxu0 0.0
  %2282 = vmatmul.mubr.f32.gmra.mrb[0].mxu0 %v2145
  %v2283 = vpop.f32.mrb[0].mxu0
  %v2284 = vadd.f32 0.0, %v2283
  %v2285 = vpop.f32.mrb[0].mxu0
  %2286 = vmatprep.mubr.f32.mxu0 0.0
  %2287 = vmatmul.mubr.f32.gmra.mrb[0].mxu0 %v2148
  %v2288 = vpop.f32.mrb[0].mxu0
  %v2289 = vadd.f32 0.0, %v2288
  %v2290 = vpop.f32.mrb[0].mxu0
  %2291 = vmatprep.mubr.f32.mxu0 0.0
  %2292 = vmatmul.mubr.f32.gmra.mrb[0].mxu0 %v2151
  %v2293 = vpop.f32.mrb[0].mxu0
  %v2294 = vadd.f32 0.0, %v2293
  %v2295 = vpop.f32.mrb[0].mxu0
  %2296 = vmatprep.mubr.f32.mxu0 0.0
  %2297 = vmatmul.mubr.f32.gmra.mrb[0].mxu0 %v2154
  %v2298 = vpop.f32.mrb[0].mxu0
  %v2299 = vadd.f32 0.0, %v2298
  %v2300 = vpop.f32.mrb[0].mxu0
  %2301 = vmatprep.mubr.f32.mxu0 0.0
  %2302 = vmatmul.mubr.f32.gmra.mrb[0].mxu0 %v2157
  %v2303 = vpop.f32.mrb[0].mxu0
  %v2304 = vadd.f32 0.0, %v2303
  %v2305 = vpop.f32.mrb[0].mxu0
  %2306 = vmatprep.mubr.f32.mxu0 0.0
  %2307 = vmatmul.mubr.f32.gmra.mrb[0].mxu0 %v2160
  %v2308 = vpop.f32.mrb[0].mxu0
  %v2309 = vadd.f32 0.0, %v2308
  %v2310 = vpop.f32.mrb[0].mxu0
  %2311 = vmatprep.mubr.f32.mxu0 0.0
  %2312 = vmatmul.mubr.f32.gmra.mrb[0].mxu0 %v2163
  %v2313 = vpop.f32.mrb[0].mxu0
  %v2314 = vadd.f32 0.0, %v2313
  %v2315 = vpop.f32.mrb[0].mxu0
  %2316 = vmatprep.mubr.f32.mxu0 0.0
  %2317 = vmatmul.mubr.f32.gmra.mrb[0].mxu0 %v2166
  %v2318 = vpop.f32.mrb[0].mxu0
  %v2319 = vadd.f32 0.0, %v2318
  %v2320 = vpop.f32.mrb[0].mxu0
  %2321 = vmatprep.mubr.f32.mxu0 0.0
  %2322 = vmatmul.mubr.f32.gmra.mrb[0].mxu0 %v2169
  %v2323 = vpop.f32.mrb[0].mxu0
  %v2324 = vadd.f32 0.0, %v2323
  %v2325 = vpop.f32.mrb[0].mxu0
  %2326 = vmatprep.mubr.f32.mxu0 0.0
  %2327 = vmatmul.mubr.f32.gmra.mrb[0].mxu0 %v2172
  %v2328 = vpop.f32.mrb[0].mxu0
  %v2329 = vadd.f32 0.0, %v2328
  %v2330 = vpop.f32.mrb[0].mxu0
  %2331 = vmatprep.mubr.f32.mxu0 0.0
  %2332 = vmatmul.mubr.f32.gmra.mrb[0].mxu0 %v2175
  %v2333 = vpop.f32.mrb[0].mxu0
  %v2334 = vadd.f32 0.0, %v2333
  %v2335 = vpop.f32.mrb[0].mxu0
  %2336 = vmatprep.mubr.f32.mxu0 0.0
  %2337 = vmatmul.mubr.f32.gmra.mrb[0].mxu0 %v2178
  %v2338 = vpop.f32.mrb[0].mxu0
  %v2339 = vadd.f32 0.0, %v2338
  %v2340 = vpop.f32.mrb[0].mxu0
  %2341 = vmatprep.mubr.f32.mxu0 0.0
  %2342 = vmatmul.mubr.f32.gmra.mrb[0].mxu0 %v2181
  %v2343 = vpop.f32.mrb[0].mxu0
  %v2344 = vadd.f32 0.0, %v2343
  %v2345 = vpop.f32.mrb[0].mxu0
  %2346 = vmatprep.mubr.f32.mxu0 0.0
  %2347 = vmatmul.mubr.f32.gmra.mrb[0].mxu0 %v2184
  %v2348 = vpop.f32.mrb[0].mxu0
  %v2349 = vadd.f32 0.0, %v2348
  %v2350 = vpop.f32.mrb[0].mxu0
  %2351 = vmatprep.mubr.f32.mxu0 0.0
  %2352 = vmatmul.mubr.f32.gmra.mrb[0].mxu0 %v2187
  %v2353 = vpop.f32.mrb[0].mxu0
  %v2354 = vadd.f32 0.0, %v2353
  %v2355 = vpop.f32.mrb[0].mxu0
  %2356 = vmatprep.mubr.f32.mxu0 0.0
  %2357 = vmatmul.mubr.f32.gmra.mrb[0].mxu0 %v2190
  %v2358 = vpop.f32.mrb[0].mxu0
  %v2359 = vadd.f32 0.0, %v2358
  %v2360 = vpop.f32.mrb[0].mxu0
  %2361 = vdwg.mxu0
  %v2362 = vadd.f32 %v2003, %v2259
  %v2363 = vadd.f32 %v2008, %v2264
  %v2364 = vadd.f32 %v2013, %v2269
  %v2365 = vadd.f32 %v2018, %v2274
  %v2366 = vadd.f32 %v2023, %v2279
  %v2367 = vadd.f32 %v2028, %v2284
  %v2368 = vadd.f32 %v2033, %v2289
  %v2369 = vadd.f32 %v2038, %v2294
  %v2370 = vadd.f32 %v2043, %v2299
  %v2371 = vadd.f32 %v2048, %v2304
  %v2372 = vadd.f32 %v2053, %v2309
  %v2373 = vadd.f32 %v2058, %v2314
  %v2374 = vadd.f32 %v2063, %v2319
  %v2375 = vadd.f32 %v2068, %v2324
  %v2376 = vadd.f32 %v2073, %v2329
  %v2377 = vadd.f32 %v2078, %v2334
  %v2378 = vadd.f32 %v2083, %v2339
  %v2379 = vadd.f32 %v2088, %v2344
  %v2380 = vadd.f32 %v2093, %v2349
  %v2381 = vadd.f32 %v2098, %v2354
  %v2382 = vadd.f32 %v2103, %v2359
  %v2383 = vld [vmem:[#allocation4 + $0xe] sm:$0xff]
  %v2384 = vld [vmem:[#allocation4 + $0x16] sm:$0xff]
  %v2385 = vld [vmem:[#allocation4 + $0x1e] sm:$0xff]
  %v2386 = vld [vmem:[#allocation4 + $0x26] sm:$0xff]
  %v2387 = vld [vmem:[#allocation4 + $0x2e] sm:$0xff]
  %v2388 = vld [vmem:[#allocation4 + $0x36] sm:$0xff]
  %v2389 = vld [vmem:[#allocation4 + $0x3e] sm:$0xff]
  %v2390 = vld [vmem:[#allocation4 + $0x46] sm:$0xff]
  %v2391 = vld [vmem:[#allocation4 + $0x4e] sm:$0xff]
  %v2392 = vld [vmem:[#allocation4 + $0x56] sm:$0xff]
  %v2393 = vld [vmem:[#allocation4 + $0x5e] sm:$0xff]
  %v2394 = vld [vmem:[#allocation4 + $0x66] sm:$0xff]
  %v2395 = vld [vmem:[#allocation4 + $0x6e] sm:$0xff]
  %v2396 = vld [vmem:[#allocation4 + $0x76] sm:$0xff]
  %v2397 = vld [vmem:[#allocation4 + $0x7e] sm:$0xff]
  %v2398 = vld [vmem:[#allocation4 + $0x86] sm:$0xff]
  %v2399 = vld [vmem:[#allocation4 + $0x8e] sm:$0xff]
  %v2400 = vld [vmem:[#allocation4 + $0x96] sm:$0xff]
  %v2401 = vld [vmem:[#allocation4 + $0x9e] sm:$0xff]
  %v2402 = vld [vmem:[#allocation4 + $0xa6] sm:$0xff]
  %v2403 = vld [vmem:[#allocation4 + $0xae] sm:$0xff]
  %v2404 = vld [vmem:[%s3 + $0x30] sm:$0xff]
  %v2405 = vld [vmem:[%s3 + $0x38] sm:$0xff]
  %v2407 = vsel %vm1089, %v2383, 0
  %v2410 = vsel %vm1089, %v2384, 0
  %v2413 = vsel %vm1089, %v2385, 0
  %v2416 = vsel %vm1089, %v2386, 0
  %v2419 = vsel %vm1089, %v2387, 0
  %v2422 = vsel %vm1089, %v2388, 0
  %v2425 = vsel %vm1089, %v2389, 0
  %v2428 = vsel %vm1089, %v2390, 0
  %v2431 = vsel %vm1089, %v2391, 0
  %v2434 = vsel %vm1089, %v2392, 0
  %v2437 = vsel %vm1089, %v2393, 0
  %v2440 = vsel %vm1089, %v2394, 0
  %v2443 = vsel %vm1089, %v2395, 0
  %v2446 = vsel %vm1089, %v2396, 0
  %v2449 = vsel %vm1089, %v2397, 0
  %v2452 = vsel %vm1089, %v2398, 0
  %v2455 = vsel %vm1089, %v2399, 0
  %v2458 = vsel %vm1089, %v2400, 0
  %v2461 = vsel %vm1089, %v2401, 0
  %v2464 = vsel %vm1089, %v2402, 0
  %v2467 = vsel %vm1089, %v2403, 0
  %2469 = vmatprep.subr.mxu0 0.0
  %2470 = vmatpush1.msra.mxu0 %v2404
  %2471 = vmatprep.subr.mxu0 0.0
  %2472 = vmatpush1.msra.mxu0 %v2405
  %2473 = vmatprep.subr.mxu0 0.0
  %2474 = vmatpush1.msra.mxu0 0.0
  %2475 = vmatprep.subr.mxu0 0.0
  %2476 = vmatpush1.msra.mxu0 0.0
  %2477 = vmatprep.subr.mxu0 0.0
  %2478 = vmatpush1.msra.mxu0 0.0
  %2479 = vmatprep.subr.mxu0 0.0
  %2480 = vmatpush1.msra.mxu0 0.0
  %2481 = vmatprep.subr.mxu0 0.0
  %2482 = vmatpush1.msra.mxu0 0.0
  %2483 = vmatprep.subr.mxu0 0.0
  %2484 = vmatpush1.msra.mxu0 0.0
  %2485 = vmatprep.subr.mxu0 0.0
  %2486 = vmatpush1.msra.mxu0 0.0
  %2487 = vmatprep.subr.mxu0 0.0
  %2488 = vmatpush1.msra.mxu0 0.0
  %2489 = vmatprep.subr.mxu0 0.0
  %2490 = vmatpush1.msra.mxu0 0.0
  %2491 = vmatprep.subr.mxu0 0.0
  %2492 = vmatpush1.msra.mxu0 0.0
  %2493 = vmatprep.subr.mxu0 0.0
  %2494 = vmatpush1.msra.mxu0 0.0
  %2495 = vmatprep.subr.mxu0 0.0
  %2496 = vmatpush1.msra.mxu0 0.0
  %2497 = vmatprep.subr.mxu0 0.0
  %2498 = vmatpush1.msra.mxu0 0.0
  %2499 = vmatprep.subr.mxu0 0.0
  %2500 = vmatpush1.msra.mxu0 0.0
  %2501 = vmatprep.subr.mxu0 0.0
  %2502 = vmatpush1.msra.mxu0 0.0
  %2503 = vmatprep.subr.mxu0 0.0
  %2504 = vmatpush1.msra.mxu0 0.0
  %2505 = vmatprep.subr.mxu0 0.0
  %2506 = vmatpush1.msra.mxu0 0.0
  %2507 = vmatprep.subr.mxu0 0.0
  %2508 = vmatpush1.msra.mxu0 0.0
  %2509 = vmatprep.subr.mxu0 0.0
  %2510 = vmatpush1.msra.mxu0 0.0
  %2511 = vmatprep.subr.mxu0 0.0
  %2512 = vmatpush1.msra.mxu0 0.0
  %2513 = vmatprep.subr.mxu0 0.0
  %2514 = vmatpush1.msra.mxu0 0.0
  %2515 = vmatprep.subr.mxu0 0.0
  %2516 = vmatpush1.msra.mxu0 0.0
  %2517 = vmatprep.subr.mxu0 0.0
  %2518 = vmatpush1.msra.mxu0 0.0
  %2519 = vmatprep.subr.mxu0 0.0
  %2520 = vmatpush1.msra.mxu0 0.0
  %2521 = vmatprep.subr.mxu0 0.0
  %2522 = vmatpush1.msra.mxu0 0.0
  %2523 = vmatprep.subr.mxu0 0.0
  %2524 = vmatpush1.msra.mxu0 0.0
  %2525 = vmatprep.subr.mxu0 0.0
  %2526 = vmatpush1.msra.mxu0 0.0
  %2527 = vmatprep.subr.mxu0 0.0
  %2528 = vmatpush1.msra.mxu0 0.0
  %2529 = vmatprep.subr.mxu0 0.0
  %2530 = vmatpush1.msra.mxu0 0.0
  %2531 = vmatprep.subr.mxu0 0.0
  %2532 = vmatpush1.msra.mxu0 0.0
  %2533 = vmatprep.mubr.f32.mxu0 0.0
  %2534 = vmatmul.mubr.f32.gmra.mrb[0].mxu0 %v2407
  %v2535 = vpop.f32.mrb[0].mxu0
  %v2536 = vadd.f32 0.0, %v2535
  %v2537 = vpop.f32.mrb[0].mxu0
  %2538 = vmatprep.mubr.f32.mxu0 0.0
  %2539 = vmatmul.mubr.f32.gmra.mrb[0].mxu0 %v2410
  %v2540 = vpop.f32.mrb[0].mxu0
  %v2541 = vadd.f32 0.0, %v2540
  %v2542 = vpop.f32.mrb[0].mxu0
  %2543 = vmatprep.mubr.f32.mxu0 0.0
  %2544 = vmatmul.mubr.f32.gmra.mrb[0].mxu0 %v2413
  %v2545 = vpop.f32.mrb[0].mxu0
  %v2546 = vadd.f32 0.0, %v2545
  %v2547 = vpop.f32.mrb[0].mxu0
  %2548 = vmatprep.mubr.f32.mxu0 0.0
  %2549 = vmatmul.mubr.f32.gmra.mrb[0].mxu0 %v2416
  %v2550 = vpop.f32.mrb[0].mxu0
  %v2551 = vadd.f32 0.0, %v2550
  %v2552 = vpop.f32.mrb[0].mxu0
  %2553 = vmatprep.mubr.f32.mxu0 0.0
  %2554 = vmatmul.mubr.f32.gmra.mrb[0].mxu0 %v2419
  %v2555 = vpop.f32.mrb[0].mxu0
  %v2556 = vadd.f32 0.0, %v2555
  %v2557 = vpop.f32.mrb[0].mxu0
  %2558 = vmatprep.mubr.f32.mxu0 0.0
  %2559 = vmatmul.mubr.f32.gmra.mrb[0].mxu0 %v2422
  %v2560 = vpop.f32.mrb[0].mxu0
  %v2561 = vadd.f32 0.0, %v2560
  %v2562 = vpop.f32.mrb[0].mxu0
  %2563 = vmatprep.mubr.f32.mxu0 0.0
  %2564 = vmatmul.mubr.f32.gmra.mrb[0].mxu0 %v2425
  %v2565 = vpop.f32.mrb[0].mxu0
  %v2566 = vadd.f32 0.0, %v2565
  %v2567 = vpop.f32.mrb[0].mxu0
  %2568 = vmatprep.mubr.f32.mxu0 0.0
  %2569 = vmatmul.mubr.f32.gmra.mrb[0].mxu0 %v2428
  %v2570 = vpop.f32.mrb[0].mxu0
  %v2571 = vadd.f32 0.0, %v2570
  %v2572 = vpop.f32.mrb[0].mxu0
  %2573 = vmatprep.mubr.f32.mxu0 0.0
  %2574 = vmatmul.mubr.f32.gmra.mrb[0].mxu0 %v2431
  %v2575 = vpop.f32.mrb[0].mxu0
  %v2576 = vadd.f32 0.0, %v2575
  %v2577 = vpop.f32.mrb[0].mxu0
  %2578 = vmatprep.mubr.f32.mxu0 0.0
  %2579 = vmatmul.mubr.f32.gmra.mrb[0].mxu0 %v2434
  %v2580 = vpop.f32.mrb[0].mxu0
  %v2581 = vadd.f32 0.0, %v2580
  %v2582 = vpop.f32.mrb[0].mxu0
  %2583 = vmatprep.mubr.f32.mxu0 0.0
  %2584 = vmatmul.mubr.f32.gmra.mrb[0].mxu0 %v2437
  %v2585 = vpop.f32.mrb[0].mxu0
  %v2586 = vadd.f32 0.0, %v2585
  %v2587 = vpop.f32.mrb[0].mxu0
  %2588 = vmatprep.mubr.f32.mxu0 0.0
  %2589 = vmatmul.mubr.f32.gmra.mrb[0].mxu0 %v2440
  %v2590 = vpop.f32.mrb[0].mxu0
  %v2591 = vadd.f32 0.0, %v2590
  %v2592 = vpop.f32.mrb[0].mxu0
  %2593 = vmatprep.mubr.f32.mxu0 0.0
  %2594 = vmatmul.mubr.f32.gmra.mrb[0].mxu0 %v2443
  %v2595 = vpop.f32.mrb[0].mxu0
  %v2596 = vadd.f32 0.0, %v2595
  %v2597 = vpop.f32.mrb[0].mxu0
  %2598 = vmatprep.mubr.f32.mxu0 0.0
  %2599 = vmatmul.mubr.f32.gmra.mrb[0].mxu0 %v2446
  %v2600 = vpop.f32.mrb[0].mxu0
  %v2601 = vadd.f32 0.0, %v2600
  %v2602 = vpop.f32.mrb[0].mxu0
  %2603 = vmatprep.mubr.f32.mxu0 0.0
  %2604 = vmatmul.mubr.f32.gmra.mrb[0].mxu0 %v2449
  %v2605 = vpop.f32.mrb[0].mxu0
  %v2606 = vadd.f32 0.0, %v2605
  %v2607 = vpop.f32.mrb[0].mxu0
  %2608 = vmatprep.mubr.f32.mxu0 0.0
  %2609 = vmatmul.mubr.f32.gmra.mrb[0].mxu0 %v2452
  %v2610 = vpop.f32.mrb[0].mxu0
  %v2611 = vadd.f32 0.0, %v2610
  %v2612 = vpop.f32.mrb[0].mxu0
  %2613 = vmatprep.mubr.f32.mxu0 0.0
  %2614 = vmatmul.mubr.f32.gmra.mrb[0].mxu0 %v2455
  %v2615 = vpop.f32.mrb[0].mxu0
  %v2616 = vadd.f32 0.0, %v2615
  %v2617 = vpop.f32.mrb[0].mxu0
  %2618 = vmatprep.mubr.f32.mxu0 0.0
  %2619 = vmatmul.mubr.f32.gmra.mrb[0].mxu0 %v2458
  %v2620 = vpop.f32.mrb[0].mxu0
  %v2621 = vadd.f32 0.0, %v2620
  %v2622 = vpop.f32.mrb[0].mxu0
  %2623 = vmatprep.mubr.f32.mxu0 0.0
  %2624 = vmatmul.mubr.f32.gmra.mrb[0].mxu0 %v2461
  %v2625 = vpop.f32.mrb[0].mxu0
  %v2626 = vadd.f32 0.0, %v2625
  %v2627 = vpop.f32.mrb[0].mxu0
  %2628 = vmatprep.mubr.f32.mxu0 0.0
  %2629 = vmatmul.mubr.f32.gmra.mrb[0].mxu0 %v2464
  %v2630 = vpop.f32.mrb[0].mxu0
  %v2631 = vadd.f32 0.0, %v2630
  %v2632 = vpop.f32.mrb[0].mxu0
  %2633 = vmatprep.mubr.f32.mxu0 0.0
  %2634 = vmatmul.mubr.f32.gmra.mrb[0].mxu0 %v2467
  %v2635 = vpop.f32.mrb[0].mxu0
  %v2636 = vadd.f32 0.0, %v2635
  %v2637 = vpop.f32.mrb[0].mxu0
  %2638 = vdwg.mxu0
  %v2639 = vadd.f32 %v2362, %v2536
  %v2640 = vadd.f32 %v2363, %v2541
  %v2641 = vadd.f32 %v2364, %v2546
  %v2642 = vadd.f32 %v2365, %v2551
  %v2643 = vadd.f32 %v2366, %v2556
  %v2644 = vadd.f32 %v2367, %v2561
  %v2645 = vadd.f32 %v2368, %v2566
  %v2646 = vadd.f32 %v2369, %v2571
  %v2647 = vadd.f32 %v2370, %v2576
  %v2648 = vadd.f32 %v2371, %v2581
  %v2649 = vadd.f32 %v2372, %v2586
  %v2650 = vadd.f32 %v2373, %v2591
  %v2651 = vadd.f32 %v2374, %v2596
  %v2652 = vadd.f32 %v2375, %v2601
  %v2653 = vadd.f32 %v2376, %v2606
  %v2654 = vadd.f32 %v2377, %v2611
  %v2655 = vadd.f32 %v2378, %v2616
  %v2656 = vadd.f32 %v2379, %v2621
  %v2657 = vadd.f32 %v2380, %v2626
  %v2658 = vadd.f32 %v2381, %v2631
  %v2659 = vadd.f32 %v2382, %v2636
  %v2660 = vld [vmem:[#allocation4 + $0xf] sm:$0xff]
  %v2661 = vld [vmem:[#allocation4 + $0x17] sm:$0xff]
  %v2662 = vld [vmem:[#allocation4 + $0x1f] sm:$0xff]
  %v2663 = vld [vmem:[#allocation4 + $0x27] sm:$0xff]
  %v2664 = vld [vmem:[#allocation4 + $0x2f] sm:$0xff]
  %v2665 = vld [vmem:[#allocation4 + $0x37] sm:$0xff]
  %v2666 = vld [vmem:[#allocation4 + $0x3f] sm:$0xff]
  %v2667 = vld [vmem:[#allocation4 + $0x47] sm:$0xff]
  %v2668 = vld [vmem:[#allocation4 + $0x4f] sm:$0xff]
  %v2669 = vld [vmem:[#allocation4 + $0x57] sm:$0xff]
  %v2670 = vld [vmem:[#allocation4 + $0x5f] sm:$0xff]
  %v2671 = vld [vmem:[#allocation4 + $0x67] sm:$0xff]
  %v2672 = vld [vmem:[#allocation4 + $0x6f] sm:$0xff]
  %v2673 = vld [vmem:[#allocation4 + $0x77] sm:$0xff]
  %v2674 = vld [vmem:[#allocation4 + $0x7f] sm:$0xff]
  %v2675 = vld [vmem:[#allocation4 + $0x87] sm:$0xff]
  %v2676 = vld [vmem:[#allocation4 + $0x8f] sm:$0xff]
  %v2677 = vld [vmem:[#allocation4 + $0x97] sm:$0xff]
  %v2678 = vld [vmem:[#allocation4 + $0x9f] sm:$0xff]
  %v2679 = vld [vmem:[#allocation4 + $0xa7] sm:$0xff]
  %v2680 = vld [vmem:[#allocation4 + $0xaf] sm:$0xff]
  %v2681 = vld [vmem:[%s3 + $0x40] sm:$0xff]
  %v2682 = vld [vmem:[%s3 + $0x48] sm:$0xff]
  %v2684 = vsel %vm1089, %v2660, 0
  %v2687 = vsel %vm1089, %v2661, 0
  %v2690 = vsel %vm1089, %v2662, 0
  %v2693 = vsel %vm1089, %v2663, 0
  %v2696 = vsel %vm1089, %v2664, 0
  %v2699 = vsel %vm1089, %v2665, 0
  %v2702 = vsel %vm1089, %v2666, 0
  %v2705 = vsel %vm1089, %v2667, 0
  %v2708 = vsel %vm1089, %v2668, 0
  %v2711 = vsel %vm1089, %v2669, 0
  %v2714 = vsel %vm1089, %v2670, 0
  %v2717 = vsel %vm1089, %v2671, 0
  %v2720 = vsel %vm1089, %v2672, 0
  %v2723 = vsel %vm1089, %v2673, 0
  %v2726 = vsel %vm1089, %v2674, 0
  %v2729 = vsel %vm1089, %v2675, 0
  %v2732 = vsel %vm1089, %v2676, 0
  %v2735 = vsel %vm1089, %v2677, 0
  %v2738 = vsel %vm1089, %v2678, 0
  %v2741 = vsel %vm1089, %v2679, 0
  %v2744 = vsel %vm1089, %v2680, 0
  %2746 = vmatprep.subr.mxu0 0.0
  %2747 = vmatpush1.msra.mxu0 %v2681
  %2748 = vmatprep.subr.mxu0 0.0
  %2749 = vmatpush1.msra.mxu0 %v2682
  %2750 = vmatprep.subr.mxu0 0.0
  %2751 = vmatpush1.msra.mxu0 0.0
  %2752 = vmatprep.subr.mxu0 0.0
  %2753 = vmatpush1.msra.mxu0 0.0
  %2754 = vmatprep.subr.mxu0 0.0
  %2755 = vmatpush1.msra.mxu0 0.0
  %2756 = vmatprep.subr.mxu0 0.0
  %2757 = vmatpush1.msra.mxu0 0.0
  %2758 = vmatprep.subr.mxu0 0.0
  %2759 = vmatpush1.msra.mxu0 0.0
  %2760 = vmatprep.subr.mxu0 0.0
  %2761 = vmatpush1.msra.mxu0 0.0
  %2762 = vmatprep.subr.mxu0 0.0
  %2763 = vmatpush1.msra.mxu0 0.0
  %2764 = vmatprep.subr.mxu0 0.0
  %2765 = vmatpush1.msra.mxu0 0.0
  %2766 = vmatprep.subr.mxu0 0.0
  %2767 = vmatpush1.msra.mxu0 0.0
  %2768 = vmatprep.subr.mxu0 0.0
  %2769 = vmatpush1.msra.mxu0 0.0
  %2770 = vmatprep.subr.mxu0 0.0
  %2771 = vmatpush1.msra.mxu0 0.0
  %2772 = vmatprep.subr.mxu0 0.0
  %2773 = vmatpush1.msra.mxu0 0.0
  %2774 = vmatprep.subr.mxu0 0.0
  %2775 = vmatpush1.msra.mxu0 0.0
  %2776 = vmatprep.subr.mxu0 0.0
  %2777 = vmatpush1.msra.mxu0 0.0
  %2778 = vmatprep.subr.mxu0 0.0
  %2779 = vmatpush1.msra.mxu0 0.0
  %2780 = vmatprep.subr.mxu0 0.0
  %2781 = vmatpush1.msra.mxu0 0.0
  %2782 = vmatprep.subr.mxu0 0.0
  %2783 = vmatpush1.msra.mxu0 0.0
  %2784 = vmatprep.subr.mxu0 0.0
  %2785 = vmatpush1.msra.mxu0 0.0
  %2786 = vmatprep.subr.mxu0 0.0
  %2787 = vmatpush1.msra.mxu0 0.0
  %2788 = vmatprep.subr.mxu0 0.0
  %2789 = vmatpush1.msra.mxu0 0.0
  %2790 = vmatprep.subr.mxu0 0.0
  %2791 = vmatpush1.msra.mxu0 0.0
  %2792 = vmatprep.subr.mxu0 0.0
  %2793 = vmatpush1.msra.mxu0 0.0
  %2794 = vmatprep.subr.mxu0 0.0
  %2795 = vmatpush1.msra.mxu0 0.0
  %2796 = vmatprep.subr.mxu0 0.0
  %2797 = vmatpush1.msra.mxu0 0.0
  %2798 = vmatprep.subr.mxu0 0.0
  %2799 = vmatpush1.msra.mxu0 0.0
  %2800 = vmatprep.subr.mxu0 0.0
  %2801 = vmatpush1.msra.mxu0 0.0
  %2802 = vmatprep.subr.mxu0 0.0
  %2803 = vmatpush1.msra.mxu0 0.0
  %2804 = vmatprep.subr.mxu0 0.0
  %2805 = vmatpush1.msra.mxu0 0.0
  %2806 = vmatprep.subr.mxu0 0.0
  %2807 = vmatpush1.msra.mxu0 0.0
  %2808 = vmatprep.subr.mxu0 0.0
  %2809 = vmatpush1.msra.mxu0 0.0
  %2810 = vmatprep.mubr.f32.mxu0 0.0
  %2811 = vmatmul.mubr.f32.gmra.mrb[0].mxu0 %v2684
  %v2812 = vpop.f32.mrb[0].mxu0
  %v2813 = vadd.f32 0.0, %v2812
  %v2814 = vpop.f32.mrb[0].mxu0
  %2815 = vmatprep.mubr.f32.mxu0 0.0
  %2816 = vmatmul.mubr.f32.gmra.mrb[0].mxu0 %v2687
  %v2817 = vpop.f32.mrb[0].mxu0
  %v2818 = vadd.f32 0.0, %v2817
  %v2819 = vpop.f32.mrb[0].mxu0
  %2820 = vmatprep.mubr.f32.mxu0 0.0
  %2821 = vmatmul.mubr.f32.gmra.mrb[0].mxu0 %v2690
  %v2822 = vpop.f32.mrb[0].mxu0
  %v2823 = vadd.f32 0.0, %v2822
  %v2824 = vpop.f32.mrb[0].mxu0
  %2825 = vmatprep.mubr.f32.mxu0 0.0
  %2826 = vmatmul.mubr.f32.gmra.mrb[0].mxu0 %v2693
  %v2827 = vpop.f32.mrb[0].mxu0
  %v2828 = vadd.f32 0.0, %v2827
  %v2829 = vpop.f32.mrb[0].mxu0
  %2830 = vmatprep.mubr.f32.mxu0 0.0
  %2831 = vmatmul.mubr.f32.gmra.mrb[0].mxu0 %v2696
  %v2832 = vpop.f32.mrb[0].mxu0
  %v2833 = vadd.f32 0.0, %v2832
  %v2834 = vpop.f32.mrb[0].mxu0
  %2835 = vmatprep.mubr.f32.mxu0 0.0
  %2836 = vmatmul.mubr.f32.gmra.mrb[0].mxu0 %v2699
  %v2837 = vpop.f32.mrb[0].mxu0
  %v2838 = vadd.f32 0.0, %v2837
  %v2839 = vpop.f32.mrb[0].mxu0
  %2840 = vmatprep.mubr.f32.mxu0 0.0
  %2841 = vmatmul.mubr.f32.gmra.mrb[0].mxu0 %v2702
  %v2842 = vpop.f32.mrb[0].mxu0
  %v2843 = vadd.f32 0.0, %v2842
  %v2844 = vpop.f32.mrb[0].mxu0
  %2845 = vmatprep.mubr.f32.mxu0 0.0
  %2846 = vmatmul.mubr.f32.gmra.mrb[0].mxu0 %v2705
  %v2847 = vpop.f32.mrb[0].mxu0
  %v2848 = vadd.f32 0.0, %v2847
  %v2849 = vpop.f32.mrb[0].mxu0
  %2850 = vmatprep.mubr.f32.mxu0 0.0
  %2851 = vmatmul.mubr.f32.gmra.mrb[0].mxu0 %v2708
  %v2852 = vpop.f32.mrb[0].mxu0
  %v2853 = vadd.f32 0.0, %v2852
  %v2854 = vpop.f32.mrb[0].mxu0
  %2855 = vmatprep.mubr.f32.mxu0 0.0
  %2856 = vmatmul.mubr.f32.gmra.mrb[0].mxu0 %v2711
  %v2857 = vpop.f32.mrb[0].mxu0
  %v2858 = vadd.f32 0.0, %v2857
  %v2859 = vpop.f32.mrb[0].mxu0
  %2860 = vmatprep.mubr.f32.mxu0 0.0
  %2861 = vmatmul.mubr.f32.gmra.mrb[0].mxu0 %v2714
  %v2862 = vpop.f32.mrb[0].mxu0
  %v2863 = vadd.f32 0.0, %v2862
  %v2864 = vpop.f32.mrb[0].mxu0
  %2865 = vmatprep.mubr.f32.mxu0 0.0
  %2866 = vmatmul.mubr.f32.gmra.mrb[0].mxu0 %v2717
  %v2867 = vpop.f32.mrb[0].mxu0
  %v2868 = vadd.f32 0.0, %v2867
  %v2869 = vpop.f32.mrb[0].mxu0
  %2870 = vmatprep.mubr.f32.mxu0 0.0
  %2871 = vmatmul.mubr.f32.gmra.mrb[0].mxu0 %v2720
  %v2872 = vpop.f32.mrb[0].mxu0
  %v2873 = vadd.f32 0.0, %v2872
  %v2874 = vpop.f32.mrb[0].mxu0
  %2875 = vmatprep.mubr.f32.mxu0 0.0
  %2876 = vmatmul.mubr.f32.gmra.mrb[0].mxu0 %v2723
  %v2877 = vpop.f32.mrb[0].mxu0
  %v2878 = vadd.f32 0.0, %v2877
  %v2879 = vpop.f32.mrb[0].mxu0
  %2880 = vmatprep.mubr.f32.mxu0 0.0
  %2881 = vmatmul.mubr.f32.gmra.mrb[0].mxu0 %v2726
  %v2882 = vpop.f32.mrb[0].mxu0
  %v2883 = vadd.f32 0.0, %v2882
  %v2884 = vpop.f32.mrb[0].mxu0
  %2885 = vmatprep.mubr.f32.mxu0 0.0
  %2886 = vmatmul.mubr.f32.gmra.mrb[0].mxu0 %v2729
  %v2887 = vpop.f32.mrb[0].mxu0
  %v2888 = vadd.f32 0.0, %v2887
  %v2889 = vpop.f32.mrb[0].mxu0
  %2890 = vmatprep.mubr.f32.mxu0 0.0
  %2891 = vmatmul.mubr.f32.gmra.mrb[0].mxu0 %v2732
  %v2892 = vpop.f32.mrb[0].mxu0
  %v2893 = vadd.f32 0.0, %v2892
  %v2894 = vpop.f32.mrb[0].mxu0
  %2895 = vmatprep.mubr.f32.mxu0 0.0
  %2896 = vmatmul.mubr.f32.gmra.mrb[0].mxu0 %v2735
  %v2897 = vpop.f32.mrb[0].mxu0
  %v2898 = vadd.f32 0.0, %v2897
  %v2899 = vpop.f32.mrb[0].mxu0
  %2900 = vmatprep.mubr.f32.mxu0 0.0
  %2901 = vmatmul.mubr.f32.gmra.mrb[0].mxu0 %v2738
  %v2902 = vpop.f32.mrb[0].mxu0
  %v2903 = vadd.f32 0.0, %v2902
  %v2904 = vpop.f32.mrb[0].mxu0
  %2905 = vmatprep.mubr.f32.mxu0 0.0
  %2906 = vmatmul.mubr.f32.gmra.mrb[0].mxu0 %v2741
  %v2907 = vpop.f32.mrb[0].mxu0
  %v2908 = vadd.f32 0.0, %v2907
  %v2909 = vpop.f32.mrb[0].mxu0
  %2910 = vmatprep.mubr.f32.mxu0 0.0
  %2911 = vmatmul.mubr.f32.gmra.mrb[0].mxu0 %v2744
  %v2912 = vpop.f32.mrb[0].mxu0
  %v2913 = vadd.f32 0.0, %v2912
  %v2914 = vpop.f32.mrb[0].mxu0
  %2915 = vdwg.mxu0
  %v2916 = vadd.f32 %v2639, %v2813
  %v2917 = vadd.f32 %v2640, %v2818
  %v2918 = vadd.f32 %v2641, %v2823
  %v2919 = vadd.f32 %v2642, %v2828
  %v2920 = vadd.f32 %v2643, %v2833
  %v2921 = vadd.f32 %v2644, %v2838
  %v2922 = vadd.f32 %v2645, %v2843
  %v2923 = vadd.f32 %v2646, %v2848
  %v2924 = vadd.f32 %v2647, %v2853
  %v2925 = vadd.f32 %v2648, %v2858
  %v2926 = vadd.f32 %v2649, %v2863
  %v2927 = vadd.f32 %v2650, %v2868
  %v2928 = vadd.f32 %v2651, %v2873
  %v2929 = vadd.f32 %v2652, %v2878
  %v2930 = vadd.f32 %v2653, %v2883
  %v2931 = vadd.f32 %v2654, %v2888
  %v2932 = vadd.f32 %v2655, %v2893
  %v2933 = vadd.f32 %v2656, %v2898
  %v2934 = vadd.f32 %v2657, %v2903
  %v2935 = vadd.f32 %v2658, %v2908
  %v2936 = vadd.f32 %v2659, %v2913
  %v2937 = vld [vmem:[#allocation4 + $0x10] sm:$0xff]
  %v2938 = vld [vmem:[#allocation4 + $0x18] sm:$0xff]
  %v2939 = vld [vmem:[#allocation4 + $0x20] sm:$0xff]
  %v2940 = vld [vmem:[#allocation4 + $0x28] sm:$0xff]
  %v2941 = vld [vmem:[#allocation4 + $0x30] sm:$0xff]
  %v2942 = vld [vmem:[#allocation4 + $0x38] sm:$0xff]
  %v2943 = vld [vmem:[#allocation4 + $0x40] sm:$0xff]
  %v2944 = vld [vmem:[#allocation4 + $0x48] sm:$0xff]
  %v2945 = vld [vmem:[#allocation4 + $0x50] sm:$0xff]
  %v2946 = vld [vmem:[#allocation4 + $0x58] sm:$0xff]
  %v2947 = vld [vmem:[#allocation4 + $0x60] sm:$0xff]
  %v2948 = vld [vmem:[#allocation4 + $0x68] sm:$0xff]
  %v2949 = vld [vmem:[#allocation4 + $0x70] sm:$0xff]
  %v2950 = vld [vmem:[#allocation4 + $0x78] sm:$0xff]
  %v2951 = vld [vmem:[#allocation4 + $0x80] sm:$0xff]
  %v2952 = vld [vmem:[#allocation4 + $0x88] sm:$0xff]
  %v2953 = vld [vmem:[#allocation4 + $0x90] sm:$0xff]
  %v2954 = vld [vmem:[#allocation4 + $0x98] sm:$0xff]
  %v2955 = vld [vmem:[#allocation4 + $0xa0] sm:$0xff]
  %v2956 = vld [vmem:[#allocation4 + $0xa8] sm:$0xff]
  %v2957 = vld [vmem:[#allocation4 + $0xb0] sm:$0xff]
  %v2958 = vld [vmem:[%s3 + $0x50] sm:$0xff]
  %v2959 = vld [vmem:[%s3 + $0x58] sm:$0xff]
  %v2961 = vsel %vm1089, %v2937, 0
  %v2964 = vsel %vm1089, %v2938, 0
  %v2967 = vsel %vm1089, %v2939, 0
  %v2970 = vsel %vm1089, %v2940, 0
  %v2973 = vsel %vm1089, %v2941, 0
  %v2976 = vsel %vm1089, %v2942, 0
  %v2979 = vsel %vm1089, %v2943, 0
  %v2982 = vsel %vm1089, %v2944, 0
  %v2985 = vsel %vm1089, %v2945, 0
  %v2988 = vsel %vm1089, %v2946, 0
  %v2991 = vsel %vm1089, %v2947, 0
  %v2994 = vsel %vm1089, %v2948, 0
  %v2997 = vsel %vm1089, %v2949, 0
  %v3000 = vsel %vm1089, %v2950, 0
  %v3003 = vsel %vm1089, %v2951, 0
  %v3006 = vsel %vm1089, %v2952, 0
  %v3009 = vsel %vm1089, %v2953, 0
  %v3012 = vsel %vm1089, %v2954, 0
  %v3015 = vsel %vm1089, %v2955, 0
  %v3018 = vsel %vm1089, %v2956, 0
  %v3021 = vsel %vm1089, %v2957, 0
  %3023 = vmatprep.subr.mxu0 0.0
  %3024 = vmatpush1.msra.mxu0 %v2958
  %3025 = vmatprep.subr.mxu0 0.0
  %3026 = vmatpush1.msra.mxu0 %v2959
  %3027 = vmatprep.subr.mxu0 0.0
  %3028 = vmatpush1.msra.mxu0 0.0
  %3029 = vmatprep.subr.mxu0 0.0
  %3030 = vmatpush1.msra.mxu0 0.0
  %3031 = vmatprep.subr.mxu0 0.0
  %3032 = vmatpush1.msra.mxu0 0.0
  %3033 = vmatprep.subr.mxu0 0.0
  %3034 = vmatpush1.msra.mxu0 0.0
  %3035 = vmatprep.subr.mxu0 0.0
  %3036 = vmatpush1.msra.mxu0 0.0
  %3037 = vmatprep.subr.mxu0 0.0
  %3038 = vmatpush1.msra.mxu0 0.0
  %3039 = vmatprep.subr.mxu0 0.0
  %3040 = vmatpush1.msra.mxu0 0.0
  %3041 = vmatprep.subr.mxu0 0.0
  %3042 = vmatpush1.msra.mxu0 0.0
  %3043 = vmatprep.subr.mxu0 0.0
  %3044 = vmatpush1.msra.mxu0 0.0
  %3045 = vmatprep.subr.mxu0 0.0
  %3046 = vmatpush1.msra.mxu0 0.0
  %3047 = vmatprep.subr.mxu0 0.0
  %3048 = vmatpush1.msra.mxu0 0.0
  %3049 = vmatprep.subr.mxu0 0.0
  %3050 = vmatpush1.msra.mxu0 0.0
  %3051 = vmatprep.subr.mxu0 0.0
  %3052 = vmatpush1.msra.mxu0 0.0
  %3053 = vmatprep.subr.mxu0 0.0
  %3054 = vmatpush1.msra.mxu0 0.0
  %3055 = vmatprep.subr.mxu0 0.0
  %3056 = vmatpush1.msra.mxu0 0.0
  %3057 = vmatprep.subr.mxu0 0.0
  %3058 = vmatpush1.msra.mxu0 0.0
  %3059 = vmatprep.subr.mxu0 0.0
  %3060 = vmatpush1.msra.mxu0 0.0
  %3061 = vmatprep.subr.mxu0 0.0
  %3062 = vmatpush1.msra.mxu0 0.0
  %3063 = vmatprep.subr.mxu0 0.0
  %3064 = vmatpush1.msra.mxu0 0.0
  %3065 = vmatprep.subr.mxu0 0.0
  %3066 = vmatpush1.msra.mxu0 0.0
  %3067 = vmatprep.subr.mxu0 0.0
  %3068 = vmatpush1.msra.mxu0 0.0
  %3069 = vmatprep.subr.mxu0 0.0
  %3070 = vmatpush1.msra.mxu0 0.0
  %3071 = vmatprep.subr.mxu0 0.0
  %3072 = vmatpush1.msra.mxu0 0.0
  %3073 = vmatprep.subr.mxu0 0.0
  %3074 = vmatpush1.msra.mxu0 0.0
  %3075 = vmatprep.subr.mxu0 0.0
  %3076 = vmatpush1.msra.mxu0 0.0
  %3077 = vmatprep.subr.mxu0 0.0
  %3078 = vmatpush1.msra.mxu0 0.0
  %3079 = vmatprep.subr.mxu0 0.0
  %3080 = vmatpush1.msra.mxu0 0.0
  %3081 = vmatprep.subr.mxu0 0.0
  %3082 = vmatpush1.msra.mxu0 0.0
  %3083 = vmatprep.subr.mxu0 0.0
  %3084 = vmatpush1.msra.mxu0 0.0
  %3085 = vmatprep.subr.mxu0 0.0
  %3086 = vmatpush1.msra.mxu0 0.0
  %3087 = vmatprep.mubr.f32.mxu0 0.0
  %3088 = vmatmul.mubr.f32.gmra.mrb[0].mxu0 %v2961
  %v3089 = vpop.f32.mrb[0].mxu0
  %v3090 = vadd.f32 0.0, %v3089
  %v3091 = vpop.f32.mrb[0].mxu0
  %3092 = vmatprep.mubr.f32.mxu0 0.0
  %3093 = vmatmul.mubr.f32.gmra.mrb[0].mxu0 %v2964
  %v3094 = vpop.f32.mrb[0].mxu0
  %v3095 = vadd.f32 0.0, %v3094
  %v3096 = vpop.f32.mrb[0].mxu0
  %3097 = vmatprep.mubr.f32.mxu0 0.0
  %3098 = vmatmul.mubr.f32.gmra.mrb[0].mxu0 %v2967
  %v3099 = vpop.f32.mrb[0].mxu0
  %v3100 = vadd.f32 0.0, %v3099
  %v3101 = vpop.f32.mrb[0].mxu0
  %3102 = vmatprep.mubr.f32.mxu0 0.0
  %3103 = vmatmul.mubr.f32.gmra.mrb[0].mxu0 %v2970
  %v3104 = vpop.f32.mrb[0].mxu0
  %v3105 = vadd.f32 0.0, %v3104
  %v3106 = vpop.f32.mrb[0].mxu0
  %3107 = vmatprep.mubr.f32.mxu0 0.0
  %3108 = vmatmul.mubr.f32.gmra.mrb[0].mxu0 %v2973
  %v3109 = vpop.f32.mrb[0].mxu0
  %v3110 = vadd.f32 0.0, %v3109
  %v3111 = vpop.f32.mrb[0].mxu0
  %3112 = vmatprep.mubr.f32.mxu0 0.0
  %3113 = vmatmul.mubr.f32.gmra.mrb[0].mxu0 %v2976
  %v3114 = vpop.f32.mrb[0].mxu0
  %v3115 = vadd.f32 0.0, %v3114
  %v3116 = vpop.f32.mrb[0].mxu0
  %3117 = vmatprep.mubr.f32.mxu0 0.0
  %3118 = vmatmul.mubr.f32.gmra.mrb[0].mxu0 %v2979
  %v3119 = vpop.f32.mrb[0].mxu0
  %v3120 = vadd.f32 0.0, %v3119
  %v3121 = vpop.f32.mrb[0].mxu0
  %3122 = vmatprep.mubr.f32.mxu0 0.0
  %3123 = vmatmul.mubr.f32.gmra.mrb[0].mxu0 %v2982
  %v3124 = vpop.f32.mrb[0].mxu0
  %v3125 = vadd.f32 0.0, %v3124
  %v3126 = vpop.f32.mrb[0].mxu0
  %3127 = vmatprep.mubr.f32.mxu0 0.0
  %3128 = vmatmul.mubr.f32.gmra.mrb[0].mxu0 %v2985
  %v3129 = vpop.f32.mrb[0].mxu0
  %v3130 = vadd.f32 0.0, %v3129
  %v3131 = vpop.f32.mrb[0].mxu0
  %3132 = vmatprep.mubr.f32.mxu0 0.0
  %3133 = vmatmul.mubr.f32.gmra.mrb[0].mxu0 %v2988
  %v3134 = vpop.f32.mrb[0].mxu0
  %v3135 = vadd.f32 0.0, %v3134
  %v3136 = vpop.f32.mrb[0].mxu0
  %3137 = vmatprep.mubr.f32.mxu0 0.0
  %3138 = vmatmul.mubr.f32.gmra.mrb[0].mxu0 %v2991
  %v3139 = vpop.f32.mrb[0].mxu0
  %v3140 = vadd.f32 0.0, %v3139
  %v3141 = vpop.f32.mrb[0].mxu0
  %3142 = vmatprep.mubr.f32.mxu0 0.0
  %3143 = vmatmul.mubr.f32.gmra.mrb[0].mxu0 %v2994
  %v3144 = vpop.f32.mrb[0].mxu0
  %v3145 = vadd.f32 0.0, %v3144
  %v3146 = vpop.f32.mrb[0].mxu0
  %3147 = vmatprep.mubr.f32.mxu0 0.0
  %3148 = vmatmul.mubr.f32.gmra.mrb[0].mxu0 %v2997
  %v3149 = vpop.f32.mrb[0].mxu0
  %v3150 = vadd.f32 0.0, %v3149
  %v3151 = vpop.f32.mrb[0].mxu0
  %3152 = vmatprep.mubr.f32.mxu0 0.0
  %3153 = vmatmul.mubr.f32.gmra.mrb[0].mxu0 %v3000
  %v3154 = vpop.f32.mrb[0].mxu0
  %v3155 = vadd.f32 0.0, %v3154
  %v3156 = vpop.f32.mrb[0].mxu0
  %3157 = vmatprep.mubr.f32.mxu0 0.0
  %3158 = vmatmul.mubr.f32.gmra.mrb[0].mxu0 %v3003
  %v3159 = vpop.f32.mrb[0].mxu0
  %v3160 = vadd.f32 0.0, %v3159
  %v3161 = vpop.f32.mrb[0].mxu0
  %3162 = vmatprep.mubr.f32.mxu0 0.0
  %3163 = vmatmul.mubr.f32.gmra.mrb[0].mxu0 %v3006
  %v3164 = vpop.f32.mrb[0].mxu0
  %v3165 = vadd.f32 0.0, %v3164
  %v3166 = vpop.f32.mrb[0].mxu0
  %3167 = vmatprep.mubr.f32.mxu0 0.0
  %3168 = vmatmul.mubr.f32.gmra.mrb[0].mxu0 %v3009
  %v3169 = vpop.f32.mrb[0].mxu0
  %v3170 = vadd.f32 0.0, %v3169
  %v3171 = vpop.f32.mrb[0].mxu0
  %3172 = vmatprep.mubr.f32.mxu0 0.0
  %3173 = vmatmul.mubr.f32.gmra.mrb[0].mxu0 %v3012
  %v3174 = vpop.f32.mrb[0].mxu0
  %v3175 = vadd.f32 0.0, %v3174
  %v3176 = vpop.f32.mrb[0].mxu0
  %3177 = vmatprep.mubr.f32.mxu0 0.0
  %3178 = vmatmul.mubr.f32.gmra.mrb[0].mxu0 %v3015
  %v3179 = vpop.f32.mrb[0].mxu0
  %v3180 = vadd.f32 0.0, %v3179
  %v3181 = vpop.f32.mrb[0].mxu0
  %3182 = vmatprep.mubr.f32.mxu0 0.0
  %3183 = vmatmul.mubr.f32.gmra.mrb[0].mxu0 %v3018
  %v3184 = vpop.f32.mrb[0].mxu0
  %v3185 = vadd.f32 0.0, %v3184
  %v3186 = vpop.f32.mrb[0].mxu0
  %3187 = vmatprep.mubr.f32.mxu0 0.0
  %3188 = vmatmul.mubr.f32.gmra.mrb[0].mxu0 %v3021
  %v3189 = vpop.f32.mrb[0].mxu0
  %v3190 = vadd.f32 0.0, %v3189
  %v3191 = vpop.f32.mrb[0].mxu0
  %3192 = vdwg.mxu0
  %v3193 = vadd.f32 %v2916, %v3090
  %v3194 = vadd.f32 %v2917, %v3095
  %v3195 = vadd.f32 %v2918, %v3100
  %v3196 = vadd.f32 %v2919, %v3105
  %v3197 = vadd.f32 %v2920, %v3110
  %v3198 = vadd.f32 %v2921, %v3115
  %v3199 = vadd.f32 %v2922, %v3120
  %v3200 = vadd.f32 %v2923, %v3125
  %v3201 = vadd.f32 %v2924, %v3130
  %v3202 = vadd.f32 %v2925, %v3135
  %v3203 = vadd.f32 %v2926, %v3140
  %v3204 = vadd.f32 %v2927, %v3145
  %v3205 = vadd.f32 %v2928, %v3150
  %v3206 = vadd.f32 %v2929, %v3155
  %v3207 = vadd.f32 %v2930, %v3160
  %v3208 = vadd.f32 %v2931, %v3165
  %v3209 = vadd.f32 %v2932, %v3170
  %v3210 = vadd.f32 %v2933, %v3175
  %v3211 = vadd.f32 %v2934, %v3180
  %v3212 = vadd.f32 %v2935, %v3185
  %v3213 = vadd.f32 %v2936, %v3190
  %v3214 = vld [vmem:[#allocation4 + $0x1c] sm:$0xff]
  %v3215 = vld [vmem:[#allocation4 + $0x24] sm:$0xff]
  %v3216 = vld [vmem:[#allocation4 + $0x2c] sm:$0xff]
  %v3217 = vld [vmem:[#allocation4 + $0x34] sm:$0xff]
  %v3218 = vld [vmem:[#allocation4 + $0x3c] sm:$0xff]
  %v3219 = vld [vmem:[#allocation4 + $0x44] sm:$0xff]
  %v3220 = vld [vmem:[#allocation4 + $0x4c] sm:$0xff]
  %v3221 = vld [vmem:[#allocation4 + $0x54] sm:$0xff]
  %v3222 = vld [vmem:[#allocation4 + $0x5c] sm:$0xff]
  %v3223 = vld [vmem:[#allocation4 + $0x64] sm:$0xff]
  %v3224 = vld [vmem:[#allocation4 + $0x6c] sm:$0xff]
  %v3225 = vld [vmem:[#allocation4 + $0x74] sm:$0xff]
  %v3226 = vld [vmem:[#allocation4 + $0x7c] sm:$0xff]
  %v3227 = vld [vmem:[#allocation4 + $0x84] sm:$0xff]
  %v3228 = vld [vmem:[#allocation4 + $0x8c] sm:$0xff]
  %v3229 = vld [vmem:[#allocation4 + $0x94] sm:$0xff]
  %v3230 = vld [vmem:[#allocation4 + $0x9c] sm:$0xff]
  %v3231 = vld [vmem:[#allocation4 + $0xa4] sm:$0xff]
  %v3232 = vld [vmem:[#allocation4 + $0xac] sm:$0xff]
  %v3233 = vld [vmem:[#allocation4 + $0xb4] sm:$0xff]
  %v3234 = vld [vmem:[#allocation4 + $0xbc] sm:$0xff]
  %v3235 = vld [vmem:[%s3 + $0x60] sm:$0xff]
  %v3236 = vld [vmem:[%s3 + $0x68] sm:$0xff]
  %v3238 = vsel %vm1089, %v3214, 0
  %v3241 = vsel %vm1089, %v3215, 0
  %v3244 = vsel %vm1089, %v3216, 0
  %v3247 = vsel %vm1089, %v3217, 0
  %v3250 = vsel %vm1089, %v3218, 0
  %v3253 = vsel %vm1089, %v3219, 0
  %v3256 = vsel %vm1089, %v3220, 0
  %v3259 = vsel %vm1089, %v3221, 0
  %v3262 = vsel %vm1089, %v3222, 0
  %v3265 = vsel %vm1089, %v3223, 0
  %v3268 = vsel %vm1089, %v3224, 0
  %v3271 = vsel %vm1089, %v3225, 0
  %v3274 = vsel %vm1089, %v3226, 0
  %v3277 = vsel %vm1089, %v3227, 0
  %v3280 = vsel %vm1089, %v3228, 0
  %v3283 = vsel %vm1089, %v3229, 0
  %v3286 = vsel %vm1089, %v3230, 0
  %v3289 = vsel %vm1089, %v3231, 0
  %v3292 = vsel %vm1089, %v3232, 0
  %v3295 = vsel %vm1089, %v3233, 0
  %v3298 = vsel %vm1089, %v3234, 0
  %3300 = vmatprep.subr.mxu0 0.0
  %3301 = vmatpush1.msra.mxu0 %v3235
  %3302 = vmatprep.subr.mxu0 0.0
  %3303 = vmatpush1.msra.mxu0 %v3236
  %3304 = vmatprep.subr.mxu0 0.0
  %3305 = vmatpush1.msra.mxu0 0.0
  %3306 = vmatprep.subr.mxu0 0.0
  %3307 = vmatpush1.msra.mxu0 0.0
  %3308 = vmatprep.subr.mxu0 0.0
  %3309 = vmatpush1.msra.mxu0 0.0
  %3310 = vmatprep.subr.mxu0 0.0
  %3311 = vmatpush1.msra.mxu0 0.0
  %3312 = vmatprep.subr.mxu0 0.0
  %3313 = vmatpush1.msra.mxu0 0.0
  %3314 = vmatprep.subr.mxu0 0.0
  %3315 = vmatpush1.msra.mxu0 0.0
  %3316 = vmatprep.subr.mxu0 0.0
  %3317 = vmatpush1.msra.mxu0 0.0
  %3318 = vmatprep.subr.mxu0 0.0
  %3319 = vmatpush1.msra.mxu0 0.0
  %3320 = vmatprep.subr.mxu0 0.0
  %3321 = vmatpush1.msra.mxu0 0.0
  %3322 = vmatprep.subr.mxu0 0.0
  %3323 = vmatpush1.msra.mxu0 0.0
  %3324 = vmatprep.subr.mxu0 0.0
  %3325 = vmatpush1.msra.mxu0 0.0
  %3326 = vmatprep.subr.mxu0 0.0
  %3327 = vmatpush1.msra.mxu0 0.0
  %3328 = vmatprep.subr.mxu0 0.0
  %3329 = vmatpush1.msra.mxu0 0.0
  %3330 = vmatprep.subr.mxu0 0.0
  %3331 = vmatpush1.msra.mxu0 0.0
  %3332 = vmatprep.subr.mxu0 0.0
  %3333 = vmatpush1.msra.mxu0 0.0
  %3334 = vmatprep.subr.mxu0 0.0
  %3335 = vmatpush1.msra.mxu0 0.0
  %3336 = vmatprep.subr.mxu0 0.0
  %3337 = vmatpush1.msra.mxu0 0.0
  %3338 = vmatprep.subr.mxu0 0.0
  %3339 = vmatpush1.msra.mxu0 0.0
  %3340 = vmatprep.subr.mxu0 0.0
  %3341 = vmatpush1.msra.mxu0 0.0
  %3342 = vmatprep.subr.mxu0 0.0
  %3343 = vmatpush1.msra.mxu0 0.0
  %3344 = vmatprep.subr.mxu0 0.0
  %3345 = vmatpush1.msra.mxu0 0.0
  %3346 = vmatprep.subr.mxu0 0.0
  %3347 = vmatpush1.msra.mxu0 0.0
  %3348 = vmatprep.subr.mxu0 0.0
  %3349 = vmatpush1.msra.mxu0 0.0
  %3350 = vmatprep.subr.mxu0 0.0
  %3351 = vmatpush1.msra.mxu0 0.0
  %3352 = vmatprep.subr.mxu0 0.0
  %3353 = vmatpush1.msra.mxu0 0.0
  %3354 = vmatprep.subr.mxu0 0.0
  %3355 = vmatpush1.msra.mxu0 0.0
  %3356 = vmatprep.subr.mxu0 0.0
  %3357 = vmatpush1.msra.mxu0 0.0
  %3358 = vmatprep.subr.mxu0 0.0
  %3359 = vmatpush1.msra.mxu0 0.0
  %3360 = vmatprep.subr.mxu0 0.0
  %3361 = vmatpush1.msra.mxu0 0.0
  %3362 = vmatprep.subr.mxu0 0.0
  %3363 = vmatpush1.msra.mxu0 0.0
  %3364 = vmatprep.mubr.f32.mxu0 0.0
  %3365 = vmatmul.mubr.f32.gmra.mrb[0].mxu0 %v3238
  %v3366 = vpop.f32.mrb[0].mxu0
  %v3367 = vadd.f32 0.0, %v3366
  %v3368 = vpop.f32.mrb[0].mxu0
  %3369 = vmatprep.mubr.f32.mxu0 0.0
  %3370 = vmatmul.mubr.f32.gmra.mrb[0].mxu0 %v3241
  %v3371 = vpop.f32.mrb[0].mxu0
  %v3372 = vadd.f32 0.0, %v3371
  %v3373 = vpop.f32.mrb[0].mxu0
  %3374 = vmatprep.mubr.f32.mxu0 0.0
  %3375 = vmatmul.mubr.f32.gmra.mrb[0].mxu0 %v3244
  %v3376 = vpop.f32.mrb[0].mxu0
  %v3377 = vadd.f32 0.0, %v3376
  %v3378 = vpop.f32.mrb[0].mxu0
  %3379 = vmatprep.mubr.f32.mxu0 0.0
  %3380 = vmatmul.mubr.f32.gmra.mrb[0].mxu0 %v3247
  %v3381 = vpop.f32.mrb[0].mxu0
  %v3382 = vadd.f32 0.0, %v3381
  %v3383 = vpop.f32.mrb[0].mxu0
  %3384 = vmatprep.mubr.f32.mxu0 0.0
  %3385 = vmatmul.mubr.f32.gmra.mrb[0].mxu0 %v3250
  %v3386 = vpop.f32.mrb[0].mxu0
  %v3387 = vadd.f32 0.0, %v3386
  %v3388 = vpop.f32.mrb[0].mxu0
  %3389 = vmatprep.mubr.f32.mxu0 0.0
  %3390 = vmatmul.mubr.f32.gmra.mrb[0].mxu0 %v3253
  %v3391 = vpop.f32.mrb[0].mxu0
  %v3392 = vadd.f32 0.0, %v3391
  %v3393 = vpop.f32.mrb[0].mxu0
  %3394 = vmatprep.mubr.f32.mxu0 0.0
  %3395 = vmatmul.mubr.f32.gmra.mrb[0].mxu0 %v3256
  %v3396 = vpop.f32.mrb[0].mxu0
  %v3397 = vadd.f32 0.0, %v3396
  %v3398 = vpop.f32.mrb[0].mxu0
  %3399 = vmatprep.mubr.f32.mxu0 0.0
  %3400 = vmatmul.mubr.f32.gmra.mrb[0].mxu0 %v3259
  %v3401 = vpop.f32.mrb[0].mxu0
  %v3402 = vadd.f32 0.0, %v3401
  %v3403 = vpop.f32.mrb[0].mxu0
  %3404 = vmatprep.mubr.f32.mxu0 0.0
  %3405 = vmatmul.mubr.f32.gmra.mrb[0].mxu0 %v3262
  %v3406 = vpop.f32.mrb[0].mxu0
  %v3407 = vadd.f32 0.0, %v3406
  %v3408 = vpop.f32.mrb[0].mxu0
  %3409 = vmatprep.mubr.f32.mxu0 0.0
  %3410 = vmatmul.mubr.f32.gmra.mrb[0].mxu0 %v3265
  %v3411 = vpop.f32.mrb[0].mxu0
  %v3412 = vadd.f32 0.0, %v3411
  %v3413 = vpop.f32.mrb[0].mxu0
  %3414 = vmatprep.mubr.f32.mxu0 0.0
  %3415 = vmatmul.mubr.f32.gmra.mrb[0].mxu0 %v3268
  %v3416 = vpop.f32.mrb[0].mxu0
  %v3417 = vadd.f32 0.0, %v3416
  %v3418 = vpop.f32.mrb[0].mxu0
  %3419 = vmatprep.mubr.f32.mxu0 0.0
  %3420 = vmatmul.mubr.f32.gmra.mrb[0].mxu0 %v3271
  %v3421 = vpop.f32.mrb[0].mxu0
  %v3422 = vadd.f32 0.0, %v3421
  %v3423 = vpop.f32.mrb[0].mxu0
  %3424 = vmatprep.mubr.f32.mxu0 0.0
  %3425 = vmatmul.mubr.f32.gmra.mrb[0].mxu0 %v3274
  %v3426 = vpop.f32.mrb[0].mxu0
  %v3427 = vadd.f32 0.0, %v3426
  %v3428 = vpop.f32.mrb[0].mxu0
  %3429 = vmatprep.mubr.f32.mxu0 0.0
  %3430 = vmatmul.mubr.f32.gmra.mrb[0].mxu0 %v3277
  %v3431 = vpop.f32.mrb[0].mxu0
  %v3432 = vadd.f32 0.0, %v3431
  %v3433 = vpop.f32.mrb[0].mxu0
  %3434 = vmatprep.mubr.f32.mxu0 0.0
  %3435 = vmatmul.mubr.f32.gmra.mrb[0].mxu0 %v3280
  %v3436 = vpop.f32.mrb[0].mxu0
  %v3437 = vadd.f32 0.0, %v3436
  %v3438 = vpop.f32.mrb[0].mxu0
  %3439 = vmatprep.mubr.f32.mxu0 0.0
  %3440 = vmatmul.mubr.f32.gmra.mrb[0].mxu0 %v3283
  %v3441 = vpop.f32.mrb[0].mxu0
  %v3442 = vadd.f32 0.0, %v3441
  %v3443 = vpop.f32.mrb[0].mxu0
  %3444 = vmatprep.mubr.f32.mxu0 0.0
  %3445 = vmatmul.mubr.f32.gmra.mrb[0].mxu0 %v3286
  %v3446 = vpop.f32.mrb[0].mxu0
  %v3447 = vadd.f32 0.0, %v3446
  %v3448 = vpop.f32.mrb[0].mxu0
  %3449 = vmatprep.mubr.f32.mxu0 0.0
  %3450 = vmatmul.mubr.f32.gmra.mrb[0].mxu0 %v3289
  %v3451 = vpop.f32.mrb[0].mxu0
  %v3452 = vadd.f32 0.0, %v3451
  %v3453 = vpop.f32.mrb[0].mxu0
  %3454 = vmatprep.mubr.f32.mxu0 0.0
  %3455 = vmatmul.mubr.f32.gmra.mrb[0].mxu0 %v3292
  %v3456 = vpop.f32.mrb[0].mxu0
  %v3457 = vadd.f32 0.0, %v3456
  %v3458 = vpop.f32.mrb[0].mxu0
  %3459 = vmatprep.mubr.f32.mxu0 0.0
  %3460 = vmatmul.mubr.f32.gmra.mrb[0].mxu0 %v3295
  %v3461 = vpop.f32.mrb[0].mxu0
  %v3462 = vadd.f32 0.0, %v3461
  %v3463 = vpop.f32.mrb[0].mxu0
  %3464 = vmatprep.mubr.f32.mxu0 0.0
  %3465 = vmatmul.mubr.f32.gmra.mrb[0].mxu0 %v3298
  %v3466 = vpop.f32.mrb[0].mxu0
  %v3467 = vadd.f32 0.0, %v3466
  %v3468 = vpop.f32.mrb[0].mxu0
  %3469 = vdwg.mxu0
  %v3470 = vadd.f32 %v3193, %v3367
  %v3471 = vadd.f32 %v3194, %v3372
  %v3472 = vadd.f32 %v3195, %v3377
  %v3473 = vadd.f32 %v3196, %v3382
  %v3474 = vadd.f32 %v3197, %v3387
  %v3475 = vadd.f32 %v3198, %v3392
  %v3476 = vadd.f32 %v3199, %v3397
  %v3477 = vadd.f32 %v3200, %v3402
  %v3478 = vadd.f32 %v3201, %v3407
  %v3479 = vadd.f32 %v3202, %v3412
  %v3480 = vadd.f32 %v3203, %v3417
  %v3481 = vadd.f32 %v3204, %v3422
  %v3482 = vadd.f32 %v3205, %v3427
  %v3483 = vadd.f32 %v3206, %v3432
  %v3484 = vadd.f32 %v3207, %v3437
  %v3485 = vadd.f32 %v3208, %v3442
  %v3486 = vadd.f32 %v3209, %v3447
  %v3487 = vadd.f32 %v3210, %v3452
  %v3488 = vadd.f32 %v3211, %v3457
  %v3489 = vadd.f32 %v3212, %v3462
  %v3490 = vadd.f32 %v3213, %v3467
  %v3491 = vld [vmem:[#allocation4 + $0x1d] sm:$0xff]
  %v3492 = vld [vmem:[#allocation4 + $0x25] sm:$0xff]
  %v3493 = vld [vmem:[#allocation4 + $0x2d] sm:$0xff]
  %v3494 = vld [vmem:[#allocation4 + $0x35] sm:$0xff]
  %v3495 = vld [vmem:[#allocation4 + $0x3d] sm:$0xff]
  %v3496 = vld [vmem:[#allocation4 + $0x45] sm:$0xff]
  %v3497 = vld [vmem:[#allocation4 + $0x4d] sm:$0xff]
  %v3498 = vld [vmem:[#allocation4 + $0x55] sm:$0xff]
  %v3499 = vld [vmem:[#allocation4 + $0x5d] sm:$0xff]
  %v3500 = vld [vmem:[#allocation4 + $0x65] sm:$0xff]
  %v3501 = vld [vmem:[#allocation4 + $0x6d] sm:$0xff]
  %v3502 = vld [vmem:[#allocation4 + $0x75] sm:$0xff]
  %v3503 = vld [vmem:[#allocation4 + $0x7d] sm:$0xff]
  %v3504 = vld [vmem:[#allocation4 + $0x85] sm:$0xff]
  %v3505 = vld [vmem:[#allocation4 + $0x8d] sm:$0xff]
  %v3506 = vld [vmem:[#allocation4 + $0x95] sm:$0xff]
  %v3507 = vld [vmem:[#allocation4 + $0x9d] sm:$0xff]
  %v3508 = vld [vmem:[#allocation4 + $0xa5] sm:$0xff]
  %v3509 = vld [vmem:[#allocation4 + $0xad] sm:$0xff]
  %v3510 = vld [vmem:[#allocation4 + $0xb5] sm:$0xff]
  %v3511 = vld [vmem:[#allocation4 + $0xbd] sm:$0xff]
  %v3512 = vld [vmem:[%s3 + $0x70] sm:$0xff]
  %v3513 = vld [vmem:[%s3 + $0x78] sm:$0xff]
  %v3515 = vsel %vm1089, %v3491, 0
  %v3518 = vsel %vm1089, %v3492, 0
  %v3521 = vsel %vm1089, %v3493, 0
  %v3524 = vsel %vm1089, %v3494, 0
  %v3527 = vsel %vm1089, %v3495, 0
  %v3530 = vsel %vm1089, %v3496, 0
  %v3533 = vsel %vm1089, %v3497, 0
  %v3536 = vsel %vm1089, %v3498, 0
  %v3539 = vsel %vm1089, %v3499, 0
  %v3542 = vsel %vm1089, %v3500, 0
  %v3545 = vsel %vm1089, %v3501, 0
  %v3548 = vsel %vm1089, %v3502, 0
  %v3551 = vsel %vm1089, %v3503, 0
  %v3554 = vsel %vm1089, %v3504, 0
  %v3557 = vsel %vm1089, %v3505, 0
  %v3560 = vsel %vm1089, %v3506, 0
  %v3563 = vsel %vm1089, %v3507, 0
  %v3566 = vsel %vm1089, %v3508, 0
  %v3569 = vsel %vm1089, %v3509, 0
  %v3572 = vsel %vm1089, %v3510, 0
  %v3575 = vsel %vm1089, %v3511, 0
  %3577 = vmatprep.subr.mxu0 0.0
  %3578 = vmatpush1.msra.mxu0 %v3512
  %3579 = vmatprep.subr.mxu0 0.0
  %3580 = vmatpush1.msra.mxu0 %v3513
  %3581 = vmatprep.subr.mxu0 0.0
  %3582 = vmatpush1.msra.mxu0 0.0
  %3583 = vmatprep.subr.mxu0 0.0
  %3584 = vmatpush1.msra.mxu0 0.0
  %3585 = vmatprep.subr.mxu0 0.0
  %3586 = vmatpush1.msra.mxu0 0.0
  %3587 = vmatprep.subr.mxu0 0.0
  %3588 = vmatpush1.msra.mxu0 0.0
  %3589 = vmatprep.subr.mxu0 0.0
  %3590 = vmatpush1.msra.mxu0 0.0
  %3591 = vmatprep.subr.mxu0 0.0
  %3592 = vmatpush1.msra.mxu0 0.0
  %3593 = vmatprep.subr.mxu0 0.0
  %3594 = vmatpush1.msra.mxu0 0.0
  %3595 = vmatprep.subr.mxu0 0.0
  %3596 = vmatpush1.msra.mxu0 0.0
  %3597 = vmatprep.subr.mxu0 0.0
  %3598 = vmatpush1.msra.mxu0 0.0
  %3599 = vmatprep.subr.mxu0 0.0
  %3600 = vmatpush1.msra.mxu0 0.0
  %3601 = vmatprep.subr.mxu0 0.0
  %3602 = vmatpush1.msra.mxu0 0.0
  %3603 = vmatprep.subr.mxu0 0.0
  %3604 = vmatpush1.msra.mxu0 0.0
  %3605 = vmatprep.subr.mxu0 0.0
  %3606 = vmatpush1.msra.mxu0 0.0
  %3607 = vmatprep.subr.mxu0 0.0
  %3608 = vmatpush1.msra.mxu0 0.0
  %3609 = vmatprep.subr.mxu0 0.0
  %3610 = vmatpush1.msra.mxu0 0.0
  %3611 = vmatprep.subr.mxu0 0.0
  %3612 = vmatpush1.msra.mxu0 0.0
  %3613 = vmatprep.subr.mxu0 0.0
  %3614 = vmatpush1.msra.mxu0 0.0
  %3615 = vmatprep.subr.mxu0 0.0
  %3616 = vmatpush1.msra.mxu0 0.0
  %3617 = vmatprep.subr.mxu0 0.0
  %3618 = vmatpush1.msra.mxu0 0.0
  %3619 = vmatprep.subr.mxu0 0.0
  %3620 = vmatpush1.msra.mxu0 0.0
  %3621 = vmatprep.subr.mxu0 0.0
  %3622 = vmatpush1.msra.mxu0 0.0
  %3623 = vmatprep.subr.mxu0 0.0
  %3624 = vmatpush1.msra.mxu0 0.0
  %3625 = vmatprep.subr.mxu0 0.0
  %3626 = vmatpush1.msra.mxu0 0.0
  %3627 = vmatprep.subr.mxu0 0.0
  %3628 = vmatpush1.msra.mxu0 0.0
  %3629 = vmatprep.subr.mxu0 0.0
  %3630 = vmatpush1.msra.mxu0 0.0
  %3631 = vmatprep.subr.mxu0 0.0
  %3632 = vmatpush1.msra.mxu0 0.0
  %3633 = vmatprep.subr.mxu0 0.0
  %3634 = vmatpush1.msra.mxu0 0.0
  %3635 = vmatprep.subr.mxu0 0.0
  %3636 = vmatpush1.msra.mxu0 0.0
  %3637 = vmatprep.subr.mxu0 0.0
  %3638 = vmatpush1.msra.mxu0 0.0
  %3639 = vmatprep.subr.mxu0 0.0
  %3640 = vmatpush1.msra.mxu0 0.0
  %3641 = vmatprep.mubr.f32.mxu0 0.0
  %3642 = vmatmul.mubr.f32.gmra.mrb[0].mxu0 %v3515
  %v3643 = vpop.f32.mrb[0].mxu0
  %v3644 = vadd.f32 0.0, %v3643
  %v3645 = vpop.f32.mrb[0].mxu0
  %3646 = vmatprep.mubr.f32.mxu0 0.0
  %3647 = vmatmul.mubr.f32.gmra.mrb[0].mxu0 %v3518
  %v3648 = vpop.f32.mrb[0].mxu0
  %v3649 = vadd.f32 0.0, %v3648
  %v3650 = vpop.f32.mrb[0].mxu0
  %3651 = vmatprep.mubr.f32.mxu0 0.0
  %3652 = vmatmul.mubr.f32.gmra.mrb[0].mxu0 %v3521
  %v3653 = vpop.f32.mrb[0].mxu0
  %v3654 = vadd.f32 0.0, %v3653
  %v3655 = vpop.f32.mrb[0].mxu0
  %3656 = vmatprep.mubr.f32.mxu0 0.0
  %3657 = vmatmul.mubr.f32.gmra.mrb[0].mxu0 %v3524
  %v3658 = vpop.f32.mrb[0].mxu0
  %v3659 = vadd.f32 0.0, %v3658
  %v3660 = vpop.f32.mrb[0].mxu0
  %3661 = vmatprep.mubr.f32.mxu0 0.0
  %3662 = vmatmul.mubr.f32.gmra.mrb[0].mxu0 %v3527
  %v3663 = vpop.f32.mrb[0].mxu0
  %v3664 = vadd.f32 0.0, %v3663
  %v3665 = vpop.f32.mrb[0].mxu0
  %3666 = vmatprep.mubr.f32.mxu0 0.0
  %3667 = vmatmul.mubr.f32.gmra.mrb[0].mxu0 %v3530
  %v3668 = vpop.f32.mrb[0].mxu0
  %v3669 = vadd.f32 0.0, %v3668
  %v3670 = vpop.f32.mrb[0].mxu0
  %3671 = vmatprep.mubr.f32.mxu0 0.0
  %3672 = vmatmul.mubr.f32.gmra.mrb[0].mxu0 %v3533
  %v3673 = vpop.f32.mrb[0].mxu0
  %v3674 = vadd.f32 0.0, %v3673
  %v3675 = vpop.f32.mrb[0].mxu0
  %3676 = vmatprep.mubr.f32.mxu0 0.0
  %3677 = vmatmul.mubr.f32.gmra.mrb[0].mxu0 %v3536
  %v3678 = vpop.f32.mrb[0].mxu0
  %v3679 = vadd.f32 0.0, %v3678
  %v3680 = vpop.f32.mrb[0].mxu0
  %3681 = vmatprep.mubr.f32.mxu0 0.0
  %3682 = vmatmul.mubr.f32.gmra.mrb[0].mxu0 %v3539
  %v3683 = vpop.f32.mrb[0].mxu0
  %v3684 = vadd.f32 0.0, %v3683
  %v3685 = vpop.f32.mrb[0].mxu0
  %3686 = vmatprep.mubr.f32.mxu0 0.0
  %3687 = vmatmul.mubr.f32.gmra.mrb[0].mxu0 %v3542
  %v3688 = vpop.f32.mrb[0].mxu0
  %v3689 = vadd.f32 0.0, %v3688
  %v3690 = vpop.f32.mrb[0].mxu0
  %3691 = vmatprep.mubr.f32.mxu0 0.0
  %3692 = vmatmul.mubr.f32.gmra.mrb[0].mxu0 %v3545
  %v3693 = vpop.f32.mrb[0].mxu0
  %v3694 = vadd.f32 0.0, %v3693
  %v3695 = vpop.f32.mrb[0].mxu0
  %3696 = vmatprep.mubr.f32.mxu0 0.0
  %3697 = vmatmul.mubr.f32.gmra.mrb[0].mxu0 %v3548
  %v3698 = vpop.f32.mrb[0].mxu0
  %v3699 = vadd.f32 0.0, %v3698
  %v3700 = vpop.f32.mrb[0].mxu0
  %3701 = vmatprep.mubr.f32.mxu0 0.0
  %3702 = vmatmul.mubr.f32.gmra.mrb[0].mxu0 %v3551
  %v3703 = vpop.f32.mrb[0].mxu0
  %v3704 = vadd.f32 0.0, %v3703
  %v3705 = vpop.f32.mrb[0].mxu0
  %3706 = vmatprep.mubr.f32.mxu0 0.0
  %3707 = vmatmul.mubr.f32.gmra.mrb[0].mxu0 %v3554
  %v3708 = vpop.f32.mrb[0].mxu0
  %v3709 = vadd.f32 0.0, %v3708
  %v3710 = vpop.f32.mrb[0].mxu0
  %3711 = vmatprep.mubr.f32.mxu0 0.0
  %3712 = vmatmul.mubr.f32.gmra.mrb[0].mxu0 %v3557
  %v3713 = vpop.f32.mrb[0].mxu0
  %v3714 = vadd.f32 0.0, %v3713
  %v3715 = vpop.f32.mrb[0].mxu0
  %3716 = vmatprep.mubr.f32.mxu0 0.0
  %3717 = vmatmul.mubr.f32.gmra.mrb[0].mxu0 %v3560
  %v3718 = vpop.f32.mrb[0].mxu0
  %v3719 = vadd.f32 0.0, %v3718
  %v3720 = vpop.f32.mrb[0].mxu0
  %3721 = vmatprep.mubr.f32.mxu0 0.0
  %3722 = vmatmul.mubr.f32.gmra.mrb[0].mxu0 %v3563
  %v3723 = vpop.f32.mrb[0].mxu0
  %v3724 = vadd.f32 0.0, %v3723
  %v3725 = vpop.f32.mrb[0].mxu0
  %3726 = vmatprep.mubr.f32.mxu0 0.0
  %3727 = vmatmul.mubr.f32.gmra.mrb[0].mxu0 %v3566
  %v3728 = vpop.f32.mrb[0].mxu0
  %v3729 = vadd.f32 0.0, %v3728
  %v3730 = vpop.f32.mrb[0].mxu0
  %3731 = vmatprep.mubr.f32.mxu0 0.0
  %3732 = vmatmul.mubr.f32.gmra.mrb[0].mxu0 %v3569
  %v3733 = vpop.f32.mrb[0].mxu0
  %v3734 = vadd.f32 0.0, %v3733
  %v3735 = vpop.f32.mrb[0].mxu0
  %3736 = vmatprep.mubr.f32.mxu0 0.0
  %3737 = vmatmul.mubr.f32.gmra.mrb[0].mxu0 %v3572
  %v3738 = vpop.f32.mrb[0].mxu0
  %v3739 = vadd.f32 0.0, %v3738
  %v3740 = vpop.f32.mrb[0].mxu0
  %3741 = vmatprep.mubr.f32.mxu0 0.0
  %3742 = vmatmul.mubr.f32.gmra.mrb[0].mxu0 %v3575
  %v3743 = vpop.f32.mrb[0].mxu0
  %v3744 = vadd.f32 0.0, %v3743
  %v3745 = vpop.f32.mrb[0].mxu0
  %3746 = vdwg.mxu0
  %v3747 = vadd.f32 %v3470, %v3644
  %v3748 = vadd.f32 %v3471, %v3649
  %v3749 = vadd.f32 %v3472, %v3654
  %v3750 = vadd.f32 %v3473, %v3659
  %v3751 = vadd.f32 %v3474, %v3664
  %v3752 = vadd.f32 %v3475, %v3669
  %v3753 = vadd.f32 %v3476, %v3674
  %v3754 = vadd.f32 %v3477, %v3679
  %v3755 = vadd.f32 %v3478, %v3684
  %v3756 = vadd.f32 %v3479, %v3689
  %v3757 = vadd.f32 %v3480, %v3694
  %v3758 = vadd.f32 %v3481, %v3699
  %v3759 = vadd.f32 %v3482, %v3704
  %v3760 = vadd.f32 %v3483, %v3709
  %v3761 = vadd.f32 %v3484, %v3714
  %v3762 = vadd.f32 %v3485, %v3719
  %v3763 = vadd.f32 %v3486, %v3724
  %v3764 = vadd.f32 %v3487, %v3729
  %v3765 = vadd.f32 %v3488, %v3734
  %v3766 = vadd.f32 %v3489, %v3739
  %v3767 = vadd.f32 %v3490, %v3744
  %v3768 = vld [vmem:[#allocation4 + $0x1e] sm:$0xff]
  %v3769 = vld [vmem:[#allocation4 + $0x26] sm:$0xff]
  %v3770 = vld [vmem:[#allocation4 + $0x2e] sm:$0xff]
  %v3771 = vld [vmem:[#allocation4 + $0x36] sm:$0xff]
  %v3772 = vld [vmem:[#allocation4 + $0x3e] sm:$0xff]
  %v3773 = vld [vmem:[#allocation4 + $0x46] sm:$0xff]
  %v3774 = vld [vmem:[#allocation4 + $0x4e] sm:$0xff]
  %v3775 = vld [vmem:[#allocation4 + $0x56] sm:$0xff]
  %v3776 = vld [vmem:[#allocation4 + $0x5e] sm:$0xff]
  %v3777 = vld [vmem:[#allocation4 + $0x66] sm:$0xff]
  %v3778 = vld [vmem:[#allocation4 + $0x6e] sm:$0xff]
  %v3779 = vld [vmem:[#allocation4 + $0x76] sm:$0xff]
  %v3780 = vld [vmem:[#allocation4 + $0x7e] sm:$0xff]
  %v3781 = vld [vmem:[#allocation4 + $0x86] sm:$0xff]
  %v3782 = vld [vmem:[#allocation4 + $0x8e] sm:$0xff]
  %v3783 = vld [vmem:[#allocation4 + $0x96] sm:$0xff]
  %v3784 = vld [vmem:[#allocation4 + $0x9e] sm:$0xff]
  %v3785 = vld [vmem:[#allocation4 + $0xa6] sm:$0xff]
  %v3786 = vld [vmem:[#allocation4 + $0xae] sm:$0xff]
  %v3787 = vld [vmem:[#allocation4 + $0xb6] sm:$0xff]
  %v3788 = vld [vmem:[#allocation4 + $0xbe] sm:$0xff]
  %v3789 = vld [vmem:[%s3 + $0x80] sm:$0xff]
  %v3790 = vld [vmem:[%s3 + $0x88] sm:$0xff]
  %v3792 = vsel %vm1089, %v3768, 0
  %v3795 = vsel %vm1089, %v3769, 0
  %v3798 = vsel %vm1089, %v3770, 0
  %v3801 = vsel %vm1089, %v3771, 0
  %v3804 = vsel %vm1089, %v3772, 0
  %v3807 = vsel %vm1089, %v3773, 0
  %v3810 = vsel %vm1089, %v3774, 0
  %v3813 = vsel %vm1089, %v3775, 0
  %v3816 = vsel %vm1089, %v3776, 0
  %v3819 = vsel %vm1089, %v3777, 0
  %v3822 = vsel %vm1089, %v3778, 0
  %v3825 = vsel %vm1089, %v3779, 0
  %v3828 = vsel %vm1089, %v3780, 0
  %v3831 = vsel %vm1089, %v3781, 0
  %v3834 = vsel %vm1089, %v3782, 0
  %v3837 = vsel %vm1089, %v3783, 0
  %v3840 = vsel %vm1089, %v3784, 0
  %v3843 = vsel %vm1089, %v3785, 0
  %v3846 = vsel %vm1089, %v3786, 0
  %v3849 = vsel %vm1089, %v3787, 0
  %v3852 = vsel %vm1089, %v3788, 0
  %3854 = vmatprep.subr.mxu0 0.0
  %3855 = vmatpush1.msra.mxu0 %v3789
  %3856 = vmatprep.subr.mxu0 0.0
  %3857 = vmatpush1.msra.mxu0 %v3790
  %3858 = vmatprep.subr.mxu0 0.0
  %3859 = vmatpush1.msra.mxu0 0.0
  %3860 = vmatprep.subr.mxu0 0.0
  %3861 = vmatpush1.msra.mxu0 0.0
  %3862 = vmatprep.subr.mxu0 0.0
  %3863 = vmatpush1.msra.mxu0 0.0
  %3864 = vmatprep.subr.mxu0 0.0
  %3865 = vmatpush1.msra.mxu0 0.0
  %3866 = vmatprep.subr.mxu0 0.0
  %3867 = vmatpush1.msra.mxu0 0.0
  %3868 = vmatprep.subr.mxu0 0.0
  %3869 = vmatpush1.msra.mxu0 0.0
  %3870 = vmatprep.subr.mxu0 0.0
  %3871 = vmatpush1.msra.mxu0 0.0
  %3872 = vmatprep.subr.mxu0 0.0
  %3873 = vmatpush1.msra.mxu0 0.0
  %3874 = vmatprep.subr.mxu0 0.0
  %3875 = vmatpush1.msra.mxu0 0.0
  %3876 = vmatprep.subr.mxu0 0.0
  %3877 = vmatpush1.msra.mxu0 0.0
  %3878 = vmatprep.subr.mxu0 0.0
  %3879 = vmatpush1.msra.mxu0 0.0
  %3880 = vmatprep.subr.mxu0 0.0
  %3881 = vmatpush1.msra.mxu0 0.0
  %3882 = vmatprep.subr.mxu0 0.0
  %3883 = vmatpush1.msra.mxu0 0.0
  %3884 = vmatprep.subr.mxu0 0.0
  %3885 = vmatpush1.msra.mxu0 0.0
  %3886 = vmatprep.subr.mxu0 0.0
  %3887 = vmatpush1.msra.mxu0 0.0
  %3888 = vmatprep.subr.mxu0 0.0
  %3889 = vmatpush1.msra.mxu0 0.0
  %3890 = vmatprep.subr.mxu0 0.0
  %3891 = vmatpush1.msra.mxu0 0.0
  %3892 = vmatprep.subr.mxu0 0.0
  %3893 = vmatpush1.msra.mxu0 0.0
  %3894 = vmatprep.subr.mxu0 0.0
  %3895 = vmatpush1.msra.mxu0 0.0
  %3896 = vmatprep.subr.mxu0 0.0
  %3897 = vmatpush1.msra.mxu0 0.0
  %3898 = vmatprep.subr.mxu0 0.0
  %3899 = vmatpush1.msra.mxu0 0.0
  %3900 = vmatprep.subr.mxu0 0.0
  %3901 = vmatpush1.msra.mxu0 0.0
  %3902 = vmatprep.subr.mxu0 0.0
  %3903 = vmatpush1.msra.mxu0 0.0
  %3904 = vmatprep.subr.mxu0 0.0
  %3905 = vmatpush1.msra.mxu0 0.0
  %3906 = vmatprep.subr.mxu0 0.0
  %3907 = vmatpush1.msra.mxu0 0.0
  %3908 = vmatprep.subr.mxu0 0.0
  %3909 = vmatpush1.msra.mxu0 0.0
  %3910 = vmatprep.subr.mxu0 0.0
  %3911 = vmatpush1.msra.mxu0 0.0
  %3912 = vmatprep.subr.mxu0 0.0
  %3913 = vmatpush1.msra.mxu0 0.0
  %3914 = vmatprep.subr.mxu0 0.0
  %3915 = vmatpush1.msra.mxu0 0.0
  %3916 = vmatprep.subr.mxu0 0.0
  %3917 = vmatpush1.msra.mxu0 0.0
  %3918 = vmatprep.mubr.f32.mxu0 0.0
  %3919 = vmatmul.mubr.f32.gmra.mrb[0].mxu0 %v3792
  %v3920 = vpop.f32.mrb[0].mxu0
  %v3921 = vadd.f32 0.0, %v3920
  %v3922 = vpop.f32.mrb[0].mxu0
  %3923 = vmatprep.mubr.f32.mxu0 0.0
  %3924 = vmatmul.mubr.f32.gmra.mrb[0].mxu0 %v3795
  %v3925 = vpop.f32.mrb[0].mxu0
  %v3926 = vadd.f32 0.0, %v3925
  %v3927 = vpop.f32.mrb[0].mxu0
  %3928 = vmatprep.mubr.f32.mxu0 0.0
  %3929 = vmatmul.mubr.f32.gmra.mrb[0].mxu0 %v3798
  %v3930 = vpop.f32.mrb[0].mxu0
  %v3931 = vadd.f32 0.0, %v3930
  %v3932 = vpop.f32.mrb[0].mxu0
  %3933 = vmatprep.mubr.f32.mxu0 0.0
  %3934 = vmatmul.mubr.f32.gmra.mrb[0].mxu0 %v3801
  %v3935 = vpop.f32.mrb[0].mxu0
  %v3936 = vadd.f32 0.0, %v3935
  %v3937 = vpop.f32.mrb[0].mxu0
  %3938 = vmatprep.mubr.f32.mxu0 0.0
  %3939 = vmatmul.mubr.f32.gmra.mrb[0].mxu0 %v3804
  %v3940 = vpop.f32.mrb[0].mxu0
  %v3941 = vadd.f32 0.0, %v3940
  %v3942 = vpop.f32.mrb[0].mxu0
  %3943 = vmatprep.mubr.f32.mxu0 0.0
  %3944 = vmatmul.mubr.f32.gmra.mrb[0].mxu0 %v3807
  %v3945 = vpop.f32.mrb[0].mxu0
  %v3946 = vadd.f32 0.0, %v3945
  %v3947 = vpop.f32.mrb[0].mxu0
  %3948 = vmatprep.mubr.f32.mxu0 0.0
  %3949 = vmatmul.mubr.f32.gmra.mrb[0].mxu0 %v3810
  %v3950 = vpop.f32.mrb[0].mxu0
  %v3951 = vadd.f32 0.0, %v3950
  %v3952 = vpop.f32.mrb[0].mxu0
  %3953 = vmatprep.mubr.f32.mxu0 0.0
  %3954 = vmatmul.mubr.f32.gmra.mrb[0].mxu0 %v3813
  %v3955 = vpop.f32.mrb[0].mxu0
  %v3956 = vadd.f32 0.0, %v3955
  %v3957 = vpop.f32.mrb[0].mxu0
  %3958 = vmatprep.mubr.f32.mxu0 0.0
  %3959 = vmatmul.mubr.f32.gmra.mrb[0].mxu0 %v3816
  %v3960 = vpop.f32.mrb[0].mxu0
  %v3961 = vadd.f32 0.0, %v3960
  %v3962 = vpop.f32.mrb[0].mxu0
  %3963 = vmatprep.mubr.f32.mxu0 0.0
  %3964 = vmatmul.mubr.f32.gmra.mrb[0].mxu0 %v3819
  %v3965 = vpop.f32.mrb[0].mxu0
  %v3966 = vadd.f32 0.0, %v3965
  %v3967 = vpop.f32.mrb[0].mxu0
  %3968 = vmatprep.mubr.f32.mxu0 0.0
  %3969 = vmatmul.mubr.f32.gmra.mrb[0].mxu0 %v3822
  %v3970 = vpop.f32.mrb[0].mxu0
  %v3971 = vadd.f32 0.0, %v3970
  %v3972 = vpop.f32.mrb[0].mxu0
  %3973 = vmatprep.mubr.f32.mxu0 0.0
  %3974 = vmatmul.mubr.f32.gmra.mrb[0].mxu0 %v3825
  %v3975 = vpop.f32.mrb[0].mxu0
  %v3976 = vadd.f32 0.0, %v3975
  %v3977 = vpop.f32.mrb[0].mxu0
  %3978 = vmatprep.mubr.f32.mxu0 0.0
  %3979 = vmatmul.mubr.f32.gmra.mrb[0].mxu0 %v3828
  %v3980 = vpop.f32.mrb[0].mxu0
  %v3981 = vadd.f32 0.0, %v3980
  %v3982 = vpop.f32.mrb[0].mxu0
  %3983 = vmatprep.mubr.f32.mxu0 0.0
  %3984 = vmatmul.mubr.f32.gmra.mrb[0].mxu0 %v3831
  %v3985 = vpop.f32.mrb[0].mxu0
  %v3986 = vadd.f32 0.0, %v3985
  %v3987 = vpop.f32.mrb[0].mxu0
  %3988 = vmatprep.mubr.f32.mxu0 0.0
  %3989 = vmatmul.mubr.f32.gmra.mrb[0].mxu0 %v3834
  %v3990 = vpop.f32.mrb[0].mxu0
  %v3991 = vadd.f32 0.0, %v3990
  %v3992 = vpop.f32.mrb[0].mxu0
  %3993 = vmatprep.mubr.f32.mxu0 0.0
  %3994 = vmatmul.mubr.f32.gmra.mrb[0].mxu0 %v3837
  %v3995 = vpop.f32.mrb[0].mxu0
  %v3996 = vadd.f32 0.0, %v3995
  %v3997 = vpop.f32.mrb[0].mxu0
  %3998 = vmatprep.mubr.f32.mxu0 0.0
  %3999 = vmatmul.mubr.f32.gmra.mrb[0].mxu0 %v3840
  %v4000 = vpop.f32.mrb[0].mxu0
  %v4001 = vadd.f32 0.0, %v4000
  %v4002 = vpop.f32.mrb[0].mxu0
  %4003 = vmatprep.mubr.f32.mxu0 0.0
  %4004 = vmatmul.mubr.f32.gmra.mrb[0].mxu0 %v3843
  %v4005 = vpop.f32.mrb[0].mxu0
  %v4006 = vadd.f32 0.0, %v4005
  %v4007 = vpop.f32.mrb[0].mxu0
  %4008 = vmatprep.mubr.f32.mxu0 0.0
  %4009 = vmatmul.mubr.f32.gmra.mrb[0].mxu0 %v3846
  %v4010 = vpop.f32.mrb[0].mxu0
  %v4011 = vadd.f32 0.0, %v4010
  %v4012 = vpop.f32.mrb[0].mxu0
  %4013 = vmatprep.mubr.f32.mxu0 0.0
  %4014 = vmatmul.mubr.f32.gmra.mrb[0].mxu0 %v3849
  %v4015 = vpop.f32.mrb[0].mxu0
  %v4016 = vadd.f32 0.0, %v4015
  %v4017 = vpop.f32.mrb[0].mxu0
  %4018 = vmatprep.mubr.f32.mxu0 0.0
  %4019 = vmatmul.mubr.f32.gmra.mrb[0].mxu0 %v3852
  %v4020 = vpop.f32.mrb[0].mxu0
  %v4021 = vadd.f32 0.0, %v4020
  %v4022 = vpop.f32.mrb[0].mxu0
  %4023 = vdwg.mxu0
  %v4024 = vadd.f32 %v3747, %v3921
  %v4025 = vadd.f32 %v3748, %v3926
  %v4026 = vadd.f32 %v3749, %v3931
  %v4027 = vadd.f32 %v3750, %v3936
  %v4028 = vadd.f32 %v3751, %v3941
  %v4029 = vadd.f32 %v3752, %v3946
  %v4030 = vadd.f32 %v3753, %v3951
  %v4031 = vadd.f32 %v3754, %v3956
  %v4032 = vadd.f32 %v3755, %v3961
  %v4033 = vadd.f32 %v3756, %v3966
  %v4034 = vadd.f32 %v3757, %v3971
  %v4035 = vadd.f32 %v3758, %v3976
  %v4036 = vadd.f32 %v3759, %v3981
  %v4037 = vadd.f32 %v3760, %v3986
  %v4038 = vadd.f32 %v3761, %v3991
  %v4039 = vadd.f32 %v3762, %v3996
  %v4040 = vadd.f32 %v3763, %v4001
  %v4041 = vadd.f32 %v3764, %v4006
  %v4042 = vadd.f32 %v3765, %v4011
  %v4043 = vadd.f32 %v3766, %v4016
  %v4044 = vadd.f32 %v3767, %v4021
  %v4045 = vld [vmem:[%s4] sm:$0x1]
  %v4047 = vlaneseq
  %v4048 = vshrl.u32 %v4047, 7
  %v4049 = vsub.s32 0, %v4048
  %v4050 = vrot.slane %v4045, %v4049
  %v4052 = vadd.f32 %v4024, %v4050
  %v4053 = vadd.f32 %v4025, %v4050
  %v4054 = vadd.f32 %v4026, %v4050
  %v4055 = vadd.f32 %v4027, %v4050
  %v4056 = vadd.f32 %v4028, %v4050
  %v4057 = vadd.f32 %v4029, %v4050
  %v4058 = vadd.f32 %v4030, %v4050
  %v4059 = vadd.f32 %v4031, %v4050
  %v4060 = vadd.f32 %v4032, %v4050
  %v4061 = vadd.f32 %v4033, %v4050
  %v4062 = vadd.f32 %v4034, %v4050
  %v4063 = vadd.f32 %v4035, %v4050
  %v4064 = vadd.f32 %v4036, %v4050
  %v4065 = vadd.f32 %v4037, %v4050
  %v4066 = vadd.f32 %v4038, %v4050
  %v4067 = vadd.f32 %v4039, %v4050
  %v4068 = vadd.f32 %v4040, %v4050
  %v4069 = vadd.f32 %v4041, %v4050
  %v4070 = vadd.f32 %v4042, %v4050
  %v4071 = vadd.f32 %v4043, %v4050
  %v4072 = vadd.f32 %v4044, %v4050
  %v4073 = vmax.f32 %v4052, 0.0
  %v4074 = vmax.f32 %v4053, 0.0
  %v4075 = vmax.f32 %v4054, 0.0
  %v4076 = vmax.f32 %v4055, 0.0
  %v4077 = vmax.f32 %v4056, 0.0
  %v4078 = vmax.f32 %v4057, 0.0
  %v4079 = vmax.f32 %v4058, 0.0
  %v4080 = vmax.f32 %v4059, 0.0
  %v4081 = vmax.f32 %v4060, 0.0
  %v4082 = vmax.f32 %v4061, 0.0
  %v4083 = vmax.f32 %v4062, 0.0
  %v4084 = vmax.f32 %v4063, 0.0
  %v4085 = vmax.f32 %v4064, 0.0
  %v4086 = vmax.f32 %v4065, 0.0
  %v4087 = vmax.f32 %v4066, 0.0
  %v4088 = vmax.f32 %v4067, 0.0
  %v4089 = vmax.f32 %v4068, 0.0
  %v4090 = vmax.f32 %v4069, 0.0
  %v4091 = vmax.f32 %v4070, 0.0
  %v4092 = vmax.f32 %v4071, 0.0
  %v4093 = vmax.f32 %v4072, 0.0
  %vm4094 = vcmask 261120
  %4095 = vst.msk [vmem:[#allocation5] sm:$0xff] %vm4094, %v4073
  %4096 = vst.msk [vmem:[#allocation5 + $0x8] sm:$0xff] %vm4094, %v4074
  %4097 = vst.msk [vmem:[#allocation5 + $0x10] sm:$0xff] %vm4094, %v4075
  %4098 = vst.msk [vmem:[#allocation5 + $0x18] sm:$0xff] %vm4094, %v4076
  %4099 = vst.msk [vmem:[#allocation5 + $0x20] sm:$0xff] %vm4094, %v4077
  %4100 = vst.msk [vmem:[#allocation5 + $0x28] sm:$0xff] %vm4094, %v4078
  %4101 = vst.msk [vmem:[#allocation5 + $0x30] sm:$0xff] %vm4094, %v4079
  %4102 = vst.msk [vmem:[#allocation5 + $0x38] sm:$0xff] %vm4094, %v4080
  %4103 = vst.msk [vmem:[#allocation5 + $0x40] sm:$0xff] %vm4094, %v4081
  %4104 = vst.msk [vmem:[#allocation5 + $0x48] sm:$0xff] %vm4094, %v4082
  %4105 = vst.msk [vmem:[#allocation5 + $0x50] sm:$0xff] %vm4094, %v4083
  %4106 = vst.msk [vmem:[#allocation5 + $0x58] sm:$0xff] %vm4094, %v4084
  %4107 = vst.msk [vmem:[#allocation5 + $0x60] sm:$0xff] %vm4094, %v4085
  %4108 = vst.msk [vmem:[#allocation5 + $0x68] sm:$0xff] %vm4094, %v4086
  %4109 = vst.msk [vmem:[#allocation5 + $0x70] sm:$0xff] %vm4094, %v4087
  %4110 = vst.msk [vmem:[#allocation5 + $0x78] sm:$0xff] %vm4094, %v4088
  %4111 = vst.msk [vmem:[#allocation5 + $0x80] sm:$0xff] %vm4094, %v4089
  %4112 = vst.msk [vmem:[#allocation5 + $0x88] sm:$0xff] %vm4094, %v4090
  %4113 = vst.msk [vmem:[#allocation5 + $0x90] sm:$0xff] %vm4094, %v4091
  %4114 = vst.msk [vmem:[#allocation5 + $0x98] sm:$0xff] %vm4094, %v4092
  %4115 = vst.msk [vmem:[#allocation5 + $0xa0] sm:$0xff] %vm4094, %v4093
  %v4116 = vld [vmem:[#allocation5] ss:$2 sm:$0xff]
  %s4117 = scalar_lea.vmem [#allocation5], 16
  %v4118 = vld [vmem:[%s4117] ss:$2 sm:$0xff]
  %s4119 = scalar_lea.vmem [#allocation5], 32
  %v4120 = vld [vmem:[%s4119] ss:$2 sm:$0xff]
  %s4121 = scalar_lea.vmem [#allocation5], 48
  %v4122 = vld [vmem:[%s4121] ss:$2 sm:$0xff]
  %s4123 = scalar_lea.vmem [#allocation5], 64
  %v4124 = vld [vmem:[%s4123] ss:$2 sm:$0xff]
  %s4125 = scalar_lea.vmem [#allocation5], 80
  %v4126 = vld [vmem:[%s4125] ss:$2 sm:$0xff]
  %s4127 = scalar_lea.vmem [#allocation5], 96
  %v4128 = vld [vmem:[%s4127] ss:$2 sm:$0xff]
  %s4129 = scalar_lea.vmem [#allocation5], 112
  %v4130 = vld [vmem:[%s4129] ss:$2 sm:$0xff]
  %s4131 = scalar_lea.vmem [#allocation5], 128
  %v4132 = vld [vmem:[%s4131] ss:$2 sm:$0xff]
  %s4133 = scalar_lea.vmem [#allocation5], 144
  %v4134 = vld [vmem:[%s4133] ss:$2 sm:$0xff]
  %s4135 = scalar_lea.vmem [#allocation5], 160
  %v4136 = vld [vmem:[%s4135] ss:$2 sm:$0xf]
  %s4137 = scalar_lea.vmem [#allocation5], 1
  %v4138 = vld [vmem:[%s4137] ss:$2 sm:$0xff]
  %s4139 = scalar_lea.vmem [#allocation5], 17
  %v4140 = vld [vmem:[%s4139] ss:$2 sm:$0xff]
  %s4141 = scalar_lea.vmem [#allocation5], 33
  %v4142 = vld [vmem:[%s4141] ss:$2 sm:$0xff]
  %s4143 = scalar_lea.vmem [#allocation5], 49
  %v4144 = vld [vmem:[%s4143] ss:$2 sm:$0xff]
  %s4145 = scalar_lea.vmem [#allocation5], 65
  %v4146 = vld [vmem:[%s4145] ss:$2 sm:$0xff]
  %s4147 = scalar_lea.vmem [#allocation5], 81
  %v4148 = vld [vmem:[%s4147] ss:$2 sm:$0xff]
  %s4149 = scalar_lea.vmem [#allocation5], 97
  %v4150 = vld [vmem:[%s4149] ss:$2 sm:$0xff]
  %s4151 = scalar_lea.vmem [#allocation5], 113
  %v4152 = vld [vmem:[%s4151] ss:$2 sm:$0xff]
  %s4153 = scalar_lea.vmem [#allocation5], 129
  %v4154 = vld [vmem:[%s4153] ss:$2 sm:$0xff]
  %s4155 = scalar_lea.vmem [#allocation5], 145
  %v4156 = vld [vmem:[%s4155] ss:$2 sm:$0xff]
  %s4157 = scalar_lea.vmem [#allocation5], 161
  %v4158 = vld [vmem:[%s4157] ss:$2 sm:$0xf]
  %v4159 = vmax.f32 %v4116, %v4138
  %v4160 = vmax.f32 %v4118, %v4140
  %v4161 = vmax.f32 %v4120, %v4142
  %v4162 = vmax.f32 %v4122, %v4144
  %v4163 = vmax.f32 %v4124, %v4146
  %v4164 = vmax.f32 %v4126, %v4148
  %v4165 = vmax.f32 %v4128, %v4150
  %v4166 = vmax.f32 %v4130, %v4152
  %v4167 = vmax.f32 %v4132, %v4154
  %v4168 = vmax.f32 %v4134, %v4156
  %v4169 = vmax.f32 %v4136, %v4158
  %4170 = vst.msk [vmem:[#allocation6] sm:$0xff] %vm4094, %v4159
  %4171 = vst.msk [vmem:[#allocation6 + $0x8] sm:$0xff] %vm4094, %v4160
  %4172 = vst.msk [vmem:[#allocation6 + $0x10] sm:$0xff] %vm4094, %v4161
  %4173 = vst.msk [vmem:[#allocation6 + $0x18] sm:$0xff] %vm4094, %v4162
  %4174 = vst.msk [vmem:[#allocation6 + $0x20] sm:$0xff] %vm4094, %v4163
  %4175 = vst.msk [vmem:[#allocation6 + $0x28] sm:$0xff] %vm4094, %v4164
  %4176 = vst.msk [vmem:[#allocation6 + $0x30] sm:$0xff] %vm4094, %v4165
  %4177 = vst.msk [vmem:[#allocation6 + $0x38] sm:$0xff] %vm4094, %v4166
  %4178 = vst.msk [vmem:[#allocation6 + $0x40] sm:$0xff] %vm4094, %v4167
  %4179 = vst.msk [vmem:[#allocation6 + $0x48] sm:$0xff] %vm4094, %v4168
  %vm4180 = vcmask 257024
  %4181 = vst.msk [vmem:[#allocation6 + $0x50] sm:$0xf] %vm4180, %v4169
  %v4182 = vld [vmem:[#allocation6] sm:$0x3f]
  %v4183 = vld [vmem:[#allocation6 + $0x7] sm:$0x3f]
  %v4184 = vmax.f32 %v4182, %v4183
  %vm4185 = vcmask 259072
  %4186 = vst.msk [vmem:[#allocation7] sm:$0x3f] %vm4185, %v4184
  %v4187 = vld [vmem:[#allocation6 + $0xe] sm:$0x3f]
  %v4188 = vld [vmem:[#allocation6 + $0x15] sm:$0x3f]
  %v4189 = vmax.f32 %v4187, %v4188
  %4190 = vst.msk [vmem:[#allocation7 + $0x6] sm:$0x3f] %vm4185, %v4189
  %v4191 = vld [vmem:[#allocation6 + $0x1c] sm:$0x3f]
  %v4192 = vld [vmem:[#allocation6 + $0x23] sm:$0x3f]
  %v4193 = vmax.f32 %v4191, %v4192
  %4194 = vst.msk [vmem:[#allocation7 + $0xc] sm:$0x3f] %vm4185, %v4193
  %v4195 = vld [vmem:[#allocation6 + $0x2a] sm:$0x3f]
  %v4196 = vld [vmem:[#allocation6 + $0x31] sm:$0x3f]
  %v4197 = vmax.f32 %v4195, %v4196
  %4198 = vst.msk [vmem:[#allocation7 + $0x12] sm:$0x3f] %vm4185, %v4197
  %v4199 = vld [vmem:[#allocation6 + $0x38] sm:$0x3f]
  %v4200 = vld [vmem:[#allocation6 + $0x3f] sm:$0x3f]
  %v4201 = vmax.f32 %v4199, %v4200
  %4202 = vst.msk [vmem:[#allocation7 + $0x18] sm:$0x3f] %vm4185, %v4201
  %v4203 = vld [vmem:[#allocation6 + $0x46] sm:$0x3f]
  %v4204 = vld [vmem:[#allocation6 + $0x4d] sm:$0x3f]
  %v4205 = vmax.f32 %v4203, %v4204
  %4206 = vst.msk [vmem:[#allocation7 + $0x1e] sm:$0x3f] %vm4185, %v4205
  %v4207 = vld [vmem:[#allocation7] sm:$0xff]
  %v4208 = vld [vmem:[#allocation7 + $0x8] sm:$0xff]
  %v4209 = vld [vmem:[#allocation7 + $0x10] sm:$0xff]
  %v4210 = vld [vmem:[#allocation7 + $0x18] sm:$0xff]
  %v4211 = vld [vmem:[#allocation7 + $0x20] sm:$0xf]
  %v4212 = vld [vmem:[%s5] sm:$0xff]
  %v4213 = vld [vmem:[%s5 + $0x8] sm:$0xff]
  %v4214 = vld [vmem:[%s5 + $0x10] sm:$0xff]
  %v4215 = vld [vmem:[%s5 + $0x18] sm:$0xff]
  %v4216 = vld [vmem:[%s5 + $0x20] sm:$0xf]
  %v4217 = vld [vmem:[%s5 + $0x28] sm:$0xff]
  %v4218 = vld [vmem:[%s5 + $0x30] sm:$0xff]
  %v4219 = vld [vmem:[%s5 + $0x38] sm:$0xff]
  %v4220 = vld [vmem:[%s5 + $0x40] sm:$0xff]
  %v4221 = vld [vmem:[%s5 + $0x48] sm:$0xf]
  %v4222 = vld [vmem:[%s5 + $0x50] sm:$0xff]
  %v4223 = vld [vmem:[%s5 + $0x58] sm:$0xff]
  %v4224 = vld [vmem:[%s5 + $0x60] sm:$0xff]
  %v4225 = vld [vmem:[%s5 + $0x68] sm:$0xff]
  %v4226 = vld [vmem:[%s5 + $0x70] sm:$0xf]
  %v4227 = vld [vmem:[%s5 + $0x78] sm:$0xff]
  %v4228 = vld [vmem:[%s5 + $0x80] sm:$0xff]
  %v4229 = vld [vmem:[%s5 + $0x88] sm:$0xff]
  %v4230 = vld [vmem:[%s5 + $0x90] sm:$0xff]
  %v4231 = vld [vmem:[%s5 + $0x98] sm:$0xf]
  %v4232 = vld [vmem:[%s5 + $0xa0] sm:$0xff]
  %v4233 = vld [vmem:[%s5 + $0xa8] sm:$0xff]
  %v4234 = vld [vmem:[%s5 + $0xb0] sm:$0xff]
  %v4235 = vld [vmem:[%s5 + $0xb8] sm:$0xff]
  %v4236 = vld [vmem:[%s5 + $0xc0] sm:$0xf]
  %v4237 = vmul.f32 %v4207, %v4212
  %v4238 = vmul.f32 %v4208, %v4213
  %v4239 = vmul.f32 %v4209, %v4214
  %v4240 = vmul.f32 %v4210, %v4215
  %v4241 = vmul.f32 %v4211, %v4216
  %v4242 = vmul.f32 %v4207, %v4217
  %v4243 = vmul.f32 %v4208, %v4218
  %v4244 = vmul.f32 %v4209, %v4219
  %v4245 = vmul.f32 %v4210, %v4220
  %v4246 = vmul.f32 %v4211, %v4221
  %v4247 = vmul.f32 %v4207, %v4222
  %v4248 = vmul.f32 %v4208, %v4223
  %v4249 = vmul.f32 %v4209, %v4224
  %v4250 = vmul.f32 %v4210, %v4225
  %v4251 = vmul.f32 %v4211, %v4226
  %v4252 = vmul.f32 %v4207, %v4227
  %v4253 = vmul.f32 %v4208, %v4228
  %v4254 = vmul.f32 %v4209, %v4229
  %v4255 = vmul.f32 %v4210, %v4230
  %v4256 = vmul.f32 %v4211, %v4231
  %v4257 = vmul.f32 %v4207, %v4232
  %v4258 = vmul.f32 %v4208, %v4233
  %v4259 = vmul.f32 %v4209, %v4234
  %v4260 = vmul.f32 %v4210, %v4235
  %v4261 = vmul.f32 %v4211, %v4236
  %v4262 = vsel %vm4094, %v4237, 0.0
  %v4263 = vsel %vm4094, %v4238, 0.0
  %v4264 = vadd.f32 %v4262, %v4263
  %v4265 = vsel %vm4094, %v4239, 0.0
  %v4266 = vadd.f32 %v4264, %v4265
  %v4267 = vsel %vm4094, %v4240, 0.0
  %v4268 = vadd.f32 %v4266, %v4267
  %v4269 = vsel %vm4180, %v4241, 0.0
  %v4270 = vadd.f32 %v4268, %v4269
  %v4271 = vrot.slane %v4270, 4
  %v4272 = vadd.f32 %v4270, %v4271
  %v4273 = vrot.slane %v4272, 2
  %v4274 = vadd.f32 %v4272, %v4273
  %v4275 = vrot.slane %v4274, 1
  %v4276 = vadd.f32 %v4274, %v4275
  %v4277 = vsel %vm4094, %v4242, 0.0
  %v4278 = vsel %vm4094, %v4243, 0.0
  %v4279 = vadd.f32 %v4277, %v4278
  %v4280 = vsel %vm4094, %v4244, 0.0
  %v4281 = vadd.f32 %v4279, %v4280
  %v4282 = vsel %vm4094, %v4245, 0.0
  %v4283 = vadd.f32 %v4281, %v4282
  %v4284 = vsel %vm4180, %v4246, 0.0
  %v4285 = vadd.f32 %v4283, %v4284
  %v4286 = vrot.slane %v4285, 4
  %v4287 = vadd.f32 %v4285, %v4286
  %v4288 = vrot.slane %v4287, 2
  %v4289 = vadd.f32 %v4287, %v4288
  %v4290 = vrot.slane %v4289, 1
  %v4291 = vadd.f32 %v4289, %v4290
  %v4292 = vsel %vm4094, %v4247, 0.0
  %v4293 = vsel %vm4094, %v4248, 0.0
  %v4294 = vadd.f32 %v4292, %v4293
  %v4295 = vsel %vm4094, %v4249, 0.0
  %v4296 = vadd.f32 %v4294, %v4295
  %v4297 = vsel %vm4094, %v4250, 0.0
  %v4298 = vadd.f32 %v4296, %v4297
  %v4299 = vsel %vm4180, %v4251, 0.0
  %v4300 = vadd.f32 %v4298, %v4299
  %v4301 = vrot.slane %v4300, 4
  %v4302 = vadd.f32 %v4300, %v4301
  %v4303 = vrot.slane %v4302, 2
  %v4304 = vadd.f32 %v4302, %v4303
  %v4305 = vrot.slane %v4304, 1
  %v4306 = vadd.f32 %v4304, %v4305
  %v4307 = vsel %vm4094, %v4252, 0.0
  %v4308 = vsel %vm4094, %v4253, 0.0
  %v4309 = vadd.f32 %v4307, %v4308
  %v4310 = vsel %vm4094, %v4254, 0.0
  %v4311 = vadd.f32 %v4309, %v4310
  %v4312 = vsel %vm4094, %v4255, 0.0
  %v4313 = vadd.f32 %v4311, %v4312
  %v4314 = vsel %vm4180, %v4256, 0.0
  %v4315 = vadd.f32 %v4313, %v4314
  %v4316 = vrot.slane %v4315, 4
  %v4317 = vadd.f32 %v4315, %v4316
  %v4318 = vrot.slane %v4317, 2
  %v4319 = vadd.f32 %v4317, %v4318
  %v4320 = vrot.slane %v4319, 1
  %v4321 = vadd.f32 %v4319, %v4320
  %v4322 = vsel %vm4094, %v4257, 0.0
  %v4323 = vsel %vm4094, %v4258, 0.0
  %v4324 = vadd.f32 %v4322, %v4323
  %v4325 = vsel %vm4094, %v4259, 0.0
  %v4326 = vadd.f32 %v4324, %v4325
  %v4327 = vsel %vm4094, %v4260, 0.0
  %v4328 = vadd.f32 %v4326, %v4327
  %v4329 = vsel %vm4180, %v4261, 0.0
  %v4330 = vadd.f32 %v4328, %v4329
  %v4331 = vrot.slane %v4330, 4
  %v4332 = vadd.f32 %v4330, %v4331
  %v4333 = vrot.slane %v4332, 2
  %v4334 = vadd.f32 %v4332, %v4333
  %v4335 = vrot.slane %v4334, 1
  %v4336 = vadd.f32 %v4334, %v4335
  %vm4342 = vcmask 1041409
  %v4343 = vsel %vm4342, %v4291, %v4276
  %vm4344 = vcmask 1042434
  %v4345 = vsel %vm4344, %v4306, %v4343
  %vm4346 = vcmask 1043459
  %v4347 = vsel %vm4346, %v4321, %v4345
  %vm4348 = vcmask 1044484
  %v4349 = vsel %vm4348, %v4336, %v4347
  %vm4351 = vcmask 258048
  %v4352 = vsel %vm4351, %v4349, 0.0
  %4353 = vadd.xlane.f32.xlu0 %v4352
  %v4354 = vpop.xlane.xlu0 %4353
  %v4355 = vld [vmem:[%s6] sm:$0x1f]
  %v4356 = vadd.f32 %v4354, %v4355
  %vm4357 = vcmask 4096
  %4358 = vst.msk [vmem:[%s7] sm:$0x1f] %vm4357, %v4356
  %s4359 = scalar_lea.vmem %s0, 784
  %v4360 = vld [vmem:[%s4359] sm:$0xff]
  %v4361 = vld [vmem:[%s4359 + $0x8] sm:$0xff]
  %v4362 = vld [vmem:[%s4359 + $0x10] sm:$0xff]
  %v4363 = vld [vmem:[%s4359 + $0x18] sm:$0xff]
  %v4364 = vld [vmem:[%s4359 + $0x20] sm:$0xff]
  %v4365 = vld [vmem:[%s4359 + $0x28] sm:$0xff]
  %v4366 = vld [vmem:[%s4359 + $0x30] sm:$0xff]
  %v4367 = vld [vmem:[%s4359 + $0x38] sm:$0xff]
  %v4368 = vld [vmem:[%s4359 + $0x40] sm:$0xff]
  %v4369 = vld [vmem:[%s4359 + $0x48] sm:$0xff]
  %v4370 = vld [vmem:[%s4359 + $0x50] sm:$0xff]
  %v4371 = vld [vmem:[%s4359 + $0x58] sm:$0xff]
  %v4372 = vld [vmem:[%s4359 + $0x60] sm:$0xff]
  %v4373 = vld [vmem:[%s4359 + $0x68] sm:$0xff]
  %v4374 = vld [vmem:[%s4359 + $0x70] sm:$0xff]
  %v4375 = vld [vmem:[%s4359 + $0x78] sm:$0xff]
  %v4376 = vld [vmem:[%s4359 + $0x80] sm:$0xff]
  %v4377 = vld [vmem:[%s4359 + $0x88] sm:$0xff]
  %v4378 = vld [vmem:[%s4359 + $0x90] sm:$0xff]
  %v4379 = vld [vmem:[%s4359 + $0x98] sm:$0xff]
  %v4380 = vld [vmem:[%s4359 + $0xa0] sm:$0xff]
  %v4381 = vld [vmem:[%s4359 + $0xa8] sm:$0xff]
  %v4382 = vld [vmem:[%s4359 + $0xb0] sm:$0xff]
  %v4383 = vld [vmem:[%s4359 + $0xb8] sm:$0xff]
  %v4384 = vld [vmem:[%s4359 + $0xc0] sm:$0xff]
  %v4385 = vld [vmem:[%s4359 + $0xc8] sm:$0xff]
  %v4386 = vld [vmem:[%s4359 + $0xd0] sm:$0xff]
  %v4387 = vld [vmem:[%s4359 + $0xd8] sm:$0xff]
  %v4388 = vld [vmem:[%s4359 + $0xe0] sm:$0xff]
  %v4389 = vld [vmem:[%s4359 + $0xe8] sm:$0xff]
  %v4390 = vld [vmem:[%s4359 + $0xf0] sm:$0xff]
  %v4391 = vld [vmem:[%s4359 + $0xf8] sm:$0xff]
  %v4392 = vld [vmem:[%s4359 + $0x100] sm:$0xff]
  %v4393 = vld [vmem:[%s4359 + $0x108] sm:$0xff]
  %v4394 = vld [vmem:[%s4359 + $0x110] sm:$0xff]
  %v4395 = vld [vmem:[%s4359 + $0x118] sm:$0xff]
  %v4396 = vld [vmem:[%s4359 + $0x120] sm:$0xff]
  %v4397 = vld [vmem:[%s4359 + $0x128] sm:$0xff]
  %v4398 = vld [vmem:[%s4359 + $0x130] sm:$0xff]
  %v4399 = vld [vmem:[%s4359 + $0x138] sm:$0xff]
  %v4400 = vld [vmem:[%s4359 + $0x140] sm:$0xff]
  %v4401 = vld [vmem:[%s4359 + $0x148] sm:$0xff]
  %v4402 = vld [vmem:[%s4359 + $0x150] sm:$0xff]
  %v4403 = vld [vmem:[%s4359 + $0x158] sm:$0xff]
  %v4404 = vld [vmem:[%s4359 + $0x160] sm:$0xff]
  %v4405 = vld [vmem:[%s4359 + $0x168] sm:$0xff]
  %v4406 = vld [vmem:[%s4359 + $0x170] sm:$0xff]
  %v4407 = vld [vmem:[%s4359 + $0x178] sm:$0xff]
  %v4408 = vld [vmem:[%s4359 + $0x180] sm:$0xff]
  %v4409 = vld [vmem:[%s4359 + $0x188] sm:$0xff]
  %v4410 = vld [vmem:[%s4359 + $0x190] sm:$0xff]
  %v4411 = vld [vmem:[%s4359 + $0x198] sm:$0xff]
  %v4412 = vld [vmem:[%s4359 + $0x1a0] sm:$0xff]
  %v4413 = vld [vmem:[%s4359 + $0x1a8] sm:$0xff]
  %v4414 = vld [vmem:[%s4359 + $0x1b0] sm:$0xff]
  %v4415 = vld [vmem:[%s4359 + $0x1b8] sm:$0xff]
  %v4416 = vld [vmem:[%s4359 + $0x1c0] sm:$0xff]
  %v4417 = vld [vmem:[%s4359 + $0x1c8] sm:$0xff]
  %v4418 = vld [vmem:[%s4359 + $0x1d0] sm:$0xff]
  %v4419 = vld [vmem:[%s4359 + $0x1d8] sm:$0xff]
  %v4420 = vld [vmem:[%s4359 + $0x1e0] sm:$0xff]
  %v4421 = vld [vmem:[%s4359 + $0x1e8] sm:$0xff]
  %v4422 = vld [vmem:[%s4359 + $0x1f0] sm:$0xff]
  %v4423 = vld [vmem:[%s4359 + $0x1f8] sm:$0xff]
  %v4424 = vld [vmem:[%s4359 + $0x200] sm:$0xff]
  %v4425 = vld [vmem:[%s4359 + $0x208] sm:$0xff]
  %v4426 = vld [vmem:[%s4359 + $0x210] sm:$0xff]
  %v4427 = vld [vmem:[%s4359 + $0x218] sm:$0xff]
  %v4428 = vld [vmem:[%s4359 + $0x220] sm:$0xff]
  %v4429 = vld [vmem:[%s4359 + $0x228] sm:$0xff]
  %v4430 = vld [vmem:[%s4359 + $0x230] sm:$0xff]
  %v4431 = vld [vmem:[%s4359 + $0x238] sm:$0xff]
  %v4432 = vld [vmem:[%s4359 + $0x240] sm:$0xff]
  %v4433 = vld [vmem:[%s4359 + $0x248] sm:$0xff]
  %v4434 = vld [vmem:[%s4359 + $0x250] sm:$0xff]
  %v4435 = vld [vmem:[%s4359 + $0x258] sm:$0xff]
  %v4436 = vld [vmem:[%s4359 + $0x260] sm:$0xff]
  %v4437 = vld [vmem:[%s4359 + $0x268] sm:$0xff]
  %v4438 = vld [vmem:[%s4359 + $0x270] sm:$0xff]
  %v4439 = vld [vmem:[%s4359 + $0x278] sm:$0xff]
  %v4440 = vld [vmem:[%s4359 + $0x280] sm:$0xff]
  %v4441 = vld [vmem:[%s4359 + $0x288] sm:$0xff]
  %v4442 = vld [vmem:[%s4359 + $0x290] sm:$0xff]
  %v4443 = vld [vmem:[%s4359 + $0x298] sm:$0xff]
  %v4444 = vld [vmem:[%s4359 + $0x2a0] sm:$0xff]
  %v4445 = vld [vmem:[%s4359 + $0x2a8] sm:$0xff]
  %v4446 = vld [vmem:[%s4359 + $0x2b0] sm:$0xff]
  %v4447 = vld [vmem:[%s4359 + $0x2b8] sm:$0xff]
  %v4448 = vld [vmem:[%s4359 + $0x2c0] sm:$0xff]
  %v4449 = vld [vmem:[%s4359 + $0x2c8] sm:$0xff]
  %v4450 = vld [vmem:[%s4359 + $0x2d0] sm:$0xff]
  %v4451 = vld [vmem:[%s4359 + $0x2d8] sm:$0xff]
  %v4452 = vld [vmem:[%s4359 + $0x2e0] sm:$0xff]
  %v4453 = vld [vmem:[%s4359 + $0x2e8] sm:$0xff]
  %v4454 = vld [vmem:[%s4359 + $0x2f0] sm:$0xff]
  %v4455 = vld [vmem:[%s4359 + $0x2f8] sm:$0xff]
  %v4456 = vld [vmem:[%s4359 + $0x300] sm:$0xff]
  %v4457 = vld [vmem:[%s4359 + $0x308] sm:$0xff]
  %v4458 = vld [vmem:[%s1] sm:$0xff]
  %v4459 = vld [vmem:[%s1 + $0x8] sm:$0xff]
  %v4460 = vld [vmem:[%s1 + $0x10] sm:$0xff]
  %v4461 = vld [vmem:[%s1 + $0x18] sm:$0x7]
  %v4462 = vld [vmem:[%s2] sm:$0x1]
  %v4464 = vlaneseq
  %v4465 = vshrl.u32 %v4464, 7
  %v4466 = vsub.s32 0, %v4465
  %v4467 = vrot.slane %v4462, %v4466
  %v4470 = vsel %vm137, %v4360, 0
  %v4473 = vsel %vm137, %v4361, 0
  %v4476 = vsel %vm137, %v4362, 0
  %v4479 = vsel %vm137, %v4363, 0
  %v4482 = vsel %vm137, %v4364, 0
  %v4485 = vsel %vm137, %v4365, 0
  %v4488 = vsel %vm137, %v4366, 0
  %v4491 = vsel %vm137, %v4367, 0
  %v4494 = vsel %vm137, %v4368, 0
  %v4497 = vsel %vm137, %v4369, 0
  %v4500 = vsel %vm137, %v4370, 0
  %v4503 = vsel %vm137, %v4371, 0
  %v4506 = vsel %vm137, %v4372, 0
  %v4509 = vsel %vm137, %v4373, 0
  %v4512 = vsel %vm137, %v4374, 0
  %v4515 = vsel %vm137, %v4375, 0
  %v4518 = vsel %vm137, %v4376, 0
  %v4521 = vsel %vm137, %v4377, 0
  %v4524 = vsel %vm137, %v4378, 0
  %v4527 = vsel %vm137, %v4379, 0
  %v4530 = vsel %vm137, %v4380, 0
  %v4533 = vsel %vm137, %v4381, 0
  %v4536 = vsel %vm137, %v4382, 0
  %v4539 = vsel %vm137, %v4383, 0
  %v4542 = vsel %vm137, %v4384, 0
  %v4545 = vsel %vm137, %v4385, 0
  %v4548 = vsel %vm137, %v4386, 0
  %v4551 = vsel %vm137, %v4387, 0
  %v4554 = vsel %vm137, %v4388, 0
  %v4557 = vsel %vm137, %v4389, 0
  %v4560 = vsel %vm137, %v4390, 0
  %v4563 = vsel %vm137, %v4391, 0
  %v4566 = vsel %vm137, %v4392, 0
  %v4569 = vsel %vm137, %v4393, 0
  %v4572 = vsel %vm137, %v4394, 0
  %v4575 = vsel %vm137, %v4395, 0
  %v4578 = vsel %vm137, %v4396, 0
  %v4581 = vsel %vm137, %v4397, 0
  %v4584 = vsel %vm137, %v4398, 0
  %v4587 = vsel %vm137, %v4399, 0
  %v4590 = vsel %vm137, %v4400, 0
  %v4593 = vsel %vm137, %v4401, 0
  %v4596 = vsel %vm137, %v4402, 0
  %v4599 = vsel %vm137, %v4403, 0
  %v4602 = vsel %vm137, %v4404, 0
  %v4605 = vsel %vm137, %v4405, 0
  %v4608 = vsel %vm137, %v4406, 0
  %v4611 = vsel %vm137, %v4407, 0
  %v4614 = vsel %vm137, %v4408, 0
  %v4617 = vsel %vm137, %v4409, 0
  %v4620 = vsel %vm137, %v4410, 0
  %v4623 = vsel %vm137, %v4411, 0
  %v4626 = vsel %vm137, %v4412, 0
  %v4629 = vsel %vm137, %v4413, 0
  %v4632 = vsel %vm137, %v4414, 0
  %v4635 = vsel %vm137, %v4415, 0
  %v4638 = vsel %vm137, %v4416, 0
  %v4641 = vsel %vm137, %v4417, 0
  %v4644 = vsel %vm137, %v4418, 0
  %v4647 = vsel %vm137, %v4419, 0
  %v4650 = vsel %vm137, %v4420, 0
  %v4653 = vsel %vm137, %v4421, 0
  %v4656 = vsel %vm137, %v4422, 0
  %v4659 = vsel %vm137, %v4423, 0
  %v4662 = vsel %vm137, %v4424, 0
  %v4665 = vsel %vm137, %v4425, 0
  %v4668 = vsel %vm137, %v4426, 0
  %v4671 = vsel %vm137, %v4427, 0
  %v4674 = vsel %vm137, %v4428, 0
  %v4677 = vsel %vm137, %v4429, 0
  %v4680 = vsel %vm137, %v4430, 0
  %v4683 = vsel %vm137, %v4431, 0
  %v4686 = vsel %vm137, %v4432, 0
  %v4689 = vsel %vm137, %v4433, 0
  %v4692 = vsel %vm137, %v4434, 0
  %v4695 = vsel %vm137, %v4435, 0
  %v4698 = vsel %vm137, %v4436, 0
  %v4701 = vsel %vm137, %v4437, 0
  %v4704 = vsel %vm137, %v4438, 0
  %v4707 = vsel %vm137, %v4439, 0
  %v4710 = vsel %vm137, %v4440, 0
  %v4713 = vsel %vm137, %v4441, 0
  %v4716 = vsel %vm137, %v4442, 0
  %v4719 = vsel %vm137, %v4443, 0
  %v4722 = vsel %vm137, %v4444, 0
  %v4725 = vsel %vm137, %v4445, 0
  %v4728 = vsel %vm137, %v4446, 0
  %v4731 = vsel %vm137, %v4447, 0
  %v4734 = vsel %vm137, %v4448, 0
  %v4737 = vsel %vm137, %v4449, 0
  %v4740 = vsel %vm137, %v4450, 0
  %v4743 = vsel %vm137, %v4451, 0
  %v4746 = vsel %vm137, %v4452, 0
  %v4749 = vsel %vm137, %v4453, 0
  %v4752 = vsel %vm137, %v4454, 0
  %v4755 = vsel %vm137, %v4455, 0
  %v4758 = vsel %vm137, %v4456, 0
  %v4761 = vsel %vm137, %v4457, 0
  %v4764 = vsel %vm432, %v4461, 0
  %4766 = vmatprep.subr.mxu0 0.0
  %4767 = vmatpush1.msra.mxu0 %v4458
  %4768 = vmatprep.subr.mxu0 0.0
  %4769 = vmatpush1.msra.mxu0 %v4459
  %4770 = vmatprep.subr.mxu0 0.0
  %4771 = vmatpush1.msra.mxu0 %v4460
  %4772 = vmatprep.subr.mxu0 0.0
  %4773 = vmatpush1.msra.mxu0 %v4764
  %4774 = vmatprep.subr.mxu0 0.0
  %4775 = vmatpush1.msra.mxu0 0.0
  %4776 = vmatprep.subr.mxu0 0.0
  %4777 = vmatpush1.msra.mxu0 0.0
  %4778 = vmatprep.subr.mxu0 0.0
  %4779 = vmatpush1.msra.mxu0 0.0
  %4780 = vmatprep.subr.mxu0 0.0
  %4781 = vmatpush1.msra.mxu0 0.0
  %4782 = vmatprep.subr.mxu0 0.0
  %4783 = vmatpush1.msra.mxu0 0.0
  %4784 = vmatprep.subr.mxu0 0.0
  %4785 = vmatpush1.msra.mxu0 0.0
  %4786 = vmatprep.subr.mxu0 0.0
  %4787 = vmatpush1.msra.mxu0 0.0
  %4788 = vmatprep.subr.mxu0 0.0
  %4789 = vmatpush1.msra.mxu0 0.0
  %4790 = vmatprep.subr.mxu0 0.0
  %4791 = vmatpush1.msra.mxu0 0.0
  %4792 = vmatprep.subr.mxu0 0.0
  %4793 = vmatpush1.msra.mxu0 0.0
  %4794 = vmatprep.subr.mxu0 0.0
  %4795 = vmatpush1.msra.mxu0 0.0
  %4796 = vmatprep.subr.mxu0 0.0
  %4797 = vmatpush1.msra.mxu0 0.0
  %4798 = vmatprep.subr.mxu0 0.0
  %4799 = vmatpush1.msra.mxu0 0.0
  %4800 = vmatprep.subr.mxu0 0.0
  %4801 = vmatpush1.msra.mxu0 0.0
  %4802 = vmatprep.subr.mxu0 0.0
  %4803 = vmatpush1.msra.mxu0 0.0
  %4804 = vmatprep.subr.mxu0 0.0
  %4805 = vmatpush1.msra.mxu0 0.0
  %4806 = vmatprep.subr.mxu0 0.0
  %4807 = vmatpush1.msra.mxu0 0.0
  %4808 = vmatprep.subr.mxu0 0.0
  %4809 = vmatpush1.msra.mxu0 0.0
  %4810 = vmatprep.subr.mxu0 0.0
  %4811 = vmatpush1.msra.mxu0 0.0
  %4812 = vmatprep.subr.mxu0 0.0
  %4813 = vmatpush1.msra.mxu0 0.0
  %4814 = vmatprep.subr.mxu0 0.0
  %4815 = vmatpush1.msra.mxu0 0.0
  %4816 = vmatprep.subr.mxu0 0.0
  %4817 = vmatpush1.msra.mxu0 0.0
  %4818 = vmatprep.subr.mxu0 0.0
  %4819 = vmatpush1.msra.mxu0 0.0
  %4820 = vmatprep.subr.mxu0 0.0
  %4821 = vmatpush1.msra.mxu0 0.0
  %4822 = vmatprep.subr.mxu0 0.0
  %4823 = vmatpush1.msra.mxu0 0.0
  %4824 = vmatprep.subr.mxu0 0.0
  %4825 = vmatpush1.msra.mxu0 0.0
  %4826 = vmatprep.subr.mxu0 0.0
  %4827 = vmatpush1.msra.mxu0 0.0
  %4828 = vmatprep.subr.mxu0 0.0
  %4829 = vmatpush1.msra.mxu0 0.0
  %4830 = vmatprep.mubr.f32.mxu0 0.0
  %4831 = vmatmul.mubr.f32.gmra.mrb[0].mxu0 %v4470
  %v4832 = vpop.f32.mrb[0].mxu0
  %v4833 = vadd.f32 %v4467, %v4832
  %v4834 = vpop.f32.mrb[0].mxu0
  %4835 = vmatprep.mubr.f32.mxu0 0.0
  %4836 = vmatmul.mubr.f32.gmra.mrb[0].mxu0 %v4473
  %v4837 = vpop.f32.mrb[0].mxu0
  %v4838 = vadd.f32 %v4467, %v4837
  %v4839 = vpop.f32.mrb[0].mxu0
  %4840 = vmatprep.mubr.f32.mxu0 0.0
  %4841 = vmatmul.mubr.f32.gmra.mrb[0].mxu0 %v4476
  %v4842 = vpop.f32.mrb[0].mxu0
  %v4843 = vadd.f32 %v4467, %v4842
  %v4844 = vpop.f32.mrb[0].mxu0
  %4845 = vmatprep.mubr.f32.mxu0 0.0
  %4846 = vmatmul.mubr.f32.gmra.mrb[0].mxu0 %v4479
  %v4847 = vpop.f32.mrb[0].mxu0
  %v4848 = vadd.f32 %v4467, %v4847
  %v4849 = vpop.f32.mrb[0].mxu0
  %4850 = vmatprep.mubr.f32.mxu0 0.0
  %4851 = vmatmul.mubr.f32.gmra.mrb[0].mxu0 %v4482
  %v4852 = vpop.f32.mrb[0].mxu0
  %v4853 = vadd.f32 %v4467, %v4852
  %v4854 = vpop.f32.mrb[0].mxu0
  %4855 = vmatprep.mubr.f32.mxu0 0.0
  %4856 = vmatmul.mubr.f32.gmra.mrb[0].mxu0 %v4485
  %v4857 = vpop.f32.mrb[0].mxu0
  %v4858 = vadd.f32 %v4467, %v4857
  %v4859 = vpop.f32.mrb[0].mxu0
  %4860 = vmatprep.mubr.f32.mxu0 0.0
  %4861 = vmatmul.mubr.f32.gmra.mrb[0].mxu0 %v4488
  %v4862 = vpop.f32.mrb[0].mxu0
  %v4863 = vadd.f32 %v4467, %v4862
  %v4864 = vpop.f32.mrb[0].mxu0
  %4865 = vmatprep.mubr.f32.mxu0 0.0
  %4866 = vmatmul.mubr.f32.gmra.mrb[0].mxu0 %v4491
  %v4867 = vpop.f32.mrb[0].mxu0
  %v4868 = vadd.f32 %v4467, %v4867
  %v4869 = vpop.f32.mrb[0].mxu0
  %4870 = vmatprep.mubr.f32.mxu0 0.0
  %4871 = vmatmul.mubr.f32.gmra.mrb[0].mxu0 %v4494
  %v4872 = vpop.f32.mrb[0].mxu0
  %v4873 = vadd.f32 %v4467, %v4872
  %v4874 = vpop.f32.mrb[0].mxu0
  %4875 = vmatprep.mubr.f32.mxu0 0.0
  %4876 = vmatmul.mubr.f32.gmra.mrb[0].mxu0 %v4497
  %v4877 = vpop.f32.mrb[0].mxu0
  %v4878 = vadd.f32 %v4467, %v4877
  %v4879 = vpop.f32.mrb[0].mxu0
  %4880 = vmatprep.mubr.f32.mxu0 0.0
  %4881 = vmatmul.mubr.f32.gmra.mrb[0].mxu0 %v4500
  %v4882 = vpop.f32.mrb[0].mxu0
  %v4883 = vadd.f32 %v4467, %v4882
  %v4884 = vpop.f32.mrb[0].mxu0
  %4885 = vmatprep.mubr.f32.mxu0 0.0
  %4886 = vmatmul.mubr.f32.gmra.mrb[0].mxu0 %v4503
  %v4887 = vpop.f32.mrb[0].mxu0
  %v4888 = vadd.f32 %v4467, %v4887
  %v4889 = vpop.f32.mrb[0].mxu0
  %4890 = vmatprep.mubr.f32.mxu0 0.0
  %4891 = vmatmul.mubr.f32.gmra.mrb[0].mxu0 %v4506
  %v4892 = vpop.f32.mrb[0].mxu0
  %v4893 = vadd.f32 %v4467, %v4892
  %v4894 = vpop.f32.mrb[0].mxu0
  %4895 = vmatprep.mubr.f32.mxu0 0.0
  %4896 = vmatmul.mubr.f32.gmra.mrb[0].mxu0 %v4509
  %v4897 = vpop.f32.mrb[0].mxu0
  %v4898 = vadd.f32 %v4467, %v4897
  %v4899 = vpop.f32.mrb[0].mxu0
  %4900 = vmatprep.mubr.f32.mxu0 0.0
  %4901 = vmatmul.mubr.f32.gmra.mrb[0].mxu0 %v4512
  %v4902 = vpop.f32.mrb[0].mxu0
  %v4903 = vadd.f32 %v4467, %v4902
  %v4904 = vpop.f32.mrb[0].mxu0
  %4905 = vmatprep.mubr.f32.mxu0 0.0
  %4906 = vmatmul.mubr.f32.gmra.mrb[0].mxu0 %v4515
  %v4907 = vpop.f32.mrb[0].mxu0
  %v4908 = vadd.f32 %v4467, %v4907
  %v4909 = vpop.f32.mrb[0].mxu0
  %4910 = vmatprep.mubr.f32.mxu0 0.0
  %4911 = vmatmul.mubr.f32.gmra.mrb[0].mxu0 %v4518
  %v4912 = vpop.f32.mrb[0].mxu0
  %v4913 = vadd.f32 %v4467, %v4912
  %v4914 = vpop.f32.mrb[0].mxu0
  %4915 = vmatprep.mubr.f32.mxu0 0.0
  %4916 = vmatmul.mubr.f32.gmra.mrb[0].mxu0 %v4521
  %v4917 = vpop.f32.mrb[0].mxu0
  %v4918 = vadd.f32 %v4467, %v4917
  %v4919 = vpop.f32.mrb[0].mxu0
  %4920 = vmatprep.mubr.f32.mxu0 0.0
  %4921 = vmatmul.mubr.f32.gmra.mrb[0].mxu0 %v4524
  %v4922 = vpop.f32.mrb[0].mxu0
  %v4923 = vadd.f32 %v4467, %v4922
  %v4924 = vpop.f32.mrb[0].mxu0
  %4925 = vmatprep.mubr.f32.mxu0 0.0
  %4926 = vmatmul.mubr.f32.gmra.mrb[0].mxu0 %v4527
  %v4927 = vpop.f32.mrb[0].mxu0
  %v4928 = vadd.f32 %v4467, %v4927
  %v4929 = vpop.f32.mrb[0].mxu0
  %4930 = vmatprep.mubr.f32.mxu0 0.0
  %4931 = vmatmul.mubr.f32.gmra.mrb[0].mxu0 %v4530
  %v4932 = vpop.f32.mrb[0].mxu0
  %v4933 = vadd.f32 %v4467, %v4932
  %v4934 = vpop.f32.mrb[0].mxu0
  %4935 = vmatprep.mubr.f32.mxu0 0.0
  %4936 = vmatmul.mubr.f32.gmra.mrb[0].mxu0 %v4533
  %v4937 = vpop.f32.mrb[0].mxu0
  %v4938 = vadd.f32 %v4467, %v4937
  %v4939 = vpop.f32.mrb[0].mxu0
  %4940 = vmatprep.mubr.f32.mxu0 0.0
  %4941 = vmatmul.mubr.f32.gmra.mrb[0].mxu0 %v4536
  %v4942 = vpop.f32.mrb[0].mxu0
  %v4943 = vadd.f32 %v4467, %v4942
  %v4944 = vpop.f32.mrb[0].mxu0
  %4945 = vmatprep.mubr.f32.mxu0 0.0
  %4946 = vmatmul.mubr.f32.gmra.mrb[0].mxu0 %v4539
  %v4947 = vpop.f32.mrb[0].mxu0
  %v4948 = vadd.f32 %v4467, %v4947
  %v4949 = vpop.f32.mrb[0].mxu0
  %4950 = vmatprep.mubr.f32.mxu0 0.0
  %4951 = vmatmul.mubr.f32.gmra.mrb[0].mxu0 %v4542
  %v4952 = vpop.f32.mrb[0].mxu0
  %v4953 = vadd.f32 %v4467, %v4952
  %v4954 = vpop.f32.mrb[0].mxu0
  %4955 = vmatprep.mubr.f32.mxu0 0.0
  %4956 = vmatmul.mubr.f32.gmra.mrb[0].mxu0 %v4545
  %v4957 = vpop.f32.mrb[0].mxu0
  %v4958 = vadd.f32 %v4467, %v4957
  %v4959 = vpop.f32.mrb[0].mxu0
  %4960 = vmatprep.mubr.f32.mxu0 0.0
  %4961 = vmatmul.mubr.f32.gmra.mrb[0].mxu0 %v4548
  %v4962 = vpop.f32.mrb[0].mxu0
  %v4963 = vadd.f32 %v4467, %v4962
  %v4964 = vpop.f32.mrb[0].mxu0
  %4965 = vmatprep.mubr.f32.mxu0 0.0
  %4966 = vmatmul.mubr.f32.gmra.mrb[0].mxu0 %v4551
  %v4967 = vpop.f32.mrb[0].mxu0
  %v4968 = vadd.f32 %v4467, %v4967
  %v4969 = vpop.f32.mrb[0].mxu0
  %4970 = vmatprep.mubr.f32.mxu0 0.0
  %4971 = vmatmul.mubr.f32.gmra.mrb[0].mxu0 %v4554
  %v4972 = vpop.f32.mrb[0].mxu0
  %v4973 = vadd.f32 %v4467, %v4972
  %v4974 = vpop.f32.mrb[0].mxu0
  %4975 = vmatprep.mubr.f32.mxu0 0.0
  %4976 = vmatmul.mubr.f32.gmra.mrb[0].mxu0 %v4557
  %v4977 = vpop.f32.mrb[0].mxu0
  %v4978 = vadd.f32 %v4467, %v4977
  %v4979 = vpop.f32.mrb[0].mxu0
  %4980 = vmatprep.mubr.f32.mxu0 0.0
  %4981 = vmatmul.mubr.f32.gmra.mrb[0].mxu0 %v4560
  %v4982 = vpop.f32.mrb[0].mxu0
  %v4983 = vadd.f32 %v4467, %v4982
  %v4984 = vpop.f32.mrb[0].mxu0
  %4985 = vmatprep.mubr.f32.mxu0 0.0
  %4986 = vmatmul.mubr.f32.gmra.mrb[0].mxu0 %v4563
  %v4987 = vpop.f32.mrb[0].mxu0
  %v4988 = vadd.f32 %v4467, %v4987
  %v4989 = vpop.f32.mrb[0].mxu0
  %4990 = vmatprep.mubr.f32.mxu0 0.0
  %4991 = vmatmul.mubr.f32.gmra.mrb[0].mxu0 %v4566
  %v4992 = vpop.f32.mrb[0].mxu0
  %v4993 = vadd.f32 %v4467, %v4992
  %v4994 = vpop.f32.mrb[0].mxu0
  %4995 = vmatprep.mubr.f32.mxu0 0.0
  %4996 = vmatmul.mubr.f32.gmra.mrb[0].mxu0 %v4569
  %v4997 = vpop.f32.mrb[0].mxu0
  %v4998 = vadd.f32 %v4467, %v4997
  %v4999 = vpop.f32.mrb[0].mxu0
  %5000 = vmatprep.mubr.f32.mxu0 0.0
  %5001 = vmatmul.mubr.f32.gmra.mrb[0].mxu0 %v4572
  %v5002 = vpop.f32.mrb[0].mxu0
  %v5003 = vadd.f32 %v4467, %v5002
  %v5004 = vpop.f32.mrb[0].mxu0
  %5005 = vmatprep.mubr.f32.mxu0 0.0
  %5006 = vmatmul.mubr.f32.gmra.mrb[0].mxu0 %v4575
  %v5007 = vpop.f32.mrb[0].mxu0
  %v5008 = vadd.f32 %v4467, %v5007
  %v5009 = vpop.f32.mrb[0].mxu0
  %5010 = vmatprep.mubr.f32.mxu0 0.0
  %5011 = vmatmul.mubr.f32.gmra.mrb[0].mxu0 %v4578
  %v5012 = vpop.f32.mrb[0].mxu0
  %v5013 = vadd.f32 %v4467, %v5012
  %v5014 = vpop.f32.mrb[0].mxu0
  %5015 = vmatprep.mubr.f32.mxu0 0.0
  %5016 = vmatmul.mubr.f32.gmra.mrb[0].mxu0 %v4581
  %v5017 = vpop.f32.mrb[0].mxu0
  %v5018 = vadd.f32 %v4467, %v5017
  %v5019 = vpop.f32.mrb[0].mxu0
  %5020 = vmatprep.mubr.f32.mxu0 0.0
  %5021 = vmatmul.mubr.f32.gmra.mrb[0].mxu0 %v4584
  %v5022 = vpop.f32.mrb[0].mxu0
  %v5023 = vadd.f32 %v4467, %v5022
  %v5024 = vpop.f32.mrb[0].mxu0
  %5025 = vmatprep.mubr.f32.mxu0 0.0
  %5026 = vmatmul.mubr.f32.gmra.mrb[0].mxu0 %v4587
  %v5027 = vpop.f32.mrb[0].mxu0
  %v5028 = vadd.f32 %v4467, %v5027
  %v5029 = vpop.f32.mrb[0].mxu0
  %5030 = vmatprep.mubr.f32.mxu0 0.0
  %5031 = vmatmul.mubr.f32.gmra.mrb[0].mxu0 %v4590
  %v5032 = vpop.f32.mrb[0].mxu0
  %v5033 = vadd.f32 %v4467, %v5032
  %v5034 = vpop.f32.mrb[0].mxu0
  %5035 = vmatprep.mubr.f32.mxu0 0.0
  %5036 = vmatmul.mubr.f32.gmra.mrb[0].mxu0 %v4593
  %v5037 = vpop.f32.mrb[0].mxu0
  %v5038 = vadd.f32 %v4467, %v5037
  %v5039 = vpop.f32.mrb[0].mxu0
  %5040 = vmatprep.mubr.f32.mxu0 0.0
  %5041 = vmatmul.mubr.f32.gmra.mrb[0].mxu0 %v4596
  %v5042 = vpop.f32.mrb[0].mxu0
  %v5043 = vadd.f32 %v4467, %v5042
  %v5044 = vpop.f32.mrb[0].mxu0
  %5045 = vmatprep.mubr.f32.mxu0 0.0
  %5046 = vmatmul.mubr.f32.gmra.mrb[0].mxu0 %v4599
  %v5047 = vpop.f32.mrb[0].mxu0
  %v5048 = vadd.f32 %v4467, %v5047
  %v5049 = vpop.f32.mrb[0].mxu0
  %5050 = vmatprep.mubr.f32.mxu0 0.0
  %5051 = vmatmul.mubr.f32.gmra.mrb[0].mxu0 %v4602
  %v5052 = vpop.f32.mrb[0].mxu0
  %v5053 = vadd.f32 %v4467, %v5052
  %v5054 = vpop.f32.mrb[0].mxu0
  %5055 = vmatprep.mubr.f32.mxu0 0.0
  %5056 = vmatmul.mubr.f32.gmra.mrb[0].mxu0 %v4605
  %v5057 = vpop.f32.mrb[0].mxu0
  %v5058 = vadd.f32 %v4467, %v5057
  %v5059 = vpop.f32.mrb[0].mxu0
  %5060 = vmatprep.mubr.f32.mxu0 0.0
  %5061 = vmatmul.mubr.f32.gmra.mrb[0].mxu0 %v4608
  %v5062 = vpop.f32.mrb[0].mxu0
  %v5063 = vadd.f32 %v4467, %v5062
  %v5064 = vpop.f32.mrb[0].mxu0
  %5065 = vmatprep.mubr.f32.mxu0 0.0
  %5066 = vmatmul.mubr.f32.gmra.mrb[0].mxu0 %v4611
  %v5067 = vpop.f32.mrb[0].mxu0
  %v5068 = vadd.f32 %v4467, %v5067
  %v5069 = vpop.f32.mrb[0].mxu0
  %5070 = vmatprep.mubr.f32.mxu0 0.0
  %5071 = vmatmul.mubr.f32.gmra.mrb[0].mxu0 %v4614
  %v5072 = vpop.f32.mrb[0].mxu0
  %v5073 = vadd.f32 %v4467, %v5072
  %v5074 = vpop.f32.mrb[0].mxu0
  %5075 = vmatprep.mubr.f32.mxu0 0.0
  %5076 = vmatmul.mubr.f32.gmra.mrb[0].mxu0 %v4617
  %v5077 = vpop.f32.mrb[0].mxu0
  %v5078 = vadd.f32 %v4467, %v5077
  %v5079 = vpop.f32.mrb[0].mxu0
  %5080 = vmatprep.mubr.f32.mxu0 0.0
  %5081 = vmatmul.mubr.f32.gmra.mrb[0].mxu0 %v4620
  %v5082 = vpop.f32.mrb[0].mxu0
  %v5083 = vadd.f32 %v4467, %v5082
  %v5084 = vpop.f32.mrb[0].mxu0
  %5085 = vmatprep.mubr.f32.mxu0 0.0
  %5086 = vmatmul.mubr.f32.gmra.mrb[0].mxu0 %v4623
  %v5087 = vpop.f32.mrb[0].mxu0
  %v5088 = vadd.f32 %v4467, %v5087
  %v5089 = vpop.f32.mrb[0].mxu0
  %5090 = vmatprep.mubr.f32.mxu0 0.0
  %5091 = vmatmul.mubr.f32.gmra.mrb[0].mxu0 %v4626
  %v5092 = vpop.f32.mrb[0].mxu0
  %v5093 = vadd.f32 %v4467, %v5092
  %v5094 = vpop.f32.mrb[0].mxu0
  %5095 = vmatprep.mubr.f32.mxu0 0.0
  %5096 = vmatmul.mubr.f32.gmra.mrb[0].mxu0 %v4629
  %v5097 = vpop.f32.mrb[0].mxu0
  %v5098 = vadd.f32 %v4467, %v5097
  %v5099 = vpop.f32.mrb[0].mxu0
  %5100 = vmatprep.mubr.f32.mxu0 0.0
  %5101 = vmatmul.mubr.f32.gmra.mrb[0].mxu0 %v4632
  %v5102 = vpop.f32.mrb[0].mxu0
  %v5103 = vadd.f32 %v4467, %v5102
  %v5104 = vpop.f32.mrb[0].mxu0
  %5105 = vmatprep.mubr.f32.mxu0 0.0
  %5106 = vmatmul.mubr.f32.gmra.mrb[0].mxu0 %v4635
  %v5107 = vpop.f32.mrb[0].mxu0
  %v5108 = vadd.f32 %v4467, %v5107
  %v5109 = vpop.f32.mrb[0].mxu0
  %5110 = vmatprep.mubr.f32.mxu0 0.0
  %5111 = vmatmul.mubr.f32.gmra.mrb[0].mxu0 %v4638
  %v5112 = vpop.f32.mrb[0].mxu0
  %v5113 = vadd.f32 %v4467, %v5112
  %v5114 = vpop.f32.mrb[0].mxu0
  %5115 = vmatprep.mubr.f32.mxu0 0.0
  %5116 = vmatmul.mubr.f32.gmra.mrb[0].mxu0 %v4641
  %v5117 = vpop.f32.mrb[0].mxu0
  %v5118 = vadd.f32 %v4467, %v5117
  %v5119 = vpop.f32.mrb[0].mxu0
  %5120 = vmatprep.mubr.f32.mxu0 0.0
  %5121 = vmatmul.mubr.f32.gmra.mrb[0].mxu0 %v4644
  %v5122 = vpop.f32.mrb[0].mxu0
  %v5123 = vadd.f32 %v4467, %v5122
  %v5124 = vpop.f32.mrb[0].mxu0
  %5125 = vmatprep.mubr.f32.mxu0 0.0
  %5126 = vmatmul.mubr.f32.gmra.mrb[0].mxu0 %v4647
  %v5127 = vpop.f32.mrb[0].mxu0
  %v5128 = vadd.f32 %v4467, %v5127
  %v5129 = vpop.f32.mrb[0].mxu0
  %5130 = vmatprep.mubr.f32.mxu0 0.0
  %5131 = vmatmul.mubr.f32.gmra.mrb[0].mxu0 %v4650
  %v5132 = vpop.f32.mrb[0].mxu0
  %v5133 = vadd.f32 %v4467, %v5132
  %v5134 = vpop.f32.mrb[0].mxu0
  %5135 = vmatprep.mubr.f32.mxu0 0.0
  %5136 = vmatmul.mubr.f32.gmra.mrb[0].mxu0 %v4653
  %v5137 = vpop.f32.mrb[0].mxu0
  %v5138 = vadd.f32 %v4467, %v5137
  %v5139 = vpop.f32.mrb[0].mxu0
  %5140 = vmatprep.mubr.f32.mxu0 0.0
  %5141 = vmatmul.mubr.f32.gmra.mrb[0].mxu0 %v4656
  %v5142 = vpop.f32.mrb[0].mxu0
  %v5143 = vadd.f32 %v4467, %v5142
  %v5144 = vpop.f32.mrb[0].mxu0
  %5145 = vmatprep.mubr.f32.mxu0 0.0
  %5146 = vmatmul.mubr.f32.gmra.mrb[0].mxu0 %v4659
  %v5147 = vpop.f32.mrb[0].mxu0
  %v5148 = vadd.f32 %v4467, %v5147
  %v5149 = vpop.f32.mrb[0].mxu0
  %5150 = vmatprep.mubr.f32.mxu0 0.0
  %5151 = vmatmul.mubr.f32.gmra.mrb[0].mxu0 %v4662
  %v5152 = vpop.f32.mrb[0].mxu0
  %v5153 = vadd.f32 %v4467, %v5152
  %v5154 = vpop.f32.mrb[0].mxu0
  %5155 = vmatprep.mubr.f32.mxu0 0.0
  %5156 = vmatmul.mubr.f32.gmra.mrb[0].mxu0 %v4665
  %v5157 = vpop.f32.mrb[0].mxu0
  %v5158 = vadd.f32 %v4467, %v5157
  %v5159 = vpop.f32.mrb[0].mxu0
  %5160 = vmatprep.mubr.f32.mxu0 0.0
  %5161 = vmatmul.mubr.f32.gmra.mrb[0].mxu0 %v4668
  %v5162 = vpop.f32.mrb[0].mxu0
  %v5163 = vadd.f32 %v4467, %v5162
  %v5164 = vpop.f32.mrb[0].mxu0
  %5165 = vmatprep.mubr.f32.mxu0 0.0
  %5166 = vmatmul.mubr.f32.gmra.mrb[0].mxu0 %v4671
  %v5167 = vpop.f32.mrb[0].mxu0
  %v5168 = vadd.f32 %v4467, %v5167
  %v5169 = vpop.f32.mrb[0].mxu0
  %5170 = vmatprep.mubr.f32.mxu0 0.0
  %5171 = vmatmul.mubr.f32.gmra.mrb[0].mxu0 %v4674
  %v5172 = vpop.f32.mrb[0].mxu0
  %v5173 = vadd.f32 %v4467, %v5172
  %v5174 = vpop.f32.mrb[0].mxu0
  %5175 = vmatprep.mubr.f32.mxu0 0.0
  %5176 = vmatmul.mubr.f32.gmra.mrb[0].mxu0 %v4677
  %v5177 = vpop.f32.mrb[0].mxu0
  %v5178 = vadd.f32 %v4467, %v5177
  %v5179 = vpop.f32.mrb[0].mxu0
  %5180 = vmatprep.mubr.f32.mxu0 0.0
  %5181 = vmatmul.mubr.f32.gmra.mrb[0].mxu0 %v4680
  %v5182 = vpop.f32.mrb[0].mxu0
  %v5183 = vadd.f32 %v4467, %v5182
  %v5184 = vpop.f32.mrb[0].mxu0
  %5185 = vmatprep.mubr.f32.mxu0 0.0
  %5186 = vmatmul.mubr.f32.gmra.mrb[0].mxu0 %v4683
  %v5187 = vpop.f32.mrb[0].mxu0
  %v5188 = vadd.f32 %v4467, %v5187
  %v5189 = vpop.f32.mrb[0].mxu0
  %5190 = vmatprep.mubr.f32.mxu0 0.0
  %5191 = vmatmul.mubr.f32.gmra.mrb[0].mxu0 %v4686
  %v5192 = vpop.f32.mrb[0].mxu0
  %v5193 = vadd.f32 %v4467, %v5192
  %v5194 = vpop.f32.mrb[0].mxu0
  %5195 = vmatprep.mubr.f32.mxu0 0.0
  %5196 = vmatmul.mubr.f32.gmra.mrb[0].mxu0 %v4689
  %v5197 = vpop.f32.mrb[0].mxu0
  %v5198 = vadd.f32 %v4467, %v5197
  %v5199 = vpop.f32.mrb[0].mxu0
  %5200 = vmatprep.mubr.f32.mxu0 0.0
  %5201 = vmatmul.mubr.f32.gmra.mrb[0].mxu0 %v4692
  %v5202 = vpop.f32.mrb[0].mxu0
  %v5203 = vadd.f32 %v4467, %v5202
  %v5204 = vpop.f32.mrb[0].mxu0
  %5205 = vmatprep.mubr.f32.mxu0 0.0
  %5206 = vmatmul.mubr.f32.gmra.mrb[0].mxu0 %v4695
  %v5207 = vpop.f32.mrb[0].mxu0
  %v5208 = vadd.f32 %v4467, %v5207
  %v5209 = vpop.f32.mrb[0].mxu0
  %5210 = vmatprep.mubr.f32.mxu0 0.0
  %5211 = vmatmul.mubr.f32.gmra.mrb[0].mxu0 %v4698
  %v5212 = vpop.f32.mrb[0].mxu0
  %v5213 = vadd.f32 %v4467, %v5212
  %v5214 = vpop.f32.mrb[0].mxu0
  %5215 = vmatprep.mubr.f32.mxu0 0.0
  %5216 = vmatmul.mubr.f32.gmra.mrb[0].mxu0 %v4701
  %v5217 = vpop.f32.mrb[0].mxu0
  %v5218 = vadd.f32 %v4467, %v5217
  %v5219 = vpop.f32.mrb[0].mxu0
  %5220 = vmatprep.mubr.f32.mxu0 0.0
  %5221 = vmatmul.mubr.f32.gmra.mrb[0].mxu0 %v4704
  %v5222 = vpop.f32.mrb[0].mxu0
  %v5223 = vadd.f32 %v4467, %v5222
  %v5224 = vpop.f32.mrb[0].mxu0
  %5225 = vmatprep.mubr.f32.mxu0 0.0
  %5226 = vmatmul.mubr.f32.gmra.mrb[0].mxu0 %v4707
  %v5227 = vpop.f32.mrb[0].mxu0
  %v5228 = vadd.f32 %v4467, %v5227
  %v5229 = vpop.f32.mrb[0].mxu0
  %5230 = vmatprep.mubr.f32.mxu0 0.0
  %5231 = vmatmul.mubr.f32.gmra.mrb[0].mxu0 %v4710
  %v5232 = vpop.f32.mrb[0].mxu0
  %v5233 = vadd.f32 %v4467, %v5232
  %v5234 = vpop.f32.mrb[0].mxu0
  %5235 = vmatprep.mubr.f32.mxu0 0.0
  %5236 = vmatmul.mubr.f32.gmra.mrb[0].mxu0 %v4713
  %v5237 = vpop.f32.mrb[0].mxu0
  %v5238 = vadd.f32 %v4467, %v5237
  %v5239 = vpop.f32.mrb[0].mxu0
  %5240 = vmatprep.mubr.f32.mxu0 0.0
  %5241 = vmatmul.mubr.f32.gmra.mrb[0].mxu0 %v4716
  %v5242 = vpop.f32.mrb[0].mxu0
  %v5243 = vadd.f32 %v4467, %v5242
  %v5244 = vpop.f32.mrb[0].mxu0
  %5245 = vmatprep.mubr.f32.mxu0 0.0
  %5246 = vmatmul.mubr.f32.gmra.mrb[0].mxu0 %v4719
  %v5247 = vpop.f32.mrb[0].mxu0
  %v5248 = vadd.f32 %v4467, %v5247
  %v5249 = vpop.f32.mrb[0].mxu0
  %5250 = vmatprep.mubr.f32.mxu0 0.0
  %5251 = vmatmul.mubr.f32.gmra.mrb[0].mxu0 %v4722
  %v5252 = vpop.f32.mrb[0].mxu0
  %v5253 = vadd.f32 %v4467, %v5252
  %v5254 = vpop.f32.mrb[0].mxu0
  %5255 = vmatprep.mubr.f32.mxu0 0.0
  %5256 = vmatmul.mubr.f32.gmra.mrb[0].mxu0 %v4725
  %v5257 = vpop.f32.mrb[0].mxu0
  %v5258 = vadd.f32 %v4467, %v5257
  %v5259 = vpop.f32.mrb[0].mxu0
  %5260 = vmatprep.mubr.f32.mxu0 0.0
  %5261 = vmatmul.mubr.f32.gmra.mrb[0].mxu0 %v4728
  %v5262 = vpop.f32.mrb[0].mxu0
  %v5263 = vadd.f32 %v4467, %v5262
  %v5264 = vpop.f32.mrb[0].mxu0
  %5265 = vmatprep.mubr.f32.mxu0 0.0
  %5266 = vmatmul.mubr.f32.gmra.mrb[0].mxu0 %v4731
  %v5267 = vpop.f32.mrb[0].mxu0
  %v5268 = vadd.f32 %v4467, %v5267
  %v5269 = vpop.f32.mrb[0].mxu0
  %5270 = vmatprep.mubr.f32.mxu0 0.0
  %5271 = vmatmul.mubr.f32.gmra.mrb[0].mxu0 %v4734
  %v5272 = vpop.f32.mrb[0].mxu0
  %v5273 = vadd.f32 %v4467, %v5272
  %v5274 = vpop.f32.mrb[0].mxu0
  %5275 = vmatprep.mubr.f32.mxu0 0.0
  %5276 = vmatmul.mubr.f32.gmra.mrb[0].mxu0 %v4737
  %v5277 = vpop.f32.mrb[0].mxu0
  %v5278 = vadd.f32 %v4467, %v5277
  %v5279 = vpop.f32.mrb[0].mxu0
  %5280 = vmatprep.mubr.f32.mxu0 0.0
  %5281 = vmatmul.mubr.f32.gmra.mrb[0].mxu0 %v4740
  %v5282 = vpop.f32.mrb[0].mxu0
  %v5283 = vadd.f32 %v4467, %v5282
  %v5284 = vpop.f32.mrb[0].mxu0
  %5285 = vmatprep.mubr.f32.mxu0 0.0
  %5286 = vmatmul.mubr.f32.gmra.mrb[0].mxu0 %v4743
  %v5287 = vpop.f32.mrb[0].mxu0
  %v5288 = vadd.f32 %v4467, %v5287
  %v5289 = vpop.f32.mrb[0].mxu0
  %5290 = vmatprep.mubr.f32.mxu0 0.0
  %5291 = vmatmul.mubr.f32.gmra.mrb[0].mxu0 %v4746
  %v5292 = vpop.f32.mrb[0].mxu0
  %v5293 = vadd.f32 %v4467, %v5292
  %v5294 = vpop.f32.mrb[0].mxu0
  %5295 = vmatprep.mubr.f32.mxu0 0.0
  %5296 = vmatmul.mubr.f32.gmra.mrb[0].mxu0 %v4749
  %v5297 = vpop.f32.mrb[0].mxu0
  %v5298 = vadd.f32 %v4467, %v5297
  %v5299 = vpop.f32.mrb[0].mxu0
  %5300 = vmatprep.mubr.f32.mxu0 0.0
  %5301 = vmatmul.mubr.f32.gmra.mrb[0].mxu0 %v4752
  %v5302 = vpop.f32.mrb[0].mxu0
  %v5303 = vadd.f32 %v4467, %v5302
  %v5304 = vpop.f32.mrb[0].mxu0
  %5305 = vmatprep.mubr.f32.mxu0 0.0
  %5306 = vmatmul.mubr.f32.gmra.mrb[0].mxu0 %v4755
  %v5307 = vpop.f32.mrb[0].mxu0
  %v5308 = vadd.f32 %v4467, %v5307
  %v5309 = vpop.f32.mrb[0].mxu0
  %5310 = vmatprep.mubr.f32.mxu0 0.0
  %5311 = vmatmul.mubr.f32.gmra.mrb[0].mxu0 %v4758
  %v5312 = vpop.f32.mrb[0].mxu0
  %v5313 = vadd.f32 %v4467, %v5312
  %v5314 = vpop.f32.mrb[0].mxu0
  %5315 = vmatprep.mubr.f32.mxu0 0.0
  %5316 = vmatmul.mubr.f32.gmra.mrb[0].mxu0 %v4761
  %v5317 = vpop.f32.mrb[0].mxu0
  %v5318 = vadd.f32 %v4467, %v5317
  %v5319 = vpop.f32.mrb[0].mxu0
  %5320 = vdwg.mxu0
  %v5321 = vmax.f32 %v4833, 0.0
  %v5322 = vmax.f32 %v4838, 0.0
  %v5323 = vmax.f32 %v4843, 0.0
  %v5324 = vmax.f32 %v4848, 0.0
  %v5325 = vmax.f32 %v4853, 0.0
  %v5326 = vmax.f32 %v4858, 0.0
  %v5327 = vmax.f32 %v4863, 0.0
  %v5328 = vmax.f32 %v4868, 0.0
  %v5329 = vmax.f32 %v4873, 0.0
  %v5330 = vmax.f32 %v4878, 0.0
  %v5331 = vmax.f32 %v4883, 0.0
  %v5332 = vmax.f32 %v4888, 0.0
  %v5333 = vmax.f32 %v4893, 0.0
  %v5334 = vmax.f32 %v4898, 0.0
  %v5335 = vmax.f32 %v4903, 0.0
  %v5336 = vmax.f32 %v4908, 0.0
  %v5337 = vmax.f32 %v4913, 0.0
  %v5338 = vmax.f32 %v4918, 0.0
  %v5339 = vmax.f32 %v4923, 0.0
  %v5340 = vmax.f32 %v4928, 0.0
  %v5341 = vmax.f32 %v4933, 0.0
  %v5342 = vmax.f32 %v4938, 0.0
  %v5343 = vmax.f32 %v4943, 0.0
  %v5344 = vmax.f32 %v4948, 0.0
  %v5345 = vmax.f32 %v4953, 0.0
  %v5346 = vmax.f32 %v4958, 0.0
  %v5347 = vmax.f32 %v4963, 0.0
  %v5348 = vmax.f32 %v4968, 0.0
  %v5349 = vmax.f32 %v4973, 0.0
  %v5350 = vmax.f32 %v4978, 0.0
  %v5351 = vmax.f32 %v4983, 0.0
  %v5352 = vmax.f32 %v4988, 0.0
  %v5353 = vmax.f32 %v4993, 0.0
  %v5354 = vmax.f32 %v4998, 0.0
  %v5355 = vmax.f32 %v5003, 0.0
  %v5356 = vmax.f32 %v5008, 0.0
  %v5357 = vmax.f32 %v5013, 0.0
  %v5358 = vmax.f32 %v5018, 0.0
  %v5359 = vmax.f32 %v5023, 0.0
  %v5360 = vmax.f32 %v5028, 0.0
  %v5361 = vmax.f32 %v5033, 0.0
  %v5362 = vmax.f32 %v5038, 0.0
  %v5363 = vmax.f32 %v5043, 0.0
  %v5364 = vmax.f32 %v5048, 0.0
  %v5365 = vmax.f32 %v5053, 0.0
  %v5366 = vmax.f32 %v5058, 0.0
  %v5367 = vmax.f32 %v5063, 0.0
  %v5368 = vmax.f32 %v5068, 0.0
  %v5369 = vmax.f32 %v5073, 0.0
  %v5370 = vmax.f32 %v5078, 0.0
  %v5371 = vmax.f32 %v5083, 0.0
  %v5372 = vmax.f32 %v5088, 0.0
  %v5373 = vmax.f32 %v5093, 0.0
  %v5374 = vmax.f32 %v5098, 0.0
  %v5375 = vmax.f32 %v5103, 0.0
  %v5376 = vmax.f32 %v5108, 0.0
  %v5377 = vmax.f32 %v5113, 0.0
  %v5378 = vmax.f32 %v5118, 0.0
  %v5379 = vmax.f32 %v5123, 0.0
  %v5380 = vmax.f32 %v5128, 0.0
  %v5381 = vmax.f32 %v5133, 0.0
  %v5382 = vmax.f32 %v5138, 0.0
  %v5383 = vmax.f32 %v5143, 0.0
  %v5384 = vmax.f32 %v5148, 0.0
  %v5385 = vmax.f32 %v5153, 0.0
  %v5386 = vmax.f32 %v5158, 0.0
  %v5387 = vmax.f32 %v5163, 0.0
  %v5388 = vmax.f32 %v5168, 0.0
  %v5389 = vmax.f32 %v5173, 0.0
  %v5390 = vmax.f32 %v5178, 0.0
  %v5391 = vmax.f32 %v5183, 0.0
  %v5392 = vmax.f32 %v5188, 0.0
  %v5393 = vmax.f32 %v5193, 0.0
  %v5394 = vmax.f32 %v5198, 0.0
  %v5395 = vmax.f32 %v5203, 0.0
  %v5396 = vmax.f32 %v5208, 0.0
  %v5397 = vmax.f32 %v5213, 0.0
  %v5398 = vmax.f32 %v5218, 0.0
  %v5399 = vmax.f32 %v5223, 0.0
  %v5400 = vmax.f32 %v5228, 0.0
  %v5401 = vmax.f32 %v5233, 0.0
  %v5402 = vmax.f32 %v5238, 0.0
  %v5403 = vmax.f32 %v5243, 0.0
  %v5404 = vmax.f32 %v5248, 0.0
  %v5405 = vmax.f32 %v5253, 0.0
  %v5406 = vmax.f32 %v5258, 0.0
  %v5407 = vmax.f32 %v5263, 0.0
  %v5408 = vmax.f32 %v5268, 0.0
  %v5409 = vmax.f32 %v5273, 0.0
  %v5410 = vmax.f32 %v5278, 0.0
  %v5411 = vmax.f32 %v5283, 0.0
  %v5412 = vmax.f32 %v5288, 0.0
  %v5413 = vmax.f32 %v5293, 0.0
  %v5414 = vmax.f32 %v5298, 0.0
  %v5415 = vmax.f32 %v5303, 0.0
  %v5416 = vmax.f32 %v5308, 0.0
  %v5417 = vmax.f32 %v5313, 0.0
  %v5418 = vmax.f32 %v5318, 0.0
  %5419 = vst.msk [vmem:[#allocation2] sm:$0xff] %vm1089, %v5321
  %5420 = vst.msk [vmem:[#allocation2 + $0x8] sm:$0xff] %vm1089, %v5322
  %5421 = vst.msk [vmem:[#allocation2 + $0x10] sm:$0xff] %vm1089, %v5323
  %5422 = vst.msk [vmem:[#allocation2 + $0x18] sm:$0xff] %vm1089, %v5324
  %5423 = vst.msk [vmem:[#allocation2 + $0x20] sm:$0xff] %vm1089, %v5325
  %5424 = vst.msk [vmem:[#allocation2 + $0x28] sm:$0xff] %vm1089, %v5326
  %5425 = vst.msk [vmem:[#allocation2 + $0x30] sm:$0xff] %vm1089, %v5327
  %5426 = vst.msk [vmem:[#allocation2 + $0x38] sm:$0xff] %vm1089, %v5328
  %5427 = vst.msk [vmem:[#allocation2 + $0x40] sm:$0xff] %vm1089, %v5329
  %5428 = vst.msk [vmem:[#allocation2 + $0x48] sm:$0xff] %vm1089, %v5330
  %5429 = vst.msk [vmem:[#allocation2 + $0x50] sm:$0xff] %vm1089, %v5331
  %5430 = vst.msk [vmem:[#allocation2 + $0x58] sm:$0xff] %vm1089, %v5332
  %5431 = vst.msk [vmem:[#allocation2 + $0x60] sm:$0xff] %vm1089, %v5333
  %5432 = vst.msk [vmem:[#allocation2 + $0x68] sm:$0xff] %vm1089, %v5334
  %5433 = vst.msk [vmem:[#allocation2 + $0x70] sm:$0xff] %vm1089, %v5335
  %5434 = vst.msk [vmem:[#allocation2 + $0x78] sm:$0xff] %vm1089, %v5336
  %5435 = vst.msk [vmem:[#allocation2 + $0x80] sm:$0xff] %vm1089, %v5337
  %5436 = vst.msk [vmem:[#allocation2 + $0x88] sm:$0xff] %vm1089, %v5338
  %5437 = vst.msk [vmem:[#allocation2 + $0x90] sm:$0xff] %vm1089, %v5339
  %5438 = vst.msk [vmem:[#allocation2 + $0x98] sm:$0xff] %vm1089, %v5340
  %5439 = vst.msk [vmem:[#allocation2 + $0xa0] sm:$0xff] %vm1089, %v5341
  %5440 = vst.msk [vmem:[#allocation2 + $0xa8] sm:$0xff] %vm1089, %v5342
  %5441 = vst.msk [vmem:[#allocation2 + $0xb0] sm:$0xff] %vm1089, %v5343
  %5442 = vst.msk [vmem:[#allocation2 + $0xb8] sm:$0xff] %vm1089, %v5344
  %5443 = vst.msk [vmem:[#allocation2 + $0xc0] sm:$0xff] %vm1089, %v5345
  %5444 = vst.msk [vmem:[#allocation2 + $0xc8] sm:$0xff] %vm1089, %v5346
  %5445 = vst.msk [vmem:[#allocation2 + $0xd0] sm:$0xff] %vm1089, %v5347
  %5446 = vst.msk [vmem:[#allocation2 + $0xd8] sm:$0xff] %vm1089, %v5348
  %5447 = vst.msk [vmem:[#allocation2 + $0xe0] sm:$0xff] %vm1089, %v5349
  %5448 = vst.msk [vmem:[#allocation2 + $0xe8] sm:$0xff] %vm1089, %v5350
  %5449 = vst.msk [vmem:[#allocation2 + $0xf0] sm:$0xff] %vm1089, %v5351
  %5450 = vst.msk [vmem:[#allocation2 + $0xf8] sm:$0xff] %vm1089, %v5352
  %5451 = vst.msk [vmem:[#allocation2 + $0x100] sm:$0xff] %vm1089, %v5353
  %5452 = vst.msk [vmem:[#allocation2 + $0x108] sm:$0xff] %vm1089, %v5354
  %5453 = vst.msk [vmem:[#allocation2 + $0x110] sm:$0xff] %vm1089, %v5355
  %5454 = vst.msk [vmem:[#allocation2 + $0x118] sm:$0xff] %vm1089, %v5356
  %5455 = vst.msk [vmem:[#allocation2 + $0x120] sm:$0xff] %vm1089, %v5357
  %5456 = vst.msk [vmem:[#allocation2 + $0x128] sm:$0xff] %vm1089, %v5358
  %5457 = vst.msk [vmem:[#allocation2 + $0x130] sm:$0xff] %vm1089, %v5359
  %5458 = vst.msk [vmem:[#allocation2 + $0x138] sm:$0xff] %vm1089, %v5360
  %5459 = vst.msk [vmem:[#allocation2 + $0x140] sm:$0xff] %vm1089, %v5361
  %5460 = vst.msk [vmem:[#allocation2 + $0x148] sm:$0xff] %vm1089, %v5362
  %5461 = vst.msk [vmem:[#allocation2 + $0x150] sm:$0xff] %vm1089, %v5363
  %5462 = vst.msk [vmem:[#allocation2 + $0x158] sm:$0xff] %vm1089, %v5364
  %5463 = vst.msk [vmem:[#allocation2 + $0x160] sm:$0xff] %vm1089, %v5365
  %5464 = vst.msk [vmem:[#allocation2 + $0x168] sm:$0xff] %vm1089, %v5366
  %5465 = vst.msk [vmem:[#allocation2 + $0x170] sm:$0xff] %vm1089, %v5367
  %5466 = vst.msk [vmem:[#allocation2 + $0x178] sm:$0xff] %vm1089, %v5368
  %5467 = vst.msk [vmem:[#allocation2 + $0x180] sm:$0xff] %vm1089, %v5369
  %5468 = vst.msk [vmem:[#allocation2 + $0x188] sm:$0xff] %vm1089, %v5370
  %5469 = vst.msk [vmem:[#allocation2 + $0x190] sm:$0xff] %vm1089, %v5371
  %5470 = vst.msk [vmem:[#allocation2 + $0x198] sm:$0xff] %vm1089, %v5372
  %5471 = vst.msk [vmem:[#allocation2 + $0x1a0] sm:$0xff] %vm1089, %v5373
  %5472 = vst.msk [vmem:[#allocation2 + $0x1a8] sm:$0xff] %vm1089, %v5374
  %5473 = vst.msk [vmem:[#allocation2 + $0x1b0] sm:$0xff] %vm1089, %v5375
  %5474 = vst.msk [vmem:[#allocation2 + $0x1b8] sm:$0xff] %vm1089, %v5376
  %5475 = vst.msk [vmem:[#allocation2 + $0x1c0] sm:$0xff] %vm1089, %v5377
  %5476 = vst.msk [vmem:[#allocation2 + $0x1c8] sm:$0xff] %vm1089, %v5378
  %5477 = vst.msk [vmem:[#allocation2 + $0x1d0] sm:$0xff] %vm1089, %v5379
  %5478 = vst.msk [vmem:[#allocation2 + $0x1d8] sm:$0xff] %vm1089, %v5380
  %5479 = vst.msk [vmem:[#allocation2 + $0x1e0] sm:$0xff] %vm1089, %v5381
  %5480 = vst.msk [vmem:[#allocation2 + $0x1e8] sm:$0xff] %vm1089, %v5382
  %5481 = vst.msk [vmem:[#allocation2 + $0x1f0] sm:$0xff] %vm1089, %v5383
  %5482 = vst.msk [vmem:[#allocation2 + $0x1f8] sm:$0xff] %vm1089, %v5384
  %5483 = vst.msk [vmem:[#allocation2 + $0x200] sm:$0xff] %vm1089, %v5385
  %5484 = vst.msk [vmem:[#allocation2 + $0x208] sm:$0xff] %vm1089, %v5386
  %5485 = vst.msk [vmem:[#allocation2 + $0x210] sm:$0xff] %vm1089, %v5387
  %5486 = vst.msk [vmem:[#allocation2 + $0x218] sm:$0xff] %vm1089, %v5388
  %5487 = vst.msk [vmem:[#allocation2 + $0x220] sm:$0xff] %vm1089, %v5389
  %5488 = vst.msk [vmem:[#allocation2 + $0x228] sm:$0xff] %vm1089, %v5390
  %5489 = vst.msk [vmem:[#allocation2 + $0x230] sm:$0xff] %vm1089, %v5391
  %5490 = vst.msk [vmem:[#allocation2 + $0x238] sm:$0xff] %vm1089, %v5392
  %5491 = vst.msk [vmem:[#allocation2 + $0x240] sm:$0xff] %vm1089, %v5393
  %5492 = vst.msk [vmem:[#allocation2 + $0x248] sm:$0xff] %vm1089, %v5394
  %5493 = vst.msk [vmem:[#allocation2 + $0x250] sm:$0xff] %vm1089, %v5395
  %5494 = vst.msk [vmem:[#allocation2 + $0x258] sm:$0xff] %vm1089, %v5396
  %5495 = vst.msk [vmem:[#allocation2 + $0x260] sm:$0xff] %vm1089, %v5397
  %5496 = vst.msk [vmem:[#allocation2 + $0x268] sm:$0xff] %vm1089, %v5398
  %5497 = vst.msk [vmem:[#allocation2 + $0x270] sm:$0xff] %vm1089, %v5399
  %5498 = vst.msk [vmem:[#allocation2 + $0x278] sm:$0xff] %vm1089, %v5400
  %5499 = vst.msk [vmem:[#allocation2 + $0x280] sm:$0xff] %vm1089, %v5401
  %5500 = vst.msk [vmem:[#allocation2 + $0x288] sm:$0xff] %vm1089, %v5402
  %5501 = vst.msk [vmem:[#allocation2 + $0x290] sm:$0xff] %vm1089, %v5403
  %5502 = vst.msk [vmem:[#allocation2 + $0x298] sm:$0xff] %vm1089, %v5404
  %5503 = vst.msk [vmem:[#allocation2 + $0x2a0] sm:$0xff] %vm1089, %v5405
  %5504 = vst.msk [vmem:[#allocation2 + $0x2a8] sm:$0xff] %vm1089, %v5406
  %5505 = vst.msk [vmem:[#allocation2 + $0x2b0] sm:$0xff] %vm1089, %v5407
  %5506 = vst.msk [vmem:[#allocation2 + $0x2b8] sm:$0xff] %vm1089, %v5408
  %5507 = vst.msk [vmem:[#allocation2 + $0x2c0] sm:$0xff] %vm1089, %v5409
  %5508 = vst.msk [vmem:[#allocation2 + $0x2c8] sm:$0xff] %vm1089, %v5410
  %5509 = vst.msk [vmem:[#allocation2 + $0x2d0] sm:$0xff] %vm1089, %v5411
  %5510 = vst.msk [vmem:[#allocation2 + $0x2d8] sm:$0xff] %vm1089, %v5412
  %5511 = vst.msk [vmem:[#allocation2 + $0x2e0] sm:$0xff] %vm1089, %v5413
  %5512 = vst.msk [vmem:[#allocation2 + $0x2e8] sm:$0xff] %vm1089, %v5414
  %5513 = vst.msk [vmem:[#allocation2 + $0x2f0] sm:$0xff] %vm1089, %v5415
  %5514 = vst.msk [vmem:[#allocation2 + $0x2f8] sm:$0xff] %vm1089, %v5416
  %5515 = vst.msk [vmem:[#allocation2 + $0x300] sm:$0xff] %vm1089, %v5417
  %5516 = vst.msk [vmem:[#allocation2 + $0x308] sm:$0xff] %vm1089, %v5418
  %v5517 = vld [vmem:[#allocation2] ss:$2 sm:$0xff]
  %v5518 = vld [vmem:[%s1189] ss:$2 sm:$0xff]
  %v5519 = vld [vmem:[%s1191] ss:$2 sm:$0xff]
  %v5520 = vld [vmem:[%s1193] ss:$2 sm:$0xff]
  %v5521 = vld [vmem:[%s1195] ss:$2 sm:$0xff]
  %v5522 = vld [vmem:[%s1197] ss:$2 sm:$0xff]
  %v5523 = vld [vmem:[%s1199] ss:$2 sm:$0xff]
  %v5524 = vld [vmem:[%s1201] ss:$2 sm:$0xff]
  %v5525 = vld [vmem:[%s1203] ss:$2 sm:$0xff]
  %v5526 = vld [vmem:[%s1205] ss:$2 sm:$0xff]
  %v5527 = vld [vmem:[%s1207] ss:$2 sm:$0xff]
  %v5528 = vld [vmem:[%s1209] ss:$2 sm:$0xff]
  %v5529 = vld [vmem:[%s1211] ss:$2 sm:$0xff]
  %v5530 = vld [vmem:[%s1213] ss:$2 sm:$0xff]
  %v5531 = vld [vmem:[%s1215] ss:$2 sm:$0xff]
  %v5532 = vld [vmem:[%s1217] ss:$2 sm:$0xff]
  %v5533 = vld [vmem:[%s1219] ss:$2 sm:$0xff]
  %v5534 = vld [vmem:[%s1221] ss:$2 sm:$0xff]
  %v5535 = vld [vmem:[%s1223] ss:$2 sm:$0xff]
  %v5536 = vld [vmem:[%s1225] ss:$2 sm:$0xff]
  %v5537 = vld [vmem:[%s1227] ss:$2 sm:$0xff]
  %v5538 = vld [vmem:[%s1229] ss:$2 sm:$0xff]
  %v5539 = vld [vmem:[%s1231] ss:$2 sm:$0xff]
  %v5540 = vld [vmem:[%s1233] ss:$2 sm:$0xff]
  %v5541 = vld [vmem:[%s1235] ss:$2 sm:$0xff]
  %v5542 = vld [vmem:[%s1237] ss:$2 sm:$0xff]
  %v5543 = vld [vmem:[%s1239] ss:$2 sm:$0xff]
  %v5544 = vld [vmem:[%s1241] ss:$2 sm:$0xff]
  %v5545 = vld [vmem:[%s1243] ss:$2 sm:$0xff]
  %v5546 = vld [vmem:[%s1245] ss:$2 sm:$0xff]
  %v5547 = vld [vmem:[%s1247] ss:$2 sm:$0xff]
  %v5548 = vld [vmem:[%s1249] ss:$2 sm:$0xff]
  %v5549 = vld [vmem:[%s1251] ss:$2 sm:$0xff]
  %v5550 = vld [vmem:[%s1253] ss:$2 sm:$0xff]
  %v5551 = vld [vmem:[%s1255] ss:$2 sm:$0xff]
  %v5552 = vld [vmem:[%s1257] ss:$2 sm:$0xff]
  %v5553 = vld [vmem:[%s1259] ss:$2 sm:$0xff]
  %v5554 = vld [vmem:[%s1261] ss:$2 sm:$0xff]
  %v5555 = vld [vmem:[%s1263] ss:$2 sm:$0xff]
  %v5556 = vld [vmem:[%s1265] ss:$2 sm:$0xff]
  %v5557 = vld [vmem:[%s1267] ss:$2 sm:$0xff]
  %v5558 = vld [vmem:[%s1269] ss:$2 sm:$0xff]
  %v5559 = vld [vmem:[%s1271] ss:$2 sm:$0xff]
  %v5560 = vld [vmem:[%s1273] ss:$2 sm:$0xff]
  %v5561 = vld [vmem:[%s1275] ss:$2 sm:$0xff]
  %v5562 = vld [vmem:[%s1277] ss:$2 sm:$0xff]
  %v5563 = vld [vmem:[%s1279] ss:$2 sm:$0xff]
  %v5564 = vld [vmem:[%s1281] ss:$2 sm:$0xff]
  %v5565 = vld [vmem:[%s1283] ss:$2 sm:$0xff]
  %v5566 = vld [vmem:[%s1285] ss:$2 sm:$0xff]
  %v5567 = vld [vmem:[%s1287] ss:$2 sm:$0xff]
  %v5568 = vld [vmem:[%s1289] ss:$2 sm:$0xff]
  %v5569 = vld [vmem:[%s1291] ss:$2 sm:$0xff]
  %v5570 = vld [vmem:[%s1293] ss:$2 sm:$0xff]
  %v5571 = vld [vmem:[%s1295] ss:$2 sm:$0xff]
  %v5572 = vld [vmem:[%s1297] ss:$2 sm:$0xff]
  %v5573 = vld [vmem:[%s1299] ss:$2 sm:$0xff]
  %v5574 = vld [vmem:[%s1301] ss:$2 sm:$0xff]
  %v5575 = vld [vmem:[%s1303] ss:$2 sm:$0xff]
  %v5576 = vld [vmem:[%s1305] ss:$2 sm:$0xff]
  %v5577 = vld [vmem:[%s1307] ss:$2 sm:$0xff]
  %v5578 = vld [vmem:[%s1309] ss:$2 sm:$0xff]
  %v5579 = vld [vmem:[%s1311] ss:$2 sm:$0xff]
  %v5580 = vld [vmem:[%s1313] ss:$2 sm:$0xff]
  %v5581 = vld [vmem:[%s1315] ss:$2 sm:$0xff]
  %v5582 = vld [vmem:[%s1317] ss:$2 sm:$0xff]
  %v5583 = vld [vmem:[%s1319] ss:$2 sm:$0xff]
  %v5584 = vld [vmem:[%s1321] ss:$2 sm:$0xff]
  %v5585 = vld [vmem:[%s1323] ss:$2 sm:$0xff]
  %v5586 = vld [vmem:[%s1325] ss:$2 sm:$0xff]
  %v5587 = vld [vmem:[%s1327] ss:$2 sm:$0xff]
  %v5588 = vld [vmem:[%s1329] ss:$2 sm:$0xff]
  %v5589 = vld [vmem:[%s1331] ss:$2 sm:$0xff]
  %v5590 = vld [vmem:[%s1333] ss:$2 sm:$0xff]
  %v5591 = vld [vmem:[%s1335] ss:$2 sm:$0xff]
  %v5592 = vld [vmem:[%s1337] ss:$2 sm:$0xff]
  %v5593 = vld [vmem:[%s1339] ss:$2 sm:$0xff]
  %v5594 = vld [vmem:[%s1341] ss:$2 sm:$0xff]
  %v5595 = vld [vmem:[%s1343] ss:$2 sm:$0xff]
  %v5596 = vld [vmem:[%s1345] ss:$2 sm:$0xff]
  %v5597 = vld [vmem:[%s1347] ss:$2 sm:$0xff]
  %v5598 = vld [vmem:[%s1349] ss:$2 sm:$0xff]
  %v5599 = vld [vmem:[%s1351] ss:$2 sm:$0xff]
  %v5600 = vld [vmem:[%s1353] ss:$2 sm:$0xff]
  %v5601 = vld [vmem:[%s1355] ss:$2 sm:$0xff]
  %v5602 = vld [vmem:[%s1357] ss:$2 sm:$0xff]
  %v5603 = vld [vmem:[%s1359] ss:$2 sm:$0xff]
  %v5604 = vld [vmem:[%s1361] ss:$2 sm:$0xff]
  %v5605 = vld [vmem:[%s1363] ss:$2 sm:$0xff]
  %v5606 = vld [vmem:[%s1365] ss:$2 sm:$0xff]
  %v5607 = vld [vmem:[%s1367] ss:$2 sm:$0xff]
  %v5608 = vld [vmem:[%s1369] ss:$2 sm:$0xff]
  %v5609 = vld [vmem:[%s1371] ss:$2 sm:$0xff]
  %v5610 = vld [vmem:[%s1373] ss:$2 sm:$0xff]
  %v5611 = vld [vmem:[%s1375] ss:$2 sm:$0xff]
  %v5612 = vld [vmem:[%s1377] ss:$2 sm:$0xff]
  %v5613 = vld [vmem:[%s1379] ss:$2 sm:$0xff]
  %v5614 = vld [vmem:[%s1381] ss:$2 sm:$0xff]
  %v5615 = vmax.f32 %v5517, %v5566
  %v5616 = vmax.f32 %v5518, %v5567
  %v5617 = vmax.f32 %v5519, %v5568
  %v5618 = vmax.f32 %v5520, %v5569
  %v5619 = vmax.f32 %v5521, %v5570
  %v5620 = vmax.f32 %v5522, %v5571
  %v5621 = vmax.f32 %v5523, %v5572
  %v5622 = vmax.f32 %v5524, %v5573
  %v5623 = vmax.f32 %v5525, %v5574
  %v5624 = vmax.f32 %v5526, %v5575
  %v5625 = vmax.f32 %v5527, %v5576
  %v5626 = vmax.f32 %v5528, %v5577
  %v5627 = vmax.f32 %v5529, %v5578
  %v5628 = vmax.f32 %v5530, %v5579
  %v5629 = vmax.f32 %v5531, %v5580
  %v5630 = vmax.f32 %v5532, %v5581
  %v5631 = vmax.f32 %v5533, %v5582
  %v5632 = vmax.f32 %v5534, %v5583
  %v5633 = vmax.f32 %v5535, %v5584
  %v5634 = vmax.f32 %v5536, %v5585
  %v5635 = vmax.f32 %v5537, %v5586
  %v5636 = vmax.f32 %v5538, %v5587
  %v5637 = vmax.f32 %v5539, %v5588
  %v5638 = vmax.f32 %v5540, %v5589
  %v5639 = vmax.f32 %v5541, %v5590
  %v5640 = vmax.f32 %v5542, %v5591
  %v5641 = vmax.f32 %v5543, %v5592
  %v5642 = vmax.f32 %v5544, %v5593
  %v5643 = vmax.f32 %v5545, %v5594
  %v5644 = vmax.f32 %v5546, %v5595
  %v5645 = vmax.f32 %v5547, %v5596
  %v5646 = vmax.f32 %v5548, %v5597
  %v5647 = vmax.f32 %v5549, %v5598
  %v5648 = vmax.f32 %v5550, %v5599
  %v5649 = vmax.f32 %v5551, %v5600
  %v5650 = vmax.f32 %v5552, %v5601
  %v5651 = vmax.f32 %v5553, %v5602
  %v5652 = vmax.f32 %v5554, %v5603
  %v5653 = vmax.f32 %v5555, %v5604
  %v5654 = vmax.f32 %v5556, %v5605
  %v5655 = vmax.f32 %v5557, %v5606
  %v5656 = vmax.f32 %v5558, %v5607
  %v5657 = vmax.f32 %v5559, %v5608
  %v5658 = vmax.f32 %v5560, %v5609
  %v5659 = vmax.f32 %v5561, %v5610
  %v5660 = vmax.f32 %v5562, %v5611
  %v5661 = vmax.f32 %v5563, %v5612
  %v5662 = vmax.f32 %v5564, %v5613
  %v5663 = vmax.f32 %v5565, %v5614
  %5664 = vst.msk [vmem:[#allocation3] sm:$0xff] %vm1089, %v5615
  %5665 = vst.msk [vmem:[#allocation3 + $0x8] sm:$0xff] %vm1089, %v5616
  %5666 = vst.msk [vmem:[#allocation3 + $0x10] sm:$0xff] %vm1089, %v5617
  %5667 = vst.msk [vmem:[#allocation3 + $0x18] sm:$0xff] %vm1089, %v5618
  %5668 = vst.msk [vmem:[#allocation3 + $0x20] sm:$0xff] %vm1089, %v5619
  %5669 = vst.msk [vmem:[#allocation3 + $0x28] sm:$0xff] %vm1089, %v5620
  %5670 = vst.msk [vmem:[#allocation3 + $0x30] sm:$0xff] %vm1089, %v5621
  %5671 = vst.msk [vmem:[#allocation3 + $0x38] sm:$0xff] %vm1089, %v5622
  %5672 = vst.msk [vmem:[#allocation3 + $0x40] sm:$0xff] %vm1089, %v5623
  %5673 = vst.msk [vmem:[#allocation3 + $0x48] sm:$0xff] %vm1089, %v5624
  %5674 = vst.msk [vmem:[#allocation3 + $0x50] sm:$0xff] %vm1089, %v5625
  %5675 = vst.msk [vmem:[#allocation3 + $0x58] sm:$0xff] %vm1089, %v5626
  %5676 = vst.msk [vmem:[#allocation3 + $0x60] sm:$0xff] %vm1089, %v5627
  %5677 = vst.msk [vmem:[#allocation3 + $0x68] sm:$0xff] %vm1089, %v5628
  %5678 = vst.msk [vmem:[#allocation3 + $0x70] sm:$0xff] %vm1089, %v5629
  %5679 = vst.msk [vmem:[#allocation3 + $0x78] sm:$0xff] %vm1089, %v5630
  %5680 = vst.msk [vmem:[#allocation3 + $0x80] sm:$0xff] %vm1089, %v5631
  %5681 = vst.msk [vmem:[#allocation3 + $0x88] sm:$0xff] %vm1089, %v5632
  %5682 = vst.msk [vmem:[#allocation3 + $0x90] sm:$0xff] %vm1089, %v5633
  %5683 = vst.msk [vmem:[#allocation3 + $0x98] sm:$0xff] %vm1089, %v5634
  %5684 = vst.msk [vmem:[#allocation3 + $0xa0] sm:$0xff] %vm1089, %v5635
  %5685 = vst.msk [vmem:[#allocation3 + $0xa8] sm:$0xff] %vm1089, %v5636
  %5686 = vst.msk [vmem:[#allocation3 + $0xb0] sm:$0xff] %vm1089, %v5637
  %5687 = vst.msk [vmem:[#allocation3 + $0xb8] sm:$0xff] %vm1089, %v5638
  %5688 = vst.msk [vmem:[#allocation3 + $0xc0] sm:$0xff] %vm1089, %v5639
  %5689 = vst.msk [vmem:[#allocation3 + $0xc8] sm:$0xff] %vm1089, %v5640
  %5690 = vst.msk [vmem:[#allocation3 + $0xd0] sm:$0xff] %vm1089, %v5641
  %5691 = vst.msk [vmem:[#allocation3 + $0xd8] sm:$0xff] %vm1089, %v5642
  %5692 = vst.msk [vmem:[#allocation3 + $0xe0] sm:$0xff] %vm1089, %v5643
  %5693 = vst.msk [vmem:[#allocation3 + $0xe8] sm:$0xff] %vm1089, %v5644
  %5694 = vst.msk [vmem:[#allocation3 + $0xf0] sm:$0xff] %vm1089, %v5645
  %5695 = vst.msk [vmem:[#allocation3 + $0xf8] sm:$0xff] %vm1089, %v5646
  %5696 = vst.msk [vmem:[#allocation3 + $0x100] sm:$0xff] %vm1089, %v5647
  %5697 = vst.msk [vmem:[#allocation3 + $0x108] sm:$0xff] %vm1089, %v5648
  %5698 = vst.msk [vmem:[#allocation3 + $0x110] sm:$0xff] %vm1089, %v5649
  %5699 = vst.msk [vmem:[#allocation3 + $0x118] sm:$0xff] %vm1089, %v5650
  %5700 = vst.msk [vmem:[#allocation3 + $0x120] sm:$0xff] %vm1089, %v5651
  %5701 = vst.msk [vmem:[#allocation3 + $0x128] sm:$0xff] %vm1089, %v5652
  %5702 = vst.msk [vmem:[#allocation3 + $0x130] sm:$0xff] %vm1089, %v5653
  %5703 = vst.msk [vmem:[#allocation3 + $0x138] sm:$0xff] %vm1089, %v5654
  %5704 = vst.msk [vmem:[#allocation3 + $0x140] sm:$0xff] %vm1089, %v5655
  %5705 = vst.msk [vmem:[#allocation3 + $0x148] sm:$0xff] %vm1089, %v5656
  %5706 = vst.msk [vmem:[#allocation3 + $0x150] sm:$0xff] %vm1089, %v5657
  %5707 = vst.msk [vmem:[#allocation3 + $0x158] sm:$0xff] %vm1089, %v5658
  %5708 = vst.msk [vmem:[#allocation3 + $0x160] sm:$0xff] %vm1089, %v5659
  %5709 = vst.msk [vmem:[#allocation3 + $0x168] sm:$0xff] %vm1089, %v5660
  %5710 = vst.msk [vmem:[#allocation3 + $0x170] sm:$0xff] %vm1089, %v5661
  %5711 = vst.msk [vmem:[#allocation3 + $0x178] sm:$0xff] %vm1089, %v5662
  %5712 = vst.msk [vmem:[#allocation3 + $0x180] sm:$0xff] %vm1089, %v5663
  %v5713 = vld [vmem:[#allocation3] sm:$0xff]
  %v5714 = vld [vmem:[#allocation3 + $0x8] sm:$0x3f]
  %v5715 = vld [vmem:[#allocation3 + $0xe] sm:$0xff]
  %v5716 = vld [vmem:[#allocation3 + $0x16] sm:$0x3f]
  %v5717 = vmax.f32 %v5713, %v5715
  %v5718 = vmax.f32 %v5714, %v5716
  %5719 = vst.msk [vmem:[#allocation4] sm:$0xff] %vm1089, %v5717
  %5720 = vst.msk [vmem:[#allocation4 + $0x8] sm:$0x3f] %vm1488, %v5718
  %v5721 = vld [vmem:[#allocation3 + $0x1c] sm:$0xff]
  %v5722 = vld [vmem:[#allocation3 + $0x24] sm:$0x3f]
  %v5723 = vld [vmem:[#allocation3 + $0x2a] sm:$0xff]
  %v5724 = vld [vmem:[#allocation3 + $0x32] sm:$0x3f]
  %v5725 = vmax.f32 %v5721, %v5723
  %v5726 = vmax.f32 %v5722, %v5724
  %5727 = vst.msk [vmem:[#allocation4 + $0xe] sm:$0xff] %vm1089, %v5725
  %5728 = vst.msk [vmem:[#allocation4 + $0x16] sm:$0x3f] %vm1488, %v5726
  %v5729 = vld [vmem:[#allocation3 + $0x38] sm:$0xff]
  %v5730 = vld [vmem:[#allocation3 + $0x40] sm:$0x3f]
  %v5731 = vld [vmem:[#allocation3 + $0x46] sm:$0xff]
  %v5732 = vld [vmem:[#allocation3 + $0x4e] sm:$0x3f]
  %v5733 = vmax.f32 %v5729, %v5731
  %v5734 = vmax.f32 %v5730, %v5732
  %5735 = vst.msk [vmem:[#allocation4 + $0x1c] sm:$0xff] %vm1089, %v5733
  %5736 = vst.msk [vmem:[#allocation4 + $0x24] sm:$0x3f] %vm1488, %v5734
  %v5737 = vld [vmem:[#allocation3 + $0x54] sm:$0xff]
  %v5738 = vld [vmem:[#allocation3 + $0x5c] sm:$0x3f]
  %v5739 = vld [vmem:[#allocation3 + $0x62] sm:$0xff]
  %v5740 = vld [vmem:[#allocation3 + $0x6a] sm:$0x3f]
  %v5741 = vmax.f32 %v5737, %v5739
  %v5742 = vmax.f32 %v5738, %v5740
  %5743 = vst.msk [vmem:[#allocation4 + $0x2a] sm:$0xff] %vm1089, %v5741
  %5744 = vst.msk [vmem:[#allocation4 + $0x32] sm:$0x3f] %vm1488, %v5742
  %v5745 = vld [vmem:[#allocation3 + $0x70] sm:$0xff]
  %v5746 = vld [vmem:[#allocation3 + $0x78] sm:$0x3f]
  %v5747 = vld [vmem:[#allocation3 + $0x7e] sm:$0xff]
  %v5748 = vld [vmem:[#allocation3 + $0x86] sm:$0x3f]
  %v5749 = vmax.f32 %v5745, %v5747
  %v5750 = vmax.f32 %v5746, %v5748
  %5751 = vst.msk [vmem:[#allocation4 + $0x38] sm:$0xff] %vm1089, %v5749
  %5752 = vst.msk [vmem:[#allocation4 + $0x40] sm:$0x3f] %vm1488, %v5750
  %v5753 = vld [vmem:[#allocation3 + $0x8c] sm:$0xff]
  %v5754 = vld [vmem:[#allocation3 + $0x94] sm:$0x3f]
  %v5755 = vld [vmem:[#allocation3 + $0x9a] sm:$0xff]
  %v5756 = vld [vmem:[#allocation3 + $0xa2] sm:$0x3f]
  %v5757 = vmax.f32 %v5753, %v5755
  %v5758 = vmax.f32 %v5754, %v5756
  %5759 = vst.msk [vmem:[#allocation4 + $0x46] sm:$0xff] %vm1089, %v5757
  %5760 = vst.msk [vmem:[#allocation4 + $0x4e] sm:$0x3f] %vm1488, %v5758
  %v5761 = vld [vmem:[#allocation3 + $0xa8] sm:$0xff]
  %v5762 = vld [vmem:[#allocation3 + $0xb0] sm:$0x3f]
  %v5763 = vld [vmem:[#allocation3 + $0xb6] sm:$0xff]
  %v5764 = vld [vmem:[#allocation3 + $0xbe] sm:$0x3f]
  %v5765 = vmax.f32 %v5761, %v5763
  %v5766 = vmax.f32 %v5762, %v5764
  %5767 = vst.msk [vmem:[#allocation4 + $0x54] sm:$0xff] %vm1089, %v5765
  %5768 = vst.msk [vmem:[#allocation4 + $0x5c] sm:$0x3f] %vm1488, %v5766
  %v5769 = vld [vmem:[#allocation3 + $0xc4] sm:$0xff]
  %v5770 = vld [vmem:[#allocation3 + $0xcc] sm:$0x3f]
  %v5771 = vld [vmem:[#allocation3 + $0xd2] sm:$0xff]
  %v5772 = vld [vmem:[#allocation3 + $0xda] sm:$0x3f]
  %v5773 = vmax.f32 %v5769, %v5771
  %v5774 = vmax.f32 %v5770, %v5772
  %5775 = vst.msk [vmem:[#allocation4 + $0x62] sm:$0xff] %vm1089, %v5773
  %5776 = vst.msk [vmem:[#allocation4 + $0x6a] sm:$0x3f] %vm1488, %v5774
  %v5777 = vld [vmem:[#allocation3 + $0xe0] sm:$0xff]
  %v5778 = vld [vmem:[#allocation3 + $0xe8] sm:$0x3f]
  %v5779 = vld [vmem:[#allocation3 + $0xee] sm:$0xff]
  %v5780 = vld [vmem:[#allocation3 + $0xf6] sm:$0x3f]
  %v5781 = vmax.f32 %v5777, %v5779
  %v5782 = vmax.f32 %v5778, %v5780
  %5783 = vst.msk [vmem:[#allocation4 + $0x70] sm:$0xff] %vm1089, %v5781
  %5784 = vst.msk [vmem:[#allocation4 + $0x78] sm:$0x3f] %vm1488, %v5782
  %v5785 = vld [vmem:[#allocation3 + $0xfc] sm:$0xff]
  %v5786 = vld [vmem:[#allocation3 + $0x104] sm:$0x3f]
  %v5787 = vld [vmem:[#allocation3 + $0x10a] sm:$0xff]
  %v5788 = vld [vmem:[#allocation3 + $0x112] sm:$0x3f]
  %v5789 = vmax.f32 %v5785, %v5787
  %v5790 = vmax.f32 %v5786, %v5788
  %5791 = vst.msk [vmem:[#allocation4 + $0x7e] sm:$0xff] %vm1089, %v5789
  %5792 = vst.msk [vmem:[#allocation4 + $0x86] sm:$0x3f] %vm1488, %v5790
  %v5793 = vld [vmem:[#allocation3 + $0x118] sm:$0xff]
  %v5794 = vld [vmem:[#allocation3 + $0x120] sm:$0x3f]
  %v5795 = vld [vmem:[#allocation3 + $0x126] sm:$0xff]
  %v5796 = vld [vmem:[#allocation3 + $0x12e] sm:$0x3f]
  %v5797 = vmax.f32 %v5793, %v5795
  %v5798 = vmax.f32 %v5794, %v5796
  %5799 = vst.msk [vmem:[#allocation4 + $0x8c] sm:$0xff] %vm1089, %v5797
  %5800 = vst.msk [vmem:[#allocation4 + $0x94] sm:$0x3f] %vm1488, %v5798
  %v5801 = vld [vmem:[#allocation3 + $0x134] sm:$0xff]
  %v5802 = vld [vmem:[#allocation3 + $0x13c] sm:$0x3f]
  %v5803 = vld [vmem:[#allocation3 + $0x142] sm:$0xff]
  %v5804 = vld [vmem:[#allocation3 + $0x14a] sm:$0x3f]
  %v5805 = vmax.f32 %v5801, %v5803
  %v5806 = vmax.f32 %v5802, %v5804
  %5807 = vst.msk [vmem:[#allocation4 + $0x9a] sm:$0xff] %vm1089, %v5805
  %5808 = vst.msk [vmem:[#allocation4 + $0xa2] sm:$0x3f] %vm1488, %v5806
  %v5809 = vld [vmem:[#allocation3 + $0x150] sm:$0xff]
  %v5810 = vld [vmem:[#allocation3 + $0x158] sm:$0x3f]
  %v5811 = vld [vmem:[#allocation3 + $0x15e] sm:$0xff]
  %v5812 = vld [vmem:[#allocation3 + $0x166] sm:$0x3f]
  %v5813 = vmax.f32 %v5809, %v5811
  %v5814 = vmax.f32 %v5810, %v5812
  %5815 = vst.msk [vmem:[#allocation4 + $0xa8] sm:$0xff] %vm1089, %v5813
  %5816 = vst.msk [vmem:[#allocation4 + $0xb0] sm:$0x3f] %vm1488, %v5814
  %v5817 = vld [vmem:[#allocation3 + $0x16c] sm:$0xff]
  %v5818 = vld [vmem:[#allocation3 + $0x174] sm:$0x3f]
  %v5819 = vld [vmem:[#allocation3 + $0x17a] sm:$0xff]
  %v5820 = vld [vmem:[#allocation3 + $0x182] sm:$0x3f]
  %v5821 = vmax.f32 %v5817, %v5819
  %v5822 = vmax.f32 %v5818, %v5820
  %5823 = vst.msk [vmem:[#allocation4 + $0xb6] sm:$0xff] %vm1089, %v5821
  %5824 = vst.msk [vmem:[#allocation4 + $0xbe] sm:$0x3f] %vm1488, %v5822
  %v5825 = vld [vmem:[#allocation4] sm:$0xff]
  %v5826 = vld [vmem:[#allocation4 + $0x8] sm:$0xff]
  %v5827 = vld [vmem:[#allocation4 + $0x10] sm:$0xff]
  %v5828 = vld [vmem:[#allocation4 + $0x18] sm:$0xff]
  %v5829 = vld [vmem:[#allocation4 + $0x20] sm:$0xff]
  %v5830 = vld [vmem:[#allocation4 + $0x28] sm:$0xff]
  %v5831 = vld [vmem:[#allocation4 + $0x30] sm:$0xff]
  %v5832 = vld [vmem:[#allocation4 + $0x38] sm:$0xff]
  %v5833 = vld [vmem:[#allocation4 + $0x40] sm:$0xff]
  %v5834 = vld [vmem:[#allocation4 + $0x48] sm:$0xff]
  %v5835 = vld [vmem:[#allocation4 + $0x50] sm:$0xff]
  %v5836 = vld [vmem:[#allocation4 + $0x58] sm:$0xff]
  %v5837 = vld [vmem:[#allocation4 + $0x60] sm:$0xff]
  %v5838 = vld [vmem:[#allocation4 + $0x68] sm:$0xff]
  %v5839 = vld [vmem:[#allocation4 + $0x70] sm:$0xff]
  %v5840 = vld [vmem:[#allocation4 + $0x78] sm:$0xff]
  %v5841 = vld [vmem:[#allocation4 + $0x80] sm:$0xff]
  %v5842 = vld [vmem:[#allocation4 + $0x88] sm:$0xff]
  %v5843 = vld [vmem:[#allocation4 + $0x90] sm:$0xff]
  %v5844 = vld [vmem:[#allocation4 + $0x98] sm:$0xff]
  %v5845 = vld [vmem:[#allocation4 + $0xa0] sm:$0xff]
  %v5846 = vld [vmem:[%s3] sm:$0xff]
  %v5847 = vld [vmem:[%s3 + $0x8] sm:$0xff]
  %v5848 = vld [vmem:[#allocation4 + $0x1] sm:$0xff]
  %v5849 = vld [vmem:[#allocation4 + $0x9] sm:$0xff]
  %v5850 = vld [vmem:[#allocation4 + $0x11] sm:$0xff]
  %v5851 = vld [vmem:[#allocation4 + $0x19] sm:$0xff]
  %v5852 = vld [vmem:[#allocation4 + $0x21] sm:$0xff]
  %v5853 = vld [vmem:[#allocation4 + $0x29] sm:$0xff]
  %v5854 = vld [vmem:[#allocation4 + $0x31] sm:$0xff]
  %v5855 = vld [vmem:[#allocation4 + $0x39] sm:$0xff]
  %v5856 = vld [vmem:[#allocation4 + $0x41] sm:$0xff]
  %v5857 = vld [vmem:[#allocation4 + $0x49] sm:$0xff]
  %v5858 = vld [vmem:[#allocation4 + $0x51] sm:$0xff]
  %v5859 = vld [vmem:[#allocation4 + $0x59] sm:$0xff]
  %v5860 = vld [vmem:[#allocation4 + $0x61] sm:$0xff]
  %v5861 = vld [vmem:[#allocation4 + $0x69] sm:$0xff]
  %v5862 = vld [vmem:[#allocation4 + $0x71] sm:$0xff]
  %v5863 = vld [vmem:[#allocation4 + $0x79] sm:$0xff]
  %v5864 = vld [vmem:[#allocation4 + $0x81] sm:$0xff]
  %v5865 = vld [vmem:[#allocation4 + $0x89] sm:$0xff]
  %v5866 = vld [vmem:[#allocation4 + $0x91] sm:$0xff]
  %v5867 = vld [vmem:[#allocation4 + $0x99] sm:$0xff]
  %v5868 = vld [vmem:[#allocation4 + $0xa1] sm:$0xff]
  %v5869 = vld [vmem:[%s3 + $0x10] sm:$0xff]
  %v5870 = vld [vmem:[%s3 + $0x18] sm:$0xff]
  %v5872 = vsel %vm1089, %v5848, 0
  %v5875 = vsel %vm1089, %v5849, 0
  %v5878 = vsel %vm1089, %v5850, 0
  %v5881 = vsel %vm1089, %v5851, 0
  %v5884 = vsel %vm1089, %v5852, 0
  %v5887 = vsel %vm1089, %v5853, 0
  %v5890 = vsel %vm1089, %v5854, 0
  %v5893 = vsel %vm1089, %v5855, 0
  %v5896 = vsel %vm1089, %v5856, 0
  %v5899 = vsel %vm1089, %v5857, 0
  %v5902 = vsel %vm1089, %v5858, 0
  %v5905 = vsel %vm1089, %v5859, 0
  %v5908 = vsel %vm1089, %v5860, 0
  %v5911 = vsel %vm1089, %v5861, 0
  %v5914 = vsel %vm1089, %v5862, 0
  %v5917 = vsel %vm1089, %v5863, 0
  %v5920 = vsel %vm1089, %v5864, 0
  %v5923 = vsel %vm1089, %v5865, 0
  %v5926 = vsel %vm1089, %v5866, 0
  %v5929 = vsel %vm1089, %v5867, 0
  %v5932 = vsel %vm1089, %v5868, 0
  %5934 = vmatprep.subr.mxu0 0.0
  %5935 = vmatpush1.msra.mxu0 %v5869
  %5936 = vmatprep.subr.mxu0 0.0
  %5937 = vmatpush1.msra.mxu0 %v5870
  %5938 = vmatprep.subr.mxu0 0.0
  %5939 = vmatpush1.msra.mxu0 0.0
  %5940 = vmatprep.subr.mxu0 0.0
  %5941 = vmatpush1.msra.mxu0 0.0
  %5942 = vmatprep.subr.mxu0 0.0
  %5943 = vmatpush1.msra.mxu0 0.0
  %5944 = vmatprep.subr.mxu0 0.0
  %5945 = vmatpush1.msra.mxu0 0.0
  %5946 = vmatprep.subr.mxu0 0.0
  %5947 = vmatpush1.msra.mxu0 0.0
  %5948 = vmatprep.subr.mxu0 0.0
  %5949 = vmatpush1.msra.mxu0 0.0
  %5950 = vmatprep.subr.mxu0 0.0
  %5951 = vmatpush1.msra.mxu0 0.0
  %5952 = vmatprep.subr.mxu0 0.0
  %5953 = vmatpush1.msra.mxu0 0.0
  %5954 = vmatprep.subr.mxu0 0.0
  %5955 = vmatpush1.msra.mxu0 0.0
  %5956 = vmatprep.subr.mxu0 0.0
  %5957 = vmatpush1.msra.mxu0 0.0
  %5958 = vmatprep.subr.mxu0 0.0
  %5959 = vmatpush1.msra.mxu0 0.0
  %5960 = vmatprep.subr.mxu0 0.0
  %5961 = vmatpush1.msra.mxu0 0.0
  %5962 = vmatprep.subr.mxu0 0.0
  %5963 = vmatpush1.msra.mxu0 0.0
  %5964 = vmatprep.subr.mxu0 0.0
  %5965 = vmatpush1.msra.mxu0 0.0
  %5966 = vmatprep.subr.mxu0 0.0
  %5967 = vmatpush1.msra.mxu0 0.0
  %5968 = vmatprep.subr.mxu0 0.0
  %5969 = vmatpush1.msra.mxu0 0.0
  %5970 = vmatprep.subr.mxu0 0.0
  %5971 = vmatpush1.msra.mxu0 0.0
  %5972 = vmatprep.subr.mxu0 0.0
  %5973 = vmatpush1.msra.mxu0 0.0
  %5974 = vmatprep.subr.mxu0 0.0
  %5975 = vmatpush1.msra.mxu0 0.0
  %5976 = vmatprep.subr.mxu0 0.0
  %5977 = vmatpush1.msra.mxu0 0.0
  %5978 = vmatprep.subr.mxu0 0.0
  %5979 = vmatpush1.msra.mxu0 0.0
  %5980 = vmatprep.subr.mxu0 0.0
  %5981 = vmatpush1.msra.mxu0 0.0
  %5982 = vmatprep.subr.mxu0 0.0
  %5983 = vmatpush1.msra.mxu0 0.0
  %5984 = vmatprep.subr.mxu0 0.0
  %5985 = vmatpush1.msra.mxu0 0.0
  %5986 = vmatprep.subr.mxu0 0.0
  %5987 = vmatpush1.msra.mxu0 0.0
  %5988 = vmatprep.subr.mxu0 0.0
  %5989 = vmatpush1.msra.mxu0 0.0
  %5990 = vmatprep.subr.mxu0 0.0
  %5991 = vmatpush1.msra.mxu0 0.0
  %5992 = vmatprep.subr.mxu0 0.0
  %5993 = vmatpush1.msra.mxu0 0.0
  %5994 = vmatprep.subr.mxu0 0.0
  %5995 = vmatpush1.msra.mxu0 0.0
  %5996 = vmatprep.subr.mxu0 0.0
  %5997 = vmatpush1.msra.mxu0 0.0
  %5998 = vmatprep.mubr.f32.mxu0 0.0
  %5999 = vmatmul.mubr.f32.gmra.mrb[0].mxu0 %v5872
  %v6000 = vpop.f32.mrb[0].mxu0
  %v6001 = vadd.f32 0.0, %v6000
  %v6002 = vpop.f32.mrb[0].mxu0
  %6003 = vmatprep.mubr.f32.mxu0 0.0
  %6004 = vmatmul.mubr.f32.gmra.mrb[0].mxu0 %v5875
  %v6005 = vpop.f32.mrb[0].mxu0
  %v6006 = vadd.f32 0.0, %v6005
  %v6007 = vpop.f32.mrb[0].mxu0
  %6008 = vmatprep.mubr.f32.mxu0 0.0
  %6009 = vmatmul.mubr.f32.gmra.mrb[0].mxu0 %v5878
  %v6010 = vpop.f32.mrb[0].mxu0
  %v6011 = vadd.f32 0.0, %v6010
  %v6012 = vpop.f32.mrb[0].mxu0
  %6013 = vmatprep.mubr.f32.mxu0 0.0
  %6014 = vmatmul.mubr.f32.gmra.mrb[0].mxu0 %v5881
  %v6015 = vpop.f32.mrb[0].mxu0
  %v6016 = vadd.f32 0.0, %v6015
  %v6017 = vpop.f32.mrb[0].mxu0
  %6018 = vmatprep.mubr.f32.mxu0 0.0
  %6019 = vmatmul.mubr.f32.gmra.mrb[0].mxu0 %v5884
  %v6020 = vpop.f32.mrb[0].mxu0
  %v6021 = vadd.f32 0.0, %v6020
  %v6022 = vpop.f32.mrb[0].mxu0
  %6023 = vmatprep.mubr.f32.mxu0 0.0
  %6024 = vmatmul.mubr.f32.gmra.mrb[0].mxu0 %v5887
  %v6025 = vpop.f32.mrb[0].mxu0
  %v6026 = vadd.f32 0.0, %v6025
  %v6027 = vpop.f32.mrb[0].mxu0
  %6028 = vmatprep.mubr.f32.mxu0 0.0
  %6029 = vmatmul.mubr.f32.gmra.mrb[0].mxu0 %v5890
  %v6030 = vpop.f32.mrb[0].mxu0
  %v6031 = vadd.f32 0.0, %v6030
  %v6032 = vpop.f32.mrb[0].mxu0
  %6033 = vmatprep.mubr.f32.mxu0 0.0
  %6034 = vmatmul.mubr.f32.gmra.mrb[0].mxu0 %v5893
  %v6035 = vpop.f32.mrb[0].mxu0
  %v6036 = vadd.f32 0.0, %v6035
  %v6037 = vpop.f32.mrb[0].mxu0
  %6038 = vmatprep.mubr.f32.mxu0 0.0
  %6039 = vmatmul.mubr.f32.gmra.mrb[0].mxu0 %v5896
  %v6040 = vpop.f32.mrb[0].mxu0
  %v6041 = vadd.f32 0.0, %v6040
  %v6042 = vpop.f32.mrb[0].mxu0
  %6043 = vmatprep.mubr.f32.mxu0 0.0
  %6044 = vmatmul.mubr.f32.gmra.mrb[0].mxu0 %v5899
  %v6045 = vpop.f32.mrb[0].mxu0
  %v6046 = vadd.f32 0.0, %v6045
  %v6047 = vpop.f32.mrb[0].mxu0
  %6048 = vmatprep.mubr.f32.mxu0 0.0
  %6049 = vmatmul.mubr.f32.gmra.mrb[0].mxu0 %v5902
  %v6050 = vpop.f32.mrb[0].mxu0
  %v6051 = vadd.f32 0.0, %v6050
  %v6052 = vpop.f32.mrb[0].mxu0
  %6053 = vmatprep.mubr.f32.mxu0 0.0
  %6054 = vmatmul.mubr.f32.gmra.mrb[0].mxu0 %v5905
  %v6055 = vpop.f32.mrb[0].mxu0
  %v6056 = vadd.f32 0.0, %v6055
  %v6057 = vpop.f32.mrb[0].mxu0
  %6058 = vmatprep.mubr.f32.mxu0 0.0
  %6059 = vmatmul.mubr.f32.gmra.mrb[0].mxu0 %v5908
  %v6060 = vpop.f32.mrb[0].mxu0
  %v6061 = vadd.f32 0.0, %v6060
  %v6062 = vpop.f32.mrb[0].mxu0
  %6063 = vmatprep.mubr.f32.mxu0 0.0
  %6064 = vmatmul.mubr.f32.gmra.mrb[0].mxu0 %v5911
  %v6065 = vpop.f32.mrb[0].mxu0
  %v6066 = vadd.f32 0.0, %v6065
  %v6067 = vpop.f32.mrb[0].mxu0
  %6068 = vmatprep.mubr.f32.mxu0 0.0
  %6069 = vmatmul.mubr.f32.gmra.mrb[0].mxu0 %v5914
  %v6070 = vpop.f32.mrb[0].mxu0
  %v6071 = vadd.f32 0.0, %v6070
  %v6072 = vpop.f32.mrb[0].mxu0
  %6073 = vmatprep.mubr.f32.mxu0 0.0
  %6074 = vmatmul.mubr.f32.gmra.mrb[0].mxu0 %v5917
  %v6075 = vpop.f32.mrb[0].mxu0
  %v6076 = vadd.f32 0.0, %v6075
  %v6077 = vpop.f32.mrb[0].mxu0
  %6078 = vmatprep.mubr.f32.mxu0 0.0
  %6079 = vmatmul.mubr.f32.gmra.mrb[0].mxu0 %v5920
  %v6080 = vpop.f32.mrb[0].mxu0
  %v6081 = vadd.f32 0.0, %v6080
  %v6082 = vpop.f32.mrb[0].mxu0
  %6083 = vmatprep.mubr.f32.mxu0 0.0
  %6084 = vmatmul.mubr.f32.gmra.mrb[0].mxu0 %v5923
  %v6085 = vpop.f32.mrb[0].mxu0
  %v6086 = vadd.f32 0.0, %v6085
  %v6087 = vpop.f32.mrb[0].mxu0
  %6088 = vmatprep.mubr.f32.mxu0 0.0
  %6089 = vmatmul.mubr.f32.gmra.mrb[0].mxu0 %v5926
  %v6090 = vpop.f32.mrb[0].mxu0
  %v6091 = vadd.f32 0.0, %v6090
  %v6092 = vpop.f32.mrb[0].mxu0
  %6093 = vmatprep.mubr.f32.mxu0 0.0
  %6094 = vmatmul.mubr.f32.gmra.mrb[0].mxu0 %v5929
  %v6095 = vpop.f32.mrb[0].mxu0
  %v6096 = vadd.f32 0.0, %v6095
  %v6097 = vpop.f32.mrb[0].mxu0
  %6098 = vmatprep.mubr.f32.mxu0 0.0
  %6099 = vmatmul.mubr.f32.gmra.mrb[0].mxu0 %v5932
  %v6100 = vpop.f32.mrb[0].mxu0
  %v6101 = vadd.f32 0.0, %v6100
  %v6102 = vpop.f32.mrb[0].mxu0
  %6103 = vdwg.mxu0
  %v6105 = vsel %vm1089, %v5825, 0
  %v6108 = vsel %vm1089, %v5826, 0
  %v6111 = vsel %vm1089, %v5827, 0
  %v6114 = vsel %vm1089, %v5828, 0
  %v6117 = vsel %vm1089, %v5829, 0
  %v6120 = vsel %vm1089, %v5830, 0
  %v6123 = vsel %vm1089, %v5831, 0
  %v6126 = vsel %vm1089, %v5832, 0
  %v6129 = vsel %vm1089, %v5833, 0
  %v6132 = vsel %vm1089, %v5834, 0
  %v6135 = vsel %vm1089, %v5835, 0
  %v6138 = vsel %vm1089, %v5836, 0
  %v6141 = vsel %vm1089, %v5837, 0
  %v6144 = vsel %vm1089, %v5838, 0
  %v6147 = vsel %vm1089, %v5839, 0
  %v6150 = vsel %vm1089, %v5840, 0
  %v6153 = vsel %vm1089, %v5841, 0
  %v6156 = vsel %vm1089, %v5842, 0
  %v6159 = vsel %vm1089, %v5843, 0
  %v6162 = vsel %vm1089, %v5844, 0
  %v6165 = vsel %vm1089, %v5845, 0
  %6167 = vmatprep.subr.mxu0 0.0
  %6168 = vmatpush1.msra.mxu0 %v5846
  %6169 = vmatprep.subr.mxu0 0.0
  %6170 = vmatpush1.msra.mxu0 %v5847
  %6171 = vmatprep.subr.mxu0 0.0
  %6172 = vmatpush1.msra.mxu0 0.0
  %6173 = vmatprep.subr.mxu0 0.0
  %6174 = vmatpush1.msra.mxu0 0.0
  %6175 = vmatprep.subr.mxu0 0.0
  %6176 = vmatpush1.msra.mxu0 0.0
  %6177 = vmatprep.subr.mxu0 0.0
  %6178 = vmatpush1.msra.mxu0 0.0
  %6179 = vmatprep.subr.mxu0 0.0
  %6180 = vmatpush1.msra.mxu0 0.0
  %6181 = vmatprep.subr.mxu0 0.0
  %6182 = vmatpush1.msra.mxu0 0.0
  %6183 = vmatprep.subr.mxu0 0.0
  %6184 = vmatpush1.msra.mxu0 0.0
  %6185 = vmatprep.subr.mxu0 0.0
  %6186 = vmatpush1.msra.mxu0 0.0
  %6187 = vmatprep.subr.mxu0 0.0
  %6188 = vmatpush1.msra.mxu0 0.0
  %6189 = vmatprep.subr.mxu0 0.0
  %6190 = vmatpush1.msra.mxu0 0.0
  %6191 = vmatprep.subr.mxu0 0.0
  %6192 = vmatpush1.msra.mxu0 0.0
  %6193 = vmatprep.subr.mxu0 0.0
  %6194 = vmatpush1.msra.mxu0 0.0
  %6195 = vmatprep.subr.mxu0 0.0
  %6196 = vmatpush1.msra.mxu0 0.0
  %6197 = vmatprep.subr.mxu0 0.0
  %6198 = vmatpush1.msra.mxu0 0.0
  %6199 = vmatprep.subr.mxu0 0.0
  %6200 = vmatpush1.msra.mxu0 0.0
  %6201 = vmatprep.subr.mxu0 0.0
  %6202 = vmatpush1.msra.mxu0 0.0
  %6203 = vmatprep.subr.mxu0 0.0
  %6204 = vmatpush1.msra.mxu0 0.0
  %6205 = vmatprep.subr.mxu0 0.0
  %6206 = vmatpush1.msra.mxu0 0.0
  %6207 = vmatprep.subr.mxu0 0.0
  %6208 = vmatpush1.msra.mxu0 0.0
  %6209 = vmatprep.subr.mxu0 0.0
  %6210 = vmatpush1.msra.mxu0 0.0
  %6211 = vmatprep.subr.mxu0 0.0
  %6212 = vmatpush1.msra.mxu0 0.0
  %6213 = vmatprep.subr.mxu0 0.0
  %6214 = vmatpush1.msra.mxu0 0.0
  %6215 = vmatprep.subr.mxu0 0.0
  %6216 = vmatpush1.msra.mxu0 0.0
  %6217 = vmatprep.subr.mxu0 0.0
  %6218 = vmatpush1.msra.mxu0 0.0
  %6219 = vmatprep.subr.mxu0 0.0
  %6220 = vmatpush1.msra.mxu0 0.0
  %6221 = vmatprep.subr.mxu0 0.0
  %6222 = vmatpush1.msra.mxu0 0.0
  %6223 = vmatprep.subr.mxu0 0.0
  %6224 = vmatpush1.msra.mxu0 0.0
  %6225 = vmatprep.subr.mxu0 0.0
  %6226 = vmatpush1.msra.mxu0 0.0
  %6227 = vmatprep.subr.mxu0 0.0
  %6228 = vmatpush1.msra.mxu0 0.0
  %6229 = vmatprep.subr.mxu0 0.0
  %6230 = vmatpush1.msra.mxu0 0.0
  %6231 = vmatprep.mubr.f32.mxu0 0.0
  %6232 = vmatmul.mubr.f32.gmra.mrb[0].mxu0 %v6105
  %v6233 = vpop.f32.mrb[0].mxu0
  %v6234 = vadd.f32 %v6001, %v6233
  %v6235 = vpop.f32.mrb[0].mxu0
  %6236 = vmatprep.mubr.f32.mxu0 0.0
  %6237 = vmatmul.mubr.f32.gmra.mrb[0].mxu0 %v6108
  %v6238 = vpop.f32.mrb[0].mxu0
  %v6239 = vadd.f32 %v6006, %v6238
  %v6240 = vpop.f32.mrb[0].mxu0
  %6241 = vmatprep.mubr.f32.mxu0 0.0
  %6242 = vmatmul.mubr.f32.gmra.mrb[0].mxu0 %v6111
  %v6243 = vpop.f32.mrb[0].mxu0
  %v6244 = vadd.f32 %v6011, %v6243
  %v6245 = vpop.f32.mrb[0].mxu0
  %6246 = vmatprep.mubr.f32.mxu0 0.0
  %6247 = vmatmul.mubr.f32.gmra.mrb[0].mxu0 %v6114
  %v6248 = vpop.f32.mrb[0].mxu0
  %v6249 = vadd.f32 %v6016, %v6248
  %v6250 = vpop.f32.mrb[0].mxu0
  %6251 = vmatprep.mubr.f32.mxu0 0.0
  %6252 = vmatmul.mubr.f32.gmra.mrb[0].mxu0 %v6117
  %v6253 = vpop.f32.mrb[0].mxu0
  %v6254 = vadd.f32 %v6021, %v6253
  %v6255 = vpop.f32.mrb[0].mxu0
  %6256 = vmatprep.mubr.f32.mxu0 0.0
  %6257 = vmatmul.mubr.f32.gmra.mrb[0].mxu0 %v6120
  %v6258 = vpop.f32.mrb[0].mxu0
  %v6259 = vadd.f32 %v6026, %v6258
  %v6260 = vpop.f32.mrb[0].mxu0
  %6261 = vmatprep.mubr.f32.mxu0 0.0
  %6262 = vmatmul.mubr.f32.gmra.mrb[0].mxu0 %v6123
  %v6263 = vpop.f32.mrb[0].mxu0
  %v6264 = vadd.f32 %v6031, %v6263
  %v6265 = vpop.f32.mrb[0].mxu0
  %6266 = vmatprep.mubr.f32.mxu0 0.0
  %6267 = vmatmul.mubr.f32.gmra.mrb[0].mxu0 %v6126
  %v6268 = vpop.f32.mrb[0].mxu0
  %v6269 = vadd.f32 %v6036, %v6268
  %v6270 = vpop.f32.mrb[0].mxu0
  %6271 = vmatprep.mubr.f32.mxu0 0.0
  %6272 = vmatmul.mubr.f32.gmra.mrb[0].mxu0 %v6129
  %v6273 = vpop.f32.mrb[0].mxu0
  %v6274 = vadd.f32 %v6041, %v6273
  %v6275 = vpop.f32.mrb[0].mxu0
  %6276 = vmatprep.mubr.f32.mxu0 0.0
  %6277 = vmatmul.mubr.f32.gmra.mrb[0].mxu0 %v6132
  %v6278 = vpop.f32.mrb[0].mxu0
  %v6279 = vadd.f32 %v6046, %v6278
  %v6280 = vpop.f32.mrb[0].mxu0
  %6281 = vmatprep.mubr.f32.mxu0 0.0
  %6282 = vmatmul.mubr.f32.gmra.mrb[0].mxu0 %v6135
  %v6283 = vpop.f32.mrb[0].mxu0
  %v6284 = vadd.f32 %v6051, %v6283
  %v6285 = vpop.f32.mrb[0].mxu0
  %6286 = vmatprep.mubr.f32.mxu0 0.0
  %6287 = vmatmul.mubr.f32.gmra.mrb[0].mxu0 %v6138
  %v6288 = vpop.f32.mrb[0].mxu0
  %v6289 = vadd.f32 %v6056, %v6288
  %v6290 = vpop.f32.mrb[0].mxu0
  %6291 = vmatprep.mubr.f32.mxu0 0.0
  %6292 = vmatmul.mubr.f32.gmra.mrb[0].mxu0 %v6141
  %v6293 = vpop.f32.mrb[0].mxu0
  %v6294 = vadd.f32 %v6061, %v6293
  %v6295 = vpop.f32.mrb[0].mxu0
  %6296 = vmatprep.mubr.f32.mxu0 0.0
  %6297 = vmatmul.mubr.f32.gmra.mrb[0].mxu0 %v6144
  %v6298 = vpop.f32.mrb[0].mxu0
  %v6299 = vadd.f32 %v6066, %v6298
  %v6300 = vpop.f32.mrb[0].mxu0
  %6301 = vmatprep.mubr.f32.mxu0 0.0
  %6302 = vmatmul.mubr.f32.gmra.mrb[0].mxu0 %v6147
  %v6303 = vpop.f32.mrb[0].mxu0
  %v6304 = vadd.f32 %v6071, %v6303
  %v6305 = vpop.f32.mrb[0].mxu0
  %6306 = vmatprep.mubr.f32.mxu0 0.0
  %6307 = vmatmul.mubr.f32.gmra.mrb[0].mxu0 %v6150
  %v6308 = vpop.f32.mrb[0].mxu0
  %v6309 = vadd.f32 %v6076, %v6308
  %v6310 = vpop.f32.mrb[0].mxu0
  %6311 = vmatprep.mubr.f32.mxu0 0.0
  %6312 = vmatmul.mubr.f32.gmra.mrb[0].mxu0 %v6153
  %v6313 = vpop.f32.mrb[0].mxu0
  %v6314 = vadd.f32 %v6081, %v6313
  %v6315 = vpop.f32.mrb[0].mxu0
  %6316 = vmatprep.mubr.f32.mxu0 0.0
  %6317 = vmatmul.mubr.f32.gmra.mrb[0].mxu0 %v6156
  %v6318 = vpop.f32.mrb[0].mxu0
  %v6319 = vadd.f32 %v6086, %v6318
  %v6320 = vpop.f32.mrb[0].mxu0
  %6321 = vmatprep.mubr.f32.mxu0 0.0
  %6322 = vmatmul.mubr.f32.gmra.mrb[0].mxu0 %v6159
  %v6323 = vpop.f32.mrb[0].mxu0
  %v6324 = vadd.f32 %v6091, %v6323
  %v6325 = vpop.f32.mrb[0].mxu0
  %6326 = vmatprep.mubr.f32.mxu0 0.0
  %6327 = vmatmul.mubr.f32.gmra.mrb[0].mxu0 %v6162
  %v6328 = vpop.f32.mrb[0].mxu0
  %v6329 = vadd.f32 %v6096, %v6328
  %v6330 = vpop.f32.mrb[0].mxu0
  %6331 = vmatprep.mubr.f32.mxu0 0.0
  %6332 = vmatmul.mubr.f32.gmra.mrb[0].mxu0 %v6165
  %v6333 = vpop.f32.mrb[0].mxu0
  %v6334 = vadd.f32 %v6101, %v6333
  %v6335 = vpop.f32.mrb[0].mxu0
  %6336 = vdwg.mxu0
  %v6337 = vld [vmem:[#allocation4 + $0x2] sm:$0xff]
  %v6338 = vld [vmem:[#allocation4 + $0xa] sm:$0xff]
  %v6339 = vld [vmem:[#allocation4 + $0x12] sm:$0xff]
  %v6340 = vld [vmem:[#allocation4 + $0x1a] sm:$0xff]
  %v6341 = vld [vmem:[#allocation4 + $0x22] sm:$0xff]
  %v6342 = vld [vmem:[#allocation4 + $0x2a] sm:$0xff]
  %v6343 = vld [vmem:[#allocation4 + $0x32] sm:$0xff]
  %v6344 = vld [vmem:[#allocation4 + $0x3a] sm:$0xff]
  %v6345 = vld [vmem:[#allocation4 + $0x42] sm:$0xff]
  %v6346 = vld [vmem:[#allocation4 + $0x4a] sm:$0xff]
  %v6347 = vld [vmem:[#allocation4 + $0x52] sm:$0xff]
  %v6348 = vld [vmem:[#allocation4 + $0x5a] sm:$0xff]
  %v6349 = vld [vmem:[#allocation4 + $0x62] sm:$0xff]
  %v6350 = vld [vmem:[#allocation4 + $0x6a] sm:$0xff]
  %v6351 = vld [vmem:[#allocation4 + $0x72] sm:$0xff]
  %v6352 = vld [vmem:[#allocation4 + $0x7a] sm:$0xff]
  %v6353 = vld [vmem:[#allocation4 + $0x82] sm:$0xff]
  %v6354 = vld [vmem:[#allocation4 + $0x8a] sm:$0xff]
  %v6355 = vld [vmem:[#allocation4 + $0x92] sm:$0xff]
  %v6356 = vld [vmem:[#allocation4 + $0x9a] sm:$0xff]
  %v6357 = vld [vmem:[#allocation4 + $0xa2] sm:$0xff]
  %v6358 = vld [vmem:[%s3 + $0x20] sm:$0xff]
  %v6359 = vld [vmem:[%s3 + $0x28] sm:$0xff]
  %v6361 = vsel %vm1089, %v6337, 0
  %v6364 = vsel %vm1089, %v6338, 0
  %v6367 = vsel %vm1089, %v6339, 0
  %v6370 = vsel %vm1089, %v6340, 0
  %v6373 = vsel %vm1089, %v6341, 0
  %v6376 = vsel %vm1089, %v6342, 0
  %v6379 = vsel %vm1089, %v6343, 0
  %v6382 = vsel %vm1089, %v6344, 0
  %v6385 = vsel %vm1089, %v6345, 0
  %v6388 = vsel %vm1089, %v6346, 0
  %v6391 = vsel %vm1089, %v6347, 0
  %v6394 = vsel %vm1089, %v6348, 0
  %v6397 = vsel %vm1089, %v6349, 0
  %v6400 = vsel %vm1089, %v6350, 0
  %v6403 = vsel %vm1089, %v6351, 0
  %v6406 = vsel %vm1089, %v6352, 0
  %v6409 = vsel %vm1089, %v6353, 0
  %v6412 = vsel %vm1089, %v6354, 0
  %v6415 = vsel %vm1089, %v6355, 0
  %v6418 = vsel %vm1089, %v6356, 0
  %v6421 = vsel %vm1089, %v6357, 0
  %6423 = vmatprep.subr.mxu0 0.0
  %6424 = vmatpush1.msra.mxu0 %v6358
  %6425 = vmatprep.subr.mxu0 0.0
  %6426 = vmatpush1.msra.mxu0 %v6359
  %6427 = vmatprep.subr.mxu0 0.0
  %6428 = vmatpush1.msra.mxu0 0.0
  %6429 = vmatprep.subr.mxu0 0.0
  %6430 = vmatpush1.msra.mxu0 0.0
  %6431 = vmatprep.subr.mxu0 0.0
  %6432 = vmatpush1.msra.mxu0 0.0
  %6433 = vmatprep.subr.mxu0 0.0
  %6434 = vmatpush1.msra.mxu0 0.0
  %6435 = vmatprep.subr.mxu0 0.0
  %6436 = vmatpush1.msra.mxu0 0.0
  %6437 = vmatprep.subr.mxu0 0.0
  %6438 = vmatpush1.msra.mxu0 0.0
  %6439 = vmatprep.subr.mxu0 0.0
  %6440 = vmatpush1.msra.mxu0 0.0
  %6441 = vmatprep.subr.mxu0 0.0
  %6442 = vmatpush1.msra.mxu0 0.0
  %6443 = vmatprep.subr.mxu0 0.0
  %6444 = vmatpush1.msra.mxu0 0.0
  %6445 = vmatprep.subr.mxu0 0.0
  %6446 = vmatpush1.msra.mxu0 0.0
  %6447 = vmatprep.subr.mxu0 0.0
  %6448 = vmatpush1.msra.mxu0 0.0
  %6449 = vmatprep.subr.mxu0 0.0
  %6450 = vmatpush1.msra.mxu0 0.0
  %6451 = vmatprep.subr.mxu0 0.0
  %6452 = vmatpush1.msra.mxu0 0.0
  %6453 = vmatprep.subr.mxu0 0.0
  %6454 = vmatpush1.msra.mxu0 0.0
  %6455 = vmatprep.subr.mxu0 0.0
  %6456 = vmatpush1.msra.mxu0 0.0
  %6457 = vmatprep.subr.mxu0 0.0
  %6458 = vmatpush1.msra.mxu0 0.0
  %6459 = vmatprep.subr.mxu0 0.0
  %6460 = vmatpush1.msra.mxu0 0.0
  %6461 = vmatprep.subr.mxu0 0.0
  %6462 = vmatpush1.msra.mxu0 0.0
  %6463 = vmatprep.subr.mxu0 0.0
  %6464 = vmatpush1.msra.mxu0 0.0
  %6465 = vmatprep.subr.mxu0 0.0
  %6466 = vmatpush1.msra.mxu0 0.0
  %6467 = vmatprep.subr.mxu0 0.0
  %6468 = vmatpush1.msra.mxu0 0.0
  %6469 = vmatprep.subr.mxu0 0.0
  %6470 = vmatpush1.msra.mxu0 0.0
  %6471 = vmatprep.subr.mxu0 0.0
  %6472 = vmatpush1.msra.mxu0 0.0
  %6473 = vmatprep.subr.mxu0 0.0
  %6474 = vmatpush1.msra.mxu0 0.0
  %6475 = vmatprep.subr.mxu0 0.0
  %6476 = vmatpush1.msra.mxu0 0.0
  %6477 = vmatprep.subr.mxu0 0.0
  %6478 = vmatpush1.msra.mxu0 0.0
  %6479 = vmatprep.subr.mxu0 0.0
  %6480 = vmatpush1.msra.mxu0 0.0
  %6481 = vmatprep.subr.mxu0 0.0
  %6482 = vmatpush1.msra.mxu0 0.0
  %6483 = vmatprep.subr.mxu0 0.0
  %6484 = vmatpush1.msra.mxu0 0.0
  %6485 = vmatprep.subr.mxu0 0.0
  %6486 = vmatpush1.msra.mxu0 0.0
  %6487 = vmatprep.mubr.f32.mxu0 0.0
  %6488 = vmatmul.mubr.f32.gmra.mrb[0].mxu0 %v6361
  %v6489 = vpop.f32.mrb[0].mxu0
  %v6490 = vadd.f32 0.0, %v6489
  %v6491 = vpop.f32.mrb[0].mxu0
  %6492 = vmatprep.mubr.f32.mxu0 0.0
  %6493 = vmatmul.mubr.f32.gmra.mrb[0].mxu0 %v6364
  %v6494 = vpop.f32.mrb[0].mxu0
  %v6495 = vadd.f32 0.0, %v6494
  %v6496 = vpop.f32.mrb[0].mxu0
  %6497 = vmatprep.mubr.f32.mxu0 0.0
  %6498 = vmatmul.mubr.f32.gmra.mrb[0].mxu0 %v6367
  %v6499 = vpop.f32.mrb[0].mxu0
  %v6500 = vadd.f32 0.0, %v6499
  %v6501 = vpop.f32.mrb[0].mxu0
  %6502 = vmatprep.mubr.f32.mxu0 0.0
  %6503 = vmatmul.mubr.f32.gmra.mrb[0].mxu0 %v6370
  %v6504 = vpop.f32.mrb[0].mxu0
  %v6505 = vadd.f32 0.0, %v6504
  %v6506 = vpop.f32.mrb[0].mxu0
  %6507 = vmatprep.mubr.f32.mxu0 0.0
  %6508 = vmatmul.mubr.f32.gmra.mrb[0].mxu0 %v6373
  %v6509 = vpop.f32.mrb[0].mxu0
  %v6510 = vadd.f32 0.0, %v6509
  %v6511 = vpop.f32.mrb[0].mxu0
  %6512 = vmatprep.mubr.f32.mxu0 0.0
  %6513 = vmatmul.mubr.f32.gmra.mrb[0].mxu0 %v6376
  %v6514 = vpop.f32.mrb[0].mxu0
  %v6515 = vadd.f32 0.0, %v6514
  %v6516 = vpop.f32.mrb[0].mxu0
  %6517 = vmatprep.mubr.f32.mxu0 0.0
  %6518 = vmatmul.mubr.f32.gmra.mrb[0].mxu0 %v6379
  %v6519 = vpop.f32.mrb[0].mxu0
  %v6520 = vadd.f32 0.0, %v6519
  %v6521 = vpop.f32.mrb[0].mxu0
  %6522 = vmatprep.mubr.f32.mxu0 0.0
  %6523 = vmatmul.mubr.f32.gmra.mrb[0].mxu0 %v6382
  %v6524 = vpop.f32.mrb[0].mxu0
  %v6525 = vadd.f32 0.0, %v6524
  %v6526 = vpop.f32.mrb[0].mxu0
  %6527 = vmatprep.mubr.f32.mxu0 0.0
  %6528 = vmatmul.mubr.f32.gmra.mrb[0].mxu0 %v6385
  %v6529 = vpop.f32.mrb[0].mxu0
  %v6530 = vadd.f32 0.0, %v6529
  %v6531 = vpop.f32.mrb[0].mxu0
  %6532 = vmatprep.mubr.f32.mxu0 0.0
  %6533 = vmatmul.mubr.f32.gmra.mrb[0].mxu0 %v6388
  %v6534 = vpop.f32.mrb[0].mxu0
  %v6535 = vadd.f32 0.0, %v6534
  %v6536 = vpop.f32.mrb[0].mxu0
  %6537 = vmatprep.mubr.f32.mxu0 0.0
  %6538 = vmatmul.mubr.f32.gmra.mrb[0].mxu0 %v6391
  %v6539 = vpop.f32.mrb[0].mxu0
  %v6540 = vadd.f32 0.0, %v6539
  %v6541 = vpop.f32.mrb[0].mxu0
  %6542 = vmatprep.mubr.f32.mxu0 0.0
  %6543 = vmatmul.mubr.f32.gmra.mrb[0].mxu0 %v6394
  %v6544 = vpop.f32.mrb[0].mxu0
  %v6545 = vadd.f32 0.0, %v6544
  %v6546 = vpop.f32.mrb[0].mxu0
  %6547 = vmatprep.mubr.f32.mxu0 0.0
  %6548 = vmatmul.mubr.f32.gmra.mrb[0].mxu0 %v6397
  %v6549 = vpop.f32.mrb[0].mxu0
  %v6550 = vadd.f32 0.0, %v6549
  %v6551 = vpop.f32.mrb[0].mxu0
  %6552 = vmatprep.mubr.f32.mxu0 0.0
  %6553 = vmatmul.mubr.f32.gmra.mrb[0].mxu0 %v6400
  %v6554 = vpop.f32.mrb[0].mxu0
  %v6555 = vadd.f32 0.0, %v6554
  %v6556 = vpop.f32.mrb[0].mxu0
  %6557 = vmatprep.mubr.f32.mxu0 0.0
  %6558 = vmatmul.mubr.f32.gmra.mrb[0].mxu0 %v6403
  %v6559 = vpop.f32.mrb[0].mxu0
  %v6560 = vadd.f32 0.0, %v6559
  %v6561 = vpop.f32.mrb[0].mxu0
  %6562 = vmatprep.mubr.f32.mxu0 0.0
  %6563 = vmatmul.mubr.f32.gmra.mrb[0].mxu0 %v6406
  %v6564 = vpop.f32.mrb[0].mxu0
  %v6565 = vadd.f32 0.0, %v6564
  %v6566 = vpop.f32.mrb[0].mxu0
  %6567 = vmatprep.mubr.f32.mxu0 0.0
  %6568 = vmatmul.mubr.f32.gmra.mrb[0].mxu0 %v6409
  %v6569 = vpop.f32.mrb[0].mxu0
  %v6570 = vadd.f32 0.0, %v6569
  %v6571 = vpop.f32.mrb[0].mxu0
  %6572 = vmatprep.mubr.f32.mxu0 0.0
  %6573 = vmatmul.mubr.f32.gmra.mrb[0].mxu0 %v6412
  %v6574 = vpop.f32.mrb[0].mxu0
  %v6575 = vadd.f32 0.0, %v6574
  %v6576 = vpop.f32.mrb[0].mxu0
  %6577 = vmatprep.mubr.f32.mxu0 0.0
  %6578 = vmatmul.mubr.f32.gmra.mrb[0].mxu0 %v6415
  %v6579 = vpop.f32.mrb[0].mxu0
  %v6580 = vadd.f32 0.0, %v6579
  %v6581 = vpop.f32.mrb[0].mxu0
  %6582 = vmatprep.mubr.f32.mxu0 0.0
  %6583 = vmatmul.mubr.f32.gmra.mrb[0].mxu0 %v6418
  %v6584 = vpop.f32.mrb[0].mxu0
  %v6585 = vadd.f32 0.0, %v6584
  %v6586 = vpop.f32.mrb[0].mxu0
  %6587 = vmatprep.mubr.f32.mxu0 0.0
  %6588 = vmatmul.mubr.f32.gmra.mrb[0].mxu0 %v6421
  %v6589 = vpop.f32.mrb[0].mxu0
  %v6590 = vadd.f32 0.0, %v6589
  %v6591 = vpop.f32.mrb[0].mxu0
  %6592 = vdwg.mxu0
  %v6593 = vadd.f32 %v6234, %v6490
  %v6594 = vadd.f32 %v6239, %v6495
  %v6595 = vadd.f32 %v6244, %v6500
  %v6596 = vadd.f32 %v6249, %v6505
  %v6597 = vadd.f32 %v6254, %v6510
  %v6598 = vadd.f32 %v6259, %v6515
  %v6599 = vadd.f32 %v6264, %v6520
  %v6600 = vadd.f32 %v6269, %v6525
  %v6601 = vadd.f32 %v6274, %v6530
  %v6602 = vadd.f32 %v6279, %v6535
  %v6603 = vadd.f32 %v6284, %v6540
  %v6604 = vadd.f32 %v6289, %v6545
  %v6605 = vadd.f32 %v6294, %v6550
  %v6606 = vadd.f32 %v6299, %v6555
  %v6607 = vadd.f32 %v6304, %v6560
  %v6608 = vadd.f32 %v6309, %v6565
  %v6609 = vadd.f32 %v6314, %v6570
  %v6610 = vadd.f32 %v6319, %v6575
  %v6611 = vadd.f32 %v6324, %v6580
  %v6612 = vadd.f32 %v6329, %v6585
  %v6613 = vadd.f32 %v6334, %v6590
  %v6614 = vld [vmem:[#allocation4 + $0xe] sm:$0xff]
  %v6615 = vld [vmem:[#allocation4 + $0x16] sm:$0xff]
  %v6616 = vld [vmem:[#allocation4 + $0x1e] sm:$0xff]
  %v6617 = vld [vmem:[#allocation4 + $0x26] sm:$0xff]
  %v6618 = vld [vmem:[#allocation4 + $0x2e] sm:$0xff]
  %v6619 = vld [vmem:[#allocation4 + $0x36] sm:$0xff]
  %v6620 = vld [vmem:[#allocation4 + $0x3e] sm:$0xff]
  %v6621 = vld [vmem:[#allocation4 + $0x46] sm:$0xff]
  %v6622 = vld [vmem:[#allocation4 + $0x4e] sm:$0xff]
  %v6623 = vld [vmem:[#allocation4 + $0x56] sm:$0xff]
  %v6624 = vld [vmem:[#allocation4 + $0x5e] sm:$0xff]
  %v6625 = vld [vmem:[#allocation4 + $0x66] sm:$0xff]
  %v6626 = vld [vmem:[#allocation4 + $0x6e] sm:$0xff]
  %v6627 = vld [vmem:[#allocation4 + $0x76] sm:$0xff]
  %v6628 = vld [vmem:[#allocation4 + $0x7e] sm:$0xff]
  %v6629 = vld [vmem:[#allocation4 + $0x86] sm:$0xff]
  %v6630 = vld [vmem:[#allocation4 + $0x8e] sm:$0xff]
  %v6631 = vld [vmem:[#allocation4 + $0x96] sm:$0xff]
  %v6632 = vld [vmem:[#allocation4 + $0x9e] sm:$0xff]
  %v6633 = vld [vmem:[#allocation4 + $0xa6] sm:$0xff]
  %v6634 = vld [vmem:[#allocation4 + $0xae] sm:$0xff]
  %v6635 = vld [vmem:[%s3 + $0x30] sm:$0xff]
  %v6636 = vld [vmem:[%s3 + $0x38] sm:$0xff]
  %v6638 = vsel %vm1089, %v6614, 0
  %v6641 = vsel %vm1089, %v6615, 0
  %v6644 = vsel %vm1089, %v6616, 0
  %v6647 = vsel %vm1089, %v6617, 0
  %v6650 = vsel %vm1089, %v6618, 0
  %v6653 = vsel %vm1089, %v6619, 0
  %v6656 = vsel %vm1089, %v6620, 0
  %v6659 = vsel %vm1089, %v6621, 0
  %v6662 = vsel %vm1089, %v6622, 0
  %v6665 = vsel %vm1089, %v6623, 0
  %v6668 = vsel %vm1089, %v6624, 0
  %v6671 = vsel %vm1089, %v6625, 0
  %v6674 = vsel %vm1089, %v6626, 0
  %v6677 = vsel %vm1089, %v6627, 0
  %v6680 = vsel %vm1089, %v6628, 0
  %v6683 = vsel %vm1089, %v6629, 0
  %v6686 = vsel %vm1089, %v6630, 0
  %v6689 = vsel %vm1089, %v6631, 0
  %v6692 = vsel %vm1089, %v6632, 0
  %v6695 = vsel %vm1089, %v6633, 0
  %v6698 = vsel %vm1089, %v6634, 0
  %6700 = vmatprep.subr.mxu0 0.0
  %6701 = vmatpush1.msra.mxu0 %v6635
  %6702 = vmatprep.subr.mxu0 0.0
  %6703 = vmatpush1.msra.mxu0 %v6636
  %6704 = vmatprep.subr.mxu0 0.0
  %6705 = vmatpush1.msra.mxu0 0.0
  %6706 = vmatprep.subr.mxu0 0.0
  %6707 = vmatpush1.msra.mxu0 0.0
  %6708 = vmatprep.subr.mxu0 0.0
  %6709 = vmatpush1.msra.mxu0 0.0
  %6710 = vmatprep.subr.mxu0 0.0
  %6711 = vmatpush1.msra.mxu0 0.0
  %6712 = vmatprep.subr.mxu0 0.0
  %6713 = vmatpush1.msra.mxu0 0.0
  %6714 = vmatprep.subr.mxu0 0.0
  %6715 = vmatpush1.msra.mxu0 0.0
  %6716 = vmatprep.subr.mxu0 0.0
  %6717 = vmatpush1.msra.mxu0 0.0
  %6718 = vmatprep.subr.mxu0 0.0
  %6719 = vmatpush1.msra.mxu0 0.0
  %6720 = vmatprep.subr.mxu0 0.0
  %6721 = vmatpush1.msra.mxu0 0.0
  %6722 = vmatprep.subr.mxu0 0.0
  %6723 = vmatpush1.msra.mxu0 0.0
  %6724 = vmatprep.subr.mxu0 0.0
  %6725 = vmatpush1.msra.mxu0 0.0
  %6726 = vmatprep.subr.mxu0 0.0
  %6727 = vmatpush1.msra.mxu0 0.0
  %6728 = vmatprep.subr.mxu0 0.0
  %6729 = vmatpush1.msra.mxu0 0.0
  %6730 = vmatprep.subr.mxu0 0.0
  %6731 = vmatpush1.msra.mxu0 0.0
  %6732 = vmatprep.subr.mxu0 0.0
  %6733 = vmatpush1.msra.mxu0 0.0
  %6734 = vmatprep.subr.mxu0 0.0
  %6735 = vmatpush1.msra.mxu0 0.0
  %6736 = vmatprep.subr.mxu0 0.0
  %6737 = vmatpush1.msra.mxu0 0.0
  %6738 = vmatprep.subr.mxu0 0.0
  %6739 = vmatpush1.msra.mxu0 0.0
  %6740 = vmatprep.subr.mxu0 0.0
  %6741 = vmatpush1.msra.mxu0 0.0
  %6742 = vmatprep.subr.mxu0 0.0
  %6743 = vmatpush1.msra.mxu0 0.0
  %6744 = vmatprep.subr.mxu0 0.0
  %6745 = vmatpush1.msra.mxu0 0.0
  %6746 = vmatprep.subr.mxu0 0.0
  %6747 = vmatpush1.msra.mxu0 0.0
  %6748 = vmatprep.subr.mxu0 0.0
  %6749 = vmatpush1.msra.mxu0 0.0
  %6750 = vmatprep.subr.mxu0 0.0
  %6751 = vmatpush1.msra.mxu0 0.0
  %6752 = vmatprep.subr.mxu0 0.0
  %6753 = vmatpush1.msra.mxu0 0.0
  %6754 = vmatprep.subr.mxu0 0.0
  %6755 = vmatpush1.msra.mxu0 0.0
  %6756 = vmatprep.subr.mxu0 0.0
  %6757 = vmatpush1.msra.mxu0 0.0
  %6758 = vmatprep.subr.mxu0 0.0
  %6759 = vmatpush1.msra.mxu0 0.0
  %6760 = vmatprep.subr.mxu0 0.0
  %6761 = vmatpush1.msra.mxu0 0.0
  %6762 = vmatprep.subr.mxu0 0.0
  %6763 = vmatpush1.msra.mxu0 0.0
  %6764 = vmatprep.mubr.f32.mxu0 0.0
  %6765 = vmatmul.mubr.f32.gmra.mrb[0].mxu0 %v6638
  %v6766 = vpop.f32.mrb[0].mxu0
  %v6767 = vadd.f32 0.0, %v6766
  %v6768 = vpop.f32.mrb[0].mxu0
  %6769 = vmatprep.mubr.f32.mxu0 0.0
  %6770 = vmatmul.mubr.f32.gmra.mrb[0].mxu0 %v6641
  %v6771 = vpop.f32.mrb[0].mxu0
  %v6772 = vadd.f32 0.0, %v6771
  %v6773 = vpop.f32.mrb[0].mxu0
  %6774 = vmatprep.mubr.f32.mxu0 0.0
  %6775 = vmatmul.mubr.f32.gmra.mrb[0].mxu0 %v6644
  %v6776 = vpop.f32.mrb[0].mxu0
  %v6777 = vadd.f32 0.0, %v6776
  %v6778 = vpop.f32.mrb[0].mxu0
  %6779 = vmatprep.mubr.f32.mxu0 0.0
  %6780 = vmatmul.mubr.f32.gmra.mrb[0].mxu0 %v6647
  %v6781 = vpop.f32.mrb[0].mxu0
  %v6782 = vadd.f32 0.0, %v6781
  %v6783 = vpop.f32.mrb[0].mxu0
  %6784 = vmatprep.mubr.f32.mxu0 0.0
  %6785 = vmatmul.mubr.f32.gmra.mrb[0].mxu0 %v6650
  %v6786 = vpop.f32.mrb[0].mxu0
  %v6787 = vadd.f32 0.0, %v6786
  %v6788 = vpop.f32.mrb[0].mxu0
  %6789 = vmatprep.mubr.f32.mxu0 0.0
  %6790 = vmatmul.mubr.f32.gmra.mrb[0].mxu0 %v6653
  %v6791 = vpop.f32.mrb[0].mxu0
  %v6792 = vadd.f32 0.0, %v6791
  %v6793 = vpop.f32.mrb[0].mxu0
  %6794 = vmatprep.mubr.f32.mxu0 0.0
  %6795 = vmatmul.mubr.f32.gmra.mrb[0].mxu0 %v6656
  %v6796 = vpop.f32.mrb[0].mxu0
  %v6797 = vadd.f32 0.0, %v6796
  %v6798 = vpop.f32.mrb[0].mxu0
  %6799 = vmatprep.mubr.f32.mxu0 0.0
  %6800 = vmatmul.mubr.f32.gmra.mrb[0].mxu0 %v6659
  %v6801 = vpop.f32.mrb[0].mxu0
  %v6802 = vadd.f32 0.0, %v6801
  %v6803 = vpop.f32.mrb[0].mxu0
  %6804 = vmatprep.mubr.f32.mxu0 0.0
  %6805 = vmatmul.mubr.f32.gmra.mrb[0].mxu0 %v6662
  %v6806 = vpop.f32.mrb[0].mxu0
  %v6807 = vadd.f32 0.0, %v6806
  %v6808 = vpop.f32.mrb[0].mxu0
  %6809 = vmatprep.mubr.f32.mxu0 0.0
  %6810 = vmatmul.mubr.f32.gmra.mrb[0].mxu0 %v6665
  %v6811 = vpop.f32.mrb[0].mxu0
  %v6812 = vadd.f32 0.0, %v6811
  %v6813 = vpop.f32.mrb[0].mxu0
  %6814 = vmatprep.mubr.f32.mxu0 0.0
  %6815 = vmatmul.mubr.f32.gmra.mrb[0].mxu0 %v6668
  %v6816 = vpop.f32.mrb[0].mxu0
  %v6817 = vadd.f32 0.0, %v6816
  %v6818 = vpop.f32.mrb[0].mxu0
  %6819 = vmatprep.mubr.f32.mxu0 0.0
  %6820 = vmatmul.mubr.f32.gmra.mrb[0].mxu0 %v6671
  %v6821 = vpop.f32.mrb[0].mxu0
  %v6822 = vadd.f32 0.0, %v6821
  %v6823 = vpop.f32.mrb[0].mxu0
  %6824 = vmatprep.mubr.f32.mxu0 0.0
  %6825 = vmatmul.mubr.f32.gmra.mrb[0].mxu0 %v6674
  %v6826 = vpop.f32.mrb[0].mxu0
  %v6827 = vadd.f32 0.0, %v6826
  %v6828 = vpop.f32.mrb[0].mxu0
  %6829 = vmatprep.mubr.f32.mxu0 0.0
  %6830 = vmatmul.mubr.f32.gmra.mrb[0].mxu0 %v6677
  %v6831 = vpop.f32.mrb[0].mxu0
  %v6832 = vadd.f32 0.0, %v6831
  %v6833 = vpop.f32.mrb[0].mxu0
  %6834 = vmatprep.mubr.f32.mxu0 0.0
  %6835 = vmatmul.mubr.f32.gmra.mrb[0].mxu0 %v6680
  %v6836 = vpop.f32.mrb[0].mxu0
  %v6837 = vadd.f32 0.0, %v6836
  %v6838 = vpop.f32.mrb[0].mxu0
  %6839 = vmatprep.mubr.f32.mxu0 0.0
  %6840 = vmatmul.mubr.f32.gmra.mrb[0].mxu0 %v6683
  %v6841 = vpop.f32.mrb[0].mxu0
  %v6842 = vadd.f32 0.0, %v6841
  %v6843 = vpop.f32.mrb[0].mxu0
  %6844 = vmatprep.mubr.f32.mxu0 0.0
  %6845 = vmatmul.mubr.f32.gmra.mrb[0].mxu0 %v6686
  %v6846 = vpop.f32.mrb[0].mxu0
  %v6847 = vadd.f32 0.0, %v6846
  %v6848 = vpop.f32.mrb[0].mxu0
  %6849 = vmatprep.mubr.f32.mxu0 0.0
  %6850 = vmatmul.mubr.f32.gmra.mrb[0].mxu0 %v6689
  %v6851 = vpop.f32.mrb[0].mxu0
  %v6852 = vadd.f32 0.0, %v6851
  %v6853 = vpop.f32.mrb[0].mxu0
  %6854 = vmatprep.mubr.f32.mxu0 0.0
  %6855 = vmatmul.mubr.f32.gmra.mrb[0].mxu0 %v6692
  %v6856 = vpop.f32.mrb[0].mxu0
  %v6857 = vadd.f32 0.0, %v6856
  %v6858 = vpop.f32.mrb[0].mxu0
  %6859 = vmatprep.mubr.f32.mxu0 0.0
  %6860 = vmatmul.mubr.f32.gmra.mrb[0].mxu0 %v6695
  %v6861 = vpop.f32.mrb[0].mxu0
  %v6862 = vadd.f32 0.0, %v6861
  %v6863 = vpop.f32.mrb[0].mxu0
  %6864 = vmatprep.mubr.f32.mxu0 0.0
  %6865 = vmatmul.mubr.f32.gmra.mrb[0].mxu0 %v6698
  %v6866 = vpop.f32.mrb[0].mxu0
  %v6867 = vadd.f32 0.0, %v6866
  %v6868 = vpop.f32.mrb[0].mxu0
  %6869 = vdwg.mxu0
  %v6870 = vadd.f32 %v6593, %v6767
  %v6871 = vadd.f32 %v6594, %v6772
  %v6872 = vadd.f32 %v6595, %v6777
  %v6873 = vadd.f32 %v6596, %v6782
  %v6874 = vadd.f32 %v6597, %v6787
  %v6875 = vadd.f32 %v6598, %v6792
  %v6876 = vadd.f32 %v6599, %v6797
  %v6877 = vadd.f32 %v6600, %v6802
  %v6878 = vadd.f32 %v6601, %v6807
  %v6879 = vadd.f32 %v6602, %v6812
  %v6880 = vadd.f32 %v6603, %v6817
  %v6881 = vadd.f32 %v6604, %v6822
  %v6882 = vadd.f32 %v6605, %v6827
  %v6883 = vadd.f32 %v6606, %v6832
  %v6884 = vadd.f32 %v6607, %v6837
  %v6885 = vadd.f32 %v6608, %v6842
  %v6886 = vadd.f32 %v6609, %v6847
  %v6887 = vadd.f32 %v6610, %v6852
  %v6888 = vadd.f32 %v6611, %v6857
  %v6889 = vadd.f32 %v6612, %v6862
  %v6890 = vadd.f32 %v6613, %v6867
  %v6891 = vld [vmem:[#allocation4 + $0xf] sm:$0xff]
  %v6892 = vld [vmem:[#allocation4 + $0x17] sm:$0xff]
  %v6893 = vld [vmem:[#allocation4 + $0x1f] sm:$0xff]
  %v6894 = vld [vmem:[#allocation4 + $0x27] sm:$0xff]
  %v6895 = vld [vmem:[#allocation4 + $0x2f] sm:$0xff]
  %v6896 = vld [vmem:[#allocation4 + $0x37] sm:$0xff]
  %v6897 = vld [vmem:[#allocation4 + $0x3f] sm:$0xff]
  %v6898 = vld [vmem:[#allocation4 + $0x47] sm:$0xff]
  %v6899 = vld [vmem:[#allocation4 + $0x4f] sm:$0xff]
  %v6900 = vld [vmem:[#allocation4 + $0x57] sm:$0xff]
  %v6901 = vld [vmem:[#allocation4 + $0x5f] sm:$0xff]
  %v6902 = vld [vmem:[#allocation4 + $0x67] sm:$0xff]
  %v6903 = vld [vmem:[#allocation4 + $0x6f] sm:$0xff]
  %v6904 = vld [vmem:[#allocation4 + $0x77] sm:$0xff]
  %v6905 = vld [vmem:[#allocation4 + $0x7f] sm:$0xff]
  %v6906 = vld [vmem:[#allocation4 + $0x87] sm:$0xff]
  %v6907 = vld [vmem:[#allocation4 + $0x8f] sm:$0xff]
  %v6908 = vld [vmem:[#allocation4 + $0x97] sm:$0xff]
  %v6909 = vld [vmem:[#allocation4 + $0x9f] sm:$0xff]
  %v6910 = vld [vmem:[#allocation4 + $0xa7] sm:$0xff]
  %v6911 = vld [vmem:[#allocation4 + $0xaf] sm:$0xff]
  %v6912 = vld [vmem:[%s3 + $0x40] sm:$0xff]
  %v6913 = vld [vmem:[%s3 + $0x48] sm:$0xff]
  %v6915 = vsel %vm1089, %v6891, 0
  %v6918 = vsel %vm1089, %v6892, 0
  %v6921 = vsel %vm1089, %v6893, 0
  %v6924 = vsel %vm1089, %v6894, 0
  %v6927 = vsel %vm1089, %v6895, 0
  %v6930 = vsel %vm1089, %v6896, 0
  %v6933 = vsel %vm1089, %v6897, 0
  %v6936 = vsel %vm1089, %v6898, 0
  %v6939 = vsel %vm1089, %v6899, 0
  %v6942 = vsel %vm1089, %v6900, 0
  %v6945 = vsel %vm1089, %v6901, 0
  %v6948 = vsel %vm1089, %v6902, 0
  %v6951 = vsel %vm1089, %v6903, 0
  %v6954 = vsel %vm1089, %v6904, 0
  %v6957 = vsel %vm1089, %v6905, 0
  %v6960 = vsel %vm1089, %v6906, 0
  %v6963 = vsel %vm1089, %v6907, 0
  %v6966 = vsel %vm1089, %v6908, 0
  %v6969 = vsel %vm1089, %v6909, 0
  %v6972 = vsel %vm1089, %v6910, 0
  %v6975 = vsel %vm1089, %v6911, 0
  %6977 = vmatprep.subr.mxu0 0.0
  %6978 = vmatpush1.msra.mxu0 %v6912
  %6979 = vmatprep.subr.mxu0 0.0
  %6980 = vmatpush1.msra.mxu0 %v6913
  %6981 = vmatprep.subr.mxu0 0.0
  %6982 = vmatpush1.msra.mxu0 0.0
  %6983 = vmatprep.subr.mxu0 0.0
  %6984 = vmatpush1.msra.mxu0 0.0
  %6985 = vmatprep.subr.mxu0 0.0
  %6986 = vmatpush1.msra.mxu0 0.0
  %6987 = vmatprep.subr.mxu0 0.0
  %6988 = vmatpush1.msra.mxu0 0.0
  %6989 = vmatprep.subr.mxu0 0.0
  %6990 = vmatpush1.msra.mxu0 0.0
  %6991 = vmatprep.subr.mxu0 0.0
  %6992 = vmatpush1.msra.mxu0 0.0
  %6993 = vmatprep.subr.mxu0 0.0
  %6994 = vmatpush1.msra.mxu0 0.0
  %6995 = vmatprep.subr.mxu0 0.0
  %6996 = vmatpush1.msra.mxu0 0.0
  %6997 = vmatprep.subr.mxu0 0.0
  %6998 = vmatpush1.msra.mxu0 0.0
  %6999 = vmatprep.subr.mxu0 0.0
  %7000 = vmatpush1.msra.mxu0 0.0
  %7001 = vmatprep.subr.mxu0 0.0
  %7002 = vmatpush1.msra.mxu0 0.0
  %7003 = vmatprep.subr.mxu0 0.0
  %7004 = vmatpush1.msra.mxu0 0.0
  %7005 = vmatprep.subr.mxu0 0.0
  %7006 = vmatpush1.msra.mxu0 0.0
  %7007 = vmatprep.subr.mxu0 0.0
  %7008 = vmatpush1.msra.mxu0 0.0
  %7009 = vmatprep.subr.mxu0 0.0
  %7010 = vmatpush1.msra.mxu0 0.0
  %7011 = vmatprep.subr.mxu0 0.0
  %7012 = vmatpush1.msra.mxu0 0.0
  %7013 = vmatprep.subr.mxu0 0.0
  %7014 = vmatpush1.msra.mxu0 0.0
  %7015 = vmatprep.subr.mxu0 0.0
  %7016 = vmatpush1.msra.mxu0 0.0
  %7017 = vmatprep.subr.mxu0 0.0
  %7018 = vmatpush1.msra.mxu0 0.0
  %7019 = vmatprep.subr.mxu0 0.0
  %7020 = vmatpush1.msra.mxu0 0.0
  %7021 = vmatprep.subr.mxu0 0.0
  %7022 = vmatpush1.msra.mxu0 0.0
  %7023 = vmatprep.subr.mxu0 0.0
  %7024 = vmatpush1.msra.mxu0 0.0
  %7025 = vmatprep.subr.mxu0 0.0
  %7026 = vmatpush1.msra.mxu0 0.0
  %7027 = vmatprep.subr.mxu0 0.0
  %7028 = vmatpush1.msra.mxu0 0.0
  %7029 = vmatprep.subr.mxu0 0.0
  %7030 = vmatpush1.msra.mxu0 0.0
  %7031 = vmatprep.subr.mxu0 0.0
  %7032 = vmatpush1.msra.mxu0 0.0
  %7033 = vmatprep.subr.mxu0 0.0
  %7034 = vmatpush1.msra.mxu0 0.0
  %7035 = vmatprep.subr.mxu0 0.0
  %7036 = vmatpush1.msra.mxu0 0.0
  %7037 = vmatprep.subr.mxu0 0.0
  %7038 = vmatpush1.msra.mxu0 0.0
  %7039 = vmatprep.subr.mxu0 0.0
  %7040 = vmatpush1.msra.mxu0 0.0
  %7041 = vmatprep.mubr.f32.mxu0 0.0
  %7042 = vmatmul.mubr.f32.gmra.mrb[0].mxu0 %v6915
  %v7043 = vpop.f32.mrb[0].mxu0
  %v7044 = vadd.f32 0.0, %v7043
  %v7045 = vpop.f32.mrb[0].mxu0
  %7046 = vmatprep.mubr.f32.mxu0 0.0
  %7047 = vmatmul.mubr.f32.gmra.mrb[0].mxu0 %v6918
  %v7048 = vpop.f32.mrb[0].mxu0
  %v7049 = vadd.f32 0.0, %v7048
  %v7050 = vpop.f32.mrb[0].mxu0
  %7051 = vmatprep.mubr.f32.mxu0 0.0
  %7052 = vmatmul.mubr.f32.gmra.mrb[0].mxu0 %v6921
  %v7053 = vpop.f32.mrb[0].mxu0
  %v7054 = vadd.f32 0.0, %v7053
  %v7055 = vpop.f32.mrb[0].mxu0
  %7056 = vmatprep.mubr.f32.mxu0 0.0
  %7057 = vmatmul.mubr.f32.gmra.mrb[0].mxu0 %v6924
  %v7058 = vpop.f32.mrb[0].mxu0
  %v7059 = vadd.f32 0.0, %v7058
  %v7060 = vpop.f32.mrb[0].mxu0
  %7061 = vmatprep.mubr.f32.mxu0 0.0
  %7062 = vmatmul.mubr.f32.gmra.mrb[0].mxu0 %v6927
  %v7063 = vpop.f32.mrb[0].mxu0
  %v7064 = vadd.f32 0.0, %v7063
  %v7065 = vpop.f32.mrb[0].mxu0
  %7066 = vmatprep.mubr.f32.mxu0 0.0
  %7067 = vmatmul.mubr.f32.gmra.mrb[0].mxu0 %v6930
  %v7068 = vpop.f32.mrb[0].mxu0
  %v7069 = vadd.f32 0.0, %v7068
  %v7070 = vpop.f32.mrb[0].mxu0
  %7071 = vmatprep.mubr.f32.mxu0 0.0
  %7072 = vmatmul.mubr.f32.gmra.mrb[0].mxu0 %v6933
  %v7073 = vpop.f32.mrb[0].mxu0
  %v7074 = vadd.f32 0.0, %v7073
  %v7075 = vpop.f32.mrb[0].mxu0
  %7076 = vmatprep.mubr.f32.mxu0 0.0
  %7077 = vmatmul.mubr.f32.gmra.mrb[0].mxu0 %v6936
  %v7078 = vpop.f32.mrb[0].mxu0
  %v7079 = vadd.f32 0.0, %v7078
  %v7080 = vpop.f32.mrb[0].mxu0
  %7081 = vmatprep.mubr.f32.mxu0 0.0
  %7082 = vmatmul.mubr.f32.gmra.mrb[0].mxu0 %v6939
  %v7083 = vpop.f32.mrb[0].mxu0
  %v7084 = vadd.f32 0.0, %v7083
  %v7085 = vpop.f32.mrb[0].mxu0
  %7086 = vmatprep.mubr.f32.mxu0 0.0
  %7087 = vmatmul.mubr.f32.gmra.mrb[0].mxu0 %v6942
  %v7088 = vpop.f32.mrb[0].mxu0
  %v7089 = vadd.f32 0.0, %v7088
  %v7090 = vpop.f32.mrb[0].mxu0
  %7091 = vmatprep.mubr.f32.mxu0 0.0
  %7092 = vmatmul.mubr.f32.gmra.mrb[0].mxu0 %v6945
  %v7093 = vpop.f32.mrb[0].mxu0
  %v7094 = vadd.f32 0.0, %v7093
  %v7095 = vpop.f32.mrb[0].mxu0
  %7096 = vmatprep.mubr.f32.mxu0 0.0
  %7097 = vmatmul.mubr.f32.gmra.mrb[0].mxu0 %v6948
  %v7098 = vpop.f32.mrb[0].mxu0
  %v7099 = vadd.f32 0.0, %v7098
  %v7100 = vpop.f32.mrb[0].mxu0
  %7101 = vmatprep.mubr.f32.mxu0 0.0
  %7102 = vmatmul.mubr.f32.gmra.mrb[0].mxu0 %v6951
  %v7103 = vpop.f32.mrb[0].mxu0
  %v7104 = vadd.f32 0.0, %v7103
  %v7105 = vpop.f32.mrb[0].mxu0
  %7106 = vmatprep.mubr.f32.mxu0 0.0
  %7107 = vmatmul.mubr.f32.gmra.mrb[0].mxu0 %v6954
  %v7108 = vpop.f32.mrb[0].mxu0
  %v7109 = vadd.f32 0.0, %v7108
  %v7110 = vpop.f32.mrb[0].mxu0
  %7111 = vmatprep.mubr.f32.mxu0 0.0
  %7112 = vmatmul.mubr.f32.gmra.mrb[0].mxu0 %v6957
  %v7113 = vpop.f32.mrb[0].mxu0
  %v7114 = vadd.f32 0.0, %v7113
  %v7115 = vpop.f32.mrb[0].mxu0
  %7116 = vmatprep.mubr.f32.mxu0 0.0
  %7117 = vmatmul.mubr.f32.gmra.mrb[0].mxu0 %v6960
  %v7118 = vpop.f32.mrb[0].mxu0
  %v7119 = vadd.f32 0.0, %v7118
  %v7120 = vpop.f32.mrb[0].mxu0
  %7121 = vmatprep.mubr.f32.mxu0 0.0
  %7122 = vmatmul.mubr.f32.gmra.mrb[0].mxu0 %v6963
  %v7123 = vpop.f32.mrb[0].mxu0
  %v7124 = vadd.f32 0.0, %v7123
  %v7125 = vpop.f32.mrb[0].mxu0
  %7126 = vmatprep.mubr.f32.mxu0 0.0
  %7127 = vmatmul.mubr.f32.gmra.mrb[0].mxu0 %v6966
  %v7128 = vpop.f32.mrb[0].mxu0
  %v7129 = vadd.f32 0.0, %v7128
  %v7130 = vpop.f32.mrb[0].mxu0
  %7131 = vmatprep.mubr.f32.mxu0 0.0
  %7132 = vmatmul.mubr.f32.gmra.mrb[0].mxu0 %v6969
  %v7133 = vpop.f32.mrb[0].mxu0
  %v7134 = vadd.f32 0.0, %v7133
  %v7135 = vpop.f32.mrb[0].mxu0
  %7136 = vmatprep.mubr.f32.mxu0 0.0
  %7137 = vmatmul.mubr.f32.gmra.mrb[0].mxu0 %v6972
  %v7138 = vpop.f32.mrb[0].mxu0
  %v7139 = vadd.f32 0.0, %v7138
  %v7140 = vpop.f32.mrb[0].mxu0
  %7141 = vmatprep.mubr.f32.mxu0 0.0
  %7142 = vmatmul.mubr.f32.gmra.mrb[0].mxu0 %v6975
  %v7143 = vpop.f32.mrb[0].mxu0
  %v7144 = vadd.f32 0.0, %v7143
  %v7145 = vpop.f32.mrb[0].mxu0
  %7146 = vdwg.mxu0
  %v7147 = vadd.f32 %v6870, %v7044
  %v7148 = vadd.f32 %v6871, %v7049
  %v7149 = vadd.f32 %v6872, %v7054
  %v7150 = vadd.f32 %v6873, %v7059
  %v7151 = vadd.f32 %v6874, %v7064
  %v7152 = vadd.f32 %v6875, %v7069
  %v7153 = vadd.f32 %v6876, %v7074
  %v7154 = vadd.f32 %v6877, %v7079
  %v7155 = vadd.f32 %v6878, %v7084
  %v7156 = vadd.f32 %v6879, %v7089
  %v7157 = vadd.f32 %v6880, %v7094
  %v7158 = vadd.f32 %v6881, %v7099
  %v7159 = vadd.f32 %v6882, %v7104
  %v7160 = vadd.f32 %v6883, %v7109
  %v7161 = vadd.f32 %v6884, %v7114
  %v7162 = vadd.f32 %v6885, %v7119
  %v7163 = vadd.f32 %v6886, %v7124
  %v7164 = vadd.f32 %v6887, %v7129
  %v7165 = vadd.f32 %v6888, %v7134
  %v7166 = vadd.f32 %v6889, %v7139
  %v7167 = vadd.f32 %v6890, %v7144
  %v7168 = vld [vmem:[#allocation4 + $0x10] sm:$0xff]
  %v7169 = vld [vmem:[#allocation4 + $0x18] sm:$0xff]
  %v7170 = vld [vmem:[#allocation4 + $0x20] sm:$0xff]
  %v7171 = vld [vmem:[#allocation4 + $0x28] sm:$0xff]
  %v7172 = vld [vmem:[#allocation4 + $0x30] sm:$0xff]
  %v7173 = vld [vmem:[#allocation4 + $0x38] sm:$0xff]
  %v7174 = vld [vmem:[#allocation4 + $0x40] sm:$0xff]
  %v7175 = vld [vmem:[#allocation4 + $0x48] sm:$0xff]
  %v7176 = vld [vmem:[#allocation4 + $0x50] sm:$0xff]
  %v7177 = vld [vmem:[#allocation4 + $0x58] sm:$0xff]
  %v7178 = vld [vmem:[#allocation4 + $0x60] sm:$0xff]
  %v7179 = vld [vmem:[#allocation4 + $0x68] sm:$0xff]
  %v7180 = vld [vmem:[#allocation4 + $0x70] sm:$0xff]
  %v7181 = vld [vmem:[#allocation4 + $0x78] sm:$0xff]
  %v7182 = vld [vmem:[#allocation4 + $0x80] sm:$0xff]
  %v7183 = vld [vmem:[#allocation4 + $0x88] sm:$0xff]
  %v7184 = vld [vmem:[#allocation4 + $0x90] sm:$0xff]
  %v7185 = vld [vmem:[#allocation4 + $0x98] sm:$0xff]
  %v7186 = vld [vmem:[#allocation4 + $0xa0] sm:$0xff]
  %v7187 = vld [vmem:[#allocation4 + $0xa8] sm:$0xff]
  %v7188 = vld [vmem:[#allocation4 + $0xb0] sm:$0xff]
  %v7189 = vld [vmem:[%s3 + $0x50] sm:$0xff]
  %v7190 = vld [vmem:[%s3 + $0x58] sm:$0xff]
  %v7192 = vsel %vm1089, %v7168, 0
  %v7195 = vsel %vm1089, %v7169, 0
  %v7198 = vsel %vm1089, %v7170, 0
  %v7201 = vsel %vm1089, %v7171, 0
  %v7204 = vsel %vm1089, %v7172, 0
  %v7207 = vsel %vm1089, %v7173, 0
  %v7210 = vsel %vm1089, %v7174, 0
  %v7213 = vsel %vm1089, %v7175, 0
  %v7216 = vsel %vm1089, %v7176, 0
  %v7219 = vsel %vm1089, %v7177, 0
  %v7222 = vsel %vm1089, %v7178, 0
  %v7225 = vsel %vm1089, %v7179, 0
  %v7228 = vsel %vm1089, %v7180, 0
  %v7231 = vsel %vm1089, %v7181, 0
  %v7234 = vsel %vm1089, %v7182, 0
  %v7237 = vsel %vm1089, %v7183, 0
  %v7240 = vsel %vm1089, %v7184, 0
  %v7243 = vsel %vm1089, %v7185, 0
  %v7246 = vsel %vm1089, %v7186, 0
  %v7249 = vsel %vm1089, %v7187, 0
  %v7252 = vsel %vm1089, %v7188, 0
  %7254 = vmatprep.subr.mxu0 0.0
  %7255 = vmatpush1.msra.mxu0 %v7189
  %7256 = vmatprep.subr.mxu0 0.0
  %7257 = vmatpush1.msra.mxu0 %v7190
  %7258 = vmatprep.subr.mxu0 0.0
  %7259 = vmatpush1.msra.mxu0 0.0
  %7260 = vmatprep.subr.mxu0 0.0
  %7261 = vmatpush1.msra.mxu0 0.0
  %7262 = vmatprep.subr.mxu0 0.0
  %7263 = vmatpush1.msra.mxu0 0.0
  %7264 = vmatprep.subr.mxu0 0.0
  %7265 = vmatpush1.msra.mxu0 0.0
  %7266 = vmatprep.subr.mxu0 0.0
  %7267 = vmatpush1.msra.mxu0 0.0
  %7268 = vmatprep.subr.mxu0 0.0
  %7269 = vmatpush1.msra.mxu0 0.0
  %7270 = vmatprep.subr.mxu0 0.0
  %7271 = vmatpush1.msra.mxu0 0.0
  %7272 = vmatprep.subr.mxu0 0.0
  %7273 = vmatpush1.msra.mxu0 0.0
  %7274 = vmatprep.subr.mxu0 0.0
  %7275 = vmatpush1.msra.mxu0 0.0
  %7276 = vmatprep.subr.mxu0 0.0
  %7277 = vmatpush1.msra.mxu0 0.0
  %7278 = vmatprep.subr.mxu0 0.0
  %7279 = vmatpush1.msra.mxu0 0.0
  %7280 = vmatprep.subr.mxu0 0.0
  %7281 = vmatpush1.msra.mxu0 0.0
  %7282 = vmatprep.subr.mxu0 0.0
  %7283 = vmatpush1.msra.mxu0 0.0
  %7284 = vmatprep.subr.mxu0 0.0
  %7285 = vmatpush1.msra.mxu0 0.0
  %7286 = vmatprep.subr.mxu0 0.0
  %7287 = vmatpush1.msra.mxu0 0.0
  %7288 = vmatprep.subr.mxu0 0.0
  %7289 = vmatpush1.msra.mxu0 0.0
  %7290 = vmatprep.subr.mxu0 0.0
  %7291 = vmatpush1.msra.mxu0 0.0
  %7292 = vmatprep.subr.mxu0 0.0
  %7293 = vmatpush1.msra.mxu0 0.0
  %7294 = vmatprep.subr.mxu0 0.0
  %7295 = vmatpush1.msra.mxu0 0.0
  %7296 = vmatprep.subr.mxu0 0.0
  %7297 = vmatpush1.msra.mxu0 0.0
  %7298 = vmatprep.subr.mxu0 0.0
  %7299 = vmatpush1.msra.mxu0 0.0
  %7300 = vmatprep.subr.mxu0 0.0
  %7301 = vmatpush1.msra.mxu0 0.0
  %7302 = vmatprep.subr.mxu0 0.0
  %7303 = vmatpush1.msra.mxu0 0.0
  %7304 = vmatprep.subr.mxu0 0.0
  %7305 = vmatpush1.msra.mxu0 0.0
  %7306 = vmatprep.subr.mxu0 0.0
  %7307 = vmatpush1.msra.mxu0 0.0
  %7308 = vmatprep.subr.mxu0 0.0
  %7309 = vmatpush1.msra.mxu0 0.0
  %7310 = vmatprep.subr.mxu0 0.0
  %7311 = vmatpush1.msra.mxu0 0.0
  %7312 = vmatprep.subr.mxu0 0.0
  %7313 = vmatpush1.msra.mxu0 0.0
  %7314 = vmatprep.subr.mxu0 0.0
  %7315 = vmatpush1.msra.mxu0 0.0
  %7316 = vmatprep.subr.mxu0 0.0
  %7317 = vmatpush1.msra.mxu0 0.0
  %7318 = vmatprep.mubr.f32.mxu0 0.0
  %7319 = vmatmul.mubr.f32.gmra.mrb[0].mxu0 %v7192
  %v7320 = vpop.f32.mrb[0].mxu0
  %v7321 = vadd.f32 0.0, %v7320
  %v7322 = vpop.f32.mrb[0].mxu0
  %7323 = vmatprep.mubr.f32.mxu0 0.0
  %7324 = vmatmul.mubr.f32.gmra.mrb[0].mxu0 %v7195
  %v7325 = vpop.f32.mrb[0].mxu0
  %v7326 = vadd.f32 0.0, %v7325
  %v7327 = vpop.f32.mrb[0].mxu0
  %7328 = vmatprep.mubr.f32.mxu0 0.0
  %7329 = vmatmul.mubr.f32.gmra.mrb[0].mxu0 %v7198
  %v7330 = vpop.f32.mrb[0].mxu0
  %v7331 = vadd.f32 0.0, %v7330
  %v7332 = vpop.f32.mrb[0].mxu0
  %7333 = vmatprep.mubr.f32.mxu0 0.0
  %7334 = vmatmul.mubr.f32.gmra.mrb[0].mxu0 %v7201
  %v7335 = vpop.f32.mrb[0].mxu0
  %v7336 = vadd.f32 0.0, %v7335
  %v7337 = vpop.f32.mrb[0].mxu0
  %7338 = vmatprep.mubr.f32.mxu0 0.0
  %7339 = vmatmul.mubr.f32.gmra.mrb[0].mxu0 %v7204
  %v7340 = vpop.f32.mrb[0].mxu0
  %v7341 = vadd.f32 0.0, %v7340
  %v7342 = vpop.f32.mrb[0].mxu0
  %7343 = vmatprep.mubr.f32.mxu0 0.0
  %7344 = vmatmul.mubr.f32.gmra.mrb[0].mxu0 %v7207
  %v7345 = vpop.f32.mrb[0].mxu0
  %v7346 = vadd.f32 0.0, %v7345
  %v7347 = vpop.f32.mrb[0].mxu0
  %7348 = vmatprep.mubr.f32.mxu0 0.0
  %7349 = vmatmul.mubr.f32.gmra.mrb[0].mxu0 %v7210
  %v7350 = vpop.f32.mrb[0].mxu0
  %v7351 = vadd.f32 0.0, %v7350
  %v7352 = vpop.f32.mrb[0].mxu0
  %7353 = vmatprep.mubr.f32.mxu0 0.0
  %7354 = vmatmul.mubr.f32.gmra.mrb[0].mxu0 %v7213
  %v7355 = vpop.f32.mrb[0].mxu0
  %v7356 = vadd.f32 0.0, %v7355
  %v7357 = vpop.f32.mrb[0].mxu0
  %7358 = vmatprep.mubr.f32.mxu0 0.0
  %7359 = vmatmul.mubr.f32.gmra.mrb[0].mxu0 %v7216
  %v7360 = vpop.f32.mrb[0].mxu0
  %v7361 = vadd.f32 0.0, %v7360
  %v7362 = vpop.f32.mrb[0].mxu0
  %7363 = vmatprep.mubr.f32.mxu0 0.0
  %7364 = vmatmul.mubr.f32.gmra.mrb[0].mxu0 %v7219
  %v7365 = vpop.f32.mrb[0].mxu0
  %v7366 = vadd.f32 0.0, %v7365
  %v7367 = vpop.f32.mrb[0].mxu0
  %7368 = vmatprep.mubr.f32.mxu0 0.0
  %7369 = vmatmul.mubr.f32.gmra.mrb[0].mxu0 %v7222
  %v7370 = vpop.f32.mrb[0].mxu0
  %v7371 = vadd.f32 0.0, %v7370
  %v7372 = vpop.f32.mrb[0].mxu0
  %7373 = vmatprep.mubr.f32.mxu0 0.0
  %7374 = vmatmul.mubr.f32.gmra.mrb[0].mxu0 %v7225
  %v7375 = vpop.f32.mrb[0].mxu0
  %v7376 = vadd.f32 0.0, %v7375
  %v7377 = vpop.f32.mrb[0].mxu0
  %7378 = vmatprep.mubr.f32.mxu0 0.0
  %7379 = vmatmul.mubr.f32.gmra.mrb[0].mxu0 %v7228
  %v7380 = vpop.f32.mrb[0].mxu0
  %v7381 = vadd.f32 0.0, %v7380
  %v7382 = vpop.f32.mrb[0].mxu0
  %7383 = vmatprep.mubr.f32.mxu0 0.0
  %7384 = vmatmul.mubr.f32.gmra.mrb[0].mxu0 %v7231
  %v7385 = vpop.f32.mrb[0].mxu0
  %v7386 = vadd.f32 0.0, %v7385
  %v7387 = vpop.f32.mrb[0].mxu0
  %7388 = vmatprep.mubr.f32.mxu0 0.0
  %7389 = vmatmul.mubr.f32.gmra.mrb[0].mxu0 %v7234
  %v7390 = vpop.f32.mrb[0].mxu0
  %v7391 = vadd.f32 0.0, %v7390
  %v7392 = vpop.f32.mrb[0].mxu0
  %7393 = vmatprep.mubr.f32.mxu0 0.0
  %7394 = vmatmul.mubr.f32.gmra.mrb[0].mxu0 %v7237
  %v7395 = vpop.f32.mrb[0].mxu0
  %v7396 = vadd.f32 0.0, %v7395
  %v7397 = vpop.f32.mrb[0].mxu0
  %7398 = vmatprep.mubr.f32.mxu0 0.0
  %7399 = vmatmul.mubr.f32.gmra.mrb[0].mxu0 %v7240
  %v7400 = vpop.f32.mrb[0].mxu0
  %v7401 = vadd.f32 0.0, %v7400
  %v7402 = vpop.f32.mrb[0].mxu0
  %7403 = vmatprep.mubr.f32.mxu0 0.0
  %7404 = vmatmul.mubr.f32.gmra.mrb[0].mxu0 %v7243
  %v7405 = vpop.f32.mrb[0].mxu0
  %v7406 = vadd.f32 0.0, %v7405
  %v7407 = vpop.f32.mrb[0].mxu0
  %7408 = vmatprep.mubr.f32.mxu0 0.0
  %7409 = vmatmul.mubr.f32.gmra.mrb[0].mxu0 %v7246
  %v7410 = vpop.f32.mrb[0].mxu0
  %v7411 = vadd.f32 0.0, %v7410
  %v7412 = vpop.f32.mrb[0].mxu0
  %7413 = vmatprep.mubr.f32.mxu0 0.0
  %7414 = vmatmul.mubr.f32.gmra.mrb[0].mxu0 %v7249
  %v7415 = vpop.f32.mrb[0].mxu0
  %v7416 = vadd.f32 0.0, %v7415
  %v7417 = vpop.f32.mrb[0].mxu0
  %7418 = vmatprep.mubr.f32.mxu0 0.0
  %7419 = vmatmul.mubr.f32.gmra.mrb[0].mxu0 %v7252
  %v7420 = vpop.f32.mrb[0].mxu0
  %v7421 = vadd.f32 0.0, %v7420
  %v7422 = vpop.f32.mrb[0].mxu0
  %7423 = vdwg.mxu0
  %v7424 = vadd.f32 %v7147, %v7321
  %v7425 = vadd.f32 %v7148, %v7326
  %v7426 = vadd.f32 %v7149, %v7331
  %v7427 = vadd.f32 %v7150, %v7336
  %v7428 = vadd.f32 %v7151, %v7341
  %v7429 = vadd.f32 %v7152, %v7346
  %v7430 = vadd.f32 %v7153, %v7351
  %v7431 = vadd.f32 %v7154, %v7356
  %v7432 = vadd.f32 %v7155, %v7361
  %v7433 = vadd.f32 %v7156, %v7366
  %v7434 = vadd.f32 %v7157, %v7371
  %v7435 = vadd.f32 %v7158, %v7376
  %v7436 = vadd.f32 %v7159, %v7381
  %v7437 = vadd.f32 %v7160, %v7386
  %v7438 = vadd.f32 %v7161, %v7391
  %v7439 = vadd.f32 %v7162, %v7396
  %v7440 = vadd.f32 %v7163, %v7401
  %v7441 = vadd.f32 %v7164, %v7406
  %v7442 = vadd.f32 %v7165, %v7411
  %v7443 = vadd.f32 %v7166, %v7416
  %v7444 = vadd.f32 %v7167, %v7421
  %v7445 = vld [vmem:[#allocation4 + $0x1c] sm:$0xff]
  %v7446 = vld [vmem:[#allocation4 + $0x24] sm:$0xff]
  %v7447 = vld [vmem:[#allocation4 + $0x2c] sm:$0xff]
  %v7448 = vld [vmem:[#allocation4 + $0x34] sm:$0xff]
  %v7449 = vld [vmem:[#allocation4 + $0x3c] sm:$0xff]
  %v7450 = vld [vmem:[#allocation4 + $0x44] sm:$0xff]
  %v7451 = vld [vmem:[#allocation4 + $0x4c] sm:$0xff]
  %v7452 = vld [vmem:[#allocation4 + $0x54] sm:$0xff]
  %v7453 = vld [vmem:[#allocation4 + $0x5c] sm:$0xff]
  %v7454 = vld [vmem:[#allocation4 + $0x64] sm:$0xff]
  %v7455 = vld [vmem:[#allocation4 + $0x6c] sm:$0xff]
  %v7456 = vld [vmem:[#allocation4 + $0x74] sm:$0xff]
  %v7457 = vld [vmem:[#allocation4 + $0x7c] sm:$0xff]
  %v7458 = vld [vmem:[#allocation4 + $0x84] sm:$0xff]
  %v7459 = vld [vmem:[#allocation4 + $0x8c] sm:$0xff]
  %v7460 = vld [vmem:[#allocation4 + $0x94] sm:$0xff]
  %v7461 = vld [vmem:[#allocation4 + $0x9c] sm:$0xff]
  %v7462 = vld [vmem:[#allocation4 + $0xa4] sm:$0xff]
  %v7463 = vld [vmem:[#allocation4 + $0xac] sm:$0xff]
  %v7464 = vld [vmem:[#allocation4 + $0xb4] sm:$0xff]
  %v7465 = vld [vmem:[#allocation4 + $0xbc] sm:$0xff]
  %v7466 = vld [vmem:[%s3 + $0x60] sm:$0xff]
  %v7467 = vld [vmem:[%s3 + $0x68] sm:$0xff]
  %v7469 = vsel %vm1089, %v7445, 0
  %v7472 = vsel %vm1089, %v7446, 0
  %v7475 = vsel %vm1089, %v7447, 0
  %v7478 = vsel %vm1089, %v7448, 0
  %v7481 = vsel %vm1089, %v7449, 0
  %v7484 = vsel %vm1089, %v7450, 0
  %v7487 = vsel %vm1089, %v7451, 0
  %v7490 = vsel %vm1089, %v7452, 0
  %v7493 = vsel %vm1089, %v7453, 0
  %v7496 = vsel %vm1089, %v7454, 0
  %v7499 = vsel %vm1089, %v7455, 0
  %v7502 = vsel %vm1089, %v7456, 0
  %v7505 = vsel %vm1089, %v7457, 0
  %v7508 = vsel %vm1089, %v7458, 0
  %v7511 = vsel %vm1089, %v7459, 0
  %v7514 = vsel %vm1089, %v7460, 0
  %v7517 = vsel %vm1089, %v7461, 0
  %v7520 = vsel %vm1089, %v7462, 0
  %v7523 = vsel %vm1089, %v7463, 0
  %v7526 = vsel %vm1089, %v7464, 0
  %v7529 = vsel %vm1089, %v7465, 0
  %7531 = vmatprep.subr.mxu0 0.0
  %7532 = vmatpush1.msra.mxu0 %v7466
  %7533 = vmatprep.subr.mxu0 0.0
  %7534 = vmatpush1.msra.mxu0 %v7467
  %7535 = vmatprep.subr.mxu0 0.0
  %7536 = vmatpush1.msra.mxu0 0.0
  %7537 = vmatprep.subr.mxu0 0.0
  %7538 = vmatpush1.msra.mxu0 0.0
  %7539 = vmatprep.subr.mxu0 0.0
  %7540 = vmatpush1.msra.mxu0 0.0
  %7541 = vmatprep.subr.mxu0 0.0
  %7542 = vmatpush1.msra.mxu0 0.0
  %7543 = vmatprep.subr.mxu0 0.0
  %7544 = vmatpush1.msra.mxu0 0.0
  %7545 = vmatprep.subr.mxu0 0.0
  %7546 = vmatpush1.msra.mxu0 0.0
  %7547 = vmatprep.subr.mxu0 0.0
  %7548 = vmatpush1.msra.mxu0 0.0
  %7549 = vmatprep.subr.mxu0 0.0
  %7550 = vmatpush1.msra.mxu0 0.0
  %7551 = vmatprep.subr.mxu0 0.0
  %7552 = vmatpush1.msra.mxu0 0.0
  %7553 = vmatprep.subr.mxu0 0.0
  %7554 = vmatpush1.msra.mxu0 0.0
  %7555 = vmatprep.subr.mxu0 0.0
  %7556 = vmatpush1.msra.mxu0 0.0
  %7557 = vmatprep.subr.mxu0 0.0
  %7558 = vmatpush1.msra.mxu0 0.0
  %7559 = vmatprep.subr.mxu0 0.0
  %7560 = vmatpush1.msra.mxu0 0.0
  %7561 = vmatprep.subr.mxu0 0.0
  %7562 = vmatpush1.msra.mxu0 0.0
  %7563 = vmatprep.subr.mxu0 0.0
  %7564 = vmatpush1.msra.mxu0 0.0
  %7565 = vmatprep.subr.mxu0 0.0
  %7566 = vmatpush1.msra.mxu0 0.0
  %7567 = vmatprep.subr.mxu0 0.0
  %7568 = vmatpush1.msra.mxu0 0.0
  %7569 = vmatprep.subr.mxu0 0.0
  %7570 = vmatpush1.msra.mxu0 0.0
  %7571 = vmatprep.subr.mxu0 0.0
  %7572 = vmatpush1.msra.mxu0 0.0
  %7573 = vmatprep.subr.mxu0 0.0
  %7574 = vmatpush1.msra.mxu0 0.0
  %7575 = vmatprep.subr.mxu0 0.0
  %7576 = vmatpush1.msra.mxu0 0.0
  %7577 = vmatprep.subr.mxu0 0.0
  %7578 = vmatpush1.msra.mxu0 0.0
  %7579 = vmatprep.subr.mxu0 0.0
  %7580 = vmatpush1.msra.mxu0 0.0
  %7581 = vmatprep.subr.mxu0 0.0
  %7582 = vmatpush1.msra.mxu0 0.0
  %7583 = vmatprep.subr.mxu0 0.0
  %7584 = vmatpush1.msra.mxu0 0.0
  %7585 = vmatprep.subr.mxu0 0.0
  %7586 = vmatpush1.msra.mxu0 0.0
  %7587 = vmatprep.subr.mxu0 0.0
  %7588 = vmatpush1.msra.mxu0 0.0
  %7589 = vmatprep.subr.mxu0 0.0
  %7590 = vmatpush1.msra.mxu0 0.0
  %7591 = vmatprep.subr.mxu0 0.0
  %7592 = vmatpush1.msra.mxu0 0.0
  %7593 = vmatprep.subr.mxu0 0.0
  %7594 = vmatpush1.msra.mxu0 0.0
  %7595 = vmatprep.mubr.f32.mxu0 0.0
  %7596 = vmatmul.mubr.f32.gmra.mrb[0].mxu0 %v7469
  %v7597 = vpop.f32.mrb[0].mxu0
  %v7598 = vadd.f32 0.0, %v7597
  %v7599 = vpop.f32.mrb[0].mxu0
  %7600 = vmatprep.mubr.f32.mxu0 0.0
  %7601 = vmatmul.mubr.f32.gmra.mrb[0].mxu0 %v7472
  %v7602 = vpop.f32.mrb[0].mxu0
  %v7603 = vadd.f32 0.0, %v7602
  %v7604 = vpop.f32.mrb[0].mxu0
  %7605 = vmatprep.mubr.f32.mxu0 0.0
  %7606 = vmatmul.mubr.f32.gmra.mrb[0].mxu0 %v7475
  %v7607 = vpop.f32.mrb[0].mxu0
  %v7608 = vadd.f32 0.0, %v7607
  %v7609 = vpop.f32.mrb[0].mxu0
  %7610 = vmatprep.mubr.f32.mxu0 0.0
  %7611 = vmatmul.mubr.f32.gmra.mrb[0].mxu0 %v7478
  %v7612 = vpop.f32.mrb[0].mxu0
  %v7613 = vadd.f32 0.0, %v7612
  %v7614 = vpop.f32.mrb[0].mxu0
  %7615 = vmatprep.mubr.f32.mxu0 0.0
  %7616 = vmatmul.mubr.f32.gmra.mrb[0].mxu0 %v7481
  %v7617 = vpop.f32.mrb[0].mxu0
  %v7618 = vadd.f32 0.0, %v7617
  %v7619 = vpop.f32.mrb[0].mxu0
  %7620 = vmatprep.mubr.f32.mxu0 0.0
  %7621 = vmatmul.mubr.f32.gmra.mrb[0].mxu0 %v7484
  %v7622 = vpop.f32.mrb[0].mxu0
  %v7623 = vadd.f32 0.0, %v7622
  %v7624 = vpop.f32.mrb[0].mxu0
  %7625 = vmatprep.mubr.f32.mxu0 0.0
  %7626 = vmatmul.mubr.f32.gmra.mrb[0].mxu0 %v7487
  %v7627 = vpop.f32.mrb[0].mxu0
  %v7628 = vadd.f32 0.0, %v7627
  %v7629 = vpop.f32.mrb[0].mxu0
  %7630 = vmatprep.mubr.f32.mxu0 0.0
  %7631 = vmatmul.mubr.f32.gmra.mrb[0].mxu0 %v7490
  %v7632 = vpop.f32.mrb[0].mxu0
  %v7633 = vadd.f32 0.0, %v7632
  %v7634 = vpop.f32.mrb[0].mxu0
  %7635 = vmatprep.mubr.f32.mxu0 0.0
  %7636 = vmatmul.mubr.f32.gmra.mrb[0].mxu0 %v7493
  %v7637 = vpop.f32.mrb[0].mxu0
  %v7638 = vadd.f32 0.0, %v7637
  %v7639 = vpop.f32.mrb[0].mxu0
  %7640 = vmatprep.mubr.f32.mxu0 0.0
  %7641 = vmatmul.mubr.f32.gmra.mrb[0].mxu0 %v7496
  %v7642 = vpop.f32.mrb[0].mxu0
  %v7643 = vadd.f32 0.0, %v7642
  %v7644 = vpop.f32.mrb[0].mxu0
  %7645 = vmatprep.mubr.f32.mxu0 0.0
  %7646 = vmatmul.mubr.f32.gmra.mrb[0].mxu0 %v7499
  %v7647 = vpop.f32.mrb[0].mxu0
  %v7648 = vadd.f32 0.0, %v7647
  %v7649 = vpop.f32.mrb[0].mxu0
  %7650 = vmatprep.mubr.f32.mxu0 0.0
  %7651 = vmatmul.mubr.f32.gmra.mrb[0].mxu0 %v7502
  %v7652 = vpop.f32.mrb[0].mxu0
  %v7653 = vadd.f32 0.0, %v7652
  %v7654 = vpop.f32.mrb[0].mxu0
  %7655 = vmatprep.mubr.f32.mxu0 0.0
  %7656 = vmatmul.mubr.f32.gmra.mrb[0].mxu0 %v7505
  %v7657 = vpop.f32.mrb[0].mxu0
  %v7658 = vadd.f32 0.0, %v7657
  %v7659 = vpop.f32.mrb[0].mxu0
  %7660 = vmatprep.mubr.f32.mxu0 0.0
  %7661 = vmatmul.mubr.f32.gmra.mrb[0].mxu0 %v7508
  %v7662 = vpop.f32.mrb[0].mxu0
  %v7663 = vadd.f32 0.0, %v7662
  %v7664 = vpop.f32.mrb[0].mxu0
  %7665 = vmatprep.mubr.f32.mxu0 0.0
  %7666 = vmatmul.mubr.f32.gmra.mrb[0].mxu0 %v7511
  %v7667 = vpop.f32.mrb[0].mxu0
  %v7668 = vadd.f32 0.0, %v7667
  %v7669 = vpop.f32.mrb[0].mxu0
  %7670 = vmatprep.mubr.f32.mxu0 0.0
  %7671 = vmatmul.mubr.f32.gmra.mrb[0].mxu0 %v7514
  %v7672 = vpop.f32.mrb[0].mxu0
  %v7673 = vadd.f32 0.0, %v7672
  %v7674 = vpop.f32.mrb[0].mxu0
  %7675 = vmatprep.mubr.f32.mxu0 0.0
  %7676 = vmatmul.mubr.f32.gmra.mrb[0].mxu0 %v7517
  %v7677 = vpop.f32.mrb[0].mxu0
  %v7678 = vadd.f32 0.0, %v7677
  %v7679 = vpop.f32.mrb[0].mxu0
  %7680 = vmatprep.mubr.f32.mxu0 0.0
  %7681 = vmatmul.mubr.f32.gmra.mrb[0].mxu0 %v7520
  %v7682 = vpop.f32.mrb[0].mxu0
  %v7683 = vadd.f32 0.0, %v7682
  %v7684 = vpop.f32.mrb[0].mxu0
  %7685 = vmatprep.mubr.f32.mxu0 0.0
  %7686 = vmatmul.mubr.f32.gmra.mrb[0].mxu0 %v7523
  %v7687 = vpop.f32.mrb[0].mxu0
  %v7688 = vadd.f32 0.0, %v7687
  %v7689 = vpop.f32.mrb[0].mxu0
  %7690 = vmatprep.mubr.f32.mxu0 0.0
  %7691 = vmatmul.mubr.f32.gmra.mrb[0].mxu0 %v7526
  %v7692 = vpop.f32.mrb[0].mxu0
  %v7693 = vadd.f32 0.0, %v7692
  %v7694 = vpop.f32.mrb[0].mxu0
  %7695 = vmatprep.mubr.f32.mxu0 0.0
  %7696 = vmatmul.mubr.f32.gmra.mrb[0].mxu0 %v7529
  %v7697 = vpop.f32.mrb[0].mxu0
  %v7698 = vadd.f32 0.0, %v7697
  %v7699 = vpop.f32.mrb[0].mxu0
  %7700 = vdwg.mxu0
  %v7701 = vadd.f32 %v7424, %v7598
  %v7702 = vadd.f32 %v7425, %v7603
  %v7703 = vadd.f32 %v7426, %v7608
  %v7704 = vadd.f32 %v7427, %v7613
  %v7705 = vadd.f32 %v7428, %v7618
  %v7706 = vadd.f32 %v7429, %v7623
  %v7707 = vadd.f32 %v7430, %v7628
  %v7708 = vadd.f32 %v7431, %v7633
  %v7709 = vadd.f32 %v7432, %v7638
  %v7710 = vadd.f32 %v7433, %v7643
  %v7711 = vadd.f32 %v7434, %v7648
  %v7712 = vadd.f32 %v7435, %v7653
  %v7713 = vadd.f32 %v7436, %v7658
  %v7714 = vadd.f32 %v7437, %v7663
  %v7715 = vadd.f32 %v7438, %v7668
  %v7716 = vadd.f32 %v7439, %v7673
  %v7717 = vadd.f32 %v7440, %v7678
  %v7718 = vadd.f32 %v7441, %v7683
  %v7719 = vadd.f32 %v7442, %v7688
  %v7720 = vadd.f32 %v7443, %v7693
  %v7721 = vadd.f32 %v7444, %v7698
  %v7722 = vld [vmem:[#allocation4 + $0x1d] sm:$0xff]
  %v7723 = vld [vmem:[#allocation4 + $0x25] sm:$0xff]
  %v7724 = vld [vmem:[#allocation4 + $0x2d] sm:$0xff]
  %v7725 = vld [vmem:[#allocation4 + $0x35] sm:$0xff]
  %v7726 = vld [vmem:[#allocation4 + $0x3d] sm:$0xff]
  %v7727 = vld [vmem:[#allocation4 + $0x45] sm:$0xff]
  %v7728 = vld [vmem:[#allocation4 + $0x4d] sm:$0xff]
  %v7729 = vld [vmem:[#allocation4 + $0x55] sm:$0xff]
  %v7730 = vld [vmem:[#allocation4 + $0x5d] sm:$0xff]
  %v7731 = vld [vmem:[#allocation4 + $0x65] sm:$0xff]
  %v7732 = vld [vmem:[#allocation4 + $0x6d] sm:$0xff]
  %v7733 = vld [vmem:[#allocation4 + $0x75] sm:$0xff]
  %v7734 = vld [vmem:[#allocation4 + $0x7d] sm:$0xff]
  %v7735 = vld [vmem:[#allocation4 + $0x85] sm:$0xff]
  %v7736 = vld [vmem:[#allocation4 + $0x8d] sm:$0xff]
  %v7737 = vld [vmem:[#allocation4 + $0x95] sm:$0xff]
  %v7738 = vld [vmem:[#allocation4 + $0x9d] sm:$0xff]
  %v7739 = vld [vmem:[#allocation4 + $0xa5] sm:$0xff]
  %v7740 = vld [vmem:[#allocation4 + $0xad] sm:$0xff]
  %v7741 = vld [vmem:[#allocation4 + $0xb5] sm:$0xff]
  %v7742 = vld [vmem:[#allocation4 + $0xbd] sm:$0xff]
  %v7743 = vld [vmem:[%s3 + $0x70] sm:$0xff]
  %v7744 = vld [vmem:[%s3 + $0x78] sm:$0xff]
  %v7746 = vsel %vm1089, %v7722, 0
  %v7749 = vsel %vm1089, %v7723, 0
  %v7752 = vsel %vm1089, %v7724, 0
  %v7755 = vsel %vm1089, %v7725, 0
  %v7758 = vsel %vm1089, %v7726, 0
  %v7761 = vsel %vm1089, %v7727, 0
  %v7764 = vsel %vm1089, %v7728, 0
  %v7767 = vsel %vm1089, %v7729, 0
  %v7770 = vsel %vm1089, %v7730, 0
  %v7773 = vsel %vm1089, %v7731, 0
  %v7776 = vsel %vm1089, %v7732, 0
  %v7779 = vsel %vm1089, %v7733, 0
  %v7782 = vsel %vm1089, %v7734, 0
  %v7785 = vsel %vm1089, %v7735, 0
  %v7788 = vsel %vm1089, %v7736, 0
  %v7791 = vsel %vm1089, %v7737, 0
  %v7794 = vsel %vm1089, %v7738, 0
  %v7797 = vsel %vm1089, %v7739, 0
  %v7800 = vsel %vm1089, %v7740, 0
  %v7803 = vsel %vm1089, %v7741, 0
  %v7806 = vsel %vm1089, %v7742, 0
  %7808 = vmatprep.subr.mxu0 0.0
  %7809 = vmatpush1.msra.mxu0 %v7743
  %7810 = vmatprep.subr.mxu0 0.0
  %7811 = vmatpush1.msra.mxu0 %v7744
  %7812 = vmatprep.subr.mxu0 0.0
  %7813 = vmatpush1.msra.mxu0 0.0
  %7814 = vmatprep.subr.mxu0 0.0
  %7815 = vmatpush1.msra.mxu0 0.0
  %7816 = vmatprep.subr.mxu0 0.0
  %7817 = vmatpush1.msra.mxu0 0.0
  %7818 = vmatprep.subr.mxu0 0.0
  %7819 = vmatpush1.msra.mxu0 0.0
  %7820 = vmatprep.subr.mxu0 0.0
  %7821 = vmatpush1.msra.mxu0 0.0
  %7822 = vmatprep.subr.mxu0 0.0
  %7823 = vmatpush1.msra.mxu0 0.0
  %7824 = vmatprep.subr.mxu0 0.0
  %7825 = vmatpush1.msra.mxu0 0.0
  %7826 = vmatprep.subr.mxu0 0.0
  %7827 = vmatpush1.msra.mxu0 0.0
  %7828 = vmatprep.subr.mxu0 0.0
  %7829 = vmatpush1.msra.mxu0 0.0
  %7830 = vmatprep.subr.mxu0 0.0
  %7831 = vmatpush1.msra.mxu0 0.0
  %7832 = vmatprep.subr.mxu0 0.0
  %7833 = vmatpush1.msra.mxu0 0.0
  %7834 = vmatprep.subr.mxu0 0.0
  %7835 = vmatpush1.msra.mxu0 0.0
  %7836 = vmatprep.subr.mxu0 0.0
  %7837 = vmatpush1.msra.mxu0 0.0
  %7838 = vmatprep.subr.mxu0 0.0
  %7839 = vmatpush1.msra.mxu0 0.0
  %7840 = vmatprep.subr.mxu0 0.0
  %7841 = vmatpush1.msra.mxu0 0.0
  %7842 = vmatprep.subr.mxu0 0.0
  %7843 = vmatpush1.msra.mxu0 0.0
  %7844 = vmatprep.subr.mxu0 0.0
  %7845 = vmatpush1.msra.mxu0 0.0
  %7846 = vmatprep.subr.mxu0 0.0
  %7847 = vmatpush1.msra.mxu0 0.0
  %7848 = vmatprep.subr.mxu0 0.0
  %7849 = vmatpush1.msra.mxu0 0.0
  %7850 = vmatprep.subr.mxu0 0.0
  %7851 = vmatpush1.msra.mxu0 0.0
  %7852 = vmatprep.subr.mxu0 0.0
  %7853 = vmatpush1.msra.mxu0 0.0
  %7854 = vmatprep.subr.mxu0 0.0
  %7855 = vmatpush1.msra.mxu0 0.0
  %7856 = vmatprep.subr.mxu0 0.0
  %7857 = vmatpush1.msra.mxu0 0.0
  %7858 = vmatprep.subr.mxu0 0.0
  %7859 = vmatpush1.msra.mxu0 0.0
  %7860 = vmatprep.subr.mxu0 0.0
  %7861 = vmatpush1.msra.mxu0 0.0
  %7862 = vmatprep.subr.mxu0 0.0
  %7863 = vmatpush1.msra.mxu0 0.0
  %7864 = vmatprep.subr.mxu0 0.0
  %7865 = vmatpush1.msra.mxu0 0.0
  %7866 = vmatprep.subr.mxu0 0.0
  %7867 = vmatpush1.msra.mxu0 0.0
  %7868 = vmatprep.subr.mxu0 0.0
  %7869 = vmatpush1.msra.mxu0 0.0
  %7870 = vmatprep.subr.mxu0 0.0
  %7871 = vmatpush1.msra.mxu0 0.0
  %7872 = vmatprep.mubr.f32.mxu0 0.0
  %7873 = vmatmul.mubr.f32.gmra.mrb[0].mxu0 %v7746
  %v7874 = vpop.f32.mrb[0].mxu0
  %v7875 = vadd.f32 0.0, %v7874
  %v7876 = vpop.f32.mrb[0].mxu0
  %7877 = vmatprep.mubr.f32.mxu0 0.0
  %7878 = vmatmul.mubr.f32.gmra.mrb[0].mxu0 %v7749
  %v7879 = vpop.f32.mrb[0].mxu0
  %v7880 = vadd.f32 0.0, %v7879
  %v7881 = vpop.f32.mrb[0].mxu0
  %7882 = vmatprep.mubr.f32.mxu0 0.0
  %7883 = vmatmul.mubr.f32.gmra.mrb[0].mxu0 %v7752
  %v7884 = vpop.f32.mrb[0].mxu0
  %v7885 = vadd.f32 0.0, %v7884
  %v7886 = vpop.f32.mrb[0].mxu0
  %7887 = vmatprep.mubr.f32.mxu0 0.0
  %7888 = vmatmul.mubr.f32.gmra.mrb[0].mxu0 %v7755
  %v7889 = vpop.f32.mrb[0].mxu0
  %v7890 = vadd.f32 0.0, %v7889
  %v7891 = vpop.f32.mrb[0].mxu0
  %7892 = vmatprep.mubr.f32.mxu0 0.0
  %7893 = vmatmul.mubr.f32.gmra.mrb[0].mxu0 %v7758
  %v7894 = vpop.f32.mrb[0].mxu0
  %v7895 = vadd.f32 0.0, %v7894
  %v7896 = vpop.f32.mrb[0].mxu0
  %7897 = vmatprep.mubr.f32.mxu0 0.0
  %7898 = vmatmul.mubr.f32.gmra.mrb[0].mxu0 %v7761
  %v7899 = vpop.f32.mrb[0].mxu0
  %v7900 = vadd.f32 0.0, %v7899
  %v7901 = vpop.f32.mrb[0].mxu0
  %7902 = vmatprep.mubr.f32.mxu0 0.0
  %7903 = vmatmul.mubr.f32.gmra.mrb[0].mxu0 %v7764
  %v7904 = vpop.f32.mrb[0].mxu0
  %v7905 = vadd.f32 0.0, %v7904
  %v7906 = vpop.f32.mrb[0].mxu0
  %7907 = vmatprep.mubr.f32.mxu0 0.0
  %7908 = vmatmul.mubr.f32.gmra.mrb[0].mxu0 %v7767
  %v7909 = vpop.f32.mrb[0].mxu0
  %v7910 = vadd.f32 0.0, %v7909
  %v7911 = vpop.f32.mrb[0].mxu0
  %7912 = vmatprep.mubr.f32.mxu0 0.0
  %7913 = vmatmul.mubr.f32.gmra.mrb[0].mxu0 %v7770
  %v7914 = vpop.f32.mrb[0].mxu0
  %v7915 = vadd.f32 0.0, %v7914
  %v7916 = vpop.f32.mrb[0].mxu0
  %7917 = vmatprep.mubr.f32.mxu0 0.0
  %7918 = vmatmul.mubr.f32.gmra.mrb[0].mxu0 %v7773
  %v7919 = vpop.f32.mrb[0].mxu0
  %v7920 = vadd.f32 0.0, %v7919
  %v7921 = vpop.f32.mrb[0].mxu0
  %7922 = vmatprep.mubr.f32.mxu0 0.0
  %7923 = vmatmul.mubr.f32.gmra.mrb[0].mxu0 %v7776
  %v7924 = vpop.f32.mrb[0].mxu0
  %v7925 = vadd.f32 0.0, %v7924
  %v7926 = vpop.f32.mrb[0].mxu0
  %7927 = vmatprep.mubr.f32.mxu0 0.0
  %7928 = vmatmul.mubr.f32.gmra.mrb[0].mxu0 %v7779
  %v7929 = vpop.f32.mrb[0].mxu0
  %v7930 = vadd.f32 0.0, %v7929
  %v7931 = vpop.f32.mrb[0].mxu0
  %7932 = vmatprep.mubr.f32.mxu0 0.0
  %7933 = vmatmul.mubr.f32.gmra.mrb[0].mxu0 %v7782
  %v7934 = vpop.f32.mrb[0].mxu0
  %v7935 = vadd.f32 0.0, %v7934
  %v7936 = vpop.f32.mrb[0].mxu0
  %7937 = vmatprep.mubr.f32.mxu0 0.0
  %7938 = vmatmul.mubr.f32.gmra.mrb[0].mxu0 %v7785
  %v7939 = vpop.f32.mrb[0].mxu0
  %v7940 = vadd.f32 0.0, %v7939
  %v7941 = vpop.f32.mrb[0].mxu0
  %7942 = vmatprep.mubr.f32.mxu0 0.0
  %7943 = vmatmul.mubr.f32.gmra.mrb[0].mxu0 %v7788
  %v7944 = vpop.f32.mrb[0].mxu0
  %v7945 = vadd.f32 0.0, %v7944
  %v7946 = vpop.f32.mrb[0].mxu0
  %7947 = vmatprep.mubr.f32.mxu0 0.0
  %7948 = vmatmul.mubr.f32.gmra.mrb[0].mxu0 %v7791
  %v7949 = vpop.f32.mrb[0].mxu0
  %v7950 = vadd.f32 0.0, %v7949
  %v7951 = vpop.f32.mrb[0].mxu0
  %7952 = vmatprep.mubr.f32.mxu0 0.0
  %7953 = vmatmul.mubr.f32.gmra.mrb[0].mxu0 %v7794
  %v7954 = vpop.f32.mrb[0].mxu0
  %v7955 = vadd.f32 0.0, %v7954
  %v7956 = vpop.f32.mrb[0].mxu0
  %7957 = vmatprep.mubr.f32.mxu0 0.0
  %7958 = vmatmul.mubr.f32.gmra.mrb[0].mxu0 %v7797
  %v7959 = vpop.f32.mrb[0].mxu0
  %v7960 = vadd.f32 0.0, %v7959
  %v7961 = vpop.f32.mrb[0].mxu0
  %7962 = vmatprep.mubr.f32.mxu0 0.0
  %7963 = vmatmul.mubr.f32.gmra.mrb[0].mxu0 %v7800
  %v7964 = vpop.f32.mrb[0].mxu0
  %v7965 = vadd.f32 0.0, %v7964
  %v7966 = vpop.f32.mrb[0].mxu0
  %7967 = vmatprep.mubr.f32.mxu0 0.0
  %7968 = vmatmul.mubr.f32.gmra.mrb[0].mxu0 %v7803
  %v7969 = vpop.f32.mrb[0].mxu0
  %v7970 = vadd.f32 0.0, %v7969
  %v7971 = vpop.f32.mrb[0].mxu0
  %7972 = vmatprep.mubr.f32.mxu0 0.0
  %7973 = vmatmul.mubr.f32.gmra.mrb[0].mxu0 %v7806
  %v7974 = vpop.f32.mrb[0].mxu0
  %v7975 = vadd.f32 0.0, %v7974
  %v7976 = vpop.f32.mrb[0].mxu0
  %7977 = vdwg.mxu0
  %v7978 = vadd.f32 %v7701, %v7875
  %v7979 = vadd.f32 %v7702, %v7880
  %v7980 = vadd.f32 %v7703, %v7885
  %v7981 = vadd.f32 %v7704, %v7890
  %v7982 = vadd.f32 %v7705, %v7895
  %v7983 = vadd.f32 %v7706, %v7900
  %v7984 = vadd.f32 %v7707, %v7905
  %v7985 = vadd.f32 %v7708, %v7910
  %v7986 = vadd.f32 %v7709, %v7915
  %v7987 = vadd.f32 %v7710, %v7920
  %v7988 = vadd.f32 %v7711, %v7925
  %v7989 = vadd.f32 %v7712, %v7930
  %v7990 = vadd.f32 %v7713, %v7935
  %v7991 = vadd.f32 %v7714, %v7940
  %v7992 = vadd.f32 %v7715, %v7945
  %v7993 = vadd.f32 %v7716, %v7950
  %v7994 = vadd.f32 %v7717, %v7955
  %v7995 = vadd.f32 %v7718, %v7960
  %v7996 = vadd.f32 %v7719, %v7965
  %v7997 = vadd.f32 %v7720, %v7970
  %v7998 = vadd.f32 %v7721, %v7975
  %v7999 = vld [vmem:[#allocation4 + $0x1e] sm:$0xff]
  %v8000 = vld [vmem:[#allocation4 + $0x26] sm:$0xff]
  %v8001 = vld [vmem:[#allocation4 + $0x2e] sm:$0xff]
  %v8002 = vld [vmem:[#allocation4 + $0x36] sm:$0xff]
  %v8003 = vld [vmem:[#allocation4 + $0x3e] sm:$0xff]
  %v8004 = vld [vmem:[#allocation4 + $0x46] sm:$0xff]
  %v8005 = vld [vmem:[#allocation4 + $0x4e] sm:$0xff]
  %v8006 = vld [vmem:[#allocation4 + $0x56] sm:$0xff]
  %v8007 = vld [vmem:[#allocation4 + $0x5e] sm:$0xff]
  %v8008 = vld [vmem:[#allocation4 + $0x66] sm:$0xff]
  %v8009 = vld [vmem:[#allocation4 + $0x6e] sm:$0xff]
  %v8010 = vld [vmem:[#allocation4 + $0x76] sm:$0xff]
  %v8011 = vld [vmem:[#allocation4 + $0x7e] sm:$0xff]
  %v8012 = vld [vmem:[#allocation4 + $0x86] sm:$0xff]
  %v8013 = vld [vmem:[#allocation4 + $0x8e] sm:$0xff]
  %v8014 = vld [vmem:[#allocation4 + $0x96] sm:$0xff]
  %v8015 = vld [vmem:[#allocation4 + $0x9e] sm:$0xff]
  %v8016 = vld [vmem:[#allocation4 + $0xa6] sm:$0xff]
  %v8017 = vld [vmem:[#allocation4 + $0xae] sm:$0xff]
  %v8018 = vld [vmem:[#allocation4 + $0xb6] sm:$0xff]
  %v8019 = vld [vmem:[#allocation4 + $0xbe] sm:$0xff]
  %v8020 = vld [vmem:[%s3 + $0x80] sm:$0xff]
  %v8021 = vld [vmem:[%s3 + $0x88] sm:$0xff]
  %v8023 = vsel %vm1089, %v7999, 0
  %v8026 = vsel %vm1089, %v8000, 0
  %v8029 = vsel %vm1089, %v8001, 0
  %v8032 = vsel %vm1089, %v8002, 0
  %v8035 = vsel %vm1089, %v8003, 0
  %v8038 = vsel %vm1089, %v8004, 0
  %v8041 = vsel %vm1089, %v8005, 0
  %v8044 = vsel %vm1089, %v8006, 0
  %v8047 = vsel %vm1089, %v8007, 0
  %v8050 = vsel %vm1089, %v8008, 0
  %v8053 = vsel %vm1089, %v8009, 0
  %v8056 = vsel %vm1089, %v8010, 0
  %v8059 = vsel %vm1089, %v8011, 0
  %v8062 = vsel %vm1089, %v8012, 0
  %v8065 = vsel %vm1089, %v8013, 0
  %v8068 = vsel %vm1089, %v8014, 0
  %v8071 = vsel %vm1089, %v8015, 0
  %v8074 = vsel %vm1089, %v8016, 0
  %v8077 = vsel %vm1089, %v8017, 0
  %v8080 = vsel %vm1089, %v8018, 0
  %v8083 = vsel %vm1089, %v8019, 0
  %8085 = vmatprep.subr.mxu0 0.0
  %8086 = vmatpush1.msra.mxu0 %v8020
  %8087 = vmatprep.subr.mxu0 0.0
  %8088 = vmatpush1.msra.mxu0 %v8021
  %8089 = vmatprep.subr.mxu0 0.0
  %8090 = vmatpush1.msra.mxu0 0.0
  %8091 = vmatprep.subr.mxu0 0.0
  %8092 = vmatpush1.msra.mxu0 0.0
  %8093 = vmatprep.subr.mxu0 0.0
  %8094 = vmatpush1.msra.mxu0 0.0
  %8095 = vmatprep.subr.mxu0 0.0
  %8096 = vmatpush1.msra.mxu0 0.0
  %8097 = vmatprep.subr.mxu0 0.0
  %8098 = vmatpush1.msra.mxu0 0.0
  %8099 = vmatprep.subr.mxu0 0.0
  %8100 = vmatpush1.msra.mxu0 0.0
  %8101 = vmatprep.subr.mxu0 0.0
  %8102 = vmatpush1.msra.mxu0 0.0
  %8103 = vmatprep.subr.mxu0 0.0
  %8104 = vmatpush1.msra.mxu0 0.0
  %8105 = vmatprep.subr.mxu0 0.0
  %8106 = vmatpush1.msra.mxu0 0.0
  %8107 = vmatprep.subr.mxu0 0.0
  %8108 = vmatpush1.msra.mxu0 0.0
  %8109 = vmatprep.subr.mxu0 0.0
  %8110 = vmatpush1.msra.mxu0 0.0
  %8111 = vmatprep.subr.mxu0 0.0
  %8112 = vmatpush1.msra.mxu0 0.0
  %8113 = vmatprep.subr.mxu0 0.0
  %8114 = vmatpush1.msra.mxu0 0.0
  %8115 = vmatprep.subr.mxu0 0.0
  %8116 = vmatpush1.msra.mxu0 0.0
  %8117 = vmatprep.subr.mxu0 0.0
  %8118 = vmatpush1.msra.mxu0 0.0
  %8119 = vmatprep.subr.mxu0 0.0
  %8120 = vmatpush1.msra.mxu0 0.0
  %8121 = vmatprep.subr.mxu0 0.0
  %8122 = vmatpush1.msra.mxu0 0.0
  %8123 = vmatprep.subr.mxu0 0.0
  %8124 = vmatpush1.msra.mxu0 0.0
  %8125 = vmatprep.subr.mxu0 0.0
  %8126 = vmatpush1.msra.mxu0 0.0
  %8127 = vmatprep.subr.mxu0 0.0
  %8128 = vmatpush1.msra.mxu0 0.0
  %8129 = vmatprep.subr.mxu0 0.0
  %8130 = vmatpush1.msra.mxu0 0.0
  %8131 = vmatprep.subr.mxu0 0.0
  %8132 = vmatpush1.msra.mxu0 0.0
  %8133 = vmatprep.subr.mxu0 0.0
  %8134 = vmatpush1.msra.mxu0 0.0
  %8135 = vmatprep.subr.mxu0 0.0
  %8136 = vmatpush1.msra.mxu0 0.0
  %8137 = vmatprep.subr.mxu0 0.0
  %8138 = vmatpush1.msra.mxu0 0.0
  %8139 = vmatprep.subr.mxu0 0.0
  %8140 = vmatpush1.msra.mxu0 0.0
  %8141 = vmatprep.subr.mxu0 0.0
  %8142 = vmatpush1.msra.mxu0 0.0
  %8143 = vmatprep.subr.mxu0 0.0
  %8144 = vmatpush1.msra.mxu0 0.0
  %8145 = vmatprep.subr.mxu0 0.0
  %8146 = vmatpush1.msra.mxu0 0.0
  %8147 = vmatprep.subr.mxu0 0.0
  %8148 = vmatpush1.msra.mxu0 0.0
  %8149 = vmatprep.mubr.f32.mxu0 0.0
  %8150 = vmatmul.mubr.f32.gmra.mrb[0].mxu0 %v8023
  %v8151 = vpop.f32.mrb[0].mxu0
  %v8152 = vadd.f32 0.0, %v8151
  %v8153 = vpop.f32.mrb[0].mxu0
  %8154 = vmatprep.mubr.f32.mxu0 0.0
  %8155 = vmatmul.mubr.f32.gmra.mrb[0].mxu0 %v8026
  %v8156 = vpop.f32.mrb[0].mxu0
  %v8157 = vadd.f32 0.0, %v8156
  %v8158 = vpop.f32.mrb[0].mxu0
  %8159 = vmatprep.mubr.f32.mxu0 0.0
  %8160 = vmatmul.mubr.f32.gmra.mrb[0].mxu0 %v8029
  %v8161 = vpop.f32.mrb[0].mxu0
  %v8162 = vadd.f32 0.0, %v8161
  %v8163 = vpop.f32.mrb[0].mxu0
  %8164 = vmatprep.mubr.f32.mxu0 0.0
  %8165 = vmatmul.mubr.f32.gmra.mrb[0].mxu0 %v8032
  %v8166 = vpop.f32.mrb[0].mxu0
  %v8167 = vadd.f32 0.0, %v8166
  %v8168 = vpop.f32.mrb[0].mxu0
  %8169 = vmatprep.mubr.f32.mxu0 0.0
  %8170 = vmatmul.mubr.f32.gmra.mrb[0].mxu0 %v8035
  %v8171 = vpop.f32.mrb[0].mxu0
  %v8172 = vadd.f32 0.0, %v8171
  %v8173 = vpop.f32.mrb[0].mxu0
  %8174 = vmatprep.mubr.f32.mxu0 0.0
  %8175 = vmatmul.mubr.f32.gmra.mrb[0].mxu0 %v8038
  %v8176 = vpop.f32.mrb[0].mxu0
  %v8177 = vadd.f32 0.0, %v8176
  %v8178 = vpop.f32.mrb[0].mxu0
  %8179 = vmatprep.mubr.f32.mxu0 0.0
  %8180 = vmatmul.mubr.f32.gmra.mrb[0].mxu0 %v8041
  %v8181 = vpop.f32.mrb[0].mxu0
  %v8182 = vadd.f32 0.0, %v8181
  %v8183 = vpop.f32.mrb[0].mxu0
  %8184 = vmatprep.mubr.f32.mxu0 0.0
  %8185 = vmatmul.mubr.f32.gmra.mrb[0].mxu0 %v8044
  %v8186 = vpop.f32.mrb[0].mxu0
  %v8187 = vadd.f32 0.0, %v8186
  %v8188 = vpop.f32.mrb[0].mxu0
  %8189 = vmatprep.mubr.f32.mxu0 0.0
  %8190 = vmatmul.mubr.f32.gmra.mrb[0].mxu0 %v8047
  %v8191 = vpop.f32.mrb[0].mxu0
  %v8192 = vadd.f32 0.0, %v8191
  %v8193 = vpop.f32.mrb[0].mxu0
  %8194 = vmatprep.mubr.f32.mxu0 0.0
  %8195 = vmatmul.mubr.f32.gmra.mrb[0].mxu0 %v8050
  %v8196 = vpop.f32.mrb[0].mxu0
  %v8197 = vadd.f32 0.0, %v8196
  %v8198 = vpop.f32.mrb[0].mxu0
  %8199 = vmatprep.mubr.f32.mxu0 0.0
  %8200 = vmatmul.mubr.f32.gmra.mrb[0].mxu0 %v8053
  %v8201 = vpop.f32.mrb[0].mxu0
  %v8202 = vadd.f32 0.0, %v8201
  %v8203 = vpop.f32.mrb[0].mxu0
  %8204 = vmatprep.mubr.f32.mxu0 0.0
  %8205 = vmatmul.mubr.f32.gmra.mrb[0].mxu0 %v8056
  %v8206 = vpop.f32.mrb[0].mxu0
  %v8207 = vadd.f32 0.0, %v8206
  %v8208 = vpop.f32.mrb[0].mxu0
  %8209 = vmatprep.mubr.f32.mxu0 0.0
  %8210 = vmatmul.mubr.f32.gmra.mrb[0].mxu0 %v8059
  %v8211 = vpop.f32.mrb[0].mxu0
  %v8212 = vadd.f32 0.0, %v8211
  %v8213 = vpop.f32.mrb[0].mxu0
  %8214 = vmatprep.mubr.f32.mxu0 0.0
  %8215 = vmatmul.mubr.f32.gmra.mrb[0].mxu0 %v8062
  %v8216 = vpop.f32.mrb[0].mxu0
  %v8217 = vadd.f32 0.0, %v8216
  %v8218 = vpop.f32.mrb[0].mxu0
  %8219 = vmatprep.mubr.f32.mxu0 0.0
  %8220 = vmatmul.mubr.f32.gmra.mrb[0].mxu0 %v8065
  %v8221 = vpop.f32.mrb[0].mxu0
  %v8222 = vadd.f32 0.0, %v8221
  %v8223 = vpop.f32.mrb[0].mxu0
  %8224 = vmatprep.mubr.f32.mxu0 0.0
  %8225 = vmatmul.mubr.f32.gmra.mrb[0].mxu0 %v8068
  %v8226 = vpop.f32.mrb[0].mxu0
  %v8227 = vadd.f32 0.0, %v8226
  %v8228 = vpop.f32.mrb[0].mxu0
  %8229 = vmatprep.mubr.f32.mxu0 0.0
  %8230 = vmatmul.mubr.f32.gmra.mrb[0].mxu0 %v8071
  %v8231 = vpop.f32.mrb[0].mxu0
  %v8232 = vadd.f32 0.0, %v8231
  %v8233 = vpop.f32.mrb[0].mxu0
  %8234 = vmatprep.mubr.f32.mxu0 0.0
  %8235 = vmatmul.mubr.f32.gmra.mrb[0].mxu0 %v8074
  %v8236 = vpop.f32.mrb[0].mxu0
  %v8237 = vadd.f32 0.0, %v8236
  %v8238 = vpop.f32.mrb[0].mxu0
  %8239 = vmatprep.mubr.f32.mxu0 0.0
  %8240 = vmatmul.mubr.f32.gmra.mrb[0].mxu0 %v8077
  %v8241 = vpop.f32.mrb[0].mxu0
  %v8242 = vadd.f32 0.0, %v8241
  %v8243 = vpop.f32.mrb[0].mxu0
  %8244 = vmatprep.mubr.f32.mxu0 0.0
  %8245 = vmatmul.mubr.f32.gmra.mrb[0].mxu0 %v8080
  %v8246 = vpop.f32.mrb[0].mxu0
  %v8247 = vadd.f32 0.0, %v8246
  %v8248 = vpop.f32.mrb[0].mxu0
  %8249 = vmatprep.mubr.f32.mxu0 0.0
  %8250 = vmatmul.mubr.f32.gmra.mrb[0].mxu0 %v8083
  %v8251 = vpop.f32.mrb[0].mxu0
  %v8252 = vadd.f32 0.0, %v8251
  %v8253 = vpop.f32.mrb[0].mxu0
  %8254 = vdwg.mxu0
  %v8255 = vadd.f32 %v7978, %v8152
  %v8256 = vadd.f32 %v7979, %v8157
  %v8257 = vadd.f32 %v7980, %v8162
  %v8258 = vadd.f32 %v7981, %v8167
  %v8259 = vadd.f32 %v7982, %v8172
  %v8260 = vadd.f32 %v7983, %v8177
  %v8261 = vadd.f32 %v7984, %v8182
  %v8262 = vadd.f32 %v7985, %v8187
  %v8263 = vadd.f32 %v7986, %v8192
  %v8264 = vadd.f32 %v7987, %v8197
  %v8265 = vadd.f32 %v7988, %v8202
  %v8266 = vadd.f32 %v7989, %v8207
  %v8267 = vadd.f32 %v7990, %v8212
  %v8268 = vadd.f32 %v7991, %v8217
  %v8269 = vadd.f32 %v7992, %v8222
  %v8270 = vadd.f32 %v7993, %v8227
  %v8271 = vadd.f32 %v7994, %v8232
  %v8272 = vadd.f32 %v7995, %v8237
  %v8273 = vadd.f32 %v7996, %v8242
  %v8274 = vadd.f32 %v7997, %v8247
  %v8275 = vadd.f32 %v7998, %v8252
  %v8276 = vld [vmem:[%s4] sm:$0x1]
  %v8278 = vlaneseq
  %v8279 = vshrl.u32 %v8278, 7
  %v8280 = vsub.s32 0, %v8279
  %v8281 = vrot.slane %v8276, %v8280
  %v8283 = vadd.f32 %v8255, %v8281
  %v8284 = vadd.f32 %v8256, %v8281
  %v8285 = vadd.f32 %v8257, %v8281
  %v8286 = vadd.f32 %v8258, %v8281
  %v8287 = vadd.f32 %v8259, %v8281
  %v8288 = vadd.f32 %v8260, %v8281
  %v8289 = vadd.f32 %v8261, %v8281
  %v8290 = vadd.f32 %v8262, %v8281
  %v8291 = vadd.f32 %v8263, %v8281
  %v8292 = vadd.f32 %v8264, %v8281
  %v8293 = vadd.f32 %v8265, %v8281
  %v8294 = vadd.f32 %v8266, %v8281
  %v8295 = vadd.f32 %v8267, %v8281
  %v8296 = vadd.f32 %v8268, %v8281
  %v8297 = vadd.f32 %v8269, %v8281
  %v8298 = vadd.f32 %v8270, %v8281
  %v8299 = vadd.f32 %v8271, %v8281
  %v8300 = vadd.f32 %v8272, %v8281
  %v8301 = vadd.f32 %v8273, %v8281
  %v8302 = vadd.f32 %v8274, %v8281
  %v8303 = vadd.f32 %v8275, %v8281
  %v8304 = vmax.f32 %v8283, 0.0
  %v8305 = vmax.f32 %v8284, 0.0
  %v8306 = vmax.f32 %v8285, 0.0
  %v8307 = vmax.f32 %v8286, 0.0
  %v8308 = vmax.f32 %v8287, 0.0
  %v8309 = vmax.f32 %v8288, 0.0
  %v8310 = vmax.f32 %v8289, 0.0
  %v8311 = vmax.f32 %v8290, 0.0
  %v8312 = vmax.f32 %v8291, 0.0
  %v8313 = vmax.f32 %v8292, 0.0
  %v8314 = vmax.f32 %v8293, 0.0
  %v8315 = vmax.f32 %v8294, 0.0
  %v8316 = vmax.f32 %v8295, 0.0
  %v8317 = vmax.f32 %v8296, 0.0
  %v8318 = vmax.f32 %v8297, 0.0
  %v8319 = vmax.f32 %v8298, 0.0
  %v8320 = vmax.f32 %v8299, 0.0
  %v8321 = vmax.f32 %v8300, 0.0
  %v8322 = vmax.f32 %v8301, 0.0
  %v8323 = vmax.f32 %v8302, 0.0
  %v8324 = vmax.f32 %v8303, 0.0
  %8325 = vst.msk [vmem:[#allocation5] sm:$0xff] %vm4094, %v8304
  %8326 = vst.msk [vmem:[#allocation5 + $0x8] sm:$0xff] %vm4094, %v8305
  %8327 = vst.msk [vmem:[#allocation5 + $0x10] sm:$0xff] %vm4094, %v8306
  %8328 = vst.msk [vmem:[#allocation5 + $0x18] sm:$0xff] %vm4094, %v8307
  %8329 = vst.msk [vmem:[#allocation5 + $0x20] sm:$0xff] %vm4094, %v8308
  %8330 = vst.msk [vmem:[#allocation5 + $0x28] sm:$0xff] %vm4094, %v8309
  %8331 = vst.msk [vmem:[#allocation5 + $0x30] sm:$0xff] %vm4094, %v8310
  %8332 = vst.msk [vmem:[#allocation5 + $0x38] sm:$0xff] %vm4094, %v8311
  %8333 = vst.msk [vmem:[#allocation5 + $0x40] sm:$0xff] %vm4094, %v8312
  %8334 = vst.msk [vmem:[#allocation5 + $0x48] sm:$0xff] %vm4094, %v8313
  %8335 = vst.msk [vmem:[#allocation5 + $0x50] sm:$0xff] %vm4094, %v8314
  %8336 = vst.msk [vmem:[#allocation5 + $0x58] sm:$0xff] %vm4094, %v8315
  %8337 = vst.msk [vmem:[#allocation5 + $0x60] sm:$0xff] %vm4094, %v8316
  %8338 = vst.msk [vmem:[#allocation5 + $0x68] sm:$0xff] %vm4094, %v8317
  %8339 = vst.msk [vmem:[#allocation5 + $0x70] sm:$0xff] %vm4094, %v8318
  %8340 = vst.msk [vmem:[#allocation5 + $0x78] sm:$0xff] %vm4094, %v8319
  %8341 = vst.msk [vmem:[#allocation5 + $0x80] sm:$0xff] %vm4094, %v8320
  %8342 = vst.msk [vmem:[#allocation5 + $0x88] sm:$0xff] %vm4094, %v8321
  %8343 = vst.msk [vmem:[#allocation5 + $0x90] sm:$0xff] %vm4094, %v8322
  %8344 = vst.msk [vmem:[#allocation5 + $0x98] sm:$0xff] %vm4094, %v8323
  %8345 = vst.msk [vmem:[#allocation5 + $0xa0] sm:$0xff] %vm4094, %v8324
  %v8346 = vld [vmem:[#allocation5] ss:$2 sm:$0xff]
  %v8347 = vld [vmem:[%s4117] ss:$2 sm:$0xff]
  %v8348 = vld [vmem:[%s4119] ss:$2 sm:$0xff]
  %v8349 = vld [vmem:[%s4121] ss:$2 sm:$0xff]
  %v8350 = vld [vmem:[%s4123] ss:$2 sm:$0xff]
  %v8351 = vld [vmem:[%s4125] ss:$2 sm:$0xff]
  %v8352 = vld [vmem:[%s4127] ss:$2 sm:$0xff]
  %v8353 = vld [vmem:[%s4129] ss:$2 sm:$0xff]
  %v8354 = vld [vmem:[%s4131] ss:$2 sm:$0xff]
  %v8355 = vld [vmem:[%s4133] ss:$2 sm:$0xff]
  %v8356 = vld [vmem:[%s4135] ss:$2 sm:$0xf]
  %v8357 = vld [vmem:[%s4137] ss:$2 sm:$0xff]
  %v8358 = vld [vmem:[%s4139] ss:$2 sm:$0xff]
  %v8359 = vld [vmem:[%s4141] ss:$2 sm:$0xff]
  %v8360 = vld [vmem:[%s4143] ss:$2 sm:$0xff]
  %v8361 = vld [vmem:[%s4145] ss:$2 sm:$0xff]
  %v8362 = vld [vmem:[%s4147] ss:$2 sm:$0xff]
  %v8363 = vld [vmem:[%s4149] ss:$2 sm:$0xff]
  %v8364 = vld [vmem:[%s4151] ss:$2 sm:$0xff]
  %v8365 = vld [vmem:[%s4153] ss:$2 sm:$0xff]
  %v8366 = vld [vmem:[%s4155] ss:$2 sm:$0xff]
  %v8367 = vld [vmem:[%s4157] ss:$2 sm:$0xf]
  %v8368 = vmax.f32 %v8346, %v8357
  %v8369 = vmax.f32 %v8347, %v8358
  %v8370 = vmax.f32 %v8348, %v8359
  %v8371 = vmax.f32 %v8349, %v8360
  %v8372 = vmax.f32 %v8350, %v8361
  %v8373 = vmax.f32 %v8351, %v8362
  %v8374 = vmax.f32 %v8352, %v8363
  %v8375 = vmax.f32 %v8353, %v8364
  %v8376 = vmax.f32 %v8354, %v8365
  %v8377 = vmax.f32 %v8355, %v8366
  %v8378 = vmax.f32 %v8356, %v8367
  %8379 = vst.msk [vmem:[#allocation6] sm:$0xff] %vm4094, %v8368
  %8380 = vst.msk [vmem:[#allocation6 + $0x8] sm:$0xff] %vm4094, %v8369
  %8381 = vst.msk [vmem:[#allocation6 + $0x10] sm:$0xff] %vm4094, %v8370
  %8382 = vst.msk [vmem:[#allocation6 + $0x18] sm:$0xff] %vm4094, %v8371
  %8383 = vst.msk [vmem:[#allocation6 + $0x20] sm:$0xff] %vm4094, %v8372
  %8384 = vst.msk [vmem:[#allocation6 + $0x28] sm:$0xff] %vm4094, %v8373
  %8385 = vst.msk [vmem:[#allocation6 + $0x30] sm:$0xff] %vm4094, %v8374
  %8386 = vst.msk [vmem:[#allocation6 + $0x38] sm:$0xff] %vm4094, %v8375
  %8387 = vst.msk [vmem:[#allocation6 + $0x40] sm:$0xff] %vm4094, %v8376
  %8388 = vst.msk [vmem:[#allocation6 + $0x48] sm:$0xff] %vm4094, %v8377
  %8389 = vst.msk [vmem:[#allocation6 + $0x50] sm:$0xf] %vm4180, %v8378
  %v8390 = vld [vmem:[#allocation6] sm:$0x3f]
  %v8391 = vld [vmem:[#allocation6 + $0x7] sm:$0x3f]
  %v8392 = vmax.f32 %v8390, %v8391
  %8393 = vst.msk [vmem:[#allocation7] sm:$0x3f] %vm4185, %v8392
  %v8394 = vld [vmem:[#allocation6 + $0xe] sm:$0x3f]
  %v8395 = vld [vmem:[#allocation6 + $0x15] sm:$0x3f]
  %v8396 = vmax.f32 %v8394, %v8395
  %8397 = vst.msk [vmem:[#allocation7 + $0x6] sm:$0x3f] %vm4185, %v8396
  %v8398 = vld [vmem:[#allocation6 + $0x1c] sm:$0x3f]
  %v8399 = vld [vmem:[#allocation6 + $0x23] sm:$0x3f]
  %v8400 = vmax.f32 %v8398, %v8399
  %8401 = vst.msk [vmem:[#allocation7 + $0xc] sm:$0x3f] %vm4185, %v8400
  %v8402 = vld [vmem:[#allocation6 + $0x2a] sm:$0x3f]
  %v8403 = vld [vmem:[#allocation6 + $0x31] sm:$0x3f]
  %v8404 = vmax.f32 %v8402, %v8403
  %8405 = vst.msk [vmem:[#allocation7 + $0x12] sm:$0x3f] %vm4185, %v8404
  %v8406 = vld [vmem:[#allocation6 + $0x38] sm:$0x3f]
  %v8407 = vld [vmem:[#allocation6 + $0x3f] sm:$0x3f]
  %v8408 = vmax.f32 %v8406, %v8407
  %8409 = vst.msk [vmem:[#allocation7 + $0x18] sm:$0x3f] %vm4185, %v8408
  %v8410 = vld [vmem:[#allocation6 + $0x46] sm:$0x3f]
  %v8411 = vld [vmem:[#allocation6 + $0x4d] sm:$0x3f]
  %v8412 = vmax.f32 %v8410, %v8411
  %8413 = vst.msk [vmem:[#allocation7 + $0x1e] sm:$0x3f] %vm4185, %v8412
  %v8414 = vld [vmem:[#allocation7] sm:$0xff]
  %v8415 = vld [vmem:[#allocation7 + $0x8] sm:$0xff]
  %v8416 = vld [vmem:[#allocation7 + $0x10] sm:$0xff]
  %v8417 = vld [vmem:[#allocation7 + $0x18] sm:$0xff]
  %v8418 = vld [vmem:[#allocation7 + $0x20] sm:$0xf]
  %v8419 = vld [vmem:[%s5] sm:$0xff]
  %v8420 = vld [vmem:[%s5 + $0x8] sm:$0xff]
  %v8421 = vld [vmem:[%s5 + $0x10] sm:$0xff]
  %v8422 = vld [vmem:[%s5 + $0x18] sm:$0xff]
  %v8423 = vld [vmem:[%s5 + $0x20] sm:$0xf]
  %v8424 = vld [vmem:[%s5 + $0x28] sm:$0xff]
  %v8425 = vld [vmem:[%s5 + $0x30] sm:$0xff]
  %v8426 = vld [vmem:[%s5 + $0x38] sm:$0xff]
  %v8427 = vld [vmem:[%s5 + $0x40] sm:$0xff]
  %v8428 = vld [vmem:[%s5 + $0x48] sm:$0xf]
  %v8429 = vld [vmem:[%s5 + $0x50] sm:$0xff]
  %v8430 = vld [vmem:[%s5 + $0x58] sm:$0xff]
  %v8431 = vld [vmem:[%s5 + $0x60] sm:$0xff]
  %v8432 = vld [vmem:[%s5 + $0x68] sm:$0xff]
  %v8433 = vld [vmem:[%s5 + $0x70] sm:$0xf]
  %v8434 = vld [vmem:[%s5 + $0x78] sm:$0xff]
  %v8435 = vld [vmem:[%s5 + $0x80] sm:$0xff]
  %v8436 = vld [vmem:[%s5 + $0x88] sm:$0xff]
  %v8437 = vld [vmem:[%s5 + $0x90] sm:$0xff]
  %v8438 = vld [vmem:[%s5 + $0x98] sm:$0xf]
  %v8439 = vld [vmem:[%s5 + $0xa0] sm:$0xff]
  %v8440 = vld [vmem:[%s5 + $0xa8] sm:$0xff]
  %v8441 = vld [vmem:[%s5 + $0xb0] sm:$0xff]
  %v8442 = vld [vmem:[%s5 + $0xb8] sm:$0xff]
  %v8443 = vld [vmem:[%s5 + $0xc0] sm:$0xf]
  %v8444 = vmul.f32 %v8414, %v8419
  %v8445 = vmul.f32 %v8415, %v8420
  %v8446 = vmul.f32 %v8416, %v8421
  %v8447 = vmul.f32 %v8417, %v8422
  %v8448 = vmul.f32 %v8418, %v8423
  %v8449 = vmul.f32 %v8414, %v8424
  %v8450 = vmul.f32 %v8415, %v8425
  %v8451 = vmul.f32 %v8416, %v8426
  %v8452 = vmul.f32 %v8417, %v8427
  %v8453 = vmul.f32 %v8418, %v8428
  %v8454 = vmul.f32 %v8414, %v8429
  %v8455 = vmul.f32 %v8415, %v8430
  %v8456 = vmul.f32 %v8416, %v8431
  %v8457 = vmul.f32 %v8417, %v8432
  %v8458 = vmul.f32 %v8418, %v8433
  %v8459 = vmul.f32 %v8414, %v8434
  %v8460 = vmul.f32 %v8415, %v8435
  %v8461 = vmul.f32 %v8416, %v8436
  %v8462 = vmul.f32 %v8417, %v8437
  %v8463 = vmul.f32 %v8418, %v8438
  %v8464 = vmul.f32 %v8414, %v8439
  %v8465 = vmul.f32 %v8415, %v8440
  %v8466 = vmul.f32 %v8416, %v8441
  %v8467 = vmul.f32 %v8417, %v8442
  %v8468 = vmul.f32 %v8418, %v8443
  %v8469 = vsel %vm4094, %v8444, 0.0
  %v8470 = vsel %vm4094, %v8445, 0.0
  %v8471 = vadd.f32 %v8469, %v8470
  %v8472 = vsel %vm4094, %v8446, 0.0
  %v8473 = vadd.f32 %v8471, %v8472
  %v8474 = vsel %vm4094, %v8447, 0.0
  %v8475 = vadd.f32 %v8473, %v8474
  %v8476 = vsel %vm4180, %v8448, 0.0
  %v8477 = vadd.f32 %v8475, %v8476
  %v8478 = vrot.slane %v8477, 4
  %v8479 = vadd.f32 %v8477, %v8478
  %v8480 = vrot.slane %v8479, 2
  %v8481 = vadd.f32 %v8479, %v8480
  %v8482 = vrot.slane %v8481, 1
  %v8483 = vadd.f32 %v8481, %v8482
  %v8484 = vsel %vm4094, %v8449, 0.0
  %v8485 = vsel %vm4094, %v8450, 0.0
  %v8486 = vadd.f32 %v8484, %v8485
  %v8487 = vsel %vm4094, %v8451, 0.0
  %v8488 = vadd.f32 %v8486, %v8487
  %v8489 = vsel %vm4094, %v8452, 0.0
  %v8490 = vadd.f32 %v8488, %v8489
  %v8491 = vsel %vm4180, %v8453, 0.0
  %v8492 = vadd.f32 %v8490, %v8491
  %v8493 = vrot.slane %v8492, 4
  %v8494 = vadd.f32 %v8492, %v8493
  %v8495 = vrot.slane %v8494, 2
  %v8496 = vadd.f32 %v8494, %v8495
  %v8497 = vrot.slane %v8496, 1
  %v8498 = vadd.f32 %v8496, %v8497
  %v8499 = vsel %vm4094, %v8454, 0.0
  %v8500 = vsel %vm4094, %v8455, 0.0
  %v8501 = vadd.f32 %v8499, %v8500
  %v8502 = vsel %vm4094, %v8456, 0.0
  %v8503 = vadd.f32 %v8501, %v8502
  %v8504 = vsel %vm4094, %v8457, 0.0
  %v8505 = vadd.f32 %v8503, %v8504
  %v8506 = vsel %vm4180, %v8458, 0.0
  %v8507 = vadd.f32 %v8505, %v8506
  %v8508 = vrot.slane %v8507, 4
  %v8509 = vadd.f32 %v8507, %v8508
  %v8510 = vrot.slane %v8509, 2
  %v8511 = vadd.f32 %v8509, %v8510
  %v8512 = vrot.slane %v8511, 1
  %v8513 = vadd.f32 %v8511, %v8512
  %v8514 = vsel %vm4094, %v8459, 0.0
  %v8515 = vsel %vm4094, %v8460, 0.0
  %v8516 = vadd.f32 %v8514, %v8515
  %v8517 = vsel %vm4094, %v8461, 0.0
  %v8518 = vadd.f32 %v8516, %v8517
  %v8519 = vsel %vm4094, %v8462, 0.0
  %v8520 = vadd.f32 %v8518, %v8519
  %v8521 = vsel %vm4180, %v8463, 0.0
  %v8522 = vadd.f32 %v8520, %v8521
  %v8523 = vrot.slane %v8522, 4
  %v8524 = vadd.f32 %v8522, %v8523
  %v8525 = vrot.slane %v8524, 2
  %v8526 = vadd.f32 %v8524, %v8525
  %v8527 = vrot.slane %v8526, 1
  %v8528 = vadd.f32 %v8526, %v8527
  %v8529 = vsel %vm4094, %v8464, 0.0
  %v8530 = vsel %vm4094, %v8465, 0.0
  %v8531 = vadd.f32 %v8529, %v8530
  %v8532 = vsel %vm4094, %v8466, 0.0
  %v8533 = vadd.f32 %v8531, %v8532
  %v8534 = vsel %vm4094, %v8467, 0.0
  %v8535 = vadd.f32 %v8533, %v8534
  %v8536 = vsel %vm4180, %v8468, 0.0
  %v8537 = vadd.f32 %v8535, %v8536
  %v8538 = vrot.slane %v8537, 4
  %v8539 = vadd.f32 %v8537, %v8538
  %v8540 = vrot.slane %v8539, 2
  %v8541 = vadd.f32 %v8539, %v8540
  %v8542 = vrot.slane %v8541, 1
  %v8543 = vadd.f32 %v8541, %v8542
  %v8549 = vsel %vm4342, %v8498, %v8483
  %v8550 = vsel %vm4344, %v8513, %v8549
  %v8551 = vsel %vm4346, %v8528, %v8550
  %v8552 = vsel %vm4348, %v8543, %v8551
  %v8554 = vsel %vm4351, %v8552, 0.0
  %8555 = vadd.xlane.f32.xlu0 %v8554
  %v8556 = vpop.xlane.xlu0 %8555
  %v8557 = vld [vmem:[%s6] sm:$0x1f]
  %v8558 = vadd.f32 %v8556, %v8557
  %s8559 = scalar_lea.vmem %s7, 8
  %8560 = vst.msk [vmem:[%s8559] sm:$0x1f] %vm4357, %v8558
  // Predicated region
  $region30: #{cnn_forward.1} parent=0 // pred_check
    _
  $region31: #{cnn_forward.1} parent=0 // pred_check_branch
    %8562 = sbr.rel (0) target = $region33
  $region32: #{cnn_forward.1} parent=0 // pred_region
    _
  $region33: #{cnn_forward.1} parent=0 // pred_fallthru
    _
  // Predicated region
  $region34: #{cnn_forward.1} parent=0 // pred_check
    _
  $region35: #{cnn_forward.1} parent=0 // pred_check_branch
    %8564 = sbr.rel (0) target = $region37
  $region36: #{cnn_forward.1} parent=0 // pred_region
    _
  $region37: #{cnn_forward.1} parent=0 // pred_fallthru
    _

</llo_original>
